<compile_context>
chip_gen: v5e
topology: v5e:2x2
jax: 0.10.0
libtpu: 0.0.40
codegen_flags: <defaults>
</compile_context>

<pallas_src>
import math
import numpy as np
import jax
import jax.numpy as jnp
from jax.experimental import pallas as pl
from jax.experimental.pallas import tpu as pltpu

# ---- small configuration consistent with the module (scaled down) -----------
D_MODEL = 32          # d_model (original 80)
NHEAD = 4             # nhead   (original 8)
NUM_LAYERS = 2        # num_layers (original 6)
DIM_FF = 64           # dim_feedforward (original 2048)
B = 2
T_IN = 61             # input time frames
F_IN = 29             # fbank bins
EPS = 1e-5            # LayerNorm eps (PyTorch default)
NEG = -1e30           # additive mask value

DH = D_MODEL // NHEAD
SCALE = 1.0 / math.sqrt(DH)


def _conv_out(n):     # Conv2d(kernel=3, stride=2, no padding)
    return (n - 3) // 2 + 1


H1, W1 = _conv_out(T_IN), _conv_out(F_IN)   # 30, 14
H2, W2 = _conv_out(H1), _conv_out(W1)       # 14, 6
H3, W3 = _conv_out(H2), _conv_out(W2)       # 6, 2
T_OUT = H3                                  # output sequence length
EMB_IN = D_MODEL * W3                       # c*w fed to the embedding Linear
BS = B * T_OUT                              # flattened (batch, time) rows

# Number of rows of the "shifted-window" stride-1 conv partial sums we keep
# (batches are stacked along the rows; invalid / wrapped rows are finite junk
# that the decimation matmul never selects).
NS2 = B * H1 * W1 - (2 * W1 + 2)            # 810
NS3 = B * H2 * W2 - (2 * W2 + 2)            # 154


# ------------------------------ Pallas kernel ---------------------------------


def _fused_forward_kernel(
        p1_ref, w1_ref, b1_ref, w2_ref, b2_ref, dec2_ref, dec3_ref,
        wp0_ref, wp1_ref, embb_ref, pe_ref, bias_ref,
        ipw_ref, ipb_ref, opw_ref, opb_ref,
        l1w_ref, l1b_ref, l2w_ref, l2b_ref,
        g1_ref, be1_ref, g2_ref, be2_ref,
        out_ref):
    f32 = jnp.float32

    def shifted_conv(y, width, n_keep):
        # Stride-1 3x3 "valid-over-rows" conv on a row-flattened (H*W, C) map:
        #   s[q] = sum_tap (y @ W_tap)[q + dh*width + dw]
        # Only 2-D dots + static stride-1 row slices.
        s = None
        for dh in range(3):
            for dw in range(3):
                z = jnp.dot(y, w2_ref[dh * 3 + dw], preferred_element_type=f32)
                off = dh * width + dw
                c = z[off:off + n_keep, :]
                s = c if s is None else s + c
        return s

    # ---- conv1 (+ ReLU): patch matrix is built in XLA from the raw input ----
    y1 = jnp.maximum(
        jnp.dot(p1_ref[...], w1_ref[...], preferred_element_type=f32)
        + b1_ref[...], 0.0)                                     # (B*H1*W1, C)

    # ---- conv2 (+ ReLU): shifted windows + decimation matmul ----
    s2 = shifted_conv(y1, W1, NS2)
    y2 = jnp.maximum(
        jnp.dot(dec2_ref[...], s2, preferred_element_type=f32)
        + b2_ref[...], 0.0)                                     # (B*H2*W2, C)

    # ---- conv2 applied again (the module reuses the same layer) ----
    s3 = shifted_conv(y2, W2, NS3)
    y3 = jnp.maximum(
        jnp.dot(dec3_ref[...], s3, preferred_element_type=f32)
        + b2_ref[...], 0.0)                     # (W3*B*T, C): rows = (w3, b, t)

    # ---- embedding Linear (weights pre-split over the 2 freq columns so no
    # in-kernel interleave is needed) + positional encoding.  PE is indexed by
    # batch and broadcast over time, exactly like the reference module. ----
    x = (jnp.dot(y3[:BS, :], wp0_ref[...], preferred_element_type=f32)
         + jnp.dot(y3[BS:2 * BS, :], wp1_ref[...], preferred_element_type=f32)
         + embb_ref[...] + pe_ref[...])                         # (B*S, D)

    bias = bias_ref[...]                                        # (B*S, B*S)

    # ---- encoder layers (unrolled; batch flattened into the row dim) ----
    for l in range(NUM_LAYERS):
        qkv = jnp.dot(x, ipw_ref[l], preferred_element_type=f32) + ipb_ref[l]
        heads = []
        for h in range(NHEAD):
            q = qkv[:, h * DH:(h + 1) * DH]
            k = qkv[:, D_MODEL + h * DH:D_MODEL + (h + 1) * DH]
            v = qkv[:, 2 * D_MODEL + h * DH:2 * D_MODEL + (h + 1) * DH]
            s = jax.lax.dot_general(q, k, (((1,), (1,)), ((), ())),
                                    preferred_element_type=f32) * SCALE + bias
            s = s - jnp.max(s, axis=-1, keepdims=True)
            p = jnp.exp(s)
            p = p / jnp.sum(p, axis=-1, keepdims=True)
            heads.append(jnp.dot(p, v, preferred_element_type=f32))
        attn = jnp.dot(jnp.concatenate(heads, axis=-1), opw_ref[l],
                       preferred_element_type=f32) + opb_ref[l]

        # residual + LayerNorm1 (post-norm)
        y = x + attn
        mu = jnp.mean(y, axis=-1, keepdims=True)
        var = jnp.mean((y - mu) ** 2, axis=-1, keepdims=True)
        y = (y - mu) * jax.lax.rsqrt(var + EPS) * g1_ref[l] + be1_ref[l]

        # FFN (ReLU) + residual + LayerNorm2
        f = jnp.maximum(
            jnp.dot(y, l1w_ref[l], preferred_element_type=f32) + l1b_ref[l], 0.0)
        f = jnp.dot(f, l2w_ref[l], preferred_element_type=f32) + l2b_ref[l]
        z = y + f
        mu = jnp.mean(z, axis=-1, keepdims=True)
        var = jnp.mean((z - mu) ** 2, axis=-1, keepdims=True)
        x = (z - mu) * jax.lax.rsqrt(var + EPS) * g2_ref[l] + be2_ref[l]

    out_ref[...] = x.astype(out_ref.dtype)     # one wide (B*S, D) store


# ----------------------------------- glue -------------------------------------


def _im2col_conv1(src):
    """im2col for conv1 only, on the raw (B, T, F) input, via strided slices."""
    cols = []
    for dh in range(3):
        for dw in range(3):
            sl = jax.lax.slice(
                src, (0, dh, dw),
                (B, dh + 2 * (H1 - 1) + 1, dw + 2 * (W1 - 1) + 1),
                (1, 2, 2))                       # (B, H1, W1)
            cols.append(sl)
    return jnp.stack(cols, axis=-1).reshape(B * H1 * W1, 9)


def transformer_encoder_forward(packed, src, src_key_padding_mask):
    # src: (B, T, F) float32; src_key_padding_mask: (B, T) bool (True = pad)
    mask = src_key_padding_mask[:, None, :]              # unsqueeze(1)
    mask = mask[:, :, :-2:2][:, :, :-2:2][:, :, :-2:2]   # exactly like the module
    kpm = mask[:, 0, :]                                  # squeeze(1): (B, T_OUT)

    # Additive attention bias over the flattened (B*S) key axis:
    # 0 for same-batch unpadded keys, -1e30 for padded or cross-batch keys.
    kflat = kpm.reshape(BS)
    bids = jnp.repeat(jnp.arange(B), T_OUT)
    allowed = (bids[:, None] == bids[None, :]) & (~kflat)[None, :]
    bias = jnp.where(allowed, 0.0, NEG).astype(jnp.float32)      # (B*S, B*S)

    patches1 = _im2col_conv1(src)                                # (B*H1*W1, 9)

    out_flat = pl.pallas_call(
        _fused_forward_kernel,
        out_shape=jax.ShapeDtypeStruct((BS, D_MODEL), jnp.float32),
        compiler_params=pltpu.CompilerParams(
            vmem_limit_bytes=32 * 1024 * 1024),
    )(patches1, packed["w1m"], packed["b1"], packed["w2t"], packed["b2"],
      packed["dec2"], packed["dec3"], packed["wp0"], packed["wp1"],
      packed["emb_b"], packed["pe_rows"], bias,
      packed["ipw"], packed["ipb"], packed["opw"], packed["opb"],
      packed["l1w"], packed["l1b"], packed["l2w"], packed["l2b"],
      packed["g1"], packed["be1"], packed["g2"], packed["be2"])

    return out_flat.reshape(B, T_OUT, D_MODEL), kpm


# ------------------------------ parameters -------------------------------------


def make_pe(max_len, d_model):
    position = jnp.arange(max_len, dtype=jnp.float32)[:, None]
    div_term = jnp.exp(jnp.arange(0, d_model, 2, dtype=jnp.float32)
                       * (-math.log(10000.0) / d_model))
    pe = jnp.zeros((max_len, d_model), jnp.float32)
    pe = pe.at[:, 0::2].set(jnp.sin(position * div_term))
    pe = pe.at[:, 1::2].set(jnp.cos(position * div_term))
    return pe[:, None, :]   # (max_len, 1, d_model) == unsqueeze(0).transpose(0,1)


def _decimation_matrices():
    """0/1 matrices that pick the stride-2 conv output rows from the shifted
    stride-1 partial sums (batches stacked along the rows)."""
    dec2 = np.zeros((B * H2 * W2, NS2), np.float32)
    for b in range(B):
        for h in range(H2):
            for w in range(W2):
                dec2[b * H2 * W2 + h * W2 + w,
                     b * H1 * W1 + 2 * h * W1 + 2 * w] = 1.0
    # conv3 output rows are emitted grouped by freq column w3 (so the embedding
    # can be done as two matmuls without any in-kernel interleave).
    dec3 = np.zeros((W3 * B * H3, NS3), np.float32)
    for w3 in range(W3):
        for b in range(B):
            for h in range(H3):
                dec3[w3 * B * H3 + b * H3 + h,
                     b * H2 * W2 + 2 * h * W2 + 2 * w3] = 1.0
    return jnp.asarray(dec2), jnp.asarray(dec3)


def pack_params(raw):
    """Reshape module parameters into the kernel-ready layout (done once)."""
    D = D_MODEL
    dec2, dec3 = _decimation_matrices()
    stack = lambda name: jnp.stack([p[name] for p in raw["layers"]])
    return {
        "w1m": raw["conv1_w"].reshape(D, 9).T,                        # (9, D)
        "b1": raw["conv1_b"].reshape(1, D),
        "w2t": jnp.transpose(raw["conv2_w"], (2, 3, 1, 0)).reshape(9, D, D),
        "b2": raw["conv2_b"].reshape(1, D),
        "dec2": dec2,
        "dec3": dec3,
        "wp0": raw["emb_w"][0::2, :],        # embedding rows for freq col w3=0
        "wp1": raw["emb_w"][1::2, :],        # embedding rows for freq col w3=1
        "emb_b": raw["emb_b"].reshape(1, D),
        "pe_rows": jnp.broadcast_to(raw["pe"][:B], (B, T_OUT, D)).reshape(BS, D),
        "ipw": stack("in_proj_w"),
        "ipb": stack("in_proj_b")[:, None, :],
        "opw": stack("out_proj_w"),
        "opb": stack("out_proj_b")[:, None, :],
        "l1w": stack("lin1_w"),
        "l1b": stack("lin1_b")[:, None, :],
        "l2w": stack("lin2_w"),
        "l2b": stack("lin2_b")[:, None, :],
        "g1": stack("ln1_g")[:, None, :],
        "be1": stack("ln1_b")[:, None, :],
        "g2": stack("ln2_g")[:, None, :],
        "be2": stack("ln2_b")[:, None, :],
    }


def init_params(key):
    D = D_MODEL

    def rnd(k, shape, scale=0.05):
        return (scale * jax.random.normal(k, shape)).astype(jnp.float32)

    ks = iter(jax.random.split(key, 6 + 12 * NUM_LAYERS))
    raw = {
        "conv1_w": rnd(next(ks), (D, 1, 3, 3)),
        "conv1_b": rnd(next(ks), (D,)),
        "conv2_w": rnd(next(ks), (D, D, 3, 3)),
        "conv2_b": rnd(next(ks), (D,)),
        "emb_w": rnd(next(ks), (EMB_IN, D)),
        "emb_b": rnd(next(ks), (D,)),
        "pe": make_pe(64, D),
        "layers": [],
    }
    for _ in range(NUM_LAYERS):
        raw["layers"].append({
            "in_proj_w": rnd(next(ks), (D, 3 * D)),
            "in_proj_b": rnd(next(ks), (3 * D,)),
            "out_proj_w": rnd(next(ks), (D, D)),
            "out_proj_b": rnd(next(ks), (D,)),
            "lin1_w": rnd(next(ks), (D, DIM_FF)),
            "lin1_b": rnd(next(ks), (DIM_FF,)),
            "lin2_w": rnd(next(ks), (DIM_FF, D)),
            "lin2_b": rnd(next(ks), (D,)),
            "ln1_g": 1.0 + rnd(next(ks), (D,)),
            "ln1_b": rnd(next(ks), (D,)),
            "ln2_g": 1.0 + rnd(next(ks), (D,)),
            "ln2_b": rnd(next(ks), (D,)),
        })
    return raw, pack_params(raw)


# ------------------------- pure-JAX reference (for checking) -------------------


def reference_forward(raw, src, src_key_padding_mask):
    def layer_norm(v, g, b):
        mu = jnp.mean(v, axis=-1, keepdims=True)
        var = jnp.mean((v - mu) ** 2, axis=-1, keepdims=True)
        return (v - mu) * jax.lax.rsqrt(var + EPS) * g + b

    def conv(x, w, b):
        y = jax.lax.conv_general_dilated(
            x, w, (2, 2), "VALID", dimension_numbers=("NCHW", "OIHW", "NCHW"))
        return jnp.maximum(y + b[None, :, None, None], 0.0)

    x = src[:, None, :, :]
    x = conv(x, raw["conv1_w"], raw["conv1_b"])
    x = conv(x, raw["conv2_w"], raw["conv2_b"])
    x = conv(x, raw["conv2_w"], raw["conv2_b"])
    Bn, C, t, w = x.shape
    x = jnp.transpose(x, (0, 2, 1, 3)).reshape(Bn, t, C * w)
    x = x @ raw["emb_w"] + raw["emb_b"]
    x = x + raw["pe"][:Bn]                      # module behavior: PE by batch

    mask = src_key_padding_mask[:, None, :]
    mask = mask[:, :, :-2:2][:, :, :-2:2][:, :, :-2:2]
    kpm = mask[:, 0, :]

    for lp in raw["layers"]:
        qkv = x @ lp["in_proj_w"] + lp["in_proj_b"]
        q, k, v = jnp.split(qkv, 3, axis=-1)

        def split_heads(a):
            return a.reshape(Bn, t, NHEAD, DH).transpose(0, 2, 1, 3)

        q, k, v = split_heads(q), split_heads(k), split_heads(v)
        s = jnp.einsum("bhqd,bhkd->bhqk", q, k) * SCALE
        s = jnp.where(kpm[:, None, None, :], NEG, s)
        p = jax.nn.softmax(s, axis=-1)
        o = jnp.einsum("bhqk,bhkd->bhqd", p, v)
        o = o.transpose(0, 2, 1, 3).reshape(Bn, t, D_MODEL)
        attn = o @ lp["out_proj_w"] + lp["out_proj_b"]
        y = layer_norm(x + attn, lp["ln1_g"], lp["ln1_b"])
        f = jnp.maximum(y @ lp["lin1_w"] + lp["lin1_b"], 0.0)
        f = f @ lp["lin2_w"] + lp["lin2_b"]
        x = layer_norm(y + f, lp["ln2_g"], lp["ln2_b"])
    return x, kpm


if __name__ == "__main__":
    key = jax.random.PRNGKey(0)
    kp, kx = jax.random.split(key)
    raw, packed = init_params(kp)

    src = jax.random.normal(kx, (B, T_IN, F_IN), jnp.float32)
    # batch 0: no padding; batch 1: frames >= 17 are padding
    src_key_padding_mask = jnp.zeros((B, T_IN), jnp.bool_).at[1, 17:].set(True)

    fwd = jax.jit(transformer_encoder_forward)
    out, kpm = fwd(packed, src, src_key_padding_mask)
    jax.block_until_ready(out)
    jax.block_until_ready(kpm)

    assert out.shape == (B, T_OUT, D_MODEL), out.shape
    assert kpm.shape == (B, T_OUT), kpm.shape
    assert bool(jnp.all(jnp.isfinite(out)))

    # correctness check against a pure-JAX reference of the module
    with jax.default_matmul_precision("float32"):
        ref_out, ref_kpm = jax.jit(reference_forward)(raw, src,
                                                      src_key_padding_mask)
    jax.block_until_ready(ref_out)
    assert bool(jnp.all(kpm == ref_kpm))
    err = float(jnp.max(jnp.abs(out - ref_out)))
    assert bool(jnp.allclose(out, ref_out, atol=2e-3, rtol=2e-3)), err

    print("KERNEL_OK")
</pallas_src>

<mosaic_0001>
module attributes {stable_mosaic.version = 11 : i64} {
  func.func @_fused_forward_kernel(%arg0: memref<840x9xf32, #tpu.memory_space<vmem>>, %arg1: memref<9x32xf32, #tpu.memory_space<vmem>>, %arg2: memref<1x32xf32, #tpu.memory_space<vmem>>, %arg3: memref<9x32x32xf32, #tpu.memory_space<vmem>>, %arg4: memref<1x32xf32, #tpu.memory_space<vmem>>, %arg5: memref<168x810xf32, #tpu.memory_space<vmem>>, %arg6: memref<24x154xf32, #tpu.memory_space<vmem>>, %arg7: memref<32x32xf32, #tpu.memory_space<vmem>>, %arg8: memref<32x32xf32, #tpu.memory_space<vmem>>, %arg9: memref<1x32xf32, #tpu.memory_space<vmem>>, %arg10: memref<12x32xf32, #tpu.memory_space<vmem>>, %arg11: memref<12x12xf32, #tpu.memory_space<vmem>>, %arg12: memref<2x32x96xf32, #tpu.memory_space<vmem>>, %arg13: memref<2x1x96xf32, #tpu.memory_space<vmem>>, %arg14: memref<2x32x32xf32, #tpu.memory_space<vmem>>, %arg15: memref<2x1x32xf32, #tpu.memory_space<vmem>>, %arg16: memref<2x32x64xf32, #tpu.memory_space<vmem>>, %arg17: memref<2x1x64xf32, #tpu.memory_space<vmem>>, %arg18: memref<2x64x32xf32, #tpu.memory_space<vmem>>, %arg19: memref<2x1x32xf32, #tpu.memory_space<vmem>>, %arg20: memref<2x1x32xf32, #tpu.memory_space<vmem>>, %arg21: memref<2x1x32xf32, #tpu.memory_space<vmem>>, %arg22: memref<2x1x32xf32, #tpu.memory_space<vmem>>, %arg23: memref<2x1x32xf32, #tpu.memory_space<vmem>>, %arg24: memref<12x32xf32, #tpu.memory_space<vmem>>) attributes {dimension_semantics = [], scalar_prefetch = 0 : i64, scratch_operands = 0 : i64, tpu.core_type = #tpu.core_type<tc>} {
    %c0 = arith.constant 0 : index
    %c0_0 = arith.constant 0 : index
    %0 = vector.load %arg0[%c0, %c0_0] : memref<840x9xf32, #tpu.memory_space<vmem>>, vector<840x9xf32>
    %c0_1 = arith.constant 0 : index
    %c0_2 = arith.constant 0 : index
    %1 = vector.load %arg1[%c0_1, %c0_2] : memref<9x32xf32, #tpu.memory_space<vmem>>, vector<9x32xf32>
    %cst = arith.constant dense<0.000000e+00> : vector<840x32xf32>
    %2 = tpu.matmul %0, %1, %cst {dimension_numbers = #tpu.dot_dimension_numbers<[1], [0], [0], [1], [0, 0, 1, 1], [], []>} : vector<840x9xf32>, vector<9x32xf32>, vector<840x32xf32> -> vector<840x32xf32>
    %c0_3 = arith.constant 0 : index
    %c0_4 = arith.constant 0 : index
    %3 = vector.load %arg2[%c0_3, %c0_4] : memref<1x32xf32, #tpu.memory_space<vmem>>, vector<1x32xf32>
    %4 = vector.broadcast %3 : vector<1x32xf32> to vector<840x32xf32>
    %5 = arith.addf %2, %4 : vector<840x32xf32>
    %cst_5 = arith.constant 0.000000e+00 : f32
    %6 = vector.broadcast %cst_5 : f32 to vector<840x32xf32>
    %7 = arith.maximumf %5, %6 : vector<840x32xf32>
    %c0_6 = arith.constant 0 : index
    %c0_7 = arith.constant 0 : index
    %c0_8 = arith.constant 0 : index
    %8 = vector.load %arg3[%c0_6, %c0_7, %c0_8] : memref<9x32x32xf32, #tpu.memory_space<vmem>>, vector<1x32x32xf32>
    %9 = vector.shape_cast %8 : vector<1x32x32xf32> to vector<32x32xf32>
    %cst_9 = arith.constant dense<0.000000e+00> : vector<840x32xf32>
    %10 = tpu.matmul %7, %9, %cst_9 {dimension_numbers = #tpu.dot_dimension_numbers<[1], [0], [0], [1], [0, 0, 1, 1], [], []>} : vector<840x32xf32>, vector<32x32xf32>, vector<840x32xf32> -> vector<840x32xf32>
    %11 = vector.extract_strided_slice %10 {offsets = [0, 0], sizes = [810, 32], strides = [1, 1]} : vector<840x32xf32> to vector<810x32xf32>
    %c1 = arith.constant 1 : index
    %c0_10 = arith.constant 0 : index
    %c0_11 = arith.constant 0 : index
    %12 = vector.load %arg3[%c1, %c0_10, %c0_11] : memref<9x32x32xf32, #tpu.memory_space<vmem>>, vector<1x32x32xf32>
    %13 = vector.shape_cast %12 : vector<1x32x32xf32> to vector<32x32xf32>
    %cst_12 = arith.constant dense<0.000000e+00> : vector<840x32xf32>
    %14 = tpu.matmul %7, %13, %cst_12 {dimension_numbers = #tpu.dot_dimension_numbers<[1], [0], [0], [1], [0, 0, 1, 1], [], []>} : vector<840x32xf32>, vector<32x32xf32>, vector<840x32xf32> -> vector<840x32xf32>
    %15 = vector.extract_strided_slice %14 {offsets = [1, 0], sizes = [810, 32], strides = [1, 1]} : vector<840x32xf32> to vector<810x32xf32>
    %16 = arith.addf %11, %15 : vector<810x32xf32>
    %c2 = arith.constant 2 : index
    %c0_13 = arith.constant 0 : index
    %c0_14 = arith.constant 0 : index
    %17 = vector.load %arg3[%c2, %c0_13, %c0_14] : memref<9x32x32xf32, #tpu.memory_space<vmem>>, vector<1x32x32xf32>
    %18 = vector.shape_cast %17 : vector<1x32x32xf32> to vector<32x32xf32>
    %cst_15 = arith.constant dense<0.000000e+00> : vector<840x32xf32>
    %19 = tpu.matmul %7, %18, %cst_15 {dimension_numbers = #tpu.dot_dimension_numbers<[1], [0], [0], [1], [0, 0, 1, 1], [], []>} : vector<840x32xf32>, vector<32x32xf32>, vector<840x32xf32> -> vector<840x32xf32>
    %20 = vector.extract_strided_slice %19 {offsets = [2, 0], sizes = [810, 32], strides = [1, 1]} : vector<840x32xf32> to vector<810x32xf32>
    %21 = arith.addf %16, %20 : vector<810x32xf32>
    %c3 = arith.constant 3 : index
    %c0_16 = arith.constant 0 : index
    %c0_17 = arith.constant 0 : index
    %22 = vector.load %arg3[%c3, %c0_16, %c0_17] : memref<9x32x32xf32, #tpu.memory_space<vmem>>, vector<1x32x32xf32>
    %23 = vector.shape_cast %22 : vector<1x32x32xf32> to vector<32x32xf32>
    %cst_18 = arith.constant dense<0.000000e+00> : vector<840x32xf32>
    %24 = tpu.matmul %7, %23, %cst_18 {dimension_numbers = #tpu.dot_dimension_numbers<[1], [0], [0], [1], [0, 0, 1, 1], [], []>} : vector<840x32xf32>, vector<32x32xf32>, vector<840x32xf32> -> vector<840x32xf32>
    %25 = vector.extract_strided_slice %24 {offsets = [14, 0], sizes = [810, 32], strides = [1, 1]} : vector<840x32xf32> to vector<810x32xf32>
    %26 = arith.addf %21, %25 : vector<810x32xf32>
    %c4 = arith.constant 4 : index
    %c0_19 = arith.constant 0 : index
    %c0_20 = arith.constant 0 : index
    %27 = vector.load %arg3[%c4, %c0_19, %c0_20] : memref<9x32x32xf32, #tpu.memory_space<vmem>>, vector<1x32x32xf32>
    %28 = vector.shape_cast %27 : vector<1x32x32xf32> to vector<32x32xf32>
    %cst_21 = arith.constant dense<0.000000e+00> : vector<840x32xf32>
    %29 = tpu.matmul %7, %28, %cst_21 {dimension_numbers = #tpu.dot_dimension_numbers<[1], [0], [0], [1], [0, 0, 1, 1], [], []>} : vector<840x32xf32>, vector<32x32xf32>, vector<840x32xf32> -> vector<840x32xf32>
    %30 = vector.extract_strided_slice %29 {offsets = [15, 0], sizes = [810, 32], strides = [1, 1]} : vector<840x32xf32> to vector<810x32xf32>
    %31 = arith.addf %26, %30 : vector<810x32xf32>
    %c5 = arith.constant 5 : index
    %c0_22 = arith.constant 0 : index
    %c0_23 = arith.constant 0 : index
    %32 = vector.load %arg3[%c5, %c0_22, %c0_23] : memref<9x32x32xf32, #tpu.memory_space<vmem>>, vector<1x32x32xf32>
    %33 = vector.shape_cast %32 : vector<1x32x32xf32> to vector<32x32xf32>
    %cst_24 = arith.constant dense<0.000000e+00> : vector<840x32xf32>
    %34 = tpu.matmul %7, %33, %cst_24 {dimension_numbers = #tpu.dot_dimension_numbers<[1], [0], [0], [1], [0, 0, 1, 1], [], []>} : vector<840x32xf32>, vector<32x32xf32>, vector<840x32xf32> -> vector<840x32xf32>
    %35 = vector.extract_strided_slice %34 {offsets = [16, 0], sizes = [810, 32], strides = [1, 1]} : vector<840x32xf32> to vector<810x32xf32>
    %36 = arith.addf %31, %35 : vector<810x32xf32>
    %c6 = arith.constant 6 : index
    %c0_25 = arith.constant 0 : index
    %c0_26 = arith.constant 0 : index
    %37 = vector.load %arg3[%c6, %c0_25, %c0_26] : memref<9x32x32xf32, #tpu.memory_space<vmem>>, vector<1x32x32xf32>
    %38 = vector.shape_cast %37 : vector<1x32x32xf32> to vector<32x32xf32>
    %cst_27 = arith.constant dense<0.000000e+00> : vector<840x32xf32>
    %39 = tpu.matmul %7, %38, %cst_27 {dimension_numbers = #tpu.dot_dimension_numbers<[1], [0], [0], [1], [0, 0, 1, 1], [], []>} : vector<840x32xf32>, vector<32x32xf32>, vector<840x32xf32> -> vector<840x32xf32>
    %40 = vector.extract_strided_slice %39 {offsets = [28, 0], sizes = [810, 32], strides = [1, 1]} : vector<840x32xf32> to vector<810x32xf32>
    %41 = arith.addf %36, %40 : vector<810x32xf32>
    %c7 = arith.constant 7 : index
    %c0_28 = arith.constant 0 : index
    %c0_29 = arith.constant 0 : index
    %42 = vector.load %arg3[%c7, %c0_28, %c0_29] : memref<9x32x32xf32, #tpu.memory_space<vmem>>, vector<1x32x32xf32>
    %43 = vector.shape_cast %42 : vector<1x32x32xf32> to vector<32x32xf32>
    %cst_30 = arith.constant dense<0.000000e+00> : vector<840x32xf32>
    %44 = tpu.matmul %7, %43, %cst_30 {dimension_numbers = #tpu.dot_dimension_numbers<[1], [0], [0], [1], [0, 0, 1, 1], [], []>} : vector<840x32xf32>, vector<32x32xf32>, vector<840x32xf32> -> vector<840x32xf32>
    %45 = vector.extract_strided_slice %44 {offsets = [29, 0], sizes = [810, 32], strides = [1, 1]} : vector<840x32xf32> to vector<810x32xf32>
    %46 = arith.addf %41, %45 : vector<810x32xf32>
    %c8 = arith.constant 8 : index
    %c0_31 = arith.constant 0 : index
    %c0_32 = arith.constant 0 : index
    %47 = vector.load %arg3[%c8, %c0_31, %c0_32] : memref<9x32x32xf32, #tpu.memory_space<vmem>>, vector<1x32x32xf32>
    %48 = vector.shape_cast %47 : vector<1x32x32xf32> to vector<32x32xf32>
    %cst_33 = arith.constant dense<0.000000e+00> : vector<840x32xf32>
    %49 = tpu.matmul %7, %48, %cst_33 {dimension_numbers = #tpu.dot_dimension_numbers<[1], [0], [0], [1], [0, 0, 1, 1], [], []>} : vector<840x32xf32>, vector<32x32xf32>, vector<840x32xf32> -> vector<840x32xf32>
    %50 = vector.extract_strided_slice %49 {offsets = [30, 0], sizes = [810, 32], strides = [1, 1]} : vector<840x32xf32> to vector<810x32xf32>
    %51 = arith.addf %46, %50 : vector<810x32xf32>
    %c0_34 = arith.constant 0 : index
    %c0_35 = arith.constant 0 : index
    %52 = vector.load %arg5[%c0_34, %c0_35] : memref<168x810xf32, #tpu.memory_space<vmem>>, vector<168x810xf32>
    %cst_36 = arith.constant dense<0.000000e+00> : vector<168x32xf32>
    %53 = tpu.matmul %52, %51, %cst_36 {dimension_numbers = #tpu.dot_dimension_numbers<[1], [0], [0], [1], [0, 0, 1, 1], [], []>} : vector<168x810xf32>, vector<810x32xf32>, vector<168x32xf32> -> vector<168x32xf32>
    %c0_37 = arith.constant 0 : index
    %c0_38 = arith.constant 0 : index
    %54 = vector.load %arg4[%c0_37, %c0_38] : memref<1x32xf32, #tpu.memory_space<vmem>>, vector<1x32xf32>
    %55 = vector.broadcast %54 : vector<1x32xf32> to vector<168x32xf32>
    %56 = arith.addf %53, %55 : vector<168x32xf32>
    %cst_39 = arith.constant 0.000000e+00 : f32
    %57 = vector.broadcast %cst_39 : f32 to vector<168x32xf32>
    %58 = arith.maximumf %56, %57 : vector<168x32xf32>
    %c0_40 = arith.constant 0 : index
    %c0_41 = arith.constant 0 : index
    %c0_42 = arith.constant 0 : index
    %59 = vector.load %arg3[%c0_40, %c0_41, %c0_42] : memref<9x32x32xf32, #tpu.memory_space<vmem>>, vector<1x32x32xf32>
    %60 = vector.shape_cast %59 : vector<1x32x32xf32> to vector<32x32xf32>
    %cst_43 = arith.constant dense<0.000000e+00> : vector<168x32xf32>
    %61 = tpu.matmul %58, %60, %cst_43 {dimension_numbers = #tpu.dot_dimension_numbers<[1], [0], [0], [1], [0, 0, 1, 1], [], []>} : vector<168x32xf32>, vector<32x32xf32>, vector<168x32xf32> -> vector<168x32xf32>
    %62 = vector.extract_strided_slice %61 {offsets = [0, 0], sizes = [154, 32], strides = [1, 1]} : vector<168x32xf32> to vector<154x32xf32>
    %c1_44 = arith.constant 1 : index
    %c0_45 = arith.constant 0 : index
    %c0_46 = arith.constant 0 : index
    %63 = vector.load %arg3[%c1_44, %c0_45, %c0_46] : memref<9x32x32xf32, #tpu.memory_space<vmem>>, vector<1x32x32xf32>
    %64 = vector.shape_cast %63 : vector<1x32x32xf32> to vector<32x32xf32>
    %cst_47 = arith.constant dense<0.000000e+00> : vector<168x32xf32>
    %65 = tpu.matmul %58, %64, %cst_47 {dimension_numbers = #tpu.dot_dimension_numbers<[1], [0], [0], [1], [0, 0, 1, 1], [], []>} : vector<168x32xf32>, vector<32x32xf32>, vector<168x32xf32> -> vector<168x32xf32>
    %66 = vector.extract_strided_slice %65 {offsets = [1, 0], sizes = [154, 32], strides = [1, 1]} : vector<168x32xf32> to vector<154x32xf32>
    %67 = arith.addf %62, %66 : vector<154x32xf32>
    %c2_48 = arith.constant 2 : index
    %c0_49 = arith.constant 0 : index
    %c0_50 = arith.constant 0 : index
    %68 = vector.load %arg3[%c2_48, %c0_49, %c0_50] : memref<9x32x32xf32, #tpu.memory_space<vmem>>, vector<1x32x32xf32>
    %69 = vector.shape_cast %68 : vector<1x32x32xf32> to vector<32x32xf32>
    %cst_51 = arith.constant dense<0.000000e+00> : vector<168x32xf32>
    %70 = tpu.matmul %58, %69, %cst_51 {dimension_numbers = #tpu.dot_dimension_numbers<[1], [0], [0], [1], [0, 0, 1, 1], [], []>} : vector<168x32xf32>, vector<32x32xf32>, vector<168x32xf32> -> vector<168x32xf32>
    %71 = vector.extract_strided_slice %70 {offsets = [2, 0], sizes = [154, 32], strides = [1, 1]} : vector<168x32xf32> to vector<154x32xf32>
    %72 = arith.addf %67, %71 : vector<154x32xf32>
    %c3_52 = arith.constant 3 : index
    %c0_53 = arith.constant 0 : index
    %c0_54 = arith.constant 0 : index
    %73 = vector.load %arg3[%c3_52, %c0_53, %c0_54] : memref<9x32x32xf32, #tpu.memory_space<vmem>>, vector<1x32x32xf32>
    %74 = vector.shape_cast %73 : vector<1x32x32xf32> to vector<32x32xf32>
    %cst_55 = arith.constant dense<0.000000e+00> : vector<168x32xf32>
    %75 = tpu.matmul %58, %74, %cst_55 {dimension_numbers = #tpu.dot_dimension_numbers<[1], [0], [0], [1], [0, 0, 1, 1], [], []>} : vector<168x32xf32>, vector<32x32xf32>, vector<168x32xf32> -> vector<168x32xf32>
    %76 = vector.extract_strided_slice %75 {offsets = [6, 0], sizes = [154, 32], strides = [1, 1]} : vector<168x32xf32> to vector<154x32xf32>
    %77 = arith.addf %72, %76 : vector<154x32xf32>
    %c4_56 = arith.constant 4 : index
    %c0_57 = arith.constant 0 : index
    %c0_58 = arith.constant 0 : index
    %78 = vector.load %arg3[%c4_56, %c0_57, %c0_58] : memref<9x32x32xf32, #tpu.memory_space<vmem>>, vector<1x32x32xf32>
    %79 = vector.shape_cast %78 : vector<1x32x32xf32> to vector<32x32xf32>
    %cst_59 = arith.constant dense<0.000000e+00> : vector<168x32xf32>
    %80 = tpu.matmul %58, %79, %cst_59 {dimension_numbers = #tpu.dot_dimension_numbers<[1], [0], [0], [1], [0, 0, 1, 1], [], []>} : vector<168x32xf32>, vector<32x32xf32>, vector<168x32xf32> -> vector<168x32xf32>
    %81 = vector.extract_strided_slice %80 {offsets = [7, 0], sizes = [154, 32], strides = [1, 1]} : vector<168x32xf32> to vector<154x32xf32>
    %82 = arith.addf %77, %81 : vector<154x32xf32>
    %c5_60 = arith.constant 5 : index
    %c0_61 = arith.constant 0 : index
    %c0_62 = arith.constant 0 : index
    %83 = vector.load %arg3[%c5_60, %c0_61, %c0_62] : memref<9x32x32xf32, #tpu.memory_space<vmem>>, vector<1x32x32xf32>
    %84 = vector.shape_cast %83 : vector<1x32x32xf32> to vector<32x32xf32>
    %cst_63 = arith.constant dense<0.000000e+00> : vector<168x32xf32>
    %85 = tpu.matmul %58, %84, %cst_63 {dimension_numbers = #tpu.dot_dimension_numbers<[1], [0], [0], [1], [0, 0, 1, 1], [], []>} : vector<168x32xf32>, vector<32x32xf32>, vector<168x32xf32> -> vector<168x32xf32>
    %86 = vector.extract_strided_slice %85 {offsets = [8, 0], sizes = [154, 32], strides = [1, 1]} : vector<168x32xf32> to vector<154x32xf32>
    %87 = arith.addf %82, %86 : vector<154x32xf32>
    %c6_64 = arith.constant 6 : index
    %c0_65 = arith.constant 0 : index
    %c0_66 = arith.constant 0 : index
    %88 = vector.load %arg3[%c6_64, %c0_65, %c0_66] : memref<9x32x32xf32, #tpu.memory_space<vmem>>, vector<1x32x32xf32>
    %89 = vector.shape_cast %88 : vector<1x32x32xf32> to vector<32x32xf32>
    %cst_67 = arith.constant dense<0.000000e+00> : vector<168x32xf32>
    %90 = tpu.matmul %58, %89, %cst_67 {dimension_numbers = #tpu.dot_dimension_numbers<[1], [0], [0], [1], [0, 0, 1, 1], [], []>} : vector<168x32xf32>, vector<32x32xf32>, vector<168x32xf32> -> vector<168x32xf32>
    %91 = vector.extract_strided_slice %90 {offsets = [12, 0], sizes = [154, 32], strides = [1, 1]} : vector<168x32xf32> to vector<154x32xf32>
    %92 = arith.addf %87, %91 : vector<154x32xf32>
    %c7_68 = arith.constant 7 : index
    %c0_69 = arith.constant 0 : index
    %c0_70 = arith.constant 0 : index
    %93 = vector.load %arg3[%c7_68, %c0_69, %c0_70] : memref<9x32x32xf32, #tpu.memory_space<vmem>>, vector<1x32x32xf32>
    %94 = vector.shape_cast %93 : vector<1x32x32xf32> to vector<32x32xf32>
    %cst_71 = arith.constant dense<0.000000e+00> : vector<168x32xf32>
    %95 = tpu.matmul %58, %94, %cst_71 {dimension_numbers = #tpu.dot_dimension_numbers<[1], [0], [0], [1], [0, 0, 1, 1], [], []>} : vector<168x32xf32>, vector<32x32xf32>, vector<168x32xf32> -> vector<168x32xf32>
    %96 = vector.extract_strided_slice %95 {offsets = [13, 0], sizes = [154, 32], strides = [1, 1]} : vector<168x32xf32> to vector<154x32xf32>
    %97 = arith.addf %92, %96 : vector<154x32xf32>
    %c8_72 = arith.constant 8 : index
    %c0_73 = arith.constant 0 : index
    %c0_74 = arith.constant 0 : index
    %98 = vector.load %arg3[%c8_72, %c0_73, %c0_74] : memref<9x32x32xf32, #tpu.memory_space<vmem>>, vector<1x32x32xf32>
    %99 = vector.shape_cast %98 : vector<1x32x32xf32> to vector<32x32xf32>
    %cst_75 = arith.constant dense<0.000000e+00> : vector<168x32xf32>
    %100 = tpu.matmul %58, %99, %cst_75 {dimension_numbers = #tpu.dot_dimension_numbers<[1], [0], [0], [1], [0, 0, 1, 1], [], []>} : vector<168x32xf32>, vector<32x32xf32>, vector<168x32xf32> -> vector<168x32xf32>
    %101 = vector.extract_strided_slice %100 {offsets = [14, 0], sizes = [154, 32], strides = [1, 1]} : vector<168x32xf32> to vector<154x32xf32>
    %102 = arith.addf %97, %101 : vector<154x32xf32>
    %c0_76 = arith.constant 0 : index
    %c0_77 = arith.constant 0 : index
    %103 = vector.load %arg6[%c0_76, %c0_77] : memref<24x154xf32, #tpu.memory_space<vmem>>, vector<24x154xf32>
    %cst_78 = arith.constant dense<0.000000e+00> : vector<24x32xf32>
    %104 = tpu.matmul %103, %102, %cst_78 {dimension_numbers = #tpu.dot_dimension_numbers<[1], [0], [0], [1], [0, 0, 1, 1], [], []>} : vector<24x154xf32>, vector<154x32xf32>, vector<24x32xf32> -> vector<24x32xf32>
    %c0_79 = arith.constant 0 : index
    %c0_80 = arith.constant 0 : index
    %105 = vector.load %arg4[%c0_79, %c0_80] : memref<1x32xf32, #tpu.memory_space<vmem>>, vector<1x32xf32>
    %106 = vector.broadcast %105 : vector<1x32xf32> to vector<24x32xf32>
    %107 = arith.addf %104, %106 : vector<24x32xf32>
    %cst_81 = arith.constant 0.000000e+00 : f32
    %108 = vector.broadcast %cst_81 : f32 to vector<24x32xf32>
    %109 = arith.maximumf %107, %108 : vector<24x32xf32>
    %110 = vector.extract_strided_slice %109 {offsets = [0, 0], sizes = [12, 32], strides = [1, 1]} : vector<24x32xf32> to vector<12x32xf32>
    %c0_82 = arith.constant 0 : index
    %c0_83 = arith.constant 0 : index
    %111 = vector.load %arg7[%c0_82, %c0_83] : memref<32x32xf32, #tpu.memory_space<vmem>>, vector<32x32xf32>
    %cst_84 = arith.constant dense<0.000000e+00> : vector<12x32xf32>
    %112 = tpu.matmul %110, %111, %cst_84 {dimension_numbers = #tpu.dot_dimension_numbers<[1], [0], [0], [1], [0, 0, 1, 1], [], []>} : vector<12x32xf32>, vector<32x32xf32>, vector<12x32xf32> -> vector<12x32xf32>
    %113 = vector.extract_strided_slice %109 {offsets = [12, 0], sizes = [12, 32], strides = [1, 1]} : vector<24x32xf32> to vector<12x32xf32>
    %c0_85 = arith.constant 0 : index
    %c0_86 = arith.constant 0 : index
    %114 = vector.load %arg8[%c0_85, %c0_86] : memref<32x32xf32, #tpu.memory_space<vmem>>, vector<32x32xf32>
    %cst_87 = arith.constant dense<0.000000e+00> : vector<12x32xf32>
    %115 = tpu.matmul %113, %114, %cst_87 {dimension_numbers = #tpu.dot_dimension_numbers<[1], [0], [0], [1], [0, 0, 1, 1], [], []>} : vector<12x32xf32>, vector<32x32xf32>, vector<12x32xf32> -> vector<12x32xf32>
    %116 = arith.addf %112, %115 : vector<12x32xf32>
    %c0_88 = arith.constant 0 : index
    %c0_89 = arith.constant 0 : index
    %117 = vector.load %arg9[%c0_88, %c0_89] : memref<1x32xf32, #tpu.memory_space<vmem>>, vector<1x32xf32>
    %118 = vector.broadcast %117 : vector<1x32xf32> to vector<12x32xf32>
    %119 = arith.addf %116, %118 : vector<12x32xf32>
    %c0_90 = arith.constant 0 : index
    %c0_91 = arith.constant 0 : index
    %120 = vector.load %arg10[%c0_90, %c0_91] : memref<12x32xf32, #tpu.memory_space<vmem>>, vector<12x32xf32>
    %121 = arith.addf %119, %120 : vector<12x32xf32>
    %c0_92 = arith.constant 0 : index
    %c0_93 = arith.constant 0 : index
    %122 = vector.load %arg11[%c0_92, %c0_93] : memref<12x12xf32, #tpu.memory_space<vmem>>, vector<12x12xf32>
    %c0_94 = arith.constant 0 : index
    %c0_95 = arith.constant 0 : index
    %c0_96 = arith.constant 0 : index
    %123 = vector.load %arg12[%c0_94, %c0_95, %c0_96] : memref<2x32x96xf32, #tpu.memory_space<vmem>>, vector<1x32x96xf32>
    %124 = vector.shape_cast %123 : vector<1x32x96xf32> to vector<32x96xf32>
    %cst_97 = arith.constant dense<0.000000e+00> : vector<12x96xf32>
    %125 = tpu.matmul %121, %124, %cst_97 {dimension_numbers = #tpu.dot_dimension_numbers<[1], [0], [0], [1], [0, 0, 1, 1], [], []>} : vector<12x32xf32>, vector<32x96xf32>, vector<12x96xf32> -> vector<12x96xf32>
    %c0_98 = arith.constant 0 : index
    %c0_99 = arith.constant 0 : index
    %c0_100 = arith.constant 0 : index
    %126 = vector.load %arg13[%c0_98, %c0_99, %c0_100] : memref<2x1x96xf32, #tpu.memory_space<vmem>>, vector<1x1x96xf32>
    %127 = vector.shape_cast %126 : vector<1x1x96xf32> to vector<1x96xf32>
    %128 = vector.broadcast %127 : vector<1x96xf32> to vector<12x96xf32>
    %129 = arith.addf %125, %128 : vector<12x96xf32>
    %130 = vector.extract_strided_slice %129 {offsets = [0, 0], sizes = [12, 8], strides = [1, 1]} : vector<12x96xf32> to vector<12x8xf32>
    %131 = vector.extract_strided_slice %129 {offsets = [0, 32], sizes = [12, 8], strides = [1, 1]} : vector<12x96xf32> to vector<12x8xf32>
    %132 = vector.extract_strided_slice %129 {offsets = [0, 64], sizes = [12, 8], strides = [1, 1]} : vector<12x96xf32> to vector<12x8xf32>
    %cst_101 = arith.constant dense<0.000000e+00> : vector<12x12xf32>
    %133 = tpu.matmul %130, %131, %cst_101 {dimension_numbers = #tpu.dot_dimension_numbers<[1], [1], [0], [0], [0, 0, 1, 0], [], []>} : vector<12x8xf32>, vector<12x8xf32>, vector<12x12xf32> -> vector<12x12xf32>
    %cst_102 = arith.constant 0.353553385 : f32
    %134 = vector.broadcast %cst_102 : f32 to vector<12x12xf32>
    %135 = arith.mulf %133, %134 : vector<12x12xf32>
    %136 = arith.addf %135, %122 : vector<12x12xf32>
    %cst_103 = arith.constant dense<0xFF800000> : vector<12xf32>
    %137 = vector.multi_reduction <maximumf>, %136, %cst_103 [1] : vector<12x12xf32> to vector<12xf32>
    %138 = vector.shape_cast %137 : vector<12xf32> to vector<12x1xf32>
    %139 = vector.broadcast %138 : vector<12x1xf32> to vector<12x12xf32>
    %140 = arith.subf %136, %139 : vector<12x12xf32>
    %141 = math.exp %140 : vector<12x12xf32>
    %cst_104 = arith.constant dense<0.000000e+00> : vector<12xf32>
    %142 = vector.multi_reduction <add>, %141, %cst_104 [1] : vector<12x12xf32> to vector<12xf32>
    %143 = vector.shape_cast %142 : vector<12xf32> to vector<12x1xf32>
    %144 = vector.broadcast %143 : vector<12x1xf32> to vector<12x12xf32>
    %145 = arith.divf %141, %144 : vector<12x12xf32>
    %cst_105 = arith.constant dense<0.000000e+00> : vector<12x8xf32>
    %146 = tpu.matmul %145, %132, %cst_105 {dimension_numbers = #tpu.dot_dimension_numbers<[1], [0], [0], [1], [0, 0, 1, 1], [], []>} : vector<12x12xf32>, vector<12x8xf32>, vector<12x8xf32> -> vector<12x8xf32>
    %147 = vector.extract_strided_slice %129 {offsets = [0, 8], sizes = [12, 8], strides = [1, 1]} : vector<12x96xf32> to vector<12x8xf32>
    %148 = vector.extract_strided_slice %129 {offsets = [0, 40], sizes = [12, 8], strides = [1, 1]} : vector<12x96xf32> to vector<12x8xf32>
    %149 = vector.extract_strided_slice %129 {offsets = [0, 72], sizes = [12, 8], strides = [1, 1]} : vector<12x96xf32> to vector<12x8xf32>
    %cst_106 = arith.constant dense<0.000000e+00> : vector<12x12xf32>
    %150 = tpu.matmul %147, %148, %cst_106 {dimension_numbers = #tpu.dot_dimension_numbers<[1], [1], [0], [0], [0, 0, 1, 0], [], []>} : vector<12x8xf32>, vector<12x8xf32>, vector<12x12xf32> -> vector<12x12xf32>
    %cst_107 = arith.constant 0.353553385 : f32
    %151 = vector.broadcast %cst_107 : f32 to vector<12x12xf32>
    %152 = arith.mulf %150, %151 : vector<12x12xf32>
    %153 = arith.addf %152, %122 : vector<12x12xf32>
    %cst_108 = arith.constant dense<0xFF800000> : vector<12xf32>
    %154 = vector.multi_reduction <maximumf>, %153, %cst_108 [1] : vector<12x12xf32> to vector<12xf32>
    %155 = vector.shape_cast %154 : vector<12xf32> to vector<12x1xf32>
    %156 = vector.broadcast %155 : vector<12x1xf32> to vector<12x12xf32>
    %157 = arith.subf %153, %156 : vector<12x12xf32>
    %158 = math.exp %157 : vector<12x12xf32>
    %cst_109 = arith.constant dense<0.000000e+00> : vector<12xf32>
    %159 = vector.multi_reduction <add>, %158, %cst_109 [1] : vector<12x12xf32> to vector<12xf32>
    %160 = vector.shape_cast %159 : vector<12xf32> to vector<12x1xf32>
    %161 = vector.broadcast %160 : vector<12x1xf32> to vector<12x12xf32>
    %162 = arith.divf %158, %161 : vector<12x12xf32>
    %cst_110 = arith.constant dense<0.000000e+00> : vector<12x8xf32>
    %163 = tpu.matmul %162, %149, %cst_110 {dimension_numbers = #tpu.dot_dimension_numbers<[1], [0], [0], [1], [0, 0, 1, 1], [], []>} : vector<12x12xf32>, vector<12x8xf32>, vector<12x8xf32> -> vector<12x8xf32>
    %164 = vector.extract_strided_slice %129 {offsets = [0, 16], sizes = [12, 8], strides = [1, 1]} : vector<12x96xf32> to vector<12x8xf32>
    %165 = vector.extract_strided_slice %129 {offsets = [0, 48], sizes = [12, 8], strides = [1, 1]} : vector<12x96xf32> to vector<12x8xf32>
    %166 = vector.extract_strided_slice %129 {offsets = [0, 80], sizes = [12, 8], strides = [1, 1]} : vector<12x96xf32> to vector<12x8xf32>
    %cst_111 = arith.constant dense<0.000000e+00> : vector<12x12xf32>
    %167 = tpu.matmul %164, %165, %cst_111 {dimension_numbers = #tpu.dot_dimension_numbers<[1], [1], [0], [0], [0, 0, 1, 0], [], []>} : vector<12x8xf32>, vector<12x8xf32>, vector<12x12xf32> -> vector<12x12xf32>
    %cst_112 = arith.constant 0.353553385 : f32
    %168 = vector.broadcast %cst_112 : f32 to vector<12x12xf32>
    %169 = arith.mulf %167, %168 : vector<12x12xf32>
    %170 = arith.addf %169, %122 : vector<12x12xf32>
    %cst_113 = arith.constant dense<0xFF800000> : vector<12xf32>
    %171 = vector.multi_reduction <maximumf>, %170, %cst_113 [1] : vector<12x12xf32> to vector<12xf32>
    %172 = vector.shape_cast %171 : vector<12xf32> to vector<12x1xf32>
    %173 = vector.broadcast %172 : vector<12x1xf32> to vector<12x12xf32>
    %174 = arith.subf %170, %173 : vector<12x12xf32>
    %175 = math.exp %174 : vector<12x12xf32>
    %cst_114 = arith.constant dense<0.000000e+00> : vector<12xf32>
    %176 = vector.multi_reduction <add>, %175, %cst_114 [1] : vector<12x12xf32> to vector<12xf32>
    %177 = vector.shape_cast %176 : vector<12xf32> to vector<12x1xf32>
    %178 = vector.broadcast %177 : vector<12x1xf32> to vector<12x12xf32>
    %179 = arith.divf %175, %178 : vector<12x12xf32>
    %cst_115 = arith.constant dense<0.000000e+00> : vector<12x8xf32>
    %180 = tpu.matmul %179, %166, %cst_115 {dimension_numbers = #tpu.dot_dimension_numbers<[1], [0], [0], [1], [0, 0, 1, 1], [], []>} : vector<12x12xf32>, vector<12x8xf32>, vector<12x8xf32> -> vector<12x8xf32>
    %181 = vector.extract_strided_slice %129 {offsets = [0, 24], sizes = [12, 8], strides = [1, 1]} : vector<12x96xf32> to vector<12x8xf32>
    %182 = vector.extract_strided_slice %129 {offsets = [0, 56], sizes = [12, 8], strides = [1, 1]} : vector<12x96xf32> to vector<12x8xf32>
    %183 = vector.extract_strided_slice %129 {offsets = [0, 88], sizes = [12, 8], strides = [1, 1]} : vector<12x96xf32> to vector<12x8xf32>
    %cst_116 = arith.constant dense<0.000000e+00> : vector<12x12xf32>
    %184 = tpu.matmul %181, %182, %cst_116 {dimension_numbers = #tpu.dot_dimension_numbers<[1], [1], [0], [0], [0, 0, 1, 0], [], []>} : vector<12x8xf32>, vector<12x8xf32>, vector<12x12xf32> -> vector<12x12xf32>
    %cst_117 = arith.constant 0.353553385 : f32
    %185 = vector.broadcast %cst_117 : f32 to vector<12x12xf32>
    %186 = arith.mulf %184, %185 : vector<12x12xf32>
    %187 = arith.addf %186, %122 : vector<12x12xf32>
    %cst_118 = arith.constant dense<0xFF800000> : vector<12xf32>
    %188 = vector.multi_reduction <maximumf>, %187, %cst_118 [1] : vector<12x12xf32> to vector<12xf32>
    %189 = vector.shape_cast %188 : vector<12xf32> to vector<12x1xf32>
    %190 = vector.broadcast %189 : vector<12x1xf32> to vector<12x12xf32>
    %191 = arith.subf %187, %190 : vector<12x12xf32>
    %192 = math.exp %191 : vector<12x12xf32>
    %cst_119 = arith.constant dense<0.000000e+00> : vector<12xf32>
    %193 = vector.multi_reduction <add>, %192, %cst_119 [1] : vector<12x12xf32> to vector<12xf32>
    %194 = vector.shape_cast %193 : vector<12xf32> to vector<12x1xf32>
    %195 = vector.broadcast %194 : vector<12x1xf32> to vector<12x12xf32>
    %196 = arith.divf %192, %195 : vector<12x12xf32>
    %cst_120 = arith.constant dense<0.000000e+00> : vector<12x8xf32>
    %197 = tpu.matmul %196, %183, %cst_120 {dimension_numbers = #tpu.dot_dimension_numbers<[1], [0], [0], [1], [0, 0, 1, 1], [], []>} : vector<12x12xf32>, vector<12x8xf32>, vector<12x8xf32> -> vector<12x8xf32>
    %198 = tpu.concatenate %146, %163, %180, %197 in 1 : vector<12x8xf32>, vector<12x8xf32>, vector<12x8xf32>, vector<12x8xf32> -> vector<12x32xf32>
    %c0_121 = arith.constant 0 : index
    %c0_122 = arith.constant 0 : index
    %c0_123 = arith.constant 0 : index
    %199 = vector.load %arg14[%c0_121, %c0_122, %c0_123] : memref<2x32x32xf32, #tpu.memory_space<vmem>>, vector<1x32x32xf32>
    %200 = vector.shape_cast %199 : vector<1x32x32xf32> to vector<32x32xf32>
    %cst_124 = arith.constant dense<0.000000e+00> : vector<12x32xf32>
    %201 = tpu.matmul %198, %200, %cst_124 {dimension_numbers = #tpu.dot_dimension_numbers<[1], [0], [0], [1], [0, 0, 1, 1], [], []>} : vector<12x32xf32>, vector<32x32xf32>, vector<12x32xf32> -> vector<12x32xf32>
    %c0_125 = arith.constant 0 : index
    %c0_126 = arith.constant 0 : index
    %c0_127 = arith.constant 0 : index
    %202 = vector.load %arg15[%c0_125, %c0_126, %c0_127] : memref<2x1x32xf32, #tpu.memory_space<vmem>>, vector<1x1x32xf32>
    %203 = vector.shape_cast %202 : vector<1x1x32xf32> to vector<1x32xf32>
    %204 = vector.broadcast %203 : vector<1x32xf32> to vector<12x32xf32>
    %205 = arith.addf %201, %204 : vector<12x32xf32>
    %206 = arith.addf %121, %205 : vector<12x32xf32>
    %cst_128 = arith.constant dense<0.000000e+00> : vector<12xf32>
    %207 = vector.multi_reduction <add>, %206, %cst_128 [1] : vector<12x32xf32> to vector<12xf32>
    %208 = vector.shape_cast %207 : vector<12xf32> to vector<12x1xf32>
    %cst_129 = arith.constant 3.200000e+01 : f32
    %209 = vector.broadcast %cst_129 : f32 to vector<12x1xf32>
    %210 = arith.divf %208, %209 : vector<12x1xf32>
    %211 = vector.broadcast %210 : vector<12x1xf32> to vector<12x32xf32>
    %212 = arith.subf %206, %211 : vector<12x32xf32>
    %213 = arith.mulf %212, %212 : vector<12x32xf32>
    %cst_130 = arith.constant dense<0.000000e+00> : vector<12xf32>
    %214 = vector.multi_reduction <add>, %213, %cst_130 [1] : vector<12x32xf32> to vector<12xf32>
    %215 = vector.shape_cast %214 : vector<12xf32> to vector<12x1xf32>
    %cst_131 = arith.constant 3.200000e+01 : f32
    %216 = vector.broadcast %cst_131 : f32 to vector<12x1xf32>
    %217 = arith.divf %215, %216 : vector<12x1xf32>
    %218 = vector.broadcast %210 : vector<12x1xf32> to vector<12x32xf32>
    %219 = arith.subf %206, %218 : vector<12x32xf32>
    %cst_132 = arith.constant 9.99999974E-6 : f32
    %220 = vector.broadcast %cst_132 : f32 to vector<12x1xf32>
    %221 = arith.addf %217, %220 : vector<12x1xf32>
    %222 = math.rsqrt %221 : vector<12x1xf32>
    %223 = vector.broadcast %222 : vector<12x1xf32> to vector<12x32xf32>
    %224 = arith.mulf %219, %223 : vector<12x32xf32>
    %c0_133 = arith.constant 0 : index
    %c0_134 = arith.constant 0 : index
    %c0_135 = arith.constant 0 : index
    %225 = vector.load %arg20[%c0_133, %c0_134, %c0_135] : memref<2x1x32xf32, #tpu.memory_space<vmem>>, vector<1x1x32xf32>
    %226 = vector.shape_cast %225 : vector<1x1x32xf32> to vector<1x32xf32>
    %227 = vector.broadcast %226 : vector<1x32xf32> to vector<12x32xf32>
    %228 = arith.mulf %224, %227 : vector<12x32xf32>
    %c0_136 = arith.constant 0 : index
    %c0_137 = arith.constant 0 : index
    %c0_138 = arith.constant 0 : index
    %229 = vector.load %arg21[%c0_136, %c0_137, %c0_138] : memref<2x1x32xf32, #tpu.memory_space<vmem>>, vector<1x1x32xf32>
    %230 = vector.shape_cast %229 : vector<1x1x32xf32> to vector<1x32xf32>
    %231 = vector.broadcast %230 : vector<1x32xf32> to vector<12x32xf32>
    %232 = arith.addf %228, %231 : vector<12x32xf32>
    %c0_139 = arith.constant 0 : index
    %c0_140 = arith.constant 0 : index
    %c0_141 = arith.constant 0 : index
    %233 = vector.load %arg16[%c0_139, %c0_140, %c0_141] : memref<2x32x64xf32, #tpu.memory_space<vmem>>, vector<1x32x64xf32>
    %234 = vector.shape_cast %233 : vector<1x32x64xf32> to vector<32x64xf32>
    %cst_142 = arith.constant dense<0.000000e+00> : vector<12x64xf32>
    %235 = tpu.matmul %232, %234, %cst_142 {dimension_numbers = #tpu.dot_dimension_numbers<[1], [0], [0], [1], [0, 0, 1, 1], [], []>} : vector<12x32xf32>, vector<32x64xf32>, vector<12x64xf32> -> vector<12x64xf32>
    %c0_143 = arith.constant 0 : index
    %c0_144 = arith.constant 0 : index
    %c0_145 = arith.constant 0 : index
    %236 = vector.load %arg17[%c0_143, %c0_144, %c0_145] : memref<2x1x64xf32, #tpu.memory_space<vmem>>, vector<1x1x64xf32>
    %237 = vector.shape_cast %236 : vector<1x1x64xf32> to vector<1x64xf32>
    %238 = vector.broadcast %237 : vector<1x64xf32> to vector<12x64xf32>
    %239 = arith.addf %235, %238 : vector<12x64xf32>
    %cst_146 = arith.constant 0.000000e+00 : f32
    %240 = vector.broadcast %cst_146 : f32 to vector<12x64xf32>
    %241 = arith.maximumf %239, %240 : vector<12x64xf32>
    %c0_147 = arith.constant 0 : index
    %c0_148 = arith.constant 0 : index
    %c0_149 = arith.constant 0 : index
    %242 = vector.load %arg18[%c0_147, %c0_148, %c0_149] : memref<2x64x32xf32, #tpu.memory_space<vmem>>, vector<1x64x32xf32>
    %243 = vector.shape_cast %242 : vector<1x64x32xf32> to vector<64x32xf32>
    %cst_150 = arith.constant dense<0.000000e+00> : vector<12x32xf32>
    %244 = tpu.matmul %241, %243, %cst_150 {dimension_numbers = #tpu.dot_dimension_numbers<[1], [0], [0], [1], [0, 0, 1, 1], [], []>} : vector<12x64xf32>, vector<64x32xf32>, vector<12x32xf32> -> vector<12x32xf32>
    %c0_151 = arith.constant 0 : index
    %c0_152 = arith.constant 0 : index
    %c0_153 = arith.constant 0 : index
    %245 = vector.load %arg19[%c0_151, %c0_152, %c0_153] : memref<2x1x32xf32, #tpu.memory_space<vmem>>, vector<1x1x32xf32>
    %246 = vector.shape_cast %245 : vector<1x1x32xf32> to vector<1x32xf32>
    %247 = vector.broadcast %246 : vector<1x32xf32> to vector<12x32xf32>
    %248 = arith.addf %244, %247 : vector<12x32xf32>
    %249 = arith.addf %232, %248 : vector<12x32xf32>
    %cst_154 = arith.constant dense<0.000000e+00> : vector<12xf32>
    %250 = vector.multi_reduction <add>, %249, %cst_154 [1] : vector<12x32xf32> to vector<12xf32>
    %251 = vector.shape_cast %250 : vector<12xf32> to vector<12x1xf32>
    %cst_155 = arith.constant 3.200000e+01 : f32
    %252 = vector.broadcast %cst_155 : f32 to vector<12x1xf32>
    %253 = arith.divf %251, %252 : vector<12x1xf32>
    %254 = vector.broadcast %253 : vector<12x1xf32> to vector<12x32xf32>
    %255 = arith.subf %249, %254 : vector<12x32xf32>
    %256 = arith.mulf %255, %255 : vector<12x32xf32>
    %cst_156 = arith.constant dense<0.000000e+00> : vector<12xf32>
    %257 = vector.multi_reduction <add>, %256, %cst_156 [1] : vector<12x32xf32> to vector<12xf32>
    %258 = vector.shape_cast %257 : vector<12xf32> to vector<12x1xf32>
    %cst_157 = arith.constant 3.200000e+01 : f32
    %259 = vector.broadcast %cst_157 : f32 to vector<12x1xf32>
    %260 = arith.divf %258, %259 : vector<12x1xf32>
    %261 = vector.broadcast %253 : vector<12x1xf32> to vector<12x32xf32>
    %262 = arith.subf %249, %261 : vector<12x32xf32>
    %cst_158 = arith.constant 9.99999974E-6 : f32
    %263 = vector.broadcast %cst_158 : f32 to vector<12x1xf32>
    %264 = arith.addf %260, %263 : vector<12x1xf32>
    %265 = math.rsqrt %264 : vector<12x1xf32>
    %266 = vector.broadcast %265 : vector<12x1xf32> to vector<12x32xf32>
    %267 = arith.mulf %262, %266 : vector<12x32xf32>
    %c0_159 = arith.constant 0 : index
    %c0_160 = arith.constant 0 : index
    %c0_161 = arith.constant 0 : index
    %268 = vector.load %arg22[%c0_159, %c0_160, %c0_161] : memref<2x1x32xf32, #tpu.memory_space<vmem>>, vector<1x1x32xf32>
    %269 = vector.shape_cast %268 : vector<1x1x32xf32> to vector<1x32xf32>
    %270 = vector.broadcast %269 : vector<1x32xf32> to vector<12x32xf32>
    %271 = arith.mulf %267, %270 : vector<12x32xf32>
    %c0_162 = arith.constant 0 : index
    %c0_163 = arith.constant 0 : index
    %c0_164 = arith.constant 0 : index
    %272 = vector.load %arg23[%c0_162, %c0_163, %c0_164] : memref<2x1x32xf32, #tpu.memory_space<vmem>>, vector<1x1x32xf32>
    %273 = vector.shape_cast %272 : vector<1x1x32xf32> to vector<1x32xf32>
    %274 = vector.broadcast %273 : vector<1x32xf32> to vector<12x32xf32>
    %275 = arith.addf %271, %274 : vector<12x32xf32>
    %c1_165 = arith.constant 1 : index
    %c0_166 = arith.constant 0 : index
    %c0_167 = arith.constant 0 : index
    %276 = vector.load %arg12[%c1_165, %c0_166, %c0_167] : memref<2x32x96xf32, #tpu.memory_space<vmem>>, vector<1x32x96xf32>
    %277 = vector.shape_cast %276 : vector<1x32x96xf32> to vector<32x96xf32>
    %cst_168 = arith.constant dense<0.000000e+00> : vector<12x96xf32>
    %278 = tpu.matmul %275, %277, %cst_168 {dimension_numbers = #tpu.dot_dimension_numbers<[1], [0], [0], [1], [0, 0, 1, 1], [], []>} : vector<12x32xf32>, vector<32x96xf32>, vector<12x96xf32> -> vector<12x96xf32>
    %c1_169 = arith.constant 1 : index
    %c0_170 = arith.constant 0 : index
    %c0_171 = arith.constant 0 : index
    %279 = vector.load %arg13[%c1_169, %c0_170, %c0_171] : memref<2x1x96xf32, #tpu.memory_space<vmem>>, vector<1x1x96xf32>
    %280 = vector.shape_cast %279 : vector<1x1x96xf32> to vector<1x96xf32>
    %281 = vector.broadcast %280 : vector<1x96xf32> to vector<12x96xf32>
    %282 = arith.addf %278, %281 : vector<12x96xf32>
    %283 = vector.extract_strided_slice %282 {offsets = [0, 0], sizes = [12, 8], strides = [1, 1]} : vector<12x96xf32> to vector<12x8xf32>
    %284 = vector.extract_strided_slice %282 {offsets = [0, 32], sizes = [12, 8], strides = [1, 1]} : vector<12x96xf32> to vector<12x8xf32>
    %285 = vector.extract_strided_slice %282 {offsets = [0, 64], sizes = [12, 8], strides = [1, 1]} : vector<12x96xf32> to vector<12x8xf32>
    %cst_172 = arith.constant dense<0.000000e+00> : vector<12x12xf32>
    %286 = tpu.matmul %283, %284, %cst_172 {dimension_numbers = #tpu.dot_dimension_numbers<[1], [1], [0], [0], [0, 0, 1, 0], [], []>} : vector<12x8xf32>, vector<12x8xf32>, vector<12x12xf32> -> vector<12x12xf32>
    %cst_173 = arith.constant 0.353553385 : f32
    %287 = vector.broadcast %cst_173 : f32 to vector<12x12xf32>
    %288 = arith.mulf %286, %287 : vector<12x12xf32>
    %289 = arith.addf %288, %122 : vector<12x12xf32>
    %cst_174 = arith.constant dense<0xFF800000> : vector<12xf32>
    %290 = vector.multi_reduction <maximumf>, %289, %cst_174 [1] : vector<12x12xf32> to vector<12xf32>
    %291 = vector.shape_cast %290 : vector<12xf32> to vector<12x1xf32>
    %292 = vector.broadcast %291 : vector<12x1xf32> to vector<12x12xf32>
    %293 = arith.subf %289, %292 : vector<12x12xf32>
    %294 = math.exp %293 : vector<12x12xf32>
    %cst_175 = arith.constant dense<0.000000e+00> : vector<12xf32>
    %295 = vector.multi_reduction <add>, %294, %cst_175 [1] : vector<12x12xf32> to vector<12xf32>
    %296 = vector.shape_cast %295 : vector<12xf32> to vector<12x1xf32>
    %297 = vector.broadcast %296 : vector<12x1xf32> to vector<12x12xf32>
    %298 = arith.divf %294, %297 : vector<12x12xf32>
    %cst_176 = arith.constant dense<0.000000e+00> : vector<12x8xf32>
    %299 = tpu.matmul %298, %285, %cst_176 {dimension_numbers = #tpu.dot_dimension_numbers<[1], [0], [0], [1], [0, 0, 1, 1], [], []>} : vector<12x12xf32>, vector<12x8xf32>, vector<12x8xf32> -> vector<12x8xf32>
    %300 = vector.extract_strided_slice %282 {offsets = [0, 8], sizes = [12, 8], strides = [1, 1]} : vector<12x96xf32> to vector<12x8xf32>
    %301 = vector.extract_strided_slice %282 {offsets = [0, 40], sizes = [12, 8], strides = [1, 1]} : vector<12x96xf32> to vector<12x8xf32>
    %302 = vector.extract_strided_slice %282 {offsets = [0, 72], sizes = [12, 8], strides = [1, 1]} : vector<12x96xf32> to vector<12x8xf32>
    %cst_177 = arith.constant dense<0.000000e+00> : vector<12x12xf32>
    %303 = tpu.matmul %300, %301, %cst_177 {dimension_numbers = #tpu.dot_dimension_numbers<[1], [1], [0], [0], [0, 0, 1, 0], [], []>} : vector<12x8xf32>, vector<12x8xf32>, vector<12x12xf32> -> vector<12x12xf32>
    %cst_178 = arith.constant 0.353553385 : f32
    %304 = vector.broadcast %cst_178 : f32 to vector<12x12xf32>
    %305 = arith.mulf %303, %304 : vector<12x12xf32>
    %306 = arith.addf %305, %122 : vector<12x12xf32>
    %cst_179 = arith.constant dense<0xFF800000> : vector<12xf32>
    %307 = vector.multi_reduction <maximumf>, %306, %cst_179 [1] : vector<12x12xf32> to vector<12xf32>
    %308 = vector.shape_cast %307 : vector<12xf32> to vector<12x1xf32>
    %309 = vector.broadcast %308 : vector<12x1xf32> to vector<12x12xf32>
    %310 = arith.subf %306, %309 : vector<12x12xf32>
    %311 = math.exp %310 : vector<12x12xf32>
    %cst_180 = arith.constant dense<0.000000e+00> : vector<12xf32>
    %312 = vector.multi_reduction <add>, %311, %cst_180 [1] : vector<12x12xf32> to vector<12xf32>
    %313 = vector.shape_cast %312 : vector<12xf32> to vector<12x1xf32>
    %314 = vector.broadcast %313 : vector<12x1xf32> to vector<12x12xf32>
    %315 = arith.divf %311, %314 : vector<12x12xf32>
    %cst_181 = arith.constant dense<0.000000e+00> : vector<12x8xf32>
    %316 = tpu.matmul %315, %302, %cst_181 {dimension_numbers = #tpu.dot_dimension_numbers<[1], [0], [0], [1], [0, 0, 1, 1], [], []>} : vector<12x12xf32>, vector<12x8xf32>, vector<12x8xf32> -> vector<12x8xf32>
    %317 = vector.extract_strided_slice %282 {offsets = [0, 16], sizes = [12, 8], strides = [1, 1]} : vector<12x96xf32> to vector<12x8xf32>
    %318 = vector.extract_strided_slice %282 {offsets = [0, 48], sizes = [12, 8], strides = [1, 1]} : vector<12x96xf32> to vector<12x8xf32>
    %319 = vector.extract_strided_slice %282 {offsets = [0, 80], sizes = [12, 8], strides = [1, 1]} : vector<12x96xf32> to vector<12x8xf32>
    %cst_182 = arith.constant dense<0.000000e+00> : vector<12x12xf32>
    %320 = tpu.matmul %317, %318, %cst_182 {dimension_numbers = #tpu.dot_dimension_numbers<[1], [1], [0], [0], [0, 0, 1, 0], [], []>} : vector<12x8xf32>, vector<12x8xf32>, vector<12x12xf32> -> vector<12x12xf32>
    %cst_183 = arith.constant 0.353553385 : f32
    %321 = vector.broadcast %cst_183 : f32 to vector<12x12xf32>
    %322 = arith.mulf %320, %321 : vector<12x12xf32>
    %323 = arith.addf %322, %122 : vector<12x12xf32>
    %cst_184 = arith.constant dense<0xFF800000> : vector<12xf32>
    %324 = vector.multi_reduction <maximumf>, %323, %cst_184 [1] : vector<12x12xf32> to vector<12xf32>
    %325 = vector.shape_cast %324 : vector<12xf32> to vector<12x1xf32>
    %326 = vector.broadcast %325 : vector<12x1xf32> to vector<12x12xf32>
    %327 = arith.subf %323, %326 : vector<12x12xf32>
    %328 = math.exp %327 : vector<12x12xf32>
    %cst_185 = arith.constant dense<0.000000e+00> : vector<12xf32>
    %329 = vector.multi_reduction <add>, %328, %cst_185 [1] : vector<12x12xf32> to vector<12xf32>
    %330 = vector.shape_cast %329 : vector<12xf32> to vector<12x1xf32>
    %331 = vector.broadcast %330 : vector<12x1xf32> to vector<12x12xf32>
    %332 = arith.divf %328, %331 : vector<12x12xf32>
    %cst_186 = arith.constant dense<0.000000e+00> : vector<12x8xf32>
    %333 = tpu.matmul %332, %319, %cst_186 {dimension_numbers = #tpu.dot_dimension_numbers<[1], [0], [0], [1], [0, 0, 1, 1], [], []>} : vector<12x12xf32>, vector<12x8xf32>, vector<12x8xf32> -> vector<12x8xf32>
    %334 = vector.extract_strided_slice %282 {offsets = [0, 24], sizes = [12, 8], strides = [1, 1]} : vector<12x96xf32> to vector<12x8xf32>
    %335 = vector.extract_strided_slice %282 {offsets = [0, 56], sizes = [12, 8], strides = [1, 1]} : vector<12x96xf32> to vector<12x8xf32>
    %336 = vector.extract_strided_slice %282 {offsets = [0, 88], sizes = [12, 8], strides = [1, 1]} : vector<12x96xf32> to vector<12x8xf32>
    %cst_187 = arith.constant dense<0.000000e+00> : vector<12x12xf32>
    %337 = tpu.matmul %334, %335, %cst_187 {dimension_numbers = #tpu.dot_dimension_numbers<[1], [1], [0], [0], [0, 0, 1, 0], [], []>} : vector<12x8xf32>, vector<12x8xf32>, vector<12x12xf32> -> vector<12x12xf32>
    %cst_188 = arith.constant 0.353553385 : f32
    %338 = vector.broadcast %cst_188 : f32 to vector<12x12xf32>
    %339 = arith.mulf %337, %338 : vector<12x12xf32>
    %340 = arith.addf %339, %122 : vector<12x12xf32>
    %cst_189 = arith.constant dense<0xFF800000> : vector<12xf32>
    %341 = vector.multi_reduction <maximumf>, %340, %cst_189 [1] : vector<12x12xf32> to vector<12xf32>
    %342 = vector.shape_cast %341 : vector<12xf32> to vector<12x1xf32>
    %343 = vector.broadcast %342 : vector<12x1xf32> to vector<12x12xf32>
    %344 = arith.subf %340, %343 : vector<12x12xf32>
    %345 = math.exp %344 : vector<12x12xf32>
    %cst_190 = arith.constant dense<0.000000e+00> : vector<12xf32>
    %346 = vector.multi_reduction <add>, %345, %cst_190 [1] : vector<12x12xf32> to vector<12xf32>
    %347 = vector.shape_cast %346 : vector<12xf32> to vector<12x1xf32>
    %348 = vector.broadcast %347 : vector<12x1xf32> to vector<12x12xf32>
    %349 = arith.divf %345, %348 : vector<12x12xf32>
    %cst_191 = arith.constant dense<0.000000e+00> : vector<12x8xf32>
    %350 = tpu.matmul %349, %336, %cst_191 {dimension_numbers = #tpu.dot_dimension_numbers<[1], [0], [0], [1], [0, 0, 1, 1], [], []>} : vector<12x12xf32>, vector<12x8xf32>, vector<12x8xf32> -> vector<12x8xf32>
    %351 = tpu.concatenate %299, %316, %333, %350 in 1 : vector<12x8xf32>, vector<12x8xf32>, vector<12x8xf32>, vector<12x8xf32> -> vector<12x32xf32>
    %c1_192 = arith.constant 1 : index
    %c0_193 = arith.constant 0 : index
    %c0_194 = arith.constant 0 : index
    %352 = vector.load %arg14[%c1_192, %c0_193, %c0_194] : memref<2x32x32xf32, #tpu.memory_space<vmem>>, vector<1x32x32xf32>
    %353 = vector.shape_cast %352 : vector<1x32x32xf32> to vector<32x32xf32>
    %cst_195 = arith.constant dense<0.000000e+00> : vector<12x32xf32>
    %354 = tpu.matmul %351, %353, %cst_195 {dimension_numbers = #tpu.dot_dimension_numbers<[1], [0], [0], [1], [0, 0, 1, 1], [], []>} : vector<12x32xf32>, vector<32x32xf32>, vector<12x32xf32> -> vector<12x32xf32>
    %c1_196 = arith.constant 1 : index
    %c0_197 = arith.constant 0 : index
    %c0_198 = arith.constant 0 : index
    %355 = vector.load %arg15[%c1_196, %c0_197, %c0_198] : memref<2x1x32xf32, #tpu.memory_space<vmem>>, vector<1x1x32xf32>
    %356 = vector.shape_cast %355 : vector<1x1x32xf32> to vector<1x32xf32>
    %357 = vector.broadcast %356 : vector<1x32xf32> to vector<12x32xf32>
    %358 = arith.addf %354, %357 : vector<12x32xf32>
    %359 = arith.addf %275, %358 : vector<12x32xf32>
    %cst_199 = arith.constant dense<0.000000e+00> : vector<12xf32>
    %360 = vector.multi_reduction <add>, %359, %cst_199 [1] : vector<12x32xf32> to vector<12xf32>
    %361 = vector.shape_cast %360 : vector<12xf32> to vector<12x1xf32>
    %cst_200 = arith.constant 3.200000e+01 : f32
    %362 = vector.broadcast %cst_200 : f32 to vector<12x1xf32>
    %363 = arith.divf %361, %362 : vector<12x1xf32>
    %364 = vector.broadcast %363 : vector<12x1xf32> to vector<12x32xf32>
    %365 = arith.subf %359, %364 : vector<12x32xf32>
    %366 = arith.mulf %365, %365 : vector<12x32xf32>
    %cst_201 = arith.constant dense<0.000000e+00> : vector<12xf32>
    %367 = vector.multi_reduction <add>, %366, %cst_201 [1] : vector<12x32xf32> to vector<12xf32>
    %368 = vector.shape_cast %367 : vector<12xf32> to vector<12x1xf32>
    %cst_202 = arith.constant 3.200000e+01 : f32
    %369 = vector.broadcast %cst_202 : f32 to vector<12x1xf32>
    %370 = arith.divf %368, %369 : vector<12x1xf32>
    %371 = vector.broadcast %363 : vector<12x1xf32> to vector<12x32xf32>
    %372 = arith.subf %359, %371 : vector<12x32xf32>
    %cst_203 = arith.constant 9.99999974E-6 : f32
    %373 = vector.broadcast %cst_203 : f32 to vector<12x1xf32>
    %374 = arith.addf %370, %373 : vector<12x1xf32>
    %375 = math.rsqrt %374 : vector<12x1xf32>
    %376 = vector.broadcast %375 : vector<12x1xf32> to vector<12x32xf32>
    %377 = arith.mulf %372, %376 : vector<12x32xf32>
    %c1_204 = arith.constant 1 : index
    %c0_205 = arith.constant 0 : index
    %c0_206 = arith.constant 0 : index
    %378 = vector.load %arg20[%c1_204, %c0_205, %c0_206] : memref<2x1x32xf32, #tpu.memory_space<vmem>>, vector<1x1x32xf32>
    %379 = vector.shape_cast %378 : vector<1x1x32xf32> to vector<1x32xf32>
    %380 = vector.broadcast %379 : vector<1x32xf32> to vector<12x32xf32>
    %381 = arith.mulf %377, %380 : vector<12x32xf32>
    %c1_207 = arith.constant 1 : index
    %c0_208 = arith.constant 0 : index
    %c0_209 = arith.constant 0 : index
    %382 = vector.load %arg21[%c1_207, %c0_208, %c0_209] : memref<2x1x32xf32, #tpu.memory_space<vmem>>, vector<1x1x32xf32>
    %383 = vector.shape_cast %382 : vector<1x1x32xf32> to vector<1x32xf32>
    %384 = vector.broadcast %383 : vector<1x32xf32> to vector<12x32xf32>
    %385 = arith.addf %381, %384 : vector<12x32xf32>
    %c1_210 = arith.constant 1 : index
    %c0_211 = arith.constant 0 : index
    %c0_212 = arith.constant 0 : index
    %386 = vector.load %arg16[%c1_210, %c0_211, %c0_212] : memref<2x32x64xf32, #tpu.memory_space<vmem>>, vector<1x32x64xf32>
    %387 = vector.shape_cast %386 : vector<1x32x64xf32> to vector<32x64xf32>
    %cst_213 = arith.constant dense<0.000000e+00> : vector<12x64xf32>
    %388 = tpu.matmul %385, %387, %cst_213 {dimension_numbers = #tpu.dot_dimension_numbers<[1], [0], [0], [1], [0, 0, 1, 1], [], []>} : vector<12x32xf32>, vector<32x64xf32>, vector<12x64xf32> -> vector<12x64xf32>
    %c1_214 = arith.constant 1 : index
    %c0_215 = arith.constant 0 : index
    %c0_216 = arith.constant 0 : index
    %389 = vector.load %arg17[%c1_214, %c0_215, %c0_216] : memref<2x1x64xf32, #tpu.memory_space<vmem>>, vector<1x1x64xf32>
    %390 = vector.shape_cast %389 : vector<1x1x64xf32> to vector<1x64xf32>
    %391 = vector.broadcast %390 : vector<1x64xf32> to vector<12x64xf32>
    %392 = arith.addf %388, %391 : vector<12x64xf32>
    %cst_217 = arith.constant 0.000000e+00 : f32
    %393 = vector.broadcast %cst_217 : f32 to vector<12x64xf32>
    %394 = arith.maximumf %392, %393 : vector<12x64xf32>
    %c1_218 = arith.constant 1 : index
    %c0_219 = arith.constant 0 : index
    %c0_220 = arith.constant 0 : index
    %395 = vector.load %arg18[%c1_218, %c0_219, %c0_220] : memref<2x64x32xf32, #tpu.memory_space<vmem>>, vector<1x64x32xf32>
    %396 = vector.shape_cast %395 : vector<1x64x32xf32> to vector<64x32xf32>
    %cst_221 = arith.constant dense<0.000000e+00> : vector<12x32xf32>
    %397 = tpu.matmul %394, %396, %cst_221 {dimension_numbers = #tpu.dot_dimension_numbers<[1], [0], [0], [1], [0, 0, 1, 1], [], []>} : vector<12x64xf32>, vector<64x32xf32>, vector<12x32xf32> -> vector<12x32xf32>
    %c1_222 = arith.constant 1 : index
    %c0_223 = arith.constant 0 : index
    %c0_224 = arith.constant 0 : index
    %398 = vector.load %arg19[%c1_222, %c0_223, %c0_224] : memref<2x1x32xf32, #tpu.memory_space<vmem>>, vector<1x1x32xf32>
    %399 = vector.shape_cast %398 : vector<1x1x32xf32> to vector<1x32xf32>
    %400 = vector.broadcast %399 : vector<1x32xf32> to vector<12x32xf32>
    %401 = arith.addf %397, %400 : vector<12x32xf32>
    %402 = arith.addf %385, %401 : vector<12x32xf32>
    %cst_225 = arith.constant dense<0.000000e+00> : vector<12xf32>
    %403 = vector.multi_reduction <add>, %402, %cst_225 [1] : vector<12x32xf32> to vector<12xf32>
    %404 = vector.shape_cast %403 : vector<12xf32> to vector<12x1xf32>
    %cst_226 = arith.constant 3.200000e+01 : f32
    %405 = vector.broadcast %cst_226 : f32 to vector<12x1xf32>
    %406 = arith.divf %404, %405 : vector<12x1xf32>
    %407 = vector.broadcast %406 : vector<12x1xf32> to vector<12x32xf32>
    %408 = arith.subf %402, %407 : vector<12x32xf32>
    %409 = arith.mulf %408, %408 : vector<12x32xf32>
    %cst_227 = arith.constant dense<0.000000e+00> : vector<12xf32>
    %410 = vector.multi_reduction <add>, %409, %cst_227 [1] : vector<12x32xf32> to vector<12xf32>
    %411 = vector.shape_cast %410 : vector<12xf32> to vector<12x1xf32>
    %cst_228 = arith.constant 3.200000e+01 : f32
    %412 = vector.broadcast %cst_228 : f32 to vector<12x1xf32>
    %413 = arith.divf %411, %412 : vector<12x1xf32>
    %414 = vector.broadcast %406 : vector<12x1xf32> to vector<12x32xf32>
    %415 = arith.subf %402, %414 : vector<12x32xf32>
    %cst_229 = arith.constant 9.99999974E-6 : f32
    %416 = vector.broadcast %cst_229 : f32 to vector<12x1xf32>
    %417 = arith.addf %413, %416 : vector<12x1xf32>
    %418 = math.rsqrt %417 : vector<12x1xf32>
    %419 = vector.broadcast %418 : vector<12x1xf32> to vector<12x32xf32>
    %420 = arith.mulf %415, %419 : vector<12x32xf32>
    %c1_230 = arith.constant 1 : index
    %c0_231 = arith.constant 0 : index
    %c0_232 = arith.constant 0 : index
    %421 = vector.load %arg22[%c1_230, %c0_231, %c0_232] : memref<2x1x32xf32, #tpu.memory_space<vmem>>, vector<1x1x32xf32>
    %422 = vector.shape_cast %421 : vector<1x1x32xf32> to vector<1x32xf32>
    %423 = vector.broadcast %422 : vector<1x32xf32> to vector<12x32xf32>
    %424 = arith.mulf %420, %423 : vector<12x32xf32>
    %c1_233 = arith.constant 1 : index
    %c0_234 = arith.constant 0 : index
    %c0_235 = arith.constant 0 : index
    %425 = vector.load %arg23[%c1_233, %c0_234, %c0_235] : memref<2x1x32xf32, #tpu.memory_space<vmem>>, vector<1x1x32xf32>
    %426 = vector.shape_cast %425 : vector<1x1x32xf32> to vector<1x32xf32>
    %427 = vector.broadcast %426 : vector<1x32xf32> to vector<12x32xf32>
    %428 = arith.addf %424, %427 : vector<12x32xf32>
    %c0_236 = arith.constant 0 : index
    %c0_237 = arith.constant 0 : index
    %429 = vector.load %arg24[%c0_236, %c0_237] : memref<12x32xf32, #tpu.memory_space<vmem>>, vector<12x32xf32>
    tpu.vector_store %arg24[%c0_236, %c0_237], %428 {strides = array<i32>} : memref<12x32xf32, #tpu.memory_space<vmem>>, vector<12x32xf32>,
    return
  }
}

</mosaic_0001>

<llo_original>
// kernel: eq.8
$region0: #{eq.8}
  %s0 = inlined_call_operand.vmem [shape: s32[2,6], index: 0, kind: input, shape index: {}]
  %s1 = inlined_call_operand.vmem [shape: s32[12], index: 1, kind: output, shape index: {}]
  $region1: #{eq.8} parent=0
    #allocation0 [shape = 'u8[4096]{0}', space=vmem, size = 0x1000, scoped, tag = 'scoped mem for output reshape']
    #allocation1 [shape = 'u8[4096]{0}', space=vmem, size = 0x1000, scoped, tag = 'scoped mem for input reshape']
    %s3 = ssub.s32 4, 1
    %v4 = vld [vmem:[%s0] sm:%s3]
    %5 = vst [vmem:[#allocation1] sm:%s3] %v4
    %v6 = vld [vmem:[#allocation1] sm:$0x1]
    %vm7 = vcmask 48128
    %8 = vst.msk [vmem:[#allocation0] sm:$0x1] %vm7, %v6
    %s9 = scalar_lea.vmem [#allocation1], 1
    %v10 = vld [vmem:[%s9] sm:$0x1]
    %11 = vrot.lane.b32.xlu0 %v10, 6
    %v12 = vpop.permute.xlu0 %11
    %vm13 = vcmask 97328
    %14 = vst.msk [vmem:[#allocation0] sm:$0x1] %vm13, %v12
    %s16 = ssub.s32 2, 1
    %v17 = vld [vmem:[#allocation0] sm:%s16]
    %s19 = ssub.s32 2, 1
    %20 = vst [vmem:[%s1] sm:%s19] %v17

// kernel: transformer_encoder_forward.1
$region0: #{transformer_encoder_forward.1}
  #allocation0 [shape = 'u32[]', space=smem, size = 0x4, offset = 0x4, fixed_abs, tag = 'smem constant byte address 0x4 - core index']
  #allocation1 [shape = 'u32[72,128]{1,0:T(1,128)}', space=vmem, size = 0x9000, scoped, tag = 'internal scratch']
  %s0 = inlined_call_operand.vmem [shape: f32[840,9], index: 0, kind: input, shape index: {}]
  %s1 = inlined_call_operand.vmem [shape: f32[9,32], index: 1, kind: input, shape index: {}]
  %s2 = inlined_call_operand.vmem [shape: f32[1,32], index: 2, kind: input, shape index: {}]
  %s3 = inlined_call_operand.vmem [shape: f32[9,32,32], index: 3, kind: input, shape index: {}]
  %s4 = inlined_call_operand.vmem [shape: f32[1,32], index: 4, kind: input, shape index: {}]
  %s5 = inlined_call_operand.vmem [shape: f32[168,810], index: 5, kind: input, shape index: {}]
  %s6 = inlined_call_operand.vmem [shape: f32[24,154], index: 6, kind: input, shape index: {}]
  %s7 = inlined_call_operand.vmem [shape: f32[32,32], index: 7, kind: input, shape index: {}]
  %s8 = inlined_call_operand.vmem [shape: f32[32,32], index: 8, kind: input, shape index: {}]
  %s9 = inlined_call_operand.vmem [shape: f32[1,32], index: 9, kind: input, shape index: {}]
  %s10 = inlined_call_operand.vmem [shape: f32[12,32], index: 10, kind: input, shape index: {}]
  %s11 = inlined_call_operand.vmem [shape: f32[12,12], index: 11, kind: input, shape index: {}]
  %s12 = inlined_call_operand.vmem [shape: f32[2,32,96], index: 12, kind: input, shape index: {}]
  %s13 = inlined_call_operand.vmem [shape: f32[2,1,96], index: 13, kind: input, shape index: {}]
  %s14 = inlined_call_operand.vmem [shape: f32[2,32,32], index: 14, kind: input, shape index: {}]
  %s15 = inlined_call_operand.vmem [shape: f32[2,1,32], index: 15, kind: input, shape index: {}]
  %s16 = inlined_call_operand.vmem [shape: f32[2,32,64], index: 16, kind: input, shape index: {}]
  %s17 = inlined_call_operand.vmem [shape: f32[2,1,64], index: 17, kind: input, shape index: {}]
  %s18 = inlined_call_operand.vmem [shape: f32[2,64,32], index: 18, kind: input, shape index: {}]
  %s19 = inlined_call_operand.vmem [shape: f32[2,1,32], index: 19, kind: input, shape index: {}]
  %s20 = inlined_call_operand.vmem [shape: f32[2,1,32], index: 20, kind: input, shape index: {}]
  %s21 = inlined_call_operand.vmem [shape: f32[2,1,32], index: 21, kind: input, shape index: {}]
  %s22 = inlined_call_operand.vmem [shape: f32[2,1,32], index: 22, kind: input, shape index: {}]
  %s23 = inlined_call_operand.vmem [shape: f32[2,1,32], index: 23, kind: input, shape index: {}]
  %s24 = inlined_call_operand.vmem [shape: f32[12,32], index: 24, kind: output, shape index: {}]
  %s25 = sld [smem:[#allocation0]]
  $region106: #{transformer_encoder_forward.1} parent=0
    _
  %s27 = ssub.s32 1, %s25
  %s28 = scalar_select 0, %s27, %s25
  // Predicated region
  $region2: #{transformer_encoder_forward.1} parent=0 // pred_check
    _
  $region3: #{transformer_encoder_forward.1} parent=0 // pred_check_branch
    %30 = sbr.rel (0) target = $region5
  $region4: #{transformer_encoder_forward.1} parent=0 // pred_region
    _
  $region5: #{transformer_encoder_forward.1} parent=0 // pred_fallthru
    _
  // Predicated region
  $region6: #{transformer_encoder_forward.1} parent=0 // pred_check
    _
  $region7: #{transformer_encoder_forward.1} parent=0 // pred_check_branch
    %32 = sbr.rel (0) target = $region9
  $region8: #{transformer_encoder_forward.1} parent=0 // pred_region
    _
  $region9: #{transformer_encoder_forward.1} parent=0 // pred_fallthru
    _
  // Predicated region
  $region10: #{transformer_encoder_forward.1} parent=0 // pred_check
    _
  $region11: #{transformer_encoder_forward.1} parent=0 // pred_check_branch
    %34 = sbr.rel (0) target = $region13
  $region12: #{transformer_encoder_forward.1} parent=0 // pred_region
    _
  $region13: #{transformer_encoder_forward.1} parent=0 // pred_fallthru
    _
  // Predicated region
  $region14: #{transformer_encoder_forward.1} parent=0 // pred_check
    _
  $region15: #{transformer_encoder_forward.1} parent=0 // pred_check_branch
    %36 = sbr.rel (0) target = $region17
  $region16: #{transformer_encoder_forward.1} parent=0 // pred_region
    _
  $region17: #{transformer_encoder_forward.1} parent=0 // pred_fallthru
    _
  // Predicated region
  $region18: #{transformer_encoder_forward.1} parent=0 // pred_check
    _
  $region19: #{transformer_encoder_forward.1} parent=0 // pred_check_branch
    %38 = sbr.rel (0) target = $region21
  $region20: #{transformer_encoder_forward.1} parent=0 // pred_region
    _
  $region21: #{transformer_encoder_forward.1} parent=0 // pred_fallthru
    _
  // Predicated region
  $region22: #{transformer_encoder_forward.1} parent=0 // pred_check
    _
  $region23: #{transformer_encoder_forward.1} parent=0 // pred_check_branch
    %40 = sbr.rel (0) target = $region25
  $region24: #{transformer_encoder_forward.1} parent=0 // pred_region
    _
  $region25: #{transformer_encoder_forward.1} parent=0 // pred_fallthru
    _
  // Predicated region
  $region26: #{transformer_encoder_forward.1} parent=0 // pred_check
    _
  $region27: #{transformer_encoder_forward.1} parent=0 // pred_check_branch
    %42 = sbr.rel (0) target = $region29
  $region28: #{transformer_encoder_forward.1} parent=0 // pred_region
    _
  $region29: #{transformer_encoder_forward.1} parent=0 // pred_fallthru
    _
  // Predicated region
  $region30: #{transformer_encoder_forward.1} parent=0 // pred_check
    _
  $region31: #{transformer_encoder_forward.1} parent=0 // pred_check_branch
    %44 = sbr.rel (0) target = $region33
  $region32: #{transformer_encoder_forward.1} parent=0 // pred_region
    _
  $region33: #{transformer_encoder_forward.1} parent=0 // pred_fallthru
    _
  // Predicated region
  $region34: #{transformer_encoder_forward.1} parent=0 // pred_check
    _
  $region35: #{transformer_encoder_forward.1} parent=0 // pred_check_branch
    %46 = sbr.rel (0) target = $region37
  $region36: #{transformer_encoder_forward.1} parent=0 // pred_region
    _
  $region37: #{transformer_encoder_forward.1} parent=0 // pred_fallthru
    _
  // Predicated region
  $region38: #{transformer_encoder_forward.1} parent=0 // pred_check
    _
  $region39: #{transformer_encoder_forward.1} parent=0 // pred_check_branch
    %48 = sbr.rel (0) target = $region41
  $region40: #{transformer_encoder_forward.1} parent=0 // pred_region
    _
  $region41: #{transformer_encoder_forward.1} parent=0 // pred_fallthru
    _
  // Predicated region
  $region42: #{transformer_encoder_forward.1} parent=0 // pred_check
    _
  $region43: #{transformer_encoder_forward.1} parent=0 // pred_check_branch
    %50 = sbr.rel (0) target = $region45
  $region44: #{transformer_encoder_forward.1} parent=0 // pred_region
    _
  $region45: #{transformer_encoder_forward.1} parent=0 // pred_fallthru
    _
  // Predicated region
  $region46: #{transformer_encoder_forward.1} parent=0 // pred_check
    _
  $region47: #{transformer_encoder_forward.1} parent=0 // pred_check_branch
    %52 = sbr.rel (0) target = $region49
  $region48: #{transformer_encoder_forward.1} parent=0 // pred_region
    _
  $region49: #{transformer_encoder_forward.1} parent=0 // pred_fallthru
    _
  // Predicated region
  $region50: #{transformer_encoder_forward.1} parent=0 // pred_check
    _
  $region51: #{transformer_encoder_forward.1} parent=0 // pred_check_branch
    %54 = sbr.rel (0) target = $region53
  $region52: #{transformer_encoder_forward.1} parent=0 // pred_region
    _
  $region53: #{transformer_encoder_forward.1} parent=0 // pred_fallthru
    _
  // Predicated region
  $region54: #{transformer_encoder_forward.1} parent=0 // pred_check
    _
  $region55: #{transformer_encoder_forward.1} parent=0 // pred_check_branch
    %56 = sbr.rel (0) target = $region57
  $region56: #{transformer_encoder_forward.1} parent=0 // pred_region
    _
  $region57: #{transformer_encoder_forward.1} parent=0 // pred_fallthru
    _
  // Predicated region
  $region58: #{transformer_encoder_forward.1} parent=0 // pred_check
    _
  $region59: #{transformer_encoder_forward.1} parent=0 // pred_check_branch
    %58 = sbr.rel (0) target = $region61
  $region60: #{transformer_encoder_forward.1} parent=0 // pred_region
    _
  $region61: #{transformer_encoder_forward.1} parent=0 // pred_fallthru
    _
  // Predicated region
  $region62: #{transformer_encoder_forward.1} parent=0 // pred_check
    _
  $region63: #{transformer_encoder_forward.1} parent=0 // pred_check_branch
    %60 = sbr.rel (0) target = $region65
  $region64: #{transformer_encoder_forward.1} parent=0 // pred_region
    _
  $region65: #{transformer_encoder_forward.1} parent=0 // pred_fallthru
    _
  // Predicated region
  $region66: #{transformer_encoder_forward.1} parent=0 // pred_check
    _
  $region67: #{transformer_encoder_forward.1} parent=0 // pred_check_branch
    %62 = sbr.rel (0) target = $region69
  $region68: #{transformer_encoder_forward.1} parent=0 // pred_region
    _
  $region69: #{transformer_encoder_forward.1} parent=0 // pred_fallthru
    _
  // Predicated region
  $region70: #{transformer_encoder_forward.1} parent=0 // pred_check
    _
  $region71: #{transformer_encoder_forward.1} parent=0 // pred_check_branch
    %64 = sbr.rel (0) target = $region73
  $region72: #{transformer_encoder_forward.1} parent=0 // pred_region
    _
  $region73: #{transformer_encoder_forward.1} parent=0 // pred_fallthru
    _
  // Predicated region
  $region74: #{transformer_encoder_forward.1} parent=0 // pred_check
    _
  $region75: #{transformer_encoder_forward.1} parent=0 // pred_check_branch
    %66 = sbr.rel (0) target = $region77
  $region76: #{transformer_encoder_forward.1} parent=0 // pred_region
    _
  $region77: #{transformer_encoder_forward.1} parent=0 // pred_fallthru
    _
  // Predicated region
  $region78: #{transformer_encoder_forward.1} parent=0 // pred_check
    _
  $region79: #{transformer_encoder_forward.1} parent=0 // pred_check_branch
    %68 = sbr.rel (0) target = $region81
  $region80: #{transformer_encoder_forward.1} parent=0 // pred_region
    _
  $region81: #{transformer_encoder_forward.1} parent=0 // pred_fallthru
    _
  // Predicated region
  $region82: #{transformer_encoder_forward.1} parent=0 // pred_check
    _
  $region83: #{transformer_encoder_forward.1} parent=0 // pred_check_branch
    %70 = sbr.rel (0) target = $region85
  $region84: #{transformer_encoder_forward.1} parent=0 // pred_region
    _
  $region85: #{transformer_encoder_forward.1} parent=0 // pred_fallthru
    _
  // Predicated region
  $region86: #{transformer_encoder_forward.1} parent=0 // pred_check
    _
  $region87: #{transformer_encoder_forward.1} parent=0 // pred_check_branch
    %72 = sbr.rel (0) target = $region89
  $region88: #{transformer_encoder_forward.1} parent=0 // pred_region
    _
  $region89: #{transformer_encoder_forward.1} parent=0 // pred_fallthru
    _
  // Predicated region
  $region90: #{transformer_encoder_forward.1} parent=0 // pred_check
    _
  $region91: #{transformer_encoder_forward.1} parent=0 // pred_check_branch
    %74 = sbr.rel (0) target = $region93
  $region92: #{transformer_encoder_forward.1} parent=0 // pred_region
    _
  $region93: #{transformer_encoder_forward.1} parent=0 // pred_fallthru
    _
  // Predicated region
  $region94: #{transformer_encoder_forward.1} parent=0 // pred_check
    _
  $region95: #{transformer_encoder_forward.1} parent=0 // pred_check_branch
    %76 = sbr.rel (0) target = $region97
  $region96: #{transformer_encoder_forward.1} parent=0 // pred_region
    _
  $region97: #{transformer_encoder_forward.1} parent=0 // pred_fallthru
    _
  %v77 = vld [vmem:[%s0] sm:$0xff]
  %v78 = vld [vmem:[%s0 + $0x8] sm:$0xff]
  %v79 = vld [vmem:[%s0 + $0x10] sm:$0xff]
  %v80 = vld [vmem:[%s0 + $0x18] sm:$0xff]
  %v81 = vld [vmem:[%s0 + $0x20] sm:$0xff]
  %v82 = vld [vmem:[%s0 + $0x28] sm:$0xff]
  %v83 = vld [vmem:[%s0 + $0x30] sm:$0xff]
  %v84 = vld [vmem:[%s0 + $0x38] sm:$0xff]
  %v85 = vld [vmem:[%s0 + $0x40] sm:$0xff]
  %v86 = vld [vmem:[%s0 + $0x48] sm:$0xff]
  %v87 = vld [vmem:[%s0 + $0x50] sm:$0xff]
  %v88 = vld [vmem:[%s0 + $0x58] sm:$0xff]
  %v89 = vld [vmem:[%s0 + $0x60] sm:$0xff]
  %v90 = vld [vmem:[%s0 + $0x68] sm:$0xff]
  %v91 = vld [vmem:[%s0 + $0x70] sm:$0xff]
  %v92 = vld [vmem:[%s0 + $0x78] sm:$0xff]
  %v93 = vld [vmem:[%s0 + $0x80] sm:$0xff]
  %v94 = vld [vmem:[%s0 + $0x88] sm:$0xff]
  %v95 = vld [vmem:[%s0 + $0x90] sm:$0xff]
  %v96 = vld [vmem:[%s0 + $0x98] sm:$0xff]
  %v97 = vld [vmem:[%s0 + $0xa0] sm:$0xff]
  %v98 = vld [vmem:[%s0 + $0xa8] sm:$0xff]
  %v99 = vld [vmem:[%s0 + $0xb0] sm:$0xff]
  %v100 = vld [vmem:[%s0 + $0xb8] sm:$0xff]
  %v101 = vld [vmem:[%s0 + $0xc0] sm:$0xff]
  %v102 = vld [vmem:[%s0 + $0xc8] sm:$0xff]
  %v103 = vld [vmem:[%s0 + $0xd0] sm:$0xff]
  %v104 = vld [vmem:[%s0 + $0xd8] sm:$0xff]
  %v105 = vld [vmem:[%s0 + $0xe0] sm:$0xff]
  %v106 = vld [vmem:[%s0 + $0xe8] sm:$0xff]
  %v107 = vld [vmem:[%s0 + $0xf0] sm:$0xff]
  %v108 = vld [vmem:[%s0 + $0xf8] sm:$0xff]
  %v109 = vld [vmem:[%s0 + $0x100] sm:$0xff]
  %v110 = vld [vmem:[%s0 + $0x108] sm:$0xff]
  %v111 = vld [vmem:[%s0 + $0x110] sm:$0xff]
  %v112 = vld [vmem:[%s0 + $0x118] sm:$0xff]
  %v113 = vld [vmem:[%s0 + $0x120] sm:$0xff]
  %v114 = vld [vmem:[%s0 + $0x128] sm:$0xff]
  %v115 = vld [vmem:[%s0 + $0x130] sm:$0xff]
  %v116 = vld [vmem:[%s0 + $0x138] sm:$0xff]
  %v117 = vld [vmem:[%s0 + $0x140] sm:$0xff]
  %v118 = vld [vmem:[%s0 + $0x148] sm:$0xff]
  %v119 = vld [vmem:[%s0 + $0x150] sm:$0xff]
  %v120 = vld [vmem:[%s0 + $0x158] sm:$0xff]
  %v121 = vld [vmem:[%s0 + $0x160] sm:$0xff]
  %v122 = vld [vmem:[%s0 + $0x168] sm:$0xff]
  %v123 = vld [vmem:[%s0 + $0x170] sm:$0xff]
  %v124 = vld [vmem:[%s0 + $0x178] sm:$0xff]
  %v125 = vld [vmem:[%s0 + $0x180] sm:$0xff]
  %v126 = vld [vmem:[%s0 + $0x188] sm:$0xff]
  %v127 = vld [vmem:[%s0 + $0x190] sm:$0xff]
  %v128 = vld [vmem:[%s0 + $0x198] sm:$0xff]
  %v129 = vld [vmem:[%s0 + $0x1a0] sm:$0xff]
  %v130 = vld [vmem:[%s0 + $0x1a8] sm:$0xff]
  %v131 = vld [vmem:[%s0 + $0x1b0] sm:$0xff]
  %v132 = vld [vmem:[%s0 + $0x1b8] sm:$0xff]
  %v133 = vld [vmem:[%s0 + $0x1c0] sm:$0xff]
  %v134 = vld [vmem:[%s0 + $0x1c8] sm:$0xff]
  %v135 = vld [vmem:[%s0 + $0x1d0] sm:$0xff]
  %v136 = vld [vmem:[%s0 + $0x1d8] sm:$0xff]
  %v137 = vld [vmem:[%s0 + $0x1e0] sm:$0xff]
  %v138 = vld [vmem:[%s0 + $0x1e8] sm:$0xff]
  %v139 = vld [vmem:[%s0 + $0x1f0] sm:$0xff]
  %v140 = vld [vmem:[%s0 + $0x1f8] sm:$0xff]
  %v141 = vld [vmem:[%s0 + $0x200] sm:$0xff]
  %v142 = vld [vmem:[%s0 + $0x208] sm:$0xff]
  %v143 = vld [vmem:[%s0 + $0x210] sm:$0xff]
  %v144 = vld [vmem:[%s0 + $0x218] sm:$0xff]
  %v145 = vld [vmem:[%s0 + $0x220] sm:$0xff]
  %v146 = vld [vmem:[%s0 + $0x228] sm:$0xff]
  %v147 = vld [vmem:[%s0 + $0x230] sm:$0xff]
  %v148 = vld [vmem:[%s0 + $0x238] sm:$0xff]
  %v149 = vld [vmem:[%s0 + $0x240] sm:$0xff]
  %v150 = vld [vmem:[%s0 + $0x248] sm:$0xff]
  %v151 = vld [vmem:[%s0 + $0x250] sm:$0xff]
  %v152 = vld [vmem:[%s0 + $0x258] sm:$0xff]
  %v153 = vld [vmem:[%s0 + $0x260] sm:$0xff]
  %v154 = vld [vmem:[%s0 + $0x268] sm:$0xff]
  %v155 = vld [vmem:[%s0 + $0x270] sm:$0xff]
  %v156 = vld [vmem:[%s0 + $0x278] sm:$0xff]
  %v157 = vld [vmem:[%s0 + $0x280] sm:$0xff]
  %v158 = vld [vmem:[%s0 + $0x288] sm:$0xff]
  %v159 = vld [vmem:[%s0 + $0x290] sm:$0xff]
  %v160 = vld [vmem:[%s0 + $0x298] sm:$0xff]
  %v161 = vld [vmem:[%s0 + $0x2a0] sm:$0xff]
  %v162 = vld [vmem:[%s0 + $0x2a8] sm:$0xff]
  %v163 = vld [vmem:[%s0 + $0x2b0] sm:$0xff]
  %v164 = vld [vmem:[%s0 + $0x2b8] sm:$0xff]
  %v165 = vld [vmem:[%s0 + $0x2c0] sm:$0xff]
  %v166 = vld [vmem:[%s0 + $0x2c8] sm:$0xff]
  %v167 = vld [vmem:[%s0 + $0x2d0] sm:$0xff]
  %v168 = vld [vmem:[%s0 + $0x2d8] sm:$0xff]
  %v169 = vld [vmem:[%s0 + $0x2e0] sm:$0xff]
  %v170 = vld [vmem:[%s0 + $0x2e8] sm:$0xff]
  %v171 = vld [vmem:[%s0 + $0x2f0] sm:$0xff]
  %v172 = vld [vmem:[%s0 + $0x2f8] sm:$0xff]
  %v173 = vld [vmem:[%s0 + $0x300] sm:$0xff]
  %v174 = vld [vmem:[%s0 + $0x308] sm:$0xff]
  %v175 = vld [vmem:[%s0 + $0x310] sm:$0xff]
  %v176 = vld [vmem:[%s0 + $0x318] sm:$0xff]
  %v177 = vld [vmem:[%s0 + $0x320] sm:$0xff]
  %v178 = vld [vmem:[%s0 + $0x328] sm:$0xff]
  %v179 = vld [vmem:[%s0 + $0x330] sm:$0xff]
  %v180 = vld [vmem:[%s0 + $0x338] sm:$0xff]
  %v181 = vld [vmem:[%s0 + $0x340] sm:$0xff]
  %v182 = vld [vmem:[%s1] sm:$0xff]
  %v183 = vld [vmem:[%s1 + $0x8] sm:$0x1]
  %v184 = vld [vmem:[%s2] sm:$0x1]
  %v186 = vperm.slane %v184, 0
  %vm188 = vcmask 72704
  %v190 = vsel %vm188, %v77, 0
  %v193 = vsel %vm188, %v78, 0
  %v196 = vsel %vm188, %v79, 0
  %v199 = vsel %vm188, %v80, 0
  %v202 = vsel %vm188, %v81, 0
  %v205 = vsel %vm188, %v82, 0
  %v208 = vsel %vm188, %v83, 0
  %v211 = vsel %vm188, %v84, 0
  %v214 = vsel %vm188, %v85, 0
  %v217 = vsel %vm188, %v86, 0
  %v220 = vsel %vm188, %v87, 0
  %v223 = vsel %vm188, %v88, 0
  %v226 = vsel %vm188, %v89, 0
  %v229 = vsel %vm188, %v90, 0
  %v232 = vsel %vm188, %v91, 0
  %v235 = vsel %vm188, %v92, 0
  %v238 = vsel %vm188, %v93, 0
  %v241 = vsel %vm188, %v94, 0
  %v244 = vsel %vm188, %v95, 0
  %v247 = vsel %vm188, %v96, 0
  %v250 = vsel %vm188, %v97, 0
  %v253 = vsel %vm188, %v98, 0
  %v256 = vsel %vm188, %v99, 0
  %v259 = vsel %vm188, %v100, 0
  %v262 = vsel %vm188, %v101, 0
  %v265 = vsel %vm188, %v102, 0
  %v268 = vsel %vm188, %v103, 0
  %v271 = vsel %vm188, %v104, 0
  %v274 = vsel %vm188, %v105, 0
  %v277 = vsel %vm188, %v106, 0
  %v280 = vsel %vm188, %v107, 0
  %v283 = vsel %vm188, %v108, 0
  %v286 = vsel %vm188, %v109, 0
  %v289 = vsel %vm188, %v110, 0
  %v292 = vsel %vm188, %v111, 0
  %v295 = vsel %vm188, %v112, 0
  %v298 = vsel %vm188, %v113, 0
  %v301 = vsel %vm188, %v114, 0
  %v304 = vsel %vm188, %v115, 0
  %v307 = vsel %vm188, %v116, 0
  %v310 = vsel %vm188, %v117, 0
  %v313 = vsel %vm188, %v118, 0
  %v316 = vsel %vm188, %v119, 0
  %v319 = vsel %vm188, %v120, 0
  %v322 = vsel %vm188, %v121, 0
  %v325 = vsel %vm188, %v122, 0
  %v328 = vsel %vm188, %v123, 0
  %v331 = vsel %vm188, %v124, 0
  %v334 = vsel %vm188, %v125, 0
  %v337 = vsel %vm188, %v126, 0
  %v340 = vsel %vm188, %v127, 0
  %v343 = vsel %vm188, %v128, 0
  %v346 = vsel %vm188, %v129, 0
  %v349 = vsel %vm188, %v130, 0
  %v352 = vsel %vm188, %v131, 0
  %v355 = vsel %vm188, %v132, 0
  %v358 = vsel %vm188, %v133, 0
  %v361 = vsel %vm188, %v134, 0
  %v364 = vsel %vm188, %v135, 0
  %v367 = vsel %vm188, %v136, 0
  %v370 = vsel %vm188, %v137, 0
  %v373 = vsel %vm188, %v138, 0
  %v376 = vsel %vm188, %v139, 0
  %v379 = vsel %vm188, %v140, 0
  %v382 = vsel %vm188, %v141, 0
  %v385 = vsel %vm188, %v142, 0
  %v388 = vsel %vm188, %v143, 0
  %v391 = vsel %vm188, %v144, 0
  %v394 = vsel %vm188, %v145, 0
  %v397 = vsel %vm188, %v146, 0
  %v400 = vsel %vm188, %v147, 0
  %v403 = vsel %vm188, %v148, 0
  %v406 = vsel %vm188, %v149, 0
  %v409 = vsel %vm188, %v150, 0
  %v412 = vsel %vm188, %v151, 0
  %v415 = vsel %vm188, %v152, 0
  %v418 = vsel %vm188, %v153, 0
  %v421 = vsel %vm188, %v154, 0
  %v424 = vsel %vm188, %v155, 0
  %v427 = vsel %vm188, %v156, 0
  %v430 = vsel %vm188, %v157, 0
  %v433 = vsel %vm188, %v158, 0
  %v436 = vsel %vm188, %v159, 0
  %v439 = vsel %vm188, %v160, 0
  %v442 = vsel %vm188, %v161, 0
  %v445 = vsel %vm188, %v162, 0
  %v448 = vsel %vm188, %v163, 0
  %v451 = vsel %vm188, %v164, 0
  %v454 = vsel %vm188, %v165, 0
  %v457 = vsel %vm188, %v166, 0
  %v460 = vsel %vm188, %v167, 0
  %v463 = vsel %vm188, %v168, 0
  %v466 = vsel %vm188, %v169, 0
  %v469 = vsel %vm188, %v170, 0
  %v472 = vsel %vm188, %v171, 0
  %v475 = vsel %vm188, %v172, 0
  %v478 = vsel %vm188, %v173, 0
  %v481 = vsel %vm188, %v174, 0
  %v484 = vsel %vm188, %v175, 0
  %v487 = vsel %vm188, %v176, 0
  %v490 = vsel %vm188, %v177, 0
  %v493 = vsel %vm188, %v178, 0
  %v496 = vsel %vm188, %v179, 0
  %v499 = vsel %vm188, %v180, 0
  %v502 = vsel %vm188, %v181, 0
  %vm504 = vcmask 1040384
  %v506 = vsel %vm504, %v183, 0
  %508 = vmatpush.msra.mxu0 0.0
  %509 = vmatpush.msra.mxu0 0.0
  %510 = vmatpush.msra.mxu0 0.0
  %511 = vmatpush.msra.mxu0 0.0
  %512 = vmatpush.msra.mxu0 0.0
  %513 = vmatpush.msra.mxu0 0.0
  %514 = vmatpush.msra.mxu0 0.0
  %515 = vmatpush.msra.mxu0 0.0
  %516 = vmatpush.msra.mxu0 0.0
  %517 = vmatpush.msra.mxu0 0.0
  %518 = vmatpush.msra.mxu0 0.0
  %519 = vmatpush.msra.mxu0 0.0
  %520 = vmatpush.msra.mxu0 0.0
  %521 = vmatpush.msra.mxu0 0.0
  %522 = vmatpush.msra.mxu0 %v506
  %523 = vmatpush.msra.mxu0 %v182
  %524 = vmatmul.f32.gmra.mxu0 %v190
  %v525 = vpop.f32.mrf.mxu0
  %v526 = vadd.f32 %v186, %v525
  %527 = vmatmul.f32.gmra.mxu0 %v193
  %v528 = vpop.f32.mrf.mxu0
  %v529 = vadd.f32 %v186, %v528
  %530 = vmatmul.f32.gmra.mxu0 %v196
  %v531 = vpop.f32.mrf.mxu0
  %v532 = vadd.f32 %v186, %v531
  %533 = vmatmul.f32.gmra.mxu0 %v199
  %v534 = vpop.f32.mrf.mxu0
  %v535 = vadd.f32 %v186, %v534
  %536 = vmatmul.f32.gmra.mxu0 %v202
  %v537 = vpop.f32.mrf.mxu0
  %v538 = vadd.f32 %v186, %v537
  %539 = vmatmul.f32.gmra.mxu0 %v205
  %v540 = vpop.f32.mrf.mxu0
  %v541 = vadd.f32 %v186, %v540
  %542 = vmatmul.f32.gmra.mxu0 %v208
  %v543 = vpop.f32.mrf.mxu0
  %v544 = vadd.f32 %v186, %v543
  %545 = vmatmul.f32.gmra.mxu0 %v211
  %v546 = vpop.f32.mrf.mxu0
  %v547 = vadd.f32 %v186, %v546
  %548 = vmatmul.f32.gmra.mxu0 %v214
  %v549 = vpop.f32.mrf.mxu0
  %v550 = vadd.f32 %v186, %v549
  %551 = vmatmul.f32.gmra.mxu0 %v217
  %v552 = vpop.f32.mrf.mxu0
  %v553 = vadd.f32 %v186, %v552
  %554 = vmatmul.f32.gmra.mxu0 %v220
  %v555 = vpop.f32.mrf.mxu0
  %v556 = vadd.f32 %v186, %v555
  %557 = vmatmul.f32.gmra.mxu0 %v223
  %v558 = vpop.f32.mrf.mxu0
  %v559 = vadd.f32 %v186, %v558
  %560 = vmatmul.f32.gmra.mxu0 %v226
  %v561 = vpop.f32.mrf.mxu0
  %v562 = vadd.f32 %v186, %v561
  %563 = vmatmul.f32.gmra.mxu0 %v229
  %v564 = vpop.f32.mrf.mxu0
  %v565 = vadd.f32 %v186, %v564
  %566 = vmatmul.f32.gmra.mxu0 %v232
  %v567 = vpop.f32.mrf.mxu0
  %v568 = vadd.f32 %v186, %v567
  %569 = vmatmul.f32.gmra.mxu0 %v235
  %v570 = vpop.f32.mrf.mxu0
  %v571 = vadd.f32 %v186, %v570
  %572 = vmatmul.f32.gmra.mxu0 %v238
  %v573 = vpop.f32.mrf.mxu0
  %v574 = vadd.f32 %v186, %v573
  %575 = vmatmul.f32.gmra.mxu0 %v241
  %v576 = vpop.f32.mrf.mxu0
  %v577 = vadd.f32 %v186, %v576
  %578 = vmatmul.f32.gmra.mxu0 %v244
  %v579 = vpop.f32.mrf.mxu0
  %v580 = vadd.f32 %v186, %v579
  %581 = vmatmul.f32.gmra.mxu0 %v247
  %v582 = vpop.f32.mrf.mxu0
  %v583 = vadd.f32 %v186, %v582
  %584 = vmatmul.f32.gmra.mxu0 %v250
  %v585 = vpop.f32.mrf.mxu0
  %v586 = vadd.f32 %v186, %v585
  %587 = vmatmul.f32.gmra.mxu0 %v253
  %v588 = vpop.f32.mrf.mxu0
  %v589 = vadd.f32 %v186, %v588
  %590 = vmatmul.f32.gmra.mxu0 %v256
  %v591 = vpop.f32.mrf.mxu0
  %v592 = vadd.f32 %v186, %v591
  %593 = vmatmul.f32.gmra.mxu0 %v259
  %v594 = vpop.f32.mrf.mxu0
  %v595 = vadd.f32 %v186, %v594
  %596 = vmatmul.f32.gmra.mxu0 %v262
  %v597 = vpop.f32.mrf.mxu0
  %v598 = vadd.f32 %v186, %v597
  %599 = vmatmul.f32.gmra.mxu0 %v265
  %v600 = vpop.f32.mrf.mxu0
  %v601 = vadd.f32 %v186, %v600
  %602 = vmatmul.f32.gmra.mxu0 %v268
  %v603 = vpop.f32.mrf.mxu0
  %v604 = vadd.f32 %v186, %v603
  %605 = vmatmul.f32.gmra.mxu0 %v271
  %v606 = vpop.f32.mrf.mxu0
  %v607 = vadd.f32 %v186, %v606
  %608 = vmatmul.f32.gmra.mxu0 %v274
  %v609 = vpop.f32.mrf.mxu0
  %v610 = vadd.f32 %v186, %v609
  %611 = vmatmul.f32.gmra.mxu0 %v277
  %v612 = vpop.f32.mrf.mxu0
  %v613 = vadd.f32 %v186, %v612
  %614 = vmatmul.f32.gmra.mxu0 %v280
  %v615 = vpop.f32.mrf.mxu0
  %v616 = vadd.f32 %v186, %v615
  %617 = vmatmul.f32.gmra.mxu0 %v283
  %v618 = vpop.f32.mrf.mxu0
  %v619 = vadd.f32 %v186, %v618
  %620 = vmatmul.f32.gmra.mxu0 %v286
  %v621 = vpop.f32.mrf.mxu0
  %v622 = vadd.f32 %v186, %v621
  %623 = vmatmul.f32.gmra.mxu0 %v289
  %v624 = vpop.f32.mrf.mxu0
  %v625 = vadd.f32 %v186, %v624
  %626 = vmatmul.f32.gmra.mxu0 %v292
  %v627 = vpop.f32.mrf.mxu0
  %v628 = vadd.f32 %v186, %v627
  %629 = vmatmul.f32.gmra.mxu0 %v295
  %v630 = vpop.f32.mrf.mxu0
  %v631 = vadd.f32 %v186, %v630
  %632 = vmatmul.f32.gmra.mxu0 %v298
  %v633 = vpop.f32.mrf.mxu0
  %v634 = vadd.f32 %v186, %v633
  %635 = vmatmul.f32.gmra.mxu0 %v301
  %v636 = vpop.f32.mrf.mxu0
  %v637 = vadd.f32 %v186, %v636
  %638 = vmatmul.f32.gmra.mxu0 %v304
  %v639 = vpop.f32.mrf.mxu0
  %v640 = vadd.f32 %v186, %v639
  %641 = vmatmul.f32.gmra.mxu0 %v307
  %v642 = vpop.f32.mrf.mxu0
  %v643 = vadd.f32 %v186, %v642
  %644 = vmatmul.f32.gmra.mxu0 %v310
  %v645 = vpop.f32.mrf.mxu0
  %v646 = vadd.f32 %v186, %v645
  %647 = vmatmul.f32.gmra.mxu0 %v313
  %v648 = vpop.f32.mrf.mxu0
  %v649 = vadd.f32 %v186, %v648
  %650 = vmatmul.f32.gmra.mxu0 %v316
  %v651 = vpop.f32.mrf.mxu0
  %v652 = vadd.f32 %v186, %v651
  %653 = vmatmul.f32.gmra.mxu0 %v319
  %v654 = vpop.f32.mrf.mxu0
  %v655 = vadd.f32 %v186, %v654
  %656 = vmatmul.f32.gmra.mxu0 %v322
  %v657 = vpop.f32.mrf.mxu0
  %v658 = vadd.f32 %v186, %v657
  %659 = vmatmul.f32.gmra.mxu0 %v325
  %v660 = vpop.f32.mrf.mxu0
  %v661 = vadd.f32 %v186, %v660
  %662 = vmatmul.f32.gmra.mxu0 %v328
  %v663 = vpop.f32.mrf.mxu0
  %v664 = vadd.f32 %v186, %v663
  %665 = vmatmul.f32.gmra.mxu0 %v331
  %v666 = vpop.f32.mrf.mxu0
  %v667 = vadd.f32 %v186, %v666
  %668 = vmatmul.f32.gmra.mxu0 %v334
  %v669 = vpop.f32.mrf.mxu0
  %v670 = vadd.f32 %v186, %v669
  %671 = vmatmul.f32.gmra.mxu0 %v337
  %v672 = vpop.f32.mrf.mxu0
  %v673 = vadd.f32 %v186, %v672
  %674 = vmatmul.f32.gmra.mxu0 %v340
  %v675 = vpop.f32.mrf.mxu0
  %v676 = vadd.f32 %v186, %v675
  %677 = vmatmul.f32.gmra.mxu0 %v343
  %v678 = vpop.f32.mrf.mxu0
  %v679 = vadd.f32 %v186, %v678
  %680 = vmatmul.f32.gmra.mxu0 %v346
  %v681 = vpop.f32.mrf.mxu0
  %v682 = vadd.f32 %v186, %v681
  %683 = vmatmul.f32.gmra.mxu0 %v349
  %v684 = vpop.f32.mrf.mxu0
  %v685 = vadd.f32 %v186, %v684
  %686 = vmatmul.f32.gmra.mxu0 %v352
  %v687 = vpop.f32.mrf.mxu0
  %v688 = vadd.f32 %v186, %v687
  %689 = vmatmul.f32.gmra.mxu0 %v355
  %v690 = vpop.f32.mrf.mxu0
  %v691 = vadd.f32 %v186, %v690
  %692 = vmatmul.f32.gmra.mxu0 %v358
  %v693 = vpop.f32.mrf.mxu0
  %v694 = vadd.f32 %v186, %v693
  %695 = vmatmul.f32.gmra.mxu0 %v361
  %v696 = vpop.f32.mrf.mxu0
  %v697 = vadd.f32 %v186, %v696
  %698 = vmatmul.f32.gmra.mxu0 %v364
  %v699 = vpop.f32.mrf.mxu0
  %v700 = vadd.f32 %v186, %v699
  %701 = vmatmul.f32.gmra.mxu0 %v367
  %v702 = vpop.f32.mrf.mxu0
  %v703 = vadd.f32 %v186, %v702
  %704 = vmatmul.f32.gmra.mxu0 %v370
  %v705 = vpop.f32.mrf.mxu0
  %v706 = vadd.f32 %v186, %v705
  %707 = vmatmul.f32.gmra.mxu0 %v373
  %v708 = vpop.f32.mrf.mxu0
  %v709 = vadd.f32 %v186, %v708
  %710 = vmatmul.f32.gmra.mxu0 %v376
  %v711 = vpop.f32.mrf.mxu0
  %v712 = vadd.f32 %v186, %v711
  %713 = vmatmul.f32.gmra.mxu0 %v379
  %v714 = vpop.f32.mrf.mxu0
  %v715 = vadd.f32 %v186, %v714
  %716 = vmatmul.f32.gmra.mxu0 %v382
  %v717 = vpop.f32.mrf.mxu0
  %v718 = vadd.f32 %v186, %v717
  %719 = vmatmul.f32.gmra.mxu0 %v385
  %v720 = vpop.f32.mrf.mxu0
  %v721 = vadd.f32 %v186, %v720
  %722 = vmatmul.f32.gmra.mxu0 %v388
  %v723 = vpop.f32.mrf.mxu0
  %v724 = vadd.f32 %v186, %v723
  %725 = vmatmul.f32.gmra.mxu0 %v391
  %v726 = vpop.f32.mrf.mxu0
  %v727 = vadd.f32 %v186, %v726
  %728 = vmatmul.f32.gmra.mxu0 %v394
  %v729 = vpop.f32.mrf.mxu0
  %v730 = vadd.f32 %v186, %v729
  %731 = vmatmul.f32.gmra.mxu0 %v397
  %v732 = vpop.f32.mrf.mxu0
  %v733 = vadd.f32 %v186, %v732
  %734 = vmatmul.f32.gmra.mxu0 %v400
  %v735 = vpop.f32.mrf.mxu0
  %v736 = vadd.f32 %v186, %v735
  %737 = vmatmul.f32.gmra.mxu0 %v403
  %v738 = vpop.f32.mrf.mxu0
  %v739 = vadd.f32 %v186, %v738
  %740 = vmatmul.f32.gmra.mxu0 %v406
  %v741 = vpop.f32.mrf.mxu0
  %v742 = vadd.f32 %v186, %v741
  %743 = vmatmul.f32.gmra.mxu0 %v409
  %v744 = vpop.f32.mrf.mxu0
  %v745 = vadd.f32 %v186, %v744
  %746 = vmatmul.f32.gmra.mxu0 %v412
  %v747 = vpop.f32.mrf.mxu0
  %v748 = vadd.f32 %v186, %v747
  %749 = vmatmul.f32.gmra.mxu0 %v415
  %v750 = vpop.f32.mrf.mxu0
  %v751 = vadd.f32 %v186, %v750
  %752 = vmatmul.f32.gmra.mxu0 %v418
  %v753 = vpop.f32.mrf.mxu0
  %v754 = vadd.f32 %v186, %v753
  %755 = vmatmul.f32.gmra.mxu0 %v421
  %v756 = vpop.f32.mrf.mxu0
  %v757 = vadd.f32 %v186, %v756
  %758 = vmatmul.f32.gmra.mxu0 %v424
  %v759 = vpop.f32.mrf.mxu0
  %v760 = vadd.f32 %v186, %v759
  %761 = vmatmul.f32.gmra.mxu0 %v427
  %v762 = vpop.f32.mrf.mxu0
  %v763 = vadd.f32 %v186, %v762
  %764 = vmatmul.f32.gmra.mxu0 %v430
  %v765 = vpop.f32.mrf.mxu0
  %v766 = vadd.f32 %v186, %v765
  %767 = vmatmul.f32.gmra.mxu0 %v433
  %v768 = vpop.f32.mrf.mxu0
  %v769 = vadd.f32 %v186, %v768
  %770 = vmatmul.f32.gmra.mxu0 %v436
  %v771 = vpop.f32.mrf.mxu0
  %v772 = vadd.f32 %v186, %v771
  %773 = vmatmul.f32.gmra.mxu0 %v439
  %v774 = vpop.f32.mrf.mxu0
  %v775 = vadd.f32 %v186, %v774
  %776 = vmatmul.f32.gmra.mxu0 %v442
  %v777 = vpop.f32.mrf.mxu0
  %v778 = vadd.f32 %v186, %v777
  %779 = vmatmul.f32.gmra.mxu0 %v445
  %v780 = vpop.f32.mrf.mxu0
  %v781 = vadd.f32 %v186, %v780
  %782 = vmatmul.f32.gmra.mxu0 %v448
  %v783 = vpop.f32.mrf.mxu0
  %v784 = vadd.f32 %v186, %v783
  %785 = vmatmul.f32.gmra.mxu0 %v451
  %v786 = vpop.f32.mrf.mxu0
  %v787 = vadd.f32 %v186, %v786
  %788 = vmatmul.f32.gmra.mxu0 %v454
  %v789 = vpop.f32.mrf.mxu0
  %v790 = vadd.f32 %v186, %v789
  %791 = vmatmul.f32.gmra.mxu0 %v457
  %v792 = vpop.f32.mrf.mxu0
  %v793 = vadd.f32 %v186, %v792
  %794 = vmatmul.f32.gmra.mxu0 %v460
  %v795 = vpop.f32.mrf.mxu0
  %v796 = vadd.f32 %v186, %v795
  %797 = vmatmul.f32.gmra.mxu0 %v463
  %v798 = vpop.f32.mrf.mxu0
  %v799 = vadd.f32 %v186, %v798
  %800 = vmatmul.f32.gmra.mxu0 %v466
  %v801 = vpop.f32.mrf.mxu0
  %v802 = vadd.f32 %v186, %v801
  %803 = vmatmul.f32.gmra.mxu0 %v469
  %v804 = vpop.f32.mrf.mxu0
  %v805 = vadd.f32 %v186, %v804
  %806 = vmatmul.f32.gmra.mxu0 %v472
  %v807 = vpop.f32.mrf.mxu0
  %v808 = vadd.f32 %v186, %v807
  %809 = vmatmul.f32.gmra.mxu0 %v475
  %v810 = vpop.f32.mrf.mxu0
  %v811 = vadd.f32 %v186, %v810
  %812 = vmatmul.f32.gmra.mxu0 %v478
  %v813 = vpop.f32.mrf.mxu0
  %v814 = vadd.f32 %v186, %v813
  %815 = vmatmul.f32.gmra.mxu0 %v481
  %v816 = vpop.f32.mrf.mxu0
  %v817 = vadd.f32 %v186, %v816
  %818 = vmatmul.f32.gmra.mxu0 %v484
  %v819 = vpop.f32.mrf.mxu0
  %v820 = vadd.f32 %v186, %v819
  %821 = vmatmul.f32.gmra.mxu0 %v487
  %v822 = vpop.f32.mrf.mxu0
  %v823 = vadd.f32 %v186, %v822
  %824 = vmatmul.f32.gmra.mxu0 %v490
  %v825 = vpop.f32.mrf.mxu0
  %v826 = vadd.f32 %v186, %v825
  %827 = vmatmul.f32.gmra.mxu0 %v493
  %v828 = vpop.f32.mrf.mxu0
  %v829 = vadd.f32 %v186, %v828
  %830 = vmatmul.f32.gmra.mxu0 %v496
  %v831 = vpop.f32.mrf.mxu0
  %v832 = vadd.f32 %v186, %v831
  %833 = vmatmul.f32.gmra.mxu0 %v499
  %v834 = vpop.f32.mrf.mxu0
  %v835 = vadd.f32 %v186, %v834
  %836 = vmatmul.f32.gmra.mxu0 %v502
  %v837 = vpop.f32.mrf.mxu0
  %v838 = vadd.f32 %v186, %v837
  %839 = vdwg.mxu0
  %v840 = vmax.f32 %v526, 0.0
  %v841 = vmax.f32 %v529, 0.0
  %v842 = vmax.f32 %v532, 0.0
  %v843 = vmax.f32 %v535, 0.0
  %v844 = vmax.f32 %v538, 0.0
  %v845 = vmax.f32 %v541, 0.0
  %v846 = vmax.f32 %v544, 0.0
  %v847 = vmax.f32 %v547, 0.0
  %v848 = vmax.f32 %v550, 0.0
  %v849 = vmax.f32 %v553, 0.0
  %v850 = vmax.f32 %v556, 0.0
  %v851 = vmax.f32 %v559, 0.0
  %v852 = vmax.f32 %v562, 0.0
  %v853 = vmax.f32 %v565, 0.0
  %v854 = vmax.f32 %v568, 0.0
  %v855 = vmax.f32 %v571, 0.0
  %v856 = vmax.f32 %v574, 0.0
  %v857 = vmax.f32 %v577, 0.0
  %v858 = vmax.f32 %v580, 0.0
  %v859 = vmax.f32 %v583, 0.0
  %v860 = vmax.f32 %v586, 0.0
  %v861 = vmax.f32 %v589, 0.0
  %v862 = vmax.f32 %v592, 0.0
  %v863 = vmax.f32 %v595, 0.0
  %v864 = vmax.f32 %v598, 0.0
  %v865 = vmax.f32 %v601, 0.0
  %v866 = vmax.f32 %v604, 0.0
  %v867 = vmax.f32 %v607, 0.0
  %v868 = vmax.f32 %v610, 0.0
  %v869 = vmax.f32 %v613, 0.0
  %v870 = vmax.f32 %v616, 0.0
  %v871 = vmax.f32 %v619, 0.0
  %v872 = vmax.f32 %v622, 0.0
  %v873 = vmax.f32 %v625, 0.0
  %v874 = vmax.f32 %v628, 0.0
  %v875 = vmax.f32 %v631, 0.0
  %v876 = vmax.f32 %v634, 0.0
  %v877 = vmax.f32 %v637, 0.0
  %v878 = vmax.f32 %v640, 0.0
  %v879 = vmax.f32 %v643, 0.0
  %v880 = vmax.f32 %v646, 0.0
  %v881 = vmax.f32 %v649, 0.0
  %v882 = vmax.f32 %v652, 0.0
  %v883 = vmax.f32 %v655, 0.0
  %v884 = vmax.f32 %v658, 0.0
  %v885 = vmax.f32 %v661, 0.0
  %v886 = vmax.f32 %v664, 0.0
  %v887 = vmax.f32 %v667, 0.0
  %v888 = vmax.f32 %v670, 0.0
  %v889 = vmax.f32 %v673, 0.0
  %v890 = vmax.f32 %v676, 0.0
  %v891 = vmax.f32 %v679, 0.0
  %v892 = vmax.f32 %v682, 0.0
  %v893 = vmax.f32 %v685, 0.0
  %v894 = vmax.f32 %v688, 0.0
  %v895 = vmax.f32 %v691, 0.0
  %v896 = vmax.f32 %v694, 0.0
  %v897 = vmax.f32 %v697, 0.0
  %v898 = vmax.f32 %v700, 0.0
  %v899 = vmax.f32 %v703, 0.0
  %v900 = vmax.f32 %v706, 0.0
  %v901 = vmax.f32 %v709, 0.0
  %v902 = vmax.f32 %v712, 0.0
  %v903 = vmax.f32 %v715, 0.0
  %v904 = vmax.f32 %v718, 0.0
  %v905 = vmax.f32 %v721, 0.0
  %v906 = vmax.f32 %v724, 0.0
  %v907 = vmax.f32 %v727, 0.0
  %v908 = vmax.f32 %v730, 0.0
  %v909 = vmax.f32 %v733, 0.0
  %v910 = vmax.f32 %v736, 0.0
  %v911 = vmax.f32 %v739, 0.0
  %v912 = vmax.f32 %v742, 0.0
  %v913 = vmax.f32 %v745, 0.0
  %v914 = vmax.f32 %v748, 0.0
  %v915 = vmax.f32 %v751, 0.0
  %v916 = vmax.f32 %v754, 0.0
  %v917 = vmax.f32 %v757, 0.0
  %v918 = vmax.f32 %v760, 0.0
  %v919 = vmax.f32 %v763, 0.0
  %v920 = vmax.f32 %v766, 0.0
  %v921 = vmax.f32 %v769, 0.0
  %v922 = vmax.f32 %v772, 0.0
  %v923 = vmax.f32 %v775, 0.0
  %v924 = vmax.f32 %v778, 0.0
  %v925 = vmax.f32 %v781, 0.0
  %v926 = vmax.f32 %v784, 0.0
  %v927 = vmax.f32 %v787, 0.0
  %v928 = vmax.f32 %v790, 0.0
  %v929 = vmax.f32 %v793, 0.0
  %v930 = vmax.f32 %v796, 0.0
  %v931 = vmax.f32 %v799, 0.0
  %v932 = vmax.f32 %v802, 0.0
  %v933 = vmax.f32 %v805, 0.0
  %v934 = vmax.f32 %v808, 0.0
  %v935 = vmax.f32 %v811, 0.0
  %v936 = vmax.f32 %v814, 0.0
  %v937 = vmax.f32 %v817, 0.0
  %v938 = vmax.f32 %v820, 0.0
  %v939 = vmax.f32 %v823, 0.0
  %v940 = vmax.f32 %v826, 0.0
  %v941 = vmax.f32 %v829, 0.0
  %v942 = vmax.f32 %v832, 0.0
  %v943 = vmax.f32 %v835, 0.0
  %v944 = vmax.f32 %v838, 0.0
  %v945 = vld [vmem:[%s3] sm:$0xff]
  %v946 = vld [vmem:[%s3 + $0x8] sm:$0xff]
  %v947 = vld [vmem:[%s3 + $0x10] sm:$0xff]
  %v948 = vld [vmem:[%s3 + $0x18] sm:$0xff]
  %vm949 = vcmask 261120
  %v951 = vsel %vm949, %v840, 0
  %v954 = vsel %vm949, %v841, 0
  %v957 = vsel %vm949, %v842, 0
  %v960 = vsel %vm949, %v843, 0
  %v963 = vsel %vm949, %v844, 0
  %v966 = vsel %vm949, %v845, 0
  %v969 = vsel %vm949, %v846, 0
  %v972 = vsel %vm949, %v847, 0
  %v975 = vsel %vm949, %v848, 0
  %v978 = vsel %vm949, %v849, 0
  %v981 = vsel %vm949, %v850, 0
  %v984 = vsel %vm949, %v851, 0
  %v987 = vsel %vm949, %v852, 0
  %v990 = vsel %vm949, %v853, 0
  %v993 = vsel %vm949, %v854, 0
  %v996 = vsel %vm949, %v855, 0
  %v999 = vsel %vm949, %v856, 0
  %v1002 = vsel %vm949, %v857, 0
  %v1005 = vsel %vm949, %v858, 0
  %v1008 = vsel %vm949, %v859, 0
  %v1011 = vsel %vm949, %v860, 0
  %v1014 = vsel %vm949, %v861, 0
  %v1017 = vsel %vm949, %v862, 0
  %v1020 = vsel %vm949, %v863, 0
  %v1023 = vsel %vm949, %v864, 0
  %v1026 = vsel %vm949, %v865, 0
  %v1029 = vsel %vm949, %v866, 0
  %v1032 = vsel %vm949, %v867, 0
  %v1035 = vsel %vm949, %v868, 0
  %v1038 = vsel %vm949, %v869, 0
  %v1041 = vsel %vm949, %v870, 0
  %v1044 = vsel %vm949, %v871, 0
  %v1047 = vsel %vm949, %v872, 0
  %v1050 = vsel %vm949, %v873, 0
  %v1053 = vsel %vm949, %v874, 0
  %v1056 = vsel %vm949, %v875, 0
  %v1059 = vsel %vm949, %v876, 0
  %v1062 = vsel %vm949, %v877, 0
  %v1065 = vsel %vm949, %v878, 0
  %v1068 = vsel %vm949, %v879, 0
  %v1071 = vsel %vm949, %v880, 0
  %v1074 = vsel %vm949, %v881, 0
  %v1077 = vsel %vm949, %v882, 0
  %v1080 = vsel %vm949, %v883, 0
  %v1083 = vsel %vm949, %v884, 0
  %v1086 = vsel %vm949, %v885, 0
  %v1089 = vsel %vm949, %v886, 0
  %v1092 = vsel %vm949, %v887, 0
  %v1095 = vsel %vm949, %v888, 0
  %v1098 = vsel %vm949, %v889, 0
  %v1101 = vsel %vm949, %v890, 0
  %v1104 = vsel %vm949, %v891, 0
  %v1107 = vsel %vm949, %v892, 0
  %v1110 = vsel %vm949, %v893, 0
  %v1113 = vsel %vm949, %v894, 0
  %v1116 = vsel %vm949, %v895, 0
  %v1119 = vsel %vm949, %v896, 0
  %v1122 = vsel %vm949, %v897, 0
  %v1125 = vsel %vm949, %v898, 0
  %v1128 = vsel %vm949, %v899, 0
  %v1131 = vsel %vm949, %v900, 0
  %v1134 = vsel %vm949, %v901, 0
  %v1137 = vsel %vm949, %v902, 0
  %v1140 = vsel %vm949, %v903, 0
  %v1143 = vsel %vm949, %v904, 0
  %v1146 = vsel %vm949, %v905, 0
  %v1149 = vsel %vm949, %v906, 0
  %v1152 = vsel %vm949, %v907, 0
  %v1155 = vsel %vm949, %v908, 0
  %v1158 = vsel %vm949, %v909, 0
  %v1161 = vsel %vm949, %v910, 0
  %v1164 = vsel %vm949, %v911, 0
  %v1167 = vsel %vm949, %v912, 0
  %v1170 = vsel %vm949, %v913, 0
  %v1173 = vsel %vm949, %v914, 0
  %v1176 = vsel %vm949, %v915, 0
  %v1179 = vsel %vm949, %v916, 0
  %v1182 = vsel %vm949, %v917, 0
  %v1185 = vsel %vm949, %v918, 0
  %v1188 = vsel %vm949, %v919, 0
  %v1191 = vsel %vm949, %v920, 0
  %v1194 = vsel %vm949, %v921, 0
  %v1197 = vsel %vm949, %v922, 0
  %v1200 = vsel %vm949, %v923, 0
  %v1203 = vsel %vm949, %v924, 0
  %v1206 = vsel %vm949, %v925, 0
  %v1209 = vsel %vm949, %v926, 0
  %v1212 = vsel %vm949, %v927, 0
  %v1215 = vsel %vm949, %v928, 0
  %v1218 = vsel %vm949, %v929, 0
  %v1221 = vsel %vm949, %v930, 0
  %v1224 = vsel %vm949, %v931, 0
  %v1227 = vsel %vm949, %v932, 0
  %v1230 = vsel %vm949, %v933, 0
  %v1233 = vsel %vm949, %v934, 0
  %v1236 = vsel %vm949, %v935, 0
  %v1239 = vsel %vm949, %v936, 0
  %v1242 = vsel %vm949, %v937, 0
  %v1245 = vsel %vm949, %v938, 0
  %v1248 = vsel %vm949, %v939, 0
  %v1251 = vsel %vm949, %v940, 0
  %v1254 = vsel %vm949, %v941, 0
  %v1257 = vsel %vm949, %v942, 0
  %v1260 = vsel %vm949, %v943, 0
  %v1263 = vsel %vm949, %v944, 0
  %1265 = vmatpush.msra.mxu0 0.0
  %1266 = vmatpush.msra.mxu0 0.0
  %1267 = vmatpush.msra.mxu0 0.0
  %1268 = vmatpush.msra.mxu0 0.0
  %1269 = vmatpush.msra.mxu0 0.0
  %1270 = vmatpush.msra.mxu0 0.0
  %1271 = vmatpush.msra.mxu0 0.0
  %1272 = vmatpush.msra.mxu0 0.0
  %1273 = vmatpush.msra.mxu0 0.0
  %1274 = vmatpush.msra.mxu0 0.0
  %1275 = vmatpush.msra.mxu0 0.0
  %1276 = vmatpush.msra.mxu0 0.0
  %1277 = vmatpush.msra.mxu0 %v948
  %1278 = vmatpush.msra.mxu0 %v947
  %1279 = vmatpush.msra.mxu0 %v946
  %1280 = vmatpush.msra.mxu0 %v945
  %1281 = vmatmul.f32.gmra.mxu0 %v951
  %v1282 = vpop.f32.mrf.mxu0
  %v1283 = vadd.f32 0.0, %v1282
  %1284 = vmatmul.f32.gmra.mxu0 %v954
  %v1285 = vpop.f32.mrf.mxu0
  %v1286 = vadd.f32 0.0, %v1285
  %1287 = vmatmul.f32.gmra.mxu0 %v957
  %v1288 = vpop.f32.mrf.mxu0
  %v1289 = vadd.f32 0.0, %v1288
  %1290 = vmatmul.f32.gmra.mxu0 %v960
  %v1291 = vpop.f32.mrf.mxu0
  %v1292 = vadd.f32 0.0, %v1291
  %1293 = vmatmul.f32.gmra.mxu0 %v963
  %v1294 = vpop.f32.mrf.mxu0
  %v1295 = vadd.f32 0.0, %v1294
  %1296 = vmatmul.f32.gmra.mxu0 %v966
  %v1297 = vpop.f32.mrf.mxu0
  %v1298 = vadd.f32 0.0, %v1297
  %1299 = vmatmul.f32.gmra.mxu0 %v969
  %v1300 = vpop.f32.mrf.mxu0
  %v1301 = vadd.f32 0.0, %v1300
  %1302 = vmatmul.f32.gmra.mxu0 %v972
  %v1303 = vpop.f32.mrf.mxu0
  %v1304 = vadd.f32 0.0, %v1303
  %1305 = vmatmul.f32.gmra.mxu0 %v975
  %v1306 = vpop.f32.mrf.mxu0
  %v1307 = vadd.f32 0.0, %v1306
  %1308 = vmatmul.f32.gmra.mxu0 %v978
  %v1309 = vpop.f32.mrf.mxu0
  %v1310 = vadd.f32 0.0, %v1309
  %1311 = vmatmul.f32.gmra.mxu0 %v981
  %v1312 = vpop.f32.mrf.mxu0
  %v1313 = vadd.f32 0.0, %v1312
  %1314 = vmatmul.f32.gmra.mxu0 %v984
  %v1315 = vpop.f32.mrf.mxu0
  %v1316 = vadd.f32 0.0, %v1315
  %1317 = vmatmul.f32.gmra.mxu0 %v987
  %v1318 = vpop.f32.mrf.mxu0
  %v1319 = vadd.f32 0.0, %v1318
  %1320 = vmatmul.f32.gmra.mxu0 %v990
  %v1321 = vpop.f32.mrf.mxu0
  %v1322 = vadd.f32 0.0, %v1321
  %1323 = vmatmul.f32.gmra.mxu0 %v993
  %v1324 = vpop.f32.mrf.mxu0
  %v1325 = vadd.f32 0.0, %v1324
  %1326 = vmatmul.f32.gmra.mxu0 %v996
  %v1327 = vpop.f32.mrf.mxu0
  %v1328 = vadd.f32 0.0, %v1327
  %1329 = vmatmul.f32.gmra.mxu0 %v999
  %v1330 = vpop.f32.mrf.mxu0
  %v1331 = vadd.f32 0.0, %v1330
  %1332 = vmatmul.f32.gmra.mxu0 %v1002
  %v1333 = vpop.f32.mrf.mxu0
  %v1334 = vadd.f32 0.0, %v1333
  %1335 = vmatmul.f32.gmra.mxu0 %v1005
  %v1336 = vpop.f32.mrf.mxu0
  %v1337 = vadd.f32 0.0, %v1336
  %1338 = vmatmul.f32.gmra.mxu0 %v1008
  %v1339 = vpop.f32.mrf.mxu0
  %v1340 = vadd.f32 0.0, %v1339
  %1341 = vmatmul.f32.gmra.mxu0 %v1011
  %v1342 = vpop.f32.mrf.mxu0
  %v1343 = vadd.f32 0.0, %v1342
  %1344 = vmatmul.f32.gmra.mxu0 %v1014
  %v1345 = vpop.f32.mrf.mxu0
  %v1346 = vadd.f32 0.0, %v1345
  %1347 = vmatmul.f32.gmra.mxu0 %v1017
  %v1348 = vpop.f32.mrf.mxu0
  %v1349 = vadd.f32 0.0, %v1348
  %1350 = vmatmul.f32.gmra.mxu0 %v1020
  %v1351 = vpop.f32.mrf.mxu0
  %v1352 = vadd.f32 0.0, %v1351
  %1353 = vmatmul.f32.gmra.mxu0 %v1023
  %v1354 = vpop.f32.mrf.mxu0
  %v1355 = vadd.f32 0.0, %v1354
  %1356 = vmatmul.f32.gmra.mxu0 %v1026
  %v1357 = vpop.f32.mrf.mxu0
  %v1358 = vadd.f32 0.0, %v1357
  %1359 = vmatmul.f32.gmra.mxu0 %v1029
  %v1360 = vpop.f32.mrf.mxu0
  %v1361 = vadd.f32 0.0, %v1360
  %1362 = vmatmul.f32.gmra.mxu0 %v1032
  %v1363 = vpop.f32.mrf.mxu0
  %v1364 = vadd.f32 0.0, %v1363
  %1365 = vmatmul.f32.gmra.mxu0 %v1035
  %v1366 = vpop.f32.mrf.mxu0
  %v1367 = vadd.f32 0.0, %v1366
  %1368 = vmatmul.f32.gmra.mxu0 %v1038
  %v1369 = vpop.f32.mrf.mxu0
  %v1370 = vadd.f32 0.0, %v1369
  %1371 = vmatmul.f32.gmra.mxu0 %v1041
  %v1372 = vpop.f32.mrf.mxu0
  %v1373 = vadd.f32 0.0, %v1372
  %1374 = vmatmul.f32.gmra.mxu0 %v1044
  %v1375 = vpop.f32.mrf.mxu0
  %v1376 = vadd.f32 0.0, %v1375
  %1377 = vmatmul.f32.gmra.mxu0 %v1047
  %v1378 = vpop.f32.mrf.mxu0
  %v1379 = vadd.f32 0.0, %v1378
  %1380 = vmatmul.f32.gmra.mxu0 %v1050
  %v1381 = vpop.f32.mrf.mxu0
  %v1382 = vadd.f32 0.0, %v1381
  %1383 = vmatmul.f32.gmra.mxu0 %v1053
  %v1384 = vpop.f32.mrf.mxu0
  %v1385 = vadd.f32 0.0, %v1384
  %1386 = vmatmul.f32.gmra.mxu0 %v1056
  %v1387 = vpop.f32.mrf.mxu0
  %v1388 = vadd.f32 0.0, %v1387
  %1389 = vmatmul.f32.gmra.mxu0 %v1059
  %v1390 = vpop.f32.mrf.mxu0
  %v1391 = vadd.f32 0.0, %v1390
  %1392 = vmatmul.f32.gmra.mxu0 %v1062
  %v1393 = vpop.f32.mrf.mxu0
  %v1394 = vadd.f32 0.0, %v1393
  %1395 = vmatmul.f32.gmra.mxu0 %v1065
  %v1396 = vpop.f32.mrf.mxu0
  %v1397 = vadd.f32 0.0, %v1396
  %1398 = vmatmul.f32.gmra.mxu0 %v1068
  %v1399 = vpop.f32.mrf.mxu0
  %v1400 = vadd.f32 0.0, %v1399
  %1401 = vmatmul.f32.gmra.mxu0 %v1071
  %v1402 = vpop.f32.mrf.mxu0
  %v1403 = vadd.f32 0.0, %v1402
  %1404 = vmatmul.f32.gmra.mxu0 %v1074
  %v1405 = vpop.f32.mrf.mxu0
  %v1406 = vadd.f32 0.0, %v1405
  %1407 = vmatmul.f32.gmra.mxu0 %v1077
  %v1408 = vpop.f32.mrf.mxu0
  %v1409 = vadd.f32 0.0, %v1408
  %1410 = vmatmul.f32.gmra.mxu0 %v1080
  %v1411 = vpop.f32.mrf.mxu0
  %v1412 = vadd.f32 0.0, %v1411
  %1413 = vmatmul.f32.gmra.mxu0 %v1083
  %v1414 = vpop.f32.mrf.mxu0
  %v1415 = vadd.f32 0.0, %v1414
  %1416 = vmatmul.f32.gmra.mxu0 %v1086
  %v1417 = vpop.f32.mrf.mxu0
  %v1418 = vadd.f32 0.0, %v1417
  %1419 = vmatmul.f32.gmra.mxu0 %v1089
  %v1420 = vpop.f32.mrf.mxu0
  %v1421 = vadd.f32 0.0, %v1420
  %1422 = vmatmul.f32.gmra.mxu0 %v1092
  %v1423 = vpop.f32.mrf.mxu0
  %v1424 = vadd.f32 0.0, %v1423
  %1425 = vmatmul.f32.gmra.mxu0 %v1095
  %v1426 = vpop.f32.mrf.mxu0
  %v1427 = vadd.f32 0.0, %v1426
  %1428 = vmatmul.f32.gmra.mxu0 %v1098
  %v1429 = vpop.f32.mrf.mxu0
  %v1430 = vadd.f32 0.0, %v1429
  %1431 = vmatmul.f32.gmra.mxu0 %v1101
  %v1432 = vpop.f32.mrf.mxu0
  %v1433 = vadd.f32 0.0, %v1432
  %1434 = vmatmul.f32.gmra.mxu0 %v1104
  %v1435 = vpop.f32.mrf.mxu0
  %v1436 = vadd.f32 0.0, %v1435
  %1437 = vmatmul.f32.gmra.mxu0 %v1107
  %v1438 = vpop.f32.mrf.mxu0
  %v1439 = vadd.f32 0.0, %v1438
  %1440 = vmatmul.f32.gmra.mxu0 %v1110
  %v1441 = vpop.f32.mrf.mxu0
  %v1442 = vadd.f32 0.0, %v1441
  %1443 = vmatmul.f32.gmra.mxu0 %v1113
  %v1444 = vpop.f32.mrf.mxu0
  %v1445 = vadd.f32 0.0, %v1444
  %1446 = vmatmul.f32.gmra.mxu0 %v1116
  %v1447 = vpop.f32.mrf.mxu0
  %v1448 = vadd.f32 0.0, %v1447
  %1449 = vmatmul.f32.gmra.mxu0 %v1119
  %v1450 = vpop.f32.mrf.mxu0
  %v1451 = vadd.f32 0.0, %v1450
  %1452 = vmatmul.f32.gmra.mxu0 %v1122
  %v1453 = vpop.f32.mrf.mxu0
  %v1454 = vadd.f32 0.0, %v1453
  %1455 = vmatmul.f32.gmra.mxu0 %v1125
  %v1456 = vpop.f32.mrf.mxu0
  %v1457 = vadd.f32 0.0, %v1456
  %1458 = vmatmul.f32.gmra.mxu0 %v1128
  %v1459 = vpop.f32.mrf.mxu0
  %v1460 = vadd.f32 0.0, %v1459
  %1461 = vmatmul.f32.gmra.mxu0 %v1131
  %v1462 = vpop.f32.mrf.mxu0
  %v1463 = vadd.f32 0.0, %v1462
  %1464 = vmatmul.f32.gmra.mxu0 %v1134
  %v1465 = vpop.f32.mrf.mxu0
  %v1466 = vadd.f32 0.0, %v1465
  %1467 = vmatmul.f32.gmra.mxu0 %v1137
  %v1468 = vpop.f32.mrf.mxu0
  %v1469 = vadd.f32 0.0, %v1468
  %1470 = vmatmul.f32.gmra.mxu0 %v1140
  %v1471 = vpop.f32.mrf.mxu0
  %v1472 = vadd.f32 0.0, %v1471
  %1473 = vmatmul.f32.gmra.mxu0 %v1143
  %v1474 = vpop.f32.mrf.mxu0
  %v1475 = vadd.f32 0.0, %v1474
  %1476 = vmatmul.f32.gmra.mxu0 %v1146
  %v1477 = vpop.f32.mrf.mxu0
  %v1478 = vadd.f32 0.0, %v1477
  %1479 = vmatmul.f32.gmra.mxu0 %v1149
  %v1480 = vpop.f32.mrf.mxu0
  %v1481 = vadd.f32 0.0, %v1480
  %1482 = vmatmul.f32.gmra.mxu0 %v1152
  %v1483 = vpop.f32.mrf.mxu0
  %v1484 = vadd.f32 0.0, %v1483
  %1485 = vmatmul.f32.gmra.mxu0 %v1155
  %v1486 = vpop.f32.mrf.mxu0
  %v1487 = vadd.f32 0.0, %v1486
  %1488 = vmatmul.f32.gmra.mxu0 %v1158
  %v1489 = vpop.f32.mrf.mxu0
  %v1490 = vadd.f32 0.0, %v1489
  %1491 = vmatmul.f32.gmra.mxu0 %v1161
  %v1492 = vpop.f32.mrf.mxu0
  %v1493 = vadd.f32 0.0, %v1492
  %1494 = vmatmul.f32.gmra.mxu0 %v1164
  %v1495 = vpop.f32.mrf.mxu0
  %v1496 = vadd.f32 0.0, %v1495
  %1497 = vmatmul.f32.gmra.mxu0 %v1167
  %v1498 = vpop.f32.mrf.mxu0
  %v1499 = vadd.f32 0.0, %v1498
  %1500 = vmatmul.f32.gmra.mxu0 %v1170
  %v1501 = vpop.f32.mrf.mxu0
  %v1502 = vadd.f32 0.0, %v1501
  %1503 = vmatmul.f32.gmra.mxu0 %v1173
  %v1504 = vpop.f32.mrf.mxu0
  %v1505 = vadd.f32 0.0, %v1504
  %1506 = vmatmul.f32.gmra.mxu0 %v1176
  %v1507 = vpop.f32.mrf.mxu0
  %v1508 = vadd.f32 0.0, %v1507
  %1509 = vmatmul.f32.gmra.mxu0 %v1179
  %v1510 = vpop.f32.mrf.mxu0
  %v1511 = vadd.f32 0.0, %v1510
  %1512 = vmatmul.f32.gmra.mxu0 %v1182
  %v1513 = vpop.f32.mrf.mxu0
  %v1514 = vadd.f32 0.0, %v1513
  %1515 = vmatmul.f32.gmra.mxu0 %v1185
  %v1516 = vpop.f32.mrf.mxu0
  %v1517 = vadd.f32 0.0, %v1516
  %1518 = vmatmul.f32.gmra.mxu0 %v1188
  %v1519 = vpop.f32.mrf.mxu0
  %v1520 = vadd.f32 0.0, %v1519
  %1521 = vmatmul.f32.gmra.mxu0 %v1191
  %v1522 = vpop.f32.mrf.mxu0
  %v1523 = vadd.f32 0.0, %v1522
  %1524 = vmatmul.f32.gmra.mxu0 %v1194
  %v1525 = vpop.f32.mrf.mxu0
  %v1526 = vadd.f32 0.0, %v1525
  %1527 = vmatmul.f32.gmra.mxu0 %v1197
  %v1528 = vpop.f32.mrf.mxu0
  %v1529 = vadd.f32 0.0, %v1528
  %1530 = vmatmul.f32.gmra.mxu0 %v1200
  %v1531 = vpop.f32.mrf.mxu0
  %v1532 = vadd.f32 0.0, %v1531
  %1533 = vmatmul.f32.gmra.mxu0 %v1203
  %v1534 = vpop.f32.mrf.mxu0
  %v1535 = vadd.f32 0.0, %v1534
  %1536 = vmatmul.f32.gmra.mxu0 %v1206
  %v1537 = vpop.f32.mrf.mxu0
  %v1538 = vadd.f32 0.0, %v1537
  %1539 = vmatmul.f32.gmra.mxu0 %v1209
  %v1540 = vpop.f32.mrf.mxu0
  %v1541 = vadd.f32 0.0, %v1540
  %1542 = vmatmul.f32.gmra.mxu0 %v1212
  %v1543 = vpop.f32.mrf.mxu0
  %v1544 = vadd.f32 0.0, %v1543
  %1545 = vmatmul.f32.gmra.mxu0 %v1215
  %v1546 = vpop.f32.mrf.mxu0
  %v1547 = vadd.f32 0.0, %v1546
  %1548 = vmatmul.f32.gmra.mxu0 %v1218
  %v1549 = vpop.f32.mrf.mxu0
  %v1550 = vadd.f32 0.0, %v1549
  %1551 = vmatmul.f32.gmra.mxu0 %v1221
  %v1552 = vpop.f32.mrf.mxu0
  %v1553 = vadd.f32 0.0, %v1552
  %1554 = vmatmul.f32.gmra.mxu0 %v1224
  %v1555 = vpop.f32.mrf.mxu0
  %v1556 = vadd.f32 0.0, %v1555
  %1557 = vmatmul.f32.gmra.mxu0 %v1227
  %v1558 = vpop.f32.mrf.mxu0
  %v1559 = vadd.f32 0.0, %v1558
  %1560 = vmatmul.f32.gmra.mxu0 %v1230
  %v1561 = vpop.f32.mrf.mxu0
  %v1562 = vadd.f32 0.0, %v1561
  %1563 = vmatmul.f32.gmra.mxu0 %v1233
  %v1564 = vpop.f32.mrf.mxu0
  %v1565 = vadd.f32 0.0, %v1564
  %1566 = vmatmul.f32.gmra.mxu0 %v1236
  %v1567 = vpop.f32.mrf.mxu0
  %v1568 = vadd.f32 0.0, %v1567
  %1569 = vmatmul.f32.gmra.mxu0 %v1239
  %v1570 = vpop.f32.mrf.mxu0
  %v1571 = vadd.f32 0.0, %v1570
  %1572 = vmatmul.f32.gmra.mxu0 %v1242
  %v1573 = vpop.f32.mrf.mxu0
  %v1574 = vadd.f32 0.0, %v1573
  %1575 = vmatmul.f32.gmra.mxu0 %v1245
  %v1576 = vpop.f32.mrf.mxu0
  %v1577 = vadd.f32 0.0, %v1576
  %1578 = vmatmul.f32.gmra.mxu0 %v1248
  %v1579 = vpop.f32.mrf.mxu0
  %v1580 = vadd.f32 0.0, %v1579
  %1581 = vmatmul.f32.gmra.mxu0 %v1251
  %v1582 = vpop.f32.mrf.mxu0
  %v1583 = vadd.f32 0.0, %v1582
  %1584 = vmatmul.f32.gmra.mxu0 %v1254
  %v1585 = vpop.f32.mrf.mxu0
  %v1586 = vadd.f32 0.0, %v1585
  %1587 = vmatmul.f32.gmra.mxu0 %v1257
  %v1588 = vpop.f32.mrf.mxu0
  %1589 = vmatmul.f32.gmra.mxu0 %v1260
  %v1590 = vpop.f32.mrf.mxu0
  %1591 = vmatmul.f32.gmra.mxu0 %v1263
  %v1592 = vpop.f32.mrf.mxu0
  %1593 = vdwg.mxu0
  %s1594 = scalar_lea.vmem %s3, 32
  %v1595 = vld [vmem:[%s1594] sm:$0xff]
  %v1596 = vld [vmem:[%s1594 + $0x8] sm:$0xff]
  %v1597 = vld [vmem:[%s1594 + $0x10] sm:$0xff]
  %v1598 = vld [vmem:[%s1594 + $0x18] sm:$0xff]
  %1599 = vmatpush.msra.mxu0 0.0
  %1600 = vmatpush.msra.mxu0 0.0
  %1601 = vmatpush.msra.mxu0 0.0
  %1602 = vmatpush.msra.mxu0 0.0
  %1603 = vmatpush.msra.mxu0 0.0
  %1604 = vmatpush.msra.mxu0 0.0
  %1605 = vmatpush.msra.mxu0 0.0
  %1606 = vmatpush.msra.mxu0 0.0
  %1607 = vmatpush.msra.mxu0 0.0
  %1608 = vmatpush.msra.mxu0 0.0
  %1609 = vmatpush.msra.mxu0 0.0
  %1610 = vmatpush.msra.mxu0 0.0
  %1611 = vmatpush.msra.mxu0 %v1598
  %1612 = vmatpush.msra.mxu0 %v1597
  %1613 = vmatpush.msra.mxu0 %v1596
  %1614 = vmatpush.msra.mxu0 %v1595
  %1615 = vmatmul.f32.gmra.mxu0 %v951
  %v1616 = vpop.f32.mrf.mxu0
  %v1617 = vadd.f32 0.0, %v1616
  %1618 = vmatmul.f32.gmra.mxu0 %v954
  %v1619 = vpop.f32.mrf.mxu0
  %v1620 = vadd.f32 0.0, %v1619
  %1621 = vmatmul.f32.gmra.mxu0 %v957
  %v1622 = vpop.f32.mrf.mxu0
  %v1623 = vadd.f32 0.0, %v1622
  %1624 = vmatmul.f32.gmra.mxu0 %v960
  %v1625 = vpop.f32.mrf.mxu0
  %v1626 = vadd.f32 0.0, %v1625
  %1627 = vmatmul.f32.gmra.mxu0 %v963
  %v1628 = vpop.f32.mrf.mxu0
  %v1629 = vadd.f32 0.0, %v1628
  %1630 = vmatmul.f32.gmra.mxu0 %v966
  %v1631 = vpop.f32.mrf.mxu0
  %v1632 = vadd.f32 0.0, %v1631
  %1633 = vmatmul.f32.gmra.mxu0 %v969
  %v1634 = vpop.f32.mrf.mxu0
  %v1635 = vadd.f32 0.0, %v1634
  %1636 = vmatmul.f32.gmra.mxu0 %v972
  %v1637 = vpop.f32.mrf.mxu0
  %v1638 = vadd.f32 0.0, %v1637
  %1639 = vmatmul.f32.gmra.mxu0 %v975
  %v1640 = vpop.f32.mrf.mxu0
  %v1641 = vadd.f32 0.0, %v1640
  %1642 = vmatmul.f32.gmra.mxu0 %v978
  %v1643 = vpop.f32.mrf.mxu0
  %v1644 = vadd.f32 0.0, %v1643
  %1645 = vmatmul.f32.gmra.mxu0 %v981
  %v1646 = vpop.f32.mrf.mxu0
  %v1647 = vadd.f32 0.0, %v1646
  %1648 = vmatmul.f32.gmra.mxu0 %v984
  %v1649 = vpop.f32.mrf.mxu0
  %v1650 = vadd.f32 0.0, %v1649
  %1651 = vmatmul.f32.gmra.mxu0 %v987
  %v1652 = vpop.f32.mrf.mxu0
  %v1653 = vadd.f32 0.0, %v1652
  %1654 = vmatmul.f32.gmra.mxu0 %v990
  %v1655 = vpop.f32.mrf.mxu0
  %v1656 = vadd.f32 0.0, %v1655
  %1657 = vmatmul.f32.gmra.mxu0 %v993
  %v1658 = vpop.f32.mrf.mxu0
  %v1659 = vadd.f32 0.0, %v1658
  %1660 = vmatmul.f32.gmra.mxu0 %v996
  %v1661 = vpop.f32.mrf.mxu0
  %v1662 = vadd.f32 0.0, %v1661
  %1663 = vmatmul.f32.gmra.mxu0 %v999
  %v1664 = vpop.f32.mrf.mxu0
  %v1665 = vadd.f32 0.0, %v1664
  %1666 = vmatmul.f32.gmra.mxu0 %v1002
  %v1667 = vpop.f32.mrf.mxu0
  %v1668 = vadd.f32 0.0, %v1667
  %1669 = vmatmul.f32.gmra.mxu0 %v1005
  %v1670 = vpop.f32.mrf.mxu0
  %v1671 = vadd.f32 0.0, %v1670
  %1672 = vmatmul.f32.gmra.mxu0 %v1008
  %v1673 = vpop.f32.mrf.mxu0
  %v1674 = vadd.f32 0.0, %v1673
  %1675 = vmatmul.f32.gmra.mxu0 %v1011
  %v1676 = vpop.f32.mrf.mxu0
  %v1677 = vadd.f32 0.0, %v1676
  %1678 = vmatmul.f32.gmra.mxu0 %v1014
  %v1679 = vpop.f32.mrf.mxu0
  %v1680 = vadd.f32 0.0, %v1679
  %1681 = vmatmul.f32.gmra.mxu0 %v1017
  %v1682 = vpop.f32.mrf.mxu0
  %v1683 = vadd.f32 0.0, %v1682
  %1684 = vmatmul.f32.gmra.mxu0 %v1020
  %v1685 = vpop.f32.mrf.mxu0
  %v1686 = vadd.f32 0.0, %v1685
  %1687 = vmatmul.f32.gmra.mxu0 %v1023
  %v1688 = vpop.f32.mrf.mxu0
  %v1689 = vadd.f32 0.0, %v1688
  %1690 = vmatmul.f32.gmra.mxu0 %v1026
  %v1691 = vpop.f32.mrf.mxu0
  %v1692 = vadd.f32 0.0, %v1691
  %1693 = vmatmul.f32.gmra.mxu0 %v1029
  %v1694 = vpop.f32.mrf.mxu0
  %v1695 = vadd.f32 0.0, %v1694
  %1696 = vmatmul.f32.gmra.mxu0 %v1032
  %v1697 = vpop.f32.mrf.mxu0
  %v1698 = vadd.f32 0.0, %v1697
  %1699 = vmatmul.f32.gmra.mxu0 %v1035
  %v1700 = vpop.f32.mrf.mxu0
  %v1701 = vadd.f32 0.0, %v1700
  %1702 = vmatmul.f32.gmra.mxu0 %v1038
  %v1703 = vpop.f32.mrf.mxu0
  %v1704 = vadd.f32 0.0, %v1703
  %1705 = vmatmul.f32.gmra.mxu0 %v1041
  %v1706 = vpop.f32.mrf.mxu0
  %v1707 = vadd.f32 0.0, %v1706
  %1708 = vmatmul.f32.gmra.mxu0 %v1044
  %v1709 = vpop.f32.mrf.mxu0
  %v1710 = vadd.f32 0.0, %v1709
  %1711 = vmatmul.f32.gmra.mxu0 %v1047
  %v1712 = vpop.f32.mrf.mxu0
  %v1713 = vadd.f32 0.0, %v1712
  %1714 = vmatmul.f32.gmra.mxu0 %v1050
  %v1715 = vpop.f32.mrf.mxu0
  %v1716 = vadd.f32 0.0, %v1715
  %1717 = vmatmul.f32.gmra.mxu0 %v1053
  %v1718 = vpop.f32.mrf.mxu0
  %v1719 = vadd.f32 0.0, %v1718
  %1720 = vmatmul.f32.gmra.mxu0 %v1056
  %v1721 = vpop.f32.mrf.mxu0
  %v1722 = vadd.f32 0.0, %v1721
  %1723 = vmatmul.f32.gmra.mxu0 %v1059
  %v1724 = vpop.f32.mrf.mxu0
  %v1725 = vadd.f32 0.0, %v1724
  %1726 = vmatmul.f32.gmra.mxu0 %v1062
  %v1727 = vpop.f32.mrf.mxu0
  %v1728 = vadd.f32 0.0, %v1727
  %1729 = vmatmul.f32.gmra.mxu0 %v1065
  %v1730 = vpop.f32.mrf.mxu0
  %v1731 = vadd.f32 0.0, %v1730
  %1732 = vmatmul.f32.gmra.mxu0 %v1068
  %v1733 = vpop.f32.mrf.mxu0
  %v1734 = vadd.f32 0.0, %v1733
  %1735 = vmatmul.f32.gmra.mxu0 %v1071
  %v1736 = vpop.f32.mrf.mxu0
  %v1737 = vadd.f32 0.0, %v1736
  %1738 = vmatmul.f32.gmra.mxu0 %v1074
  %v1739 = vpop.f32.mrf.mxu0
  %v1740 = vadd.f32 0.0, %v1739
  %1741 = vmatmul.f32.gmra.mxu0 %v1077
  %v1742 = vpop.f32.mrf.mxu0
  %v1743 = vadd.f32 0.0, %v1742
  %1744 = vmatmul.f32.gmra.mxu0 %v1080
  %v1745 = vpop.f32.mrf.mxu0
  %v1746 = vadd.f32 0.0, %v1745
  %1747 = vmatmul.f32.gmra.mxu0 %v1083
  %v1748 = vpop.f32.mrf.mxu0
  %v1749 = vadd.f32 0.0, %v1748
  %1750 = vmatmul.f32.gmra.mxu0 %v1086
  %v1751 = vpop.f32.mrf.mxu0
  %v1752 = vadd.f32 0.0, %v1751
  %1753 = vmatmul.f32.gmra.mxu0 %v1089
  %v1754 = vpop.f32.mrf.mxu0
  %v1755 = vadd.f32 0.0, %v1754
  %1756 = vmatmul.f32.gmra.mxu0 %v1092
  %v1757 = vpop.f32.mrf.mxu0
  %v1758 = vadd.f32 0.0, %v1757
  %1759 = vmatmul.f32.gmra.mxu0 %v1095
  %v1760 = vpop.f32.mrf.mxu0
  %v1761 = vadd.f32 0.0, %v1760
  %1762 = vmatmul.f32.gmra.mxu0 %v1098
  %v1763 = vpop.f32.mrf.mxu0
  %v1764 = vadd.f32 0.0, %v1763
  %1765 = vmatmul.f32.gmra.mxu0 %v1101
  %v1766 = vpop.f32.mrf.mxu0
  %v1767 = vadd.f32 0.0, %v1766
  %1768 = vmatmul.f32.gmra.mxu0 %v1104
  %v1769 = vpop.f32.mrf.mxu0
  %v1770 = vadd.f32 0.0, %v1769
  %1771 = vmatmul.f32.gmra.mxu0 %v1107
  %v1772 = vpop.f32.mrf.mxu0
  %v1773 = vadd.f32 0.0, %v1772
  %1774 = vmatmul.f32.gmra.mxu0 %v1110
  %v1775 = vpop.f32.mrf.mxu0
  %v1776 = vadd.f32 0.0, %v1775
  %1777 = vmatmul.f32.gmra.mxu0 %v1113
  %v1778 = vpop.f32.mrf.mxu0
  %v1779 = vadd.f32 0.0, %v1778
  %1780 = vmatmul.f32.gmra.mxu0 %v1116
  %v1781 = vpop.f32.mrf.mxu0
  %v1782 = vadd.f32 0.0, %v1781
  %1783 = vmatmul.f32.gmra.mxu0 %v1119
  %v1784 = vpop.f32.mrf.mxu0
  %v1785 = vadd.f32 0.0, %v1784
  %1786 = vmatmul.f32.gmra.mxu0 %v1122
  %v1787 = vpop.f32.mrf.mxu0
  %v1788 = vadd.f32 0.0, %v1787
  %1789 = vmatmul.f32.gmra.mxu0 %v1125
  %v1790 = vpop.f32.mrf.mxu0
  %v1791 = vadd.f32 0.0, %v1790
  %1792 = vmatmul.f32.gmra.mxu0 %v1128
  %v1793 = vpop.f32.mrf.mxu0
  %v1794 = vadd.f32 0.0, %v1793
  %1795 = vmatmul.f32.gmra.mxu0 %v1131
  %v1796 = vpop.f32.mrf.mxu0
  %v1797 = vadd.f32 0.0, %v1796
  %1798 = vmatmul.f32.gmra.mxu0 %v1134
  %v1799 = vpop.f32.mrf.mxu0
  %v1800 = vadd.f32 0.0, %v1799
  %1801 = vmatmul.f32.gmra.mxu0 %v1137
  %v1802 = vpop.f32.mrf.mxu0
  %v1803 = vadd.f32 0.0, %v1802
  %1804 = vmatmul.f32.gmra.mxu0 %v1140
  %v1805 = vpop.f32.mrf.mxu0
  %v1806 = vadd.f32 0.0, %v1805
  %1807 = vmatmul.f32.gmra.mxu0 %v1143
  %v1808 = vpop.f32.mrf.mxu0
  %v1809 = vadd.f32 0.0, %v1808
  %1810 = vmatmul.f32.gmra.mxu0 %v1146
  %v1811 = vpop.f32.mrf.mxu0
  %v1812 = vadd.f32 0.0, %v1811
  %1813 = vmatmul.f32.gmra.mxu0 %v1149
  %v1814 = vpop.f32.mrf.mxu0
  %v1815 = vadd.f32 0.0, %v1814
  %1816 = vmatmul.f32.gmra.mxu0 %v1152
  %v1817 = vpop.f32.mrf.mxu0
  %v1818 = vadd.f32 0.0, %v1817
  %1819 = vmatmul.f32.gmra.mxu0 %v1155
  %v1820 = vpop.f32.mrf.mxu0
  %v1821 = vadd.f32 0.0, %v1820
  %1822 = vmatmul.f32.gmra.mxu0 %v1158
  %v1823 = vpop.f32.mrf.mxu0
  %v1824 = vadd.f32 0.0, %v1823
  %1825 = vmatmul.f32.gmra.mxu0 %v1161
  %v1826 = vpop.f32.mrf.mxu0
  %v1827 = vadd.f32 0.0, %v1826
  %1828 = vmatmul.f32.gmra.mxu0 %v1164
  %v1829 = vpop.f32.mrf.mxu0
  %v1830 = vadd.f32 0.0, %v1829
  %1831 = vmatmul.f32.gmra.mxu0 %v1167
  %v1832 = vpop.f32.mrf.mxu0
  %v1833 = vadd.f32 0.0, %v1832
  %1834 = vmatmul.f32.gmra.mxu0 %v1170
  %v1835 = vpop.f32.mrf.mxu0
  %v1836 = vadd.f32 0.0, %v1835
  %1837 = vmatmul.f32.gmra.mxu0 %v1173
  %v1838 = vpop.f32.mrf.mxu0
  %v1839 = vadd.f32 0.0, %v1838
  %1840 = vmatmul.f32.gmra.mxu0 %v1176
  %v1841 = vpop.f32.mrf.mxu0
  %v1842 = vadd.f32 0.0, %v1841
  %1843 = vmatmul.f32.gmra.mxu0 %v1179
  %v1844 = vpop.f32.mrf.mxu0
  %v1845 = vadd.f32 0.0, %v1844
  %1846 = vmatmul.f32.gmra.mxu0 %v1182
  %v1847 = vpop.f32.mrf.mxu0
  %v1848 = vadd.f32 0.0, %v1847
  %1849 = vmatmul.f32.gmra.mxu0 %v1185
  %v1850 = vpop.f32.mrf.mxu0
  %v1851 = vadd.f32 0.0, %v1850
  %1852 = vmatmul.f32.gmra.mxu0 %v1188
  %v1853 = vpop.f32.mrf.mxu0
  %v1854 = vadd.f32 0.0, %v1853
  %1855 = vmatmul.f32.gmra.mxu0 %v1191
  %v1856 = vpop.f32.mrf.mxu0
  %v1857 = vadd.f32 0.0, %v1856
  %1858 = vmatmul.f32.gmra.mxu0 %v1194
  %v1859 = vpop.f32.mrf.mxu0
  %v1860 = vadd.f32 0.0, %v1859
  %1861 = vmatmul.f32.gmra.mxu0 %v1197
  %v1862 = vpop.f32.mrf.mxu0
  %v1863 = vadd.f32 0.0, %v1862
  %1864 = vmatmul.f32.gmra.mxu0 %v1200
  %v1865 = vpop.f32.mrf.mxu0
  %v1866 = vadd.f32 0.0, %v1865
  %1867 = vmatmul.f32.gmra.mxu0 %v1203
  %v1868 = vpop.f32.mrf.mxu0
  %v1869 = vadd.f32 0.0, %v1868
  %1870 = vmatmul.f32.gmra.mxu0 %v1206
  %v1871 = vpop.f32.mrf.mxu0
  %v1872 = vadd.f32 0.0, %v1871
  %1873 = vmatmul.f32.gmra.mxu0 %v1209
  %v1874 = vpop.f32.mrf.mxu0
  %v1875 = vadd.f32 0.0, %v1874
  %1876 = vmatmul.f32.gmra.mxu0 %v1212
  %v1877 = vpop.f32.mrf.mxu0
  %v1878 = vadd.f32 0.0, %v1877
  %1879 = vmatmul.f32.gmra.mxu0 %v1215
  %v1880 = vpop.f32.mrf.mxu0
  %v1881 = vadd.f32 0.0, %v1880
  %1882 = vmatmul.f32.gmra.mxu0 %v1218
  %v1883 = vpop.f32.mrf.mxu0
  %v1884 = vadd.f32 0.0, %v1883
  %1885 = vmatmul.f32.gmra.mxu0 %v1221
  %v1886 = vpop.f32.mrf.mxu0
  %v1887 = vadd.f32 0.0, %v1886
  %1888 = vmatmul.f32.gmra.mxu0 %v1224
  %v1889 = vpop.f32.mrf.mxu0
  %v1890 = vadd.f32 0.0, %v1889
  %1891 = vmatmul.f32.gmra.mxu0 %v1227
  %v1892 = vpop.f32.mrf.mxu0
  %v1893 = vadd.f32 0.0, %v1892
  %1894 = vmatmul.f32.gmra.mxu0 %v1230
  %v1895 = vpop.f32.mrf.mxu0
  %v1896 = vadd.f32 0.0, %v1895
  %1897 = vmatmul.f32.gmra.mxu0 %v1233
  %v1898 = vpop.f32.mrf.mxu0
  %v1899 = vadd.f32 0.0, %v1898
  %1900 = vmatmul.f32.gmra.mxu0 %v1236
  %v1901 = vpop.f32.mrf.mxu0
  %v1902 = vadd.f32 0.0, %v1901
  %1903 = vmatmul.f32.gmra.mxu0 %v1239
  %v1904 = vpop.f32.mrf.mxu0
  %v1905 = vadd.f32 0.0, %v1904
  %1906 = vmatmul.f32.gmra.mxu0 %v1242
  %v1907 = vpop.f32.mrf.mxu0
  %v1908 = vadd.f32 0.0, %v1907
  %1909 = vmatmul.f32.gmra.mxu0 %v1245
  %v1910 = vpop.f32.mrf.mxu0
  %v1911 = vadd.f32 0.0, %v1910
  %1912 = vmatmul.f32.gmra.mxu0 %v1248
  %v1913 = vpop.f32.mrf.mxu0
  %v1914 = vadd.f32 0.0, %v1913
  %1915 = vmatmul.f32.gmra.mxu0 %v1251
  %v1916 = vpop.f32.mrf.mxu0
  %v1917 = vadd.f32 0.0, %v1916
  %1918 = vmatmul.f32.gmra.mxu0 %v1254
  %v1919 = vpop.f32.mrf.mxu0
  %v1920 = vadd.f32 0.0, %v1919
  %1921 = vmatmul.f32.gmra.mxu0 %v1257
  %v1922 = vpop.f32.mrf.mxu0
  %1923 = vmatmul.f32.gmra.mxu0 %v1260
  %v1924 = vpop.f32.mrf.mxu0
  %1925 = vmatmul.f32.gmra.mxu0 %v1263
  %v1926 = vpop.f32.mrf.mxu0
  %1927 = vdwg.mxu0
  %vm2030 = vcmask 1046528
  %v2031 = vrot.slane %v1617, 1
  %v2032 = vrot.slane %v1620, 1
  %v2033 = vsel %vm2030, %v2031, %v2032
  %v2034 = vrot.slane %v1623, 1
  %v2035 = vsel %vm2030, %v2032, %v2034
  %v2036 = vrot.slane %v1626, 1
  %v2037 = vsel %vm2030, %v2034, %v2036
  %v2038 = vrot.slane %v1629, 1
  %v2039 = vsel %vm2030, %v2036, %v2038
  %v2040 = vrot.slane %v1632, 1
  %v2041 = vsel %vm2030, %v2038, %v2040
  %v2042 = vrot.slane %v1635, 1
  %v2043 = vsel %vm2030, %v2040, %v2042
  %v2044 = vrot.slane %v1638, 1
  %v2045 = vsel %vm2030, %v2042, %v2044
  %v2046 = vrot.slane %v1641, 1
  %v2047 = vsel %vm2030, %v2044, %v2046
  %v2048 = vrot.slane %v1644, 1
  %v2049 = vsel %vm2030, %v2046, %v2048
  %v2050 = vrot.slane %v1647, 1
  %v2051 = vsel %vm2030, %v2048, %v2050
  %v2052 = vrot.slane %v1650, 1
  %v2053 = vsel %vm2030, %v2050, %v2052
  %v2054 = vrot.slane %v1653, 1
  %v2055 = vsel %vm2030, %v2052, %v2054
  %v2056 = vrot.slane %v1656, 1
  %v2057 = vsel %vm2030, %v2054, %v2056
  %v2058 = vrot.slane %v1659, 1
  %v2059 = vsel %vm2030, %v2056, %v2058
  %v2060 = vrot.slane %v1662, 1
  %v2061 = vsel %vm2030, %v2058, %v2060
  %v2062 = vrot.slane %v1665, 1
  %v2063 = vsel %vm2030, %v2060, %v2062
  %v2064 = vrot.slane %v1668, 1
  %v2065 = vsel %vm2030, %v2062, %v2064
  %v2066 = vrot.slane %v1671, 1
  %v2067 = vsel %vm2030, %v2064, %v2066
  %v2068 = vrot.slane %v1674, 1
  %v2069 = vsel %vm2030, %v2066, %v2068
  %v2070 = vrot.slane %v1677, 1
  %v2071 = vsel %vm2030, %v2068, %v2070
  %v2072 = vrot.slane %v1680, 1
  %v2073 = vsel %vm2030, %v2070, %v2072
  %v2074 = vrot.slane %v1683, 1
  %v2075 = vsel %vm2030, %v2072, %v2074
  %v2076 = vrot.slane %v1686, 1
  %v2077 = vsel %vm2030, %v2074, %v2076
  %v2078 = vrot.slane %v1689, 1
  %v2079 = vsel %vm2030, %v2076, %v2078
  %v2080 = vrot.slane %v1692, 1
  %v2081 = vsel %vm2030, %v2078, %v2080
  %v2082 = vrot.slane %v1695, 1
  %v2083 = vsel %vm2030, %v2080, %v2082
  %v2084 = vrot.slane %v1698, 1
  %v2085 = vsel %vm2030, %v2082, %v2084
  %v2086 = vrot.slane %v1701, 1
  %v2087 = vsel %vm2030, %v2084, %v2086
  %v2088 = vrot.slane %v1704, 1
  %v2089 = vsel %vm2030, %v2086, %v2088
  %v2090 = vrot.slane %v1707, 1
  %v2091 = vsel %vm2030, %v2088, %v2090
  %v2092 = vrot.slane %v1710, 1
  %v2093 = vsel %vm2030, %v2090, %v2092
  %v2094 = vrot.slane %v1713, 1
  %v2095 = vsel %vm2030, %v2092, %v2094
  %v2096 = vrot.slane %v1716, 1
  %v2097 = vsel %vm2030, %v2094, %v2096
  %v2098 = vrot.slane %v1719, 1
  %v2099 = vsel %vm2030, %v2096, %v2098
  %v2100 = vrot.slane %v1722, 1
  %v2101 = vsel %vm2030, %v2098, %v2100
  %v2102 = vrot.slane %v1725, 1
  %v2103 = vsel %vm2030, %v2100, %v2102
  %v2104 = vrot.slane %v1728, 1
  %v2105 = vsel %vm2030, %v2102, %v2104
  %v2106 = vrot.slane %v1731, 1
  %v2107 = vsel %vm2030, %v2104, %v2106
  %v2108 = vrot.slane %v1734, 1
  %v2109 = vsel %vm2030, %v2106, %v2108
  %v2110 = vrot.slane %v1737, 1
  %v2111 = vsel %vm2030, %v2108, %v2110
  %v2112 = vrot.slane %v1740, 1
  %v2113 = vsel %vm2030, %v2110, %v2112
  %v2114 = vrot.slane %v1743, 1
  %v2115 = vsel %vm2030, %v2112, %v2114
  %v2116 = vrot.slane %v1746, 1
  %v2117 = vsel %vm2030, %v2114, %v2116
  %v2118 = vrot.slane %v1749, 1
  %v2119 = vsel %vm2030, %v2116, %v2118
  %v2120 = vrot.slane %v1752, 1
  %v2121 = vsel %vm2030, %v2118, %v2120
  %v2122 = vrot.slane %v1755, 1
  %v2123 = vsel %vm2030, %v2120, %v2122
  %v2124 = vrot.slane %v1758, 1
  %v2125 = vsel %vm2030, %v2122, %v2124
  %v2126 = vrot.slane %v1761, 1
  %v2127 = vsel %vm2030, %v2124, %v2126
  %v2128 = vrot.slane %v1764, 1
  %v2129 = vsel %vm2030, %v2126, %v2128
  %v2130 = vrot.slane %v1767, 1
  %v2131 = vsel %vm2030, %v2128, %v2130
  %v2132 = vrot.slane %v1770, 1
  %v2133 = vsel %vm2030, %v2130, %v2132
  %v2134 = vrot.slane %v1773, 1
  %v2135 = vsel %vm2030, %v2132, %v2134
  %v2136 = vrot.slane %v1776, 1
  %v2137 = vsel %vm2030, %v2134, %v2136
  %v2138 = vrot.slane %v1779, 1
  %v2139 = vsel %vm2030, %v2136, %v2138
  %v2140 = vrot.slane %v1782, 1
  %v2141 = vsel %vm2030, %v2138, %v2140
  %v2142 = vrot.slane %v1785, 1
  %v2143 = vsel %vm2030, %v2140, %v2142
  %v2144 = vrot.slane %v1788, 1
  %v2145 = vsel %vm2030, %v2142, %v2144
  %v2146 = vrot.slane %v1791, 1
  %v2147 = vsel %vm2030, %v2144, %v2146
  %v2148 = vrot.slane %v1794, 1
  %v2149 = vsel %vm2030, %v2146, %v2148
  %v2150 = vrot.slane %v1797, 1
  %v2151 = vsel %vm2030, %v2148, %v2150
  %v2152 = vrot.slane %v1800, 1
  %v2153 = vsel %vm2030, %v2150, %v2152
  %v2154 = vrot.slane %v1803, 1
  %v2155 = vsel %vm2030, %v2152, %v2154
  %v2156 = vrot.slane %v1806, 1
  %v2157 = vsel %vm2030, %v2154, %v2156
  %v2158 = vrot.slane %v1809, 1
  %v2159 = vsel %vm2030, %v2156, %v2158
  %v2160 = vrot.slane %v1812, 1
  %v2161 = vsel %vm2030, %v2158, %v2160
  %v2162 = vrot.slane %v1815, 1
  %v2163 = vsel %vm2030, %v2160, %v2162
  %v2164 = vrot.slane %v1818, 1
  %v2165 = vsel %vm2030, %v2162, %v2164
  %v2166 = vrot.slane %v1821, 1
  %v2167 = vsel %vm2030, %v2164, %v2166
  %v2168 = vrot.slane %v1824, 1
  %v2169 = vsel %vm2030, %v2166, %v2168
  %v2170 = vrot.slane %v1827, 1
  %v2171 = vsel %vm2030, %v2168, %v2170
  %v2172 = vrot.slane %v1830, 1
  %v2173 = vsel %vm2030, %v2170, %v2172
  %v2174 = vrot.slane %v1833, 1
  %v2175 = vsel %vm2030, %v2172, %v2174
  %v2176 = vrot.slane %v1836, 1
  %v2177 = vsel %vm2030, %v2174, %v2176
  %v2178 = vrot.slane %v1839, 1
  %v2179 = vsel %vm2030, %v2176, %v2178
  %v2180 = vrot.slane %v1842, 1
  %v2181 = vsel %vm2030, %v2178, %v2180
  %v2182 = vrot.slane %v1845, 1
  %v2183 = vsel %vm2030, %v2180, %v2182
  %v2184 = vrot.slane %v1848, 1
  %v2185 = vsel %vm2030, %v2182, %v2184
  %v2186 = vrot.slane %v1851, 1
  %v2187 = vsel %vm2030, %v2184, %v2186
  %v2188 = vrot.slane %v1854, 1
  %v2189 = vsel %vm2030, %v2186, %v2188
  %v2190 = vrot.slane %v1857, 1
  %v2191 = vsel %vm2030, %v2188, %v2190
  %v2192 = vrot.slane %v1860, 1
  %v2193 = vsel %vm2030, %v2190, %v2192
  %v2194 = vrot.slane %v1863, 1
  %v2195 = vsel %vm2030, %v2192, %v2194
  %v2196 = vrot.slane %v1866, 1
  %v2197 = vsel %vm2030, %v2194, %v2196
  %v2198 = vrot.slane %v1869, 1
  %v2199 = vsel %vm2030, %v2196, %v2198
  %v2200 = vrot.slane %v1872, 1
  %v2201 = vsel %vm2030, %v2198, %v2200
  %v2202 = vrot.slane %v1875, 1
  %v2203 = vsel %vm2030, %v2200, %v2202
  %v2204 = vrot.slane %v1878, 1
  %v2205 = vsel %vm2030, %v2202, %v2204
  %v2206 = vrot.slane %v1881, 1
  %v2207 = vsel %vm2030, %v2204, %v2206
  %v2208 = vrot.slane %v1884, 1
  %v2209 = vsel %vm2030, %v2206, %v2208
  %v2210 = vrot.slane %v1887, 1
  %v2211 = vsel %vm2030, %v2208, %v2210
  %v2212 = vrot.slane %v1890, 1
  %v2213 = vsel %vm2030, %v2210, %v2212
  %v2214 = vrot.slane %v1893, 1
  %v2215 = vsel %vm2030, %v2212, %v2214
  %v2216 = vrot.slane %v1896, 1
  %v2217 = vsel %vm2030, %v2214, %v2216
  %v2218 = vrot.slane %v1899, 1
  %v2219 = vsel %vm2030, %v2216, %v2218
  %v2220 = vrot.slane %v1902, 1
  %v2221 = vsel %vm2030, %v2218, %v2220
  %v2222 = vrot.slane %v1905, 1
  %v2223 = vsel %vm2030, %v2220, %v2222
  %v2224 = vrot.slane %v1908, 1
  %v2225 = vsel %vm2030, %v2222, %v2224
  %v2226 = vrot.slane %v1911, 1
  %v2227 = vsel %vm2030, %v2224, %v2226
  %v2228 = vrot.slane %v1914, 1
  %v2229 = vsel %vm2030, %v2226, %v2228
  %v2230 = vrot.slane %v1917, 1
  %v2231 = vsel %vm2030, %v2228, %v2230
  %v2232 = vrot.slane %v1920, 1
  %v2233 = vsel %vm2030, %v2230, %v2232
  %v2336 = vadd.f32 %v1283, %v2033
  %v2337 = vadd.f32 %v1286, %v2035
  %v2338 = vadd.f32 %v1289, %v2037
  %v2339 = vadd.f32 %v1292, %v2039
  %v2340 = vadd.f32 %v1295, %v2041
  %v2341 = vadd.f32 %v1298, %v2043
  %v2342 = vadd.f32 %v1301, %v2045
  %v2343 = vadd.f32 %v1304, %v2047
  %v2344 = vadd.f32 %v1307, %v2049
  %v2345 = vadd.f32 %v1310, %v2051
  %v2346 = vadd.f32 %v1313, %v2053
  %v2347 = vadd.f32 %v1316, %v2055
  %v2348 = vadd.f32 %v1319, %v2057
  %v2349 = vadd.f32 %v1322, %v2059
  %v2350 = vadd.f32 %v1325, %v2061
  %v2351 = vadd.f32 %v1328, %v2063
  %v2352 = vadd.f32 %v1331, %v2065
  %v2353 = vadd.f32 %v1334, %v2067
  %v2354 = vadd.f32 %v1337, %v2069
  %v2355 = vadd.f32 %v1340, %v2071
  %v2356 = vadd.f32 %v1343, %v2073
  %v2357 = vadd.f32 %v1346, %v2075
  %v2358 = vadd.f32 %v1349, %v2077
  %v2359 = vadd.f32 %v1352, %v2079
  %v2360 = vadd.f32 %v1355, %v2081
  %v2361 = vadd.f32 %v1358, %v2083
  %v2362 = vadd.f32 %v1361, %v2085
  %v2363 = vadd.f32 %v1364, %v2087
  %v2364 = vadd.f32 %v1367, %v2089
  %v2365 = vadd.f32 %v1370, %v2091
  %v2366 = vadd.f32 %v1373, %v2093
  %v2367 = vadd.f32 %v1376, %v2095
  %v2368 = vadd.f32 %v1379, %v2097
  %v2369 = vadd.f32 %v1382, %v2099
  %v2370 = vadd.f32 %v1385, %v2101
  %v2371 = vadd.f32 %v1388, %v2103
  %v2372 = vadd.f32 %v1391, %v2105
  %v2373 = vadd.f32 %v1394, %v2107
  %v2374 = vadd.f32 %v1397, %v2109
  %v2375 = vadd.f32 %v1400, %v2111
  %v2376 = vadd.f32 %v1403, %v2113
  %v2377 = vadd.f32 %v1406, %v2115
  %v2378 = vadd.f32 %v1409, %v2117
  %v2379 = vadd.f32 %v1412, %v2119
  %v2380 = vadd.f32 %v1415, %v2121
  %v2381 = vadd.f32 %v1418, %v2123
  %v2382 = vadd.f32 %v1421, %v2125
  %v2383 = vadd.f32 %v1424, %v2127
  %v2384 = vadd.f32 %v1427, %v2129
  %v2385 = vadd.f32 %v1430, %v2131
  %v2386 = vadd.f32 %v1433, %v2133
  %v2387 = vadd.f32 %v1436, %v2135
  %v2388 = vadd.f32 %v1439, %v2137
  %v2389 = vadd.f32 %v1442, %v2139
  %v2390 = vadd.f32 %v1445, %v2141
  %v2391 = vadd.f32 %v1448, %v2143
  %v2392 = vadd.f32 %v1451, %v2145
  %v2393 = vadd.f32 %v1454, %v2147
  %v2394 = vadd.f32 %v1457, %v2149
  %v2395 = vadd.f32 %v1460, %v2151
  %v2396 = vadd.f32 %v1463, %v2153
  %v2397 = vadd.f32 %v1466, %v2155
  %v2398 = vadd.f32 %v1469, %v2157
  %v2399 = vadd.f32 %v1472, %v2159
  %v2400 = vadd.f32 %v1475, %v2161
  %v2401 = vadd.f32 %v1478, %v2163
  %v2402 = vadd.f32 %v1481, %v2165
  %v2403 = vadd.f32 %v1484, %v2167
  %v2404 = vadd.f32 %v1487, %v2169
  %v2405 = vadd.f32 %v1490, %v2171
  %v2406 = vadd.f32 %v1493, %v2173
  %v2407 = vadd.f32 %v1496, %v2175
  %v2408 = vadd.f32 %v1499, %v2177
  %v2409 = vadd.f32 %v1502, %v2179
  %v2410 = vadd.f32 %v1505, %v2181
  %v2411 = vadd.f32 %v1508, %v2183
  %v2412 = vadd.f32 %v1511, %v2185
  %v2413 = vadd.f32 %v1514, %v2187
  %v2414 = vadd.f32 %v1517, %v2189
  %v2415 = vadd.f32 %v1520, %v2191
  %v2416 = vadd.f32 %v1523, %v2193
  %v2417 = vadd.f32 %v1526, %v2195
  %v2418 = vadd.f32 %v1529, %v2197
  %v2419 = vadd.f32 %v1532, %v2199
  %v2420 = vadd.f32 %v1535, %v2201
  %v2421 = vadd.f32 %v1538, %v2203
  %v2422 = vadd.f32 %v1541, %v2205
  %v2423 = vadd.f32 %v1544, %v2207
  %v2424 = vadd.f32 %v1547, %v2209
  %v2425 = vadd.f32 %v1550, %v2211
  %v2426 = vadd.f32 %v1553, %v2213
  %v2427 = vadd.f32 %v1556, %v2215
  %v2428 = vadd.f32 %v1559, %v2217
  %v2429 = vadd.f32 %v1562, %v2219
  %v2430 = vadd.f32 %v1565, %v2221
  %v2431 = vadd.f32 %v1568, %v2223
  %v2432 = vadd.f32 %v1571, %v2225
  %v2433 = vadd.f32 %v1574, %v2227
  %v2434 = vadd.f32 %v1577, %v2229
  %v2435 = vadd.f32 %v1580, %v2231
  %v2436 = vadd.f32 %v1583, %v2233
  %v2437 = vadd.f32 %v1586, %v2232
  %s2438 = scalar_lea.vmem %s3, 64
  %v2439 = vld [vmem:[%s2438] sm:$0xff]
  %v2440 = vld [vmem:[%s2438 + $0x8] sm:$0xff]
  %v2441 = vld [vmem:[%s2438 + $0x10] sm:$0xff]
  %v2442 = vld [vmem:[%s2438 + $0x18] sm:$0xff]
  %2443 = vmatpush.msra.mxu0 0.0
  %2444 = vmatpush.msra.mxu0 0.0
  %2445 = vmatpush.msra.mxu0 0.0
  %2446 = vmatpush.msra.mxu0 0.0
  %2447 = vmatpush.msra.mxu0 0.0
  %2448 = vmatpush.msra.mxu0 0.0
  %2449 = vmatpush.msra.mxu0 0.0
  %2450 = vmatpush.msra.mxu0 0.0
  %2451 = vmatpush.msra.mxu0 0.0
  %2452 = vmatpush.msra.mxu0 0.0
  %2453 = vmatpush.msra.mxu0 0.0
  %2454 = vmatpush.msra.mxu0 0.0
  %2455 = vmatpush.msra.mxu0 %v2442
  %2456 = vmatpush.msra.mxu0 %v2441
  %2457 = vmatpush.msra.mxu0 %v2440
  %2458 = vmatpush.msra.mxu0 %v2439
  %2459 = vmatmul.f32.gmra.mxu0 %v951
  %v2460 = vpop.f32.mrf.mxu0
  %v2461 = vadd.f32 0.0, %v2460
  %2462 = vmatmul.f32.gmra.mxu0 %v954
  %v2463 = vpop.f32.mrf.mxu0
  %v2464 = vadd.f32 0.0, %v2463
  %2465 = vmatmul.f32.gmra.mxu0 %v957
  %v2466 = vpop.f32.mrf.mxu0
  %v2467 = vadd.f32 0.0, %v2466
  %2468 = vmatmul.f32.gmra.mxu0 %v960
  %v2469 = vpop.f32.mrf.mxu0
  %v2470 = vadd.f32 0.0, %v2469
  %2471 = vmatmul.f32.gmra.mxu0 %v963
  %v2472 = vpop.f32.mrf.mxu0
  %v2473 = vadd.f32 0.0, %v2472
  %2474 = vmatmul.f32.gmra.mxu0 %v966
  %v2475 = vpop.f32.mrf.mxu0
  %v2476 = vadd.f32 0.0, %v2475
  %2477 = vmatmul.f32.gmra.mxu0 %v969
  %v2478 = vpop.f32.mrf.mxu0
  %v2479 = vadd.f32 0.0, %v2478
  %2480 = vmatmul.f32.gmra.mxu0 %v972
  %v2481 = vpop.f32.mrf.mxu0
  %v2482 = vadd.f32 0.0, %v2481
  %2483 = vmatmul.f32.gmra.mxu0 %v975
  %v2484 = vpop.f32.mrf.mxu0
  %v2485 = vadd.f32 0.0, %v2484
  %2486 = vmatmul.f32.gmra.mxu0 %v978
  %v2487 = vpop.f32.mrf.mxu0
  %v2488 = vadd.f32 0.0, %v2487
  %2489 = vmatmul.f32.gmra.mxu0 %v981
  %v2490 = vpop.f32.mrf.mxu0
  %v2491 = vadd.f32 0.0, %v2490
  %2492 = vmatmul.f32.gmra.mxu0 %v984
  %v2493 = vpop.f32.mrf.mxu0
  %v2494 = vadd.f32 0.0, %v2493
  %2495 = vmatmul.f32.gmra.mxu0 %v987
  %v2496 = vpop.f32.mrf.mxu0
  %v2497 = vadd.f32 0.0, %v2496
  %2498 = vmatmul.f32.gmra.mxu0 %v990
  %v2499 = vpop.f32.mrf.mxu0
  %v2500 = vadd.f32 0.0, %v2499
  %2501 = vmatmul.f32.gmra.mxu0 %v993
  %v2502 = vpop.f32.mrf.mxu0
  %v2503 = vadd.f32 0.0, %v2502
  %2504 = vmatmul.f32.gmra.mxu0 %v996
  %v2505 = vpop.f32.mrf.mxu0
  %v2506 = vadd.f32 0.0, %v2505
  %2507 = vmatmul.f32.gmra.mxu0 %v999
  %v2508 = vpop.f32.mrf.mxu0
  %v2509 = vadd.f32 0.0, %v2508
  %2510 = vmatmul.f32.gmra.mxu0 %v1002
  %v2511 = vpop.f32.mrf.mxu0
  %v2512 = vadd.f32 0.0, %v2511
  %2513 = vmatmul.f32.gmra.mxu0 %v1005
  %v2514 = vpop.f32.mrf.mxu0
  %v2515 = vadd.f32 0.0, %v2514
  %2516 = vmatmul.f32.gmra.mxu0 %v1008
  %v2517 = vpop.f32.mrf.mxu0
  %v2518 = vadd.f32 0.0, %v2517
  %2519 = vmatmul.f32.gmra.mxu0 %v1011
  %v2520 = vpop.f32.mrf.mxu0
  %v2521 = vadd.f32 0.0, %v2520
  %2522 = vmatmul.f32.gmra.mxu0 %v1014
  %v2523 = vpop.f32.mrf.mxu0
  %v2524 = vadd.f32 0.0, %v2523
  %2525 = vmatmul.f32.gmra.mxu0 %v1017
  %v2526 = vpop.f32.mrf.mxu0
  %v2527 = vadd.f32 0.0, %v2526
  %2528 = vmatmul.f32.gmra.mxu0 %v1020
  %v2529 = vpop.f32.mrf.mxu0
  %v2530 = vadd.f32 0.0, %v2529
  %2531 = vmatmul.f32.gmra.mxu0 %v1023
  %v2532 = vpop.f32.mrf.mxu0
  %v2533 = vadd.f32 0.0, %v2532
  %2534 = vmatmul.f32.gmra.mxu0 %v1026
  %v2535 = vpop.f32.mrf.mxu0
  %v2536 = vadd.f32 0.0, %v2535
  %2537 = vmatmul.f32.gmra.mxu0 %v1029
  %v2538 = vpop.f32.mrf.mxu0
  %v2539 = vadd.f32 0.0, %v2538
  %2540 = vmatmul.f32.gmra.mxu0 %v1032
  %v2541 = vpop.f32.mrf.mxu0
  %v2542 = vadd.f32 0.0, %v2541
  %2543 = vmatmul.f32.gmra.mxu0 %v1035
  %v2544 = vpop.f32.mrf.mxu0
  %v2545 = vadd.f32 0.0, %v2544
  %2546 = vmatmul.f32.gmra.mxu0 %v1038
  %v2547 = vpop.f32.mrf.mxu0
  %v2548 = vadd.f32 0.0, %v2547
  %2549 = vmatmul.f32.gmra.mxu0 %v1041
  %v2550 = vpop.f32.mrf.mxu0
  %v2551 = vadd.f32 0.0, %v2550
  %2552 = vmatmul.f32.gmra.mxu0 %v1044
  %v2553 = vpop.f32.mrf.mxu0
  %v2554 = vadd.f32 0.0, %v2553
  %2555 = vmatmul.f32.gmra.mxu0 %v1047
  %v2556 = vpop.f32.mrf.mxu0
  %v2557 = vadd.f32 0.0, %v2556
  %2558 = vmatmul.f32.gmra.mxu0 %v1050
  %v2559 = vpop.f32.mrf.mxu0
  %v2560 = vadd.f32 0.0, %v2559
  %2561 = vmatmul.f32.gmra.mxu0 %v1053
  %v2562 = vpop.f32.mrf.mxu0
  %v2563 = vadd.f32 0.0, %v2562
  %2564 = vmatmul.f32.gmra.mxu0 %v1056
  %v2565 = vpop.f32.mrf.mxu0
  %v2566 = vadd.f32 0.0, %v2565
  %2567 = vmatmul.f32.gmra.mxu0 %v1059
  %v2568 = vpop.f32.mrf.mxu0
  %v2569 = vadd.f32 0.0, %v2568
  %2570 = vmatmul.f32.gmra.mxu0 %v1062
  %v2571 = vpop.f32.mrf.mxu0
  %v2572 = vadd.f32 0.0, %v2571
  %2573 = vmatmul.f32.gmra.mxu0 %v1065
  %v2574 = vpop.f32.mrf.mxu0
  %v2575 = vadd.f32 0.0, %v2574
  %2576 = vmatmul.f32.gmra.mxu0 %v1068
  %v2577 = vpop.f32.mrf.mxu0
  %v2578 = vadd.f32 0.0, %v2577
  %2579 = vmatmul.f32.gmra.mxu0 %v1071
  %v2580 = vpop.f32.mrf.mxu0
  %v2581 = vadd.f32 0.0, %v2580
  %2582 = vmatmul.f32.gmra.mxu0 %v1074
  %v2583 = vpop.f32.mrf.mxu0
  %v2584 = vadd.f32 0.0, %v2583
  %2585 = vmatmul.f32.gmra.mxu0 %v1077
  %v2586 = vpop.f32.mrf.mxu0
  %v2587 = vadd.f32 0.0, %v2586
  %2588 = vmatmul.f32.gmra.mxu0 %v1080
  %v2589 = vpop.f32.mrf.mxu0
  %v2590 = vadd.f32 0.0, %v2589
  %2591 = vmatmul.f32.gmra.mxu0 %v1083
  %v2592 = vpop.f32.mrf.mxu0
  %v2593 = vadd.f32 0.0, %v2592
  %2594 = vmatmul.f32.gmra.mxu0 %v1086
  %v2595 = vpop.f32.mrf.mxu0
  %v2596 = vadd.f32 0.0, %v2595
  %2597 = vmatmul.f32.gmra.mxu0 %v1089
  %v2598 = vpop.f32.mrf.mxu0
  %v2599 = vadd.f32 0.0, %v2598
  %2600 = vmatmul.f32.gmra.mxu0 %v1092
  %v2601 = vpop.f32.mrf.mxu0
  %v2602 = vadd.f32 0.0, %v2601
  %2603 = vmatmul.f32.gmra.mxu0 %v1095
  %v2604 = vpop.f32.mrf.mxu0
  %v2605 = vadd.f32 0.0, %v2604
  %2606 = vmatmul.f32.gmra.mxu0 %v1098
  %v2607 = vpop.f32.mrf.mxu0
  %v2608 = vadd.f32 0.0, %v2607
  %2609 = vmatmul.f32.gmra.mxu0 %v1101
  %v2610 = vpop.f32.mrf.mxu0
  %v2611 = vadd.f32 0.0, %v2610
  %2612 = vmatmul.f32.gmra.mxu0 %v1104
  %v2613 = vpop.f32.mrf.mxu0
  %v2614 = vadd.f32 0.0, %v2613
  %2615 = vmatmul.f32.gmra.mxu0 %v1107
  %v2616 = vpop.f32.mrf.mxu0
  %v2617 = vadd.f32 0.0, %v2616
  %2618 = vmatmul.f32.gmra.mxu0 %v1110
  %v2619 = vpop.f32.mrf.mxu0
  %v2620 = vadd.f32 0.0, %v2619
  %2621 = vmatmul.f32.gmra.mxu0 %v1113
  %v2622 = vpop.f32.mrf.mxu0
  %v2623 = vadd.f32 0.0, %v2622
  %2624 = vmatmul.f32.gmra.mxu0 %v1116
  %v2625 = vpop.f32.mrf.mxu0
  %v2626 = vadd.f32 0.0, %v2625
  %2627 = vmatmul.f32.gmra.mxu0 %v1119
  %v2628 = vpop.f32.mrf.mxu0
  %v2629 = vadd.f32 0.0, %v2628
  %2630 = vmatmul.f32.gmra.mxu0 %v1122
  %v2631 = vpop.f32.mrf.mxu0
  %v2632 = vadd.f32 0.0, %v2631
  %2633 = vmatmul.f32.gmra.mxu0 %v1125
  %v2634 = vpop.f32.mrf.mxu0
  %v2635 = vadd.f32 0.0, %v2634
  %2636 = vmatmul.f32.gmra.mxu0 %v1128
  %v2637 = vpop.f32.mrf.mxu0
  %v2638 = vadd.f32 0.0, %v2637
  %2639 = vmatmul.f32.gmra.mxu0 %v1131
  %v2640 = vpop.f32.mrf.mxu0
  %v2641 = vadd.f32 0.0, %v2640
  %2642 = vmatmul.f32.gmra.mxu0 %v1134
  %v2643 = vpop.f32.mrf.mxu0
  %v2644 = vadd.f32 0.0, %v2643
  %2645 = vmatmul.f32.gmra.mxu0 %v1137
  %v2646 = vpop.f32.mrf.mxu0
  %v2647 = vadd.f32 0.0, %v2646
  %2648 = vmatmul.f32.gmra.mxu0 %v1140
  %v2649 = vpop.f32.mrf.mxu0
  %v2650 = vadd.f32 0.0, %v2649
  %2651 = vmatmul.f32.gmra.mxu0 %v1143
  %v2652 = vpop.f32.mrf.mxu0
  %v2653 = vadd.f32 0.0, %v2652
  %2654 = vmatmul.f32.gmra.mxu0 %v1146
  %v2655 = vpop.f32.mrf.mxu0
  %v2656 = vadd.f32 0.0, %v2655
  %2657 = vmatmul.f32.gmra.mxu0 %v1149
  %v2658 = vpop.f32.mrf.mxu0
  %v2659 = vadd.f32 0.0, %v2658
  %2660 = vmatmul.f32.gmra.mxu0 %v1152
  %v2661 = vpop.f32.mrf.mxu0
  %v2662 = vadd.f32 0.0, %v2661
  %2663 = vmatmul.f32.gmra.mxu0 %v1155
  %v2664 = vpop.f32.mrf.mxu0
  %v2665 = vadd.f32 0.0, %v2664
  %2666 = vmatmul.f32.gmra.mxu0 %v1158
  %v2667 = vpop.f32.mrf.mxu0
  %v2668 = vadd.f32 0.0, %v2667
  %2669 = vmatmul.f32.gmra.mxu0 %v1161
  %v2670 = vpop.f32.mrf.mxu0
  %v2671 = vadd.f32 0.0, %v2670
  %2672 = vmatmul.f32.gmra.mxu0 %v1164
  %v2673 = vpop.f32.mrf.mxu0
  %v2674 = vadd.f32 0.0, %v2673
  %2675 = vmatmul.f32.gmra.mxu0 %v1167
  %v2676 = vpop.f32.mrf.mxu0
  %v2677 = vadd.f32 0.0, %v2676
  %2678 = vmatmul.f32.gmra.mxu0 %v1170
  %v2679 = vpop.f32.mrf.mxu0
  %v2680 = vadd.f32 0.0, %v2679
  %2681 = vmatmul.f32.gmra.mxu0 %v1173
  %v2682 = vpop.f32.mrf.mxu0
  %v2683 = vadd.f32 0.0, %v2682
  %2684 = vmatmul.f32.gmra.mxu0 %v1176
  %v2685 = vpop.f32.mrf.mxu0
  %v2686 = vadd.f32 0.0, %v2685
  %2687 = vmatmul.f32.gmra.mxu0 %v1179
  %v2688 = vpop.f32.mrf.mxu0
  %v2689 = vadd.f32 0.0, %v2688
  %2690 = vmatmul.f32.gmra.mxu0 %v1182
  %v2691 = vpop.f32.mrf.mxu0
  %v2692 = vadd.f32 0.0, %v2691
  %2693 = vmatmul.f32.gmra.mxu0 %v1185
  %v2694 = vpop.f32.mrf.mxu0
  %v2695 = vadd.f32 0.0, %v2694
  %2696 = vmatmul.f32.gmra.mxu0 %v1188
  %v2697 = vpop.f32.mrf.mxu0
  %v2698 = vadd.f32 0.0, %v2697
  %2699 = vmatmul.f32.gmra.mxu0 %v1191
  %v2700 = vpop.f32.mrf.mxu0
  %v2701 = vadd.f32 0.0, %v2700
  %2702 = vmatmul.f32.gmra.mxu0 %v1194
  %v2703 = vpop.f32.mrf.mxu0
  %v2704 = vadd.f32 0.0, %v2703
  %2705 = vmatmul.f32.gmra.mxu0 %v1197
  %v2706 = vpop.f32.mrf.mxu0
  %v2707 = vadd.f32 0.0, %v2706
  %2708 = vmatmul.f32.gmra.mxu0 %v1200
  %v2709 = vpop.f32.mrf.mxu0
  %v2710 = vadd.f32 0.0, %v2709
  %2711 = vmatmul.f32.gmra.mxu0 %v1203
  %v2712 = vpop.f32.mrf.mxu0
  %v2713 = vadd.f32 0.0, %v2712
  %2714 = vmatmul.f32.gmra.mxu0 %v1206
  %v2715 = vpop.f32.mrf.mxu0
  %v2716 = vadd.f32 0.0, %v2715
  %2717 = vmatmul.f32.gmra.mxu0 %v1209
  %v2718 = vpop.f32.mrf.mxu0
  %v2719 = vadd.f32 0.0, %v2718
  %2720 = vmatmul.f32.gmra.mxu0 %v1212
  %v2721 = vpop.f32.mrf.mxu0
  %v2722 = vadd.f32 0.0, %v2721
  %2723 = vmatmul.f32.gmra.mxu0 %v1215
  %v2724 = vpop.f32.mrf.mxu0
  %v2725 = vadd.f32 0.0, %v2724
  %2726 = vmatmul.f32.gmra.mxu0 %v1218
  %v2727 = vpop.f32.mrf.mxu0
  %v2728 = vadd.f32 0.0, %v2727
  %2729 = vmatmul.f32.gmra.mxu0 %v1221
  %v2730 = vpop.f32.mrf.mxu0
  %v2731 = vadd.f32 0.0, %v2730
  %2732 = vmatmul.f32.gmra.mxu0 %v1224
  %v2733 = vpop.f32.mrf.mxu0
  %v2734 = vadd.f32 0.0, %v2733
  %2735 = vmatmul.f32.gmra.mxu0 %v1227
  %v2736 = vpop.f32.mrf.mxu0
  %v2737 = vadd.f32 0.0, %v2736
  %2738 = vmatmul.f32.gmra.mxu0 %v1230
  %v2739 = vpop.f32.mrf.mxu0
  %v2740 = vadd.f32 0.0, %v2739
  %2741 = vmatmul.f32.gmra.mxu0 %v1233
  %v2742 = vpop.f32.mrf.mxu0
  %v2743 = vadd.f32 0.0, %v2742
  %2744 = vmatmul.f32.gmra.mxu0 %v1236
  %v2745 = vpop.f32.mrf.mxu0
  %v2746 = vadd.f32 0.0, %v2745
  %2747 = vmatmul.f32.gmra.mxu0 %v1239
  %v2748 = vpop.f32.mrf.mxu0
  %v2749 = vadd.f32 0.0, %v2748
  %2750 = vmatmul.f32.gmra.mxu0 %v1242
  %v2751 = vpop.f32.mrf.mxu0
  %v2752 = vadd.f32 0.0, %v2751
  %2753 = vmatmul.f32.gmra.mxu0 %v1245
  %v2754 = vpop.f32.mrf.mxu0
  %v2755 = vadd.f32 0.0, %v2754
  %2756 = vmatmul.f32.gmra.mxu0 %v1248
  %v2757 = vpop.f32.mrf.mxu0
  %v2758 = vadd.f32 0.0, %v2757
  %2759 = vmatmul.f32.gmra.mxu0 %v1251
  %v2760 = vpop.f32.mrf.mxu0
  %v2761 = vadd.f32 0.0, %v2760
  %2762 = vmatmul.f32.gmra.mxu0 %v1254
  %v2763 = vpop.f32.mrf.mxu0
  %v2764 = vadd.f32 0.0, %v2763
  %2765 = vmatmul.f32.gmra.mxu0 %v1257
  %v2766 = vpop.f32.mrf.mxu0
  %2767 = vmatmul.f32.gmra.mxu0 %v1260
  %v2768 = vpop.f32.mrf.mxu0
  %2769 = vmatmul.f32.gmra.mxu0 %v1263
  %v2770 = vpop.f32.mrf.mxu0
  %2771 = vdwg.mxu0
  %vm2874 = vcmask 1045504
  %v2875 = vrot.slane %v2461, 2
  %v2876 = vrot.slane %v2464, 2
  %v2877 = vsel %vm2874, %v2875, %v2876
  %v2878 = vrot.slane %v2467, 2
  %v2879 = vsel %vm2874, %v2876, %v2878
  %v2880 = vrot.slane %v2470, 2
  %v2881 = vsel %vm2874, %v2878, %v2880
  %v2882 = vrot.slane %v2473, 2
  %v2883 = vsel %vm2874, %v2880, %v2882
  %v2884 = vrot.slane %v2476, 2
  %v2885 = vsel %vm2874, %v2882, %v2884
  %v2886 = vrot.slane %v2479, 2
  %v2887 = vsel %vm2874, %v2884, %v2886
  %v2888 = vrot.slane %v2482, 2
  %v2889 = vsel %vm2874, %v2886, %v2888
  %v2890 = vrot.slane %v2485, 2
  %v2891 = vsel %vm2874, %v2888, %v2890
  %v2892 = vrot.slane %v2488, 2
  %v2893 = vsel %vm2874, %v2890, %v2892
  %v2894 = vrot.slane %v2491, 2
  %v2895 = vsel %vm2874, %v2892, %v2894
  %v2896 = vrot.slane %v2494, 2
  %v2897 = vsel %vm2874, %v2894, %v2896
  %v2898 = vrot.slane %v2497, 2
  %v2899 = vsel %vm2874, %v2896, %v2898
  %v2900 = vrot.slane %v2500, 2
  %v2901 = vsel %vm2874, %v2898, %v2900
  %v2902 = vrot.slane %v2503, 2
  %v2903 = vsel %vm2874, %v2900, %v2902
  %v2904 = vrot.slane %v2506, 2
  %v2905 = vsel %vm2874, %v2902, %v2904
  %v2906 = vrot.slane %v2509, 2
  %v2907 = vsel %vm2874, %v2904, %v2906
  %v2908 = vrot.slane %v2512, 2
  %v2909 = vsel %vm2874, %v2906, %v2908
  %v2910 = vrot.slane %v2515, 2
  %v2911 = vsel %vm2874, %v2908, %v2910
  %v2912 = vrot.slane %v2518, 2
  %v2913 = vsel %vm2874, %v2910, %v2912
  %v2914 = vrot.slane %v2521, 2
  %v2915 = vsel %vm2874, %v2912, %v2914
  %v2916 = vrot.slane %v2524, 2
  %v2917 = vsel %vm2874, %v2914, %v2916
  %v2918 = vrot.slane %v2527, 2
  %v2919 = vsel %vm2874, %v2916, %v2918
  %v2920 = vrot.slane %v2530, 2
  %v2921 = vsel %vm2874, %v2918, %v2920
  %v2922 = vrot.slane %v2533, 2
  %v2923 = vsel %vm2874, %v2920, %v2922
  %v2924 = vrot.slane %v2536, 2
  %v2925 = vsel %vm2874, %v2922, %v2924
  %v2926 = vrot.slane %v2539, 2
  %v2927 = vsel %vm2874, %v2924, %v2926
  %v2928 = vrot.slane %v2542, 2
  %v2929 = vsel %vm2874, %v2926, %v2928
  %v2930 = vrot.slane %v2545, 2
  %v2931 = vsel %vm2874, %v2928, %v2930
  %v2932 = vrot.slane %v2548, 2
  %v2933 = vsel %vm2874, %v2930, %v2932
  %v2934 = vrot.slane %v2551, 2
  %v2935 = vsel %vm2874, %v2932, %v2934
  %v2936 = vrot.slane %v2554, 2
  %v2937 = vsel %vm2874, %v2934, %v2936
  %v2938 = vrot.slane %v2557, 2
  %v2939 = vsel %vm2874, %v2936, %v2938
  %v2940 = vrot.slane %v2560, 2
  %v2941 = vsel %vm2874, %v2938, %v2940
  %v2942 = vrot.slane %v2563, 2
  %v2943 = vsel %vm2874, %v2940, %v2942
  %v2944 = vrot.slane %v2566, 2
  %v2945 = vsel %vm2874, %v2942, %v2944
  %v2946 = vrot.slane %v2569, 2
  %v2947 = vsel %vm2874, %v2944, %v2946
  %v2948 = vrot.slane %v2572, 2
  %v2949 = vsel %vm2874, %v2946, %v2948
  %v2950 = vrot.slane %v2575, 2
  %v2951 = vsel %vm2874, %v2948, %v2950
  %v2952 = vrot.slane %v2578, 2
  %v2953 = vsel %vm2874, %v2950, %v2952
  %v2954 = vrot.slane %v2581, 2
  %v2955 = vsel %vm2874, %v2952, %v2954
  %v2956 = vrot.slane %v2584, 2
  %v2957 = vsel %vm2874, %v2954, %v2956
  %v2958 = vrot.slane %v2587, 2
  %v2959 = vsel %vm2874, %v2956, %v2958
  %v2960 = vrot.slane %v2590, 2
  %v2961 = vsel %vm2874, %v2958, %v2960
  %v2962 = vrot.slane %v2593, 2
  %v2963 = vsel %vm2874, %v2960, %v2962
  %v2964 = vrot.slane %v2596, 2
  %v2965 = vsel %vm2874, %v2962, %v2964
  %v2966 = vrot.slane %v2599, 2
  %v2967 = vsel %vm2874, %v2964, %v2966
  %v2968 = vrot.slane %v2602, 2
  %v2969 = vsel %vm2874, %v2966, %v2968
  %v2970 = vrot.slane %v2605, 2
  %v2971 = vsel %vm2874, %v2968, %v2970
  %v2972 = vrot.slane %v2608, 2
  %v2973 = vsel %vm2874, %v2970, %v2972
  %v2974 = vrot.slane %v2611, 2
  %v2975 = vsel %vm2874, %v2972, %v2974
  %v2976 = vrot.slane %v2614, 2
  %v2977 = vsel %vm2874, %v2974, %v2976
  %v2978 = vrot.slane %v2617, 2
  %v2979 = vsel %vm2874, %v2976, %v2978
  %v2980 = vrot.slane %v2620, 2
  %v2981 = vsel %vm2874, %v2978, %v2980
  %v2982 = vrot.slane %v2623, 2
  %v2983 = vsel %vm2874, %v2980, %v2982
  %v2984 = vrot.slane %v2626, 2
  %v2985 = vsel %vm2874, %v2982, %v2984
  %v2986 = vrot.slane %v2629, 2
  %v2987 = vsel %vm2874, %v2984, %v2986
  %v2988 = vrot.slane %v2632, 2
  %v2989 = vsel %vm2874, %v2986, %v2988
  %v2990 = vrot.slane %v2635, 2
  %v2991 = vsel %vm2874, %v2988, %v2990
  %v2992 = vrot.slane %v2638, 2
  %v2993 = vsel %vm2874, %v2990, %v2992
  %v2994 = vrot.slane %v2641, 2
  %v2995 = vsel %vm2874, %v2992, %v2994
  %v2996 = vrot.slane %v2644, 2
  %v2997 = vsel %vm2874, %v2994, %v2996
  %v2998 = vrot.slane %v2647, 2
  %v2999 = vsel %vm2874, %v2996, %v2998
  %v3000 = vrot.slane %v2650, 2
  %v3001 = vsel %vm2874, %v2998, %v3000
  %v3002 = vrot.slane %v2653, 2
  %v3003 = vsel %vm2874, %v3000, %v3002
  %v3004 = vrot.slane %v2656, 2
  %v3005 = vsel %vm2874, %v3002, %v3004
  %v3006 = vrot.slane %v2659, 2
  %v3007 = vsel %vm2874, %v3004, %v3006
  %v3008 = vrot.slane %v2662, 2
  %v3009 = vsel %vm2874, %v3006, %v3008
  %v3010 = vrot.slane %v2665, 2
  %v3011 = vsel %vm2874, %v3008, %v3010
  %v3012 = vrot.slane %v2668, 2
  %v3013 = vsel %vm2874, %v3010, %v3012
  %v3014 = vrot.slane %v2671, 2
  %v3015 = vsel %vm2874, %v3012, %v3014
  %v3016 = vrot.slane %v2674, 2
  %v3017 = vsel %vm2874, %v3014, %v3016
  %v3018 = vrot.slane %v2677, 2
  %v3019 = vsel %vm2874, %v3016, %v3018
  %v3020 = vrot.slane %v2680, 2
  %v3021 = vsel %vm2874, %v3018, %v3020
  %v3022 = vrot.slane %v2683, 2
  %v3023 = vsel %vm2874, %v3020, %v3022
  %v3024 = vrot.slane %v2686, 2
  %v3025 = vsel %vm2874, %v3022, %v3024
  %v3026 = vrot.slane %v2689, 2
  %v3027 = vsel %vm2874, %v3024, %v3026
  %v3028 = vrot.slane %v2692, 2
  %v3029 = vsel %vm2874, %v3026, %v3028
  %v3030 = vrot.slane %v2695, 2
  %v3031 = vsel %vm2874, %v3028, %v3030
  %v3032 = vrot.slane %v2698, 2
  %v3033 = vsel %vm2874, %v3030, %v3032
  %v3034 = vrot.slane %v2701, 2
  %v3035 = vsel %vm2874, %v3032, %v3034
  %v3036 = vrot.slane %v2704, 2
  %v3037 = vsel %vm2874, %v3034, %v3036
  %v3038 = vrot.slane %v2707, 2
  %v3039 = vsel %vm2874, %v3036, %v3038
  %v3040 = vrot.slane %v2710, 2
  %v3041 = vsel %vm2874, %v3038, %v3040
  %v3042 = vrot.slane %v2713, 2
  %v3043 = vsel %vm2874, %v3040, %v3042
  %v3044 = vrot.slane %v2716, 2
  %v3045 = vsel %vm2874, %v3042, %v3044
  %v3046 = vrot.slane %v2719, 2
  %v3047 = vsel %vm2874, %v3044, %v3046
  %v3048 = vrot.slane %v2722, 2
  %v3049 = vsel %vm2874, %v3046, %v3048
  %v3050 = vrot.slane %v2725, 2
  %v3051 = vsel %vm2874, %v3048, %v3050
  %v3052 = vrot.slane %v2728, 2
  %v3053 = vsel %vm2874, %v3050, %v3052
  %v3054 = vrot.slane %v2731, 2
  %v3055 = vsel %vm2874, %v3052, %v3054
  %v3056 = vrot.slane %v2734, 2
  %v3057 = vsel %vm2874, %v3054, %v3056
  %v3058 = vrot.slane %v2737, 2
  %v3059 = vsel %vm2874, %v3056, %v3058
  %v3060 = vrot.slane %v2740, 2
  %v3061 = vsel %vm2874, %v3058, %v3060
  %v3062 = vrot.slane %v2743, 2
  %v3063 = vsel %vm2874, %v3060, %v3062
  %v3064 = vrot.slane %v2746, 2
  %v3065 = vsel %vm2874, %v3062, %v3064
  %v3066 = vrot.slane %v2749, 2
  %v3067 = vsel %vm2874, %v3064, %v3066
  %v3068 = vrot.slane %v2752, 2
  %v3069 = vsel %vm2874, %v3066, %v3068
  %v3070 = vrot.slane %v2755, 2
  %v3071 = vsel %vm2874, %v3068, %v3070
  %v3072 = vrot.slane %v2758, 2
  %v3073 = vsel %vm2874, %v3070, %v3072
  %v3074 = vrot.slane %v2761, 2
  %v3075 = vsel %vm2874, %v3072, %v3074
  %v3076 = vrot.slane %v2764, 2
  %v3077 = vsel %vm2874, %v3074, %v3076
  %v3180 = vadd.f32 %v2336, %v2877
  %v3181 = vadd.f32 %v2337, %v2879
  %v3182 = vadd.f32 %v2338, %v2881
  %v3183 = vadd.f32 %v2339, %v2883
  %v3184 = vadd.f32 %v2340, %v2885
  %v3185 = vadd.f32 %v2341, %v2887
  %v3186 = vadd.f32 %v2342, %v2889
  %v3187 = vadd.f32 %v2343, %v2891
  %v3188 = vadd.f32 %v2344, %v2893
  %v3189 = vadd.f32 %v2345, %v2895
  %v3190 = vadd.f32 %v2346, %v2897
  %v3191 = vadd.f32 %v2347, %v2899
  %v3192 = vadd.f32 %v2348, %v2901
  %v3193 = vadd.f32 %v2349, %v2903
  %v3194 = vadd.f32 %v2350, %v2905
  %v3195 = vadd.f32 %v2351, %v2907
  %v3196 = vadd.f32 %v2352, %v2909
  %v3197 = vadd.f32 %v2353, %v2911
  %v3198 = vadd.f32 %v2354, %v2913
  %v3199 = vadd.f32 %v2355, %v2915
  %v3200 = vadd.f32 %v2356, %v2917
  %v3201 = vadd.f32 %v2357, %v2919
  %v3202 = vadd.f32 %v2358, %v2921
  %v3203 = vadd.f32 %v2359, %v2923
  %v3204 = vadd.f32 %v2360, %v2925
  %v3205 = vadd.f32 %v2361, %v2927
  %v3206 = vadd.f32 %v2362, %v2929
  %v3207 = vadd.f32 %v2363, %v2931
  %v3208 = vadd.f32 %v2364, %v2933
  %v3209 = vadd.f32 %v2365, %v2935
  %v3210 = vadd.f32 %v2366, %v2937
  %v3211 = vadd.f32 %v2367, %v2939
  %v3212 = vadd.f32 %v2368, %v2941
  %v3213 = vadd.f32 %v2369, %v2943
  %v3214 = vadd.f32 %v2370, %v2945
  %v3215 = vadd.f32 %v2371, %v2947
  %v3216 = vadd.f32 %v2372, %v2949
  %v3217 = vadd.f32 %v2373, %v2951
  %v3218 = vadd.f32 %v2374, %v2953
  %v3219 = vadd.f32 %v2375, %v2955
  %v3220 = vadd.f32 %v2376, %v2957
  %v3221 = vadd.f32 %v2377, %v2959
  %v3222 = vadd.f32 %v2378, %v2961
  %v3223 = vadd.f32 %v2379, %v2963
  %v3224 = vadd.f32 %v2380, %v2965
  %v3225 = vadd.f32 %v2381, %v2967
  %v3226 = vadd.f32 %v2382, %v2969
  %v3227 = vadd.f32 %v2383, %v2971
  %v3228 = vadd.f32 %v2384, %v2973
  %v3229 = vadd.f32 %v2385, %v2975
  %v3230 = vadd.f32 %v2386, %v2977
  %v3231 = vadd.f32 %v2387, %v2979
  %v3232 = vadd.f32 %v2388, %v2981
  %v3233 = vadd.f32 %v2389, %v2983
  %v3234 = vadd.f32 %v2390, %v2985
  %v3235 = vadd.f32 %v2391, %v2987
  %v3236 = vadd.f32 %v2392, %v2989
  %v3237 = vadd.f32 %v2393, %v2991
  %v3238 = vadd.f32 %v2394, %v2993
  %v3239 = vadd.f32 %v2395, %v2995
  %v3240 = vadd.f32 %v2396, %v2997
  %v3241 = vadd.f32 %v2397, %v2999
  %v3242 = vadd.f32 %v2398, %v3001
  %v3243 = vadd.f32 %v2399, %v3003
  %v3244 = vadd.f32 %v2400, %v3005
  %v3245 = vadd.f32 %v2401, %v3007
  %v3246 = vadd.f32 %v2402, %v3009
  %v3247 = vadd.f32 %v2403, %v3011
  %v3248 = vadd.f32 %v2404, %v3013
  %v3249 = vadd.f32 %v2405, %v3015
  %v3250 = vadd.f32 %v2406, %v3017
  %v3251 = vadd.f32 %v2407, %v3019
  %v3252 = vadd.f32 %v2408, %v3021
  %v3253 = vadd.f32 %v2409, %v3023
  %v3254 = vadd.f32 %v2410, %v3025
  %v3255 = vadd.f32 %v2411, %v3027
  %v3256 = vadd.f32 %v2412, %v3029
  %v3257 = vadd.f32 %v2413, %v3031
  %v3258 = vadd.f32 %v2414, %v3033
  %v3259 = vadd.f32 %v2415, %v3035
  %v3260 = vadd.f32 %v2416, %v3037
  %v3261 = vadd.f32 %v2417, %v3039
  %v3262 = vadd.f32 %v2418, %v3041
  %v3263 = vadd.f32 %v2419, %v3043
  %v3264 = vadd.f32 %v2420, %v3045
  %v3265 = vadd.f32 %v2421, %v3047
  %v3266 = vadd.f32 %v2422, %v3049
  %v3267 = vadd.f32 %v2423, %v3051
  %v3268 = vadd.f32 %v2424, %v3053
  %v3269 = vadd.f32 %v2425, %v3055
  %v3270 = vadd.f32 %v2426, %v3057
  %v3271 = vadd.f32 %v2427, %v3059
  %v3272 = vadd.f32 %v2428, %v3061
  %v3273 = vadd.f32 %v2429, %v3063
  %v3274 = vadd.f32 %v2430, %v3065
  %v3275 = vadd.f32 %v2431, %v3067
  %v3276 = vadd.f32 %v2432, %v3069
  %v3277 = vadd.f32 %v2433, %v3071
  %v3278 = vadd.f32 %v2434, %v3073
  %v3279 = vadd.f32 %v2435, %v3075
  %v3280 = vadd.f32 %v2436, %v3077
  %v3281 = vadd.f32 %v2437, %v3076
  %s3282 = scalar_lea.vmem %s3, 96
  %v3283 = vld [vmem:[%s3282] sm:$0xff]
  %v3284 = vld [vmem:[%s3282 + $0x8] sm:$0xff]
  %v3285 = vld [vmem:[%s3282 + $0x10] sm:$0xff]
  %v3286 = vld [vmem:[%s3282 + $0x18] sm:$0xff]
  %3287 = vmatpush.msra.mxu0 0.0
  %3288 = vmatpush.msra.mxu0 0.0
  %3289 = vmatpush.msra.mxu0 0.0
  %3290 = vmatpush.msra.mxu0 0.0
  %3291 = vmatpush.msra.mxu0 0.0
  %3292 = vmatpush.msra.mxu0 0.0
  %3293 = vmatpush.msra.mxu0 0.0
  %3294 = vmatpush.msra.mxu0 0.0
  %3295 = vmatpush.msra.mxu0 0.0
  %3296 = vmatpush.msra.mxu0 0.0
  %3297 = vmatpush.msra.mxu0 0.0
  %3298 = vmatpush.msra.mxu0 0.0
  %3299 = vmatpush.msra.mxu0 %v3286
  %3300 = vmatpush.msra.mxu0 %v3285
  %3301 = vmatpush.msra.mxu0 %v3284
  %3302 = vmatpush.msra.mxu0 %v3283
  %3303 = vmatmul.f32.gmra.mxu0 %v951
  %v3304 = vpop.f32.mrf.mxu0
  %3305 = vmatmul.f32.gmra.mxu0 %v954
  %v3306 = vpop.f32.mrf.mxu0
  %v3307 = vadd.f32 0.0, %v3306
  %3308 = vmatmul.f32.gmra.mxu0 %v957
  %v3309 = vpop.f32.mrf.mxu0
  %v3310 = vadd.f32 0.0, %v3309
  %3311 = vmatmul.f32.gmra.mxu0 %v960
  %v3312 = vpop.f32.mrf.mxu0
  %v3313 = vadd.f32 0.0, %v3312
  %3314 = vmatmul.f32.gmra.mxu0 %v963
  %v3315 = vpop.f32.mrf.mxu0
  %v3316 = vadd.f32 0.0, %v3315
  %3317 = vmatmul.f32.gmra.mxu0 %v966
  %v3318 = vpop.f32.mrf.mxu0
  %v3319 = vadd.f32 0.0, %v3318
  %3320 = vmatmul.f32.gmra.mxu0 %v969
  %v3321 = vpop.f32.mrf.mxu0
  %v3322 = vadd.f32 0.0, %v3321
  %3323 = vmatmul.f32.gmra.mxu0 %v972
  %v3324 = vpop.f32.mrf.mxu0
  %v3325 = vadd.f32 0.0, %v3324
  %3326 = vmatmul.f32.gmra.mxu0 %v975
  %v3327 = vpop.f32.mrf.mxu0
  %v3328 = vadd.f32 0.0, %v3327
  %3329 = vmatmul.f32.gmra.mxu0 %v978
  %v3330 = vpop.f32.mrf.mxu0
  %v3331 = vadd.f32 0.0, %v3330
  %3332 = vmatmul.f32.gmra.mxu0 %v981
  %v3333 = vpop.f32.mrf.mxu0
  %v3334 = vadd.f32 0.0, %v3333
  %3335 = vmatmul.f32.gmra.mxu0 %v984
  %v3336 = vpop.f32.mrf.mxu0
  %v3337 = vadd.f32 0.0, %v3336
  %3338 = vmatmul.f32.gmra.mxu0 %v987
  %v3339 = vpop.f32.mrf.mxu0
  %v3340 = vadd.f32 0.0, %v3339
  %3341 = vmatmul.f32.gmra.mxu0 %v990
  %v3342 = vpop.f32.mrf.mxu0
  %v3343 = vadd.f32 0.0, %v3342
  %3344 = vmatmul.f32.gmra.mxu0 %v993
  %v3345 = vpop.f32.mrf.mxu0
  %v3346 = vadd.f32 0.0, %v3345
  %3347 = vmatmul.f32.gmra.mxu0 %v996
  %v3348 = vpop.f32.mrf.mxu0
  %v3349 = vadd.f32 0.0, %v3348
  %3350 = vmatmul.f32.gmra.mxu0 %v999
  %v3351 = vpop.f32.mrf.mxu0
  %v3352 = vadd.f32 0.0, %v3351
  %3353 = vmatmul.f32.gmra.mxu0 %v1002
  %v3354 = vpop.f32.mrf.mxu0
  %v3355 = vadd.f32 0.0, %v3354
  %3356 = vmatmul.f32.gmra.mxu0 %v1005
  %v3357 = vpop.f32.mrf.mxu0
  %v3358 = vadd.f32 0.0, %v3357
  %3359 = vmatmul.f32.gmra.mxu0 %v1008
  %v3360 = vpop.f32.mrf.mxu0
  %v3361 = vadd.f32 0.0, %v3360
  %3362 = vmatmul.f32.gmra.mxu0 %v1011
  %v3363 = vpop.f32.mrf.mxu0
  %v3364 = vadd.f32 0.0, %v3363
  %3365 = vmatmul.f32.gmra.mxu0 %v1014
  %v3366 = vpop.f32.mrf.mxu0
  %v3367 = vadd.f32 0.0, %v3366
  %3368 = vmatmul.f32.gmra.mxu0 %v1017
  %v3369 = vpop.f32.mrf.mxu0
  %v3370 = vadd.f32 0.0, %v3369
  %3371 = vmatmul.f32.gmra.mxu0 %v1020
  %v3372 = vpop.f32.mrf.mxu0
  %v3373 = vadd.f32 0.0, %v3372
  %3374 = vmatmul.f32.gmra.mxu0 %v1023
  %v3375 = vpop.f32.mrf.mxu0
  %v3376 = vadd.f32 0.0, %v3375
  %3377 = vmatmul.f32.gmra.mxu0 %v1026
  %v3378 = vpop.f32.mrf.mxu0
  %v3379 = vadd.f32 0.0, %v3378
  %3380 = vmatmul.f32.gmra.mxu0 %v1029
  %v3381 = vpop.f32.mrf.mxu0
  %v3382 = vadd.f32 0.0, %v3381
  %3383 = vmatmul.f32.gmra.mxu0 %v1032
  %v3384 = vpop.f32.mrf.mxu0
  %v3385 = vadd.f32 0.0, %v3384
  %3386 = vmatmul.f32.gmra.mxu0 %v1035
  %v3387 = vpop.f32.mrf.mxu0
  %v3388 = vadd.f32 0.0, %v3387
  %3389 = vmatmul.f32.gmra.mxu0 %v1038
  %v3390 = vpop.f32.mrf.mxu0
  %v3391 = vadd.f32 0.0, %v3390
  %3392 = vmatmul.f32.gmra.mxu0 %v1041
  %v3393 = vpop.f32.mrf.mxu0
  %v3394 = vadd.f32 0.0, %v3393
  %3395 = vmatmul.f32.gmra.mxu0 %v1044
  %v3396 = vpop.f32.mrf.mxu0
  %v3397 = vadd.f32 0.0, %v3396
  %3398 = vmatmul.f32.gmra.mxu0 %v1047
  %v3399 = vpop.f32.mrf.mxu0
  %v3400 = vadd.f32 0.0, %v3399
  %3401 = vmatmul.f32.gmra.mxu0 %v1050
  %v3402 = vpop.f32.mrf.mxu0
  %v3403 = vadd.f32 0.0, %v3402
  %3404 = vmatmul.f32.gmra.mxu0 %v1053
  %v3405 = vpop.f32.mrf.mxu0
  %v3406 = vadd.f32 0.0, %v3405
  %3407 = vmatmul.f32.gmra.mxu0 %v1056
  %v3408 = vpop.f32.mrf.mxu0
  %v3409 = vadd.f32 0.0, %v3408
  %3410 = vmatmul.f32.gmra.mxu0 %v1059
  %v3411 = vpop.f32.mrf.mxu0
  %v3412 = vadd.f32 0.0, %v3411
  %3413 = vmatmul.f32.gmra.mxu0 %v1062
  %v3414 = vpop.f32.mrf.mxu0
  %v3415 = vadd.f32 0.0, %v3414
  %3416 = vmatmul.f32.gmra.mxu0 %v1065
  %v3417 = vpop.f32.mrf.mxu0
  %v3418 = vadd.f32 0.0, %v3417
  %3419 = vmatmul.f32.gmra.mxu0 %v1068
  %v3420 = vpop.f32.mrf.mxu0
  %v3421 = vadd.f32 0.0, %v3420
  %3422 = vmatmul.f32.gmra.mxu0 %v1071
  %v3423 = vpop.f32.mrf.mxu0
  %v3424 = vadd.f32 0.0, %v3423
  %3425 = vmatmul.f32.gmra.mxu0 %v1074
  %v3426 = vpop.f32.mrf.mxu0
  %v3427 = vadd.f32 0.0, %v3426
  %3428 = vmatmul.f32.gmra.mxu0 %v1077
  %v3429 = vpop.f32.mrf.mxu0
  %v3430 = vadd.f32 0.0, %v3429
  %3431 = vmatmul.f32.gmra.mxu0 %v1080
  %v3432 = vpop.f32.mrf.mxu0
  %v3433 = vadd.f32 0.0, %v3432
  %3434 = vmatmul.f32.gmra.mxu0 %v1083
  %v3435 = vpop.f32.mrf.mxu0
  %v3436 = vadd.f32 0.0, %v3435
  %3437 = vmatmul.f32.gmra.mxu0 %v1086
  %v3438 = vpop.f32.mrf.mxu0
  %v3439 = vadd.f32 0.0, %v3438
  %3440 = vmatmul.f32.gmra.mxu0 %v1089
  %v3441 = vpop.f32.mrf.mxu0
  %v3442 = vadd.f32 0.0, %v3441
  %3443 = vmatmul.f32.gmra.mxu0 %v1092
  %v3444 = vpop.f32.mrf.mxu0
  %v3445 = vadd.f32 0.0, %v3444
  %3446 = vmatmul.f32.gmra.mxu0 %v1095
  %v3447 = vpop.f32.mrf.mxu0
  %v3448 = vadd.f32 0.0, %v3447
  %3449 = vmatmul.f32.gmra.mxu0 %v1098
  %v3450 = vpop.f32.mrf.mxu0
  %v3451 = vadd.f32 0.0, %v3450
  %3452 = vmatmul.f32.gmra.mxu0 %v1101
  %v3453 = vpop.f32.mrf.mxu0
  %v3454 = vadd.f32 0.0, %v3453
  %3455 = vmatmul.f32.gmra.mxu0 %v1104
  %v3456 = vpop.f32.mrf.mxu0
  %v3457 = vadd.f32 0.0, %v3456
  %3458 = vmatmul.f32.gmra.mxu0 %v1107
  %v3459 = vpop.f32.mrf.mxu0
  %v3460 = vadd.f32 0.0, %v3459
  %3461 = vmatmul.f32.gmra.mxu0 %v1110
  %v3462 = vpop.f32.mrf.mxu0
  %v3463 = vadd.f32 0.0, %v3462
  %3464 = vmatmul.f32.gmra.mxu0 %v1113
  %v3465 = vpop.f32.mrf.mxu0
  %v3466 = vadd.f32 0.0, %v3465
  %3467 = vmatmul.f32.gmra.mxu0 %v1116
  %v3468 = vpop.f32.mrf.mxu0
  %v3469 = vadd.f32 0.0, %v3468
  %3470 = vmatmul.f32.gmra.mxu0 %v1119
  %v3471 = vpop.f32.mrf.mxu0
  %v3472 = vadd.f32 0.0, %v3471
  %3473 = vmatmul.f32.gmra.mxu0 %v1122
  %v3474 = vpop.f32.mrf.mxu0
  %v3475 = vadd.f32 0.0, %v3474
  %3476 = vmatmul.f32.gmra.mxu0 %v1125
  %v3477 = vpop.f32.mrf.mxu0
  %v3478 = vadd.f32 0.0, %v3477
  %3479 = vmatmul.f32.gmra.mxu0 %v1128
  %v3480 = vpop.f32.mrf.mxu0
  %v3481 = vadd.f32 0.0, %v3480
  %3482 = vmatmul.f32.gmra.mxu0 %v1131
  %v3483 = vpop.f32.mrf.mxu0
  %v3484 = vadd.f32 0.0, %v3483
  %3485 = vmatmul.f32.gmra.mxu0 %v1134
  %v3486 = vpop.f32.mrf.mxu0
  %v3487 = vadd.f32 0.0, %v3486
  %3488 = vmatmul.f32.gmra.mxu0 %v1137
  %v3489 = vpop.f32.mrf.mxu0
  %v3490 = vadd.f32 0.0, %v3489
  %3491 = vmatmul.f32.gmra.mxu0 %v1140
  %v3492 = vpop.f32.mrf.mxu0
  %v3493 = vadd.f32 0.0, %v3492
  %3494 = vmatmul.f32.gmra.mxu0 %v1143
  %v3495 = vpop.f32.mrf.mxu0
  %v3496 = vadd.f32 0.0, %v3495
  %3497 = vmatmul.f32.gmra.mxu0 %v1146
  %v3498 = vpop.f32.mrf.mxu0
  %v3499 = vadd.f32 0.0, %v3498
  %3500 = vmatmul.f32.gmra.mxu0 %v1149
  %v3501 = vpop.f32.mrf.mxu0
  %v3502 = vadd.f32 0.0, %v3501
  %3503 = vmatmul.f32.gmra.mxu0 %v1152
  %v3504 = vpop.f32.mrf.mxu0
  %v3505 = vadd.f32 0.0, %v3504
  %3506 = vmatmul.f32.gmra.mxu0 %v1155
  %v3507 = vpop.f32.mrf.mxu0
  %v3508 = vadd.f32 0.0, %v3507
  %3509 = vmatmul.f32.gmra.mxu0 %v1158
  %v3510 = vpop.f32.mrf.mxu0
  %v3511 = vadd.f32 0.0, %v3510
  %3512 = vmatmul.f32.gmra.mxu0 %v1161
  %v3513 = vpop.f32.mrf.mxu0
  %v3514 = vadd.f32 0.0, %v3513
  %3515 = vmatmul.f32.gmra.mxu0 %v1164
  %v3516 = vpop.f32.mrf.mxu0
  %v3517 = vadd.f32 0.0, %v3516
  %3518 = vmatmul.f32.gmra.mxu0 %v1167
  %v3519 = vpop.f32.mrf.mxu0
  %v3520 = vadd.f32 0.0, %v3519
  %3521 = vmatmul.f32.gmra.mxu0 %v1170
  %v3522 = vpop.f32.mrf.mxu0
  %v3523 = vadd.f32 0.0, %v3522
  %3524 = vmatmul.f32.gmra.mxu0 %v1173
  %v3525 = vpop.f32.mrf.mxu0
  %v3526 = vadd.f32 0.0, %v3525
  %3527 = vmatmul.f32.gmra.mxu0 %v1176
  %v3528 = vpop.f32.mrf.mxu0
  %v3529 = vadd.f32 0.0, %v3528
  %3530 = vmatmul.f32.gmra.mxu0 %v1179
  %v3531 = vpop.f32.mrf.mxu0
  %v3532 = vadd.f32 0.0, %v3531
  %3533 = vmatmul.f32.gmra.mxu0 %v1182
  %v3534 = vpop.f32.mrf.mxu0
  %v3535 = vadd.f32 0.0, %v3534
  %3536 = vmatmul.f32.gmra.mxu0 %v1185
  %v3537 = vpop.f32.mrf.mxu0
  %v3538 = vadd.f32 0.0, %v3537
  %3539 = vmatmul.f32.gmra.mxu0 %v1188
  %v3540 = vpop.f32.mrf.mxu0
  %v3541 = vadd.f32 0.0, %v3540
  %3542 = vmatmul.f32.gmra.mxu0 %v1191
  %v3543 = vpop.f32.mrf.mxu0
  %v3544 = vadd.f32 0.0, %v3543
  %3545 = vmatmul.f32.gmra.mxu0 %v1194
  %v3546 = vpop.f32.mrf.mxu0
  %v3547 = vadd.f32 0.0, %v3546
  %3548 = vmatmul.f32.gmra.mxu0 %v1197
  %v3549 = vpop.f32.mrf.mxu0
  %v3550 = vadd.f32 0.0, %v3549
  %3551 = vmatmul.f32.gmra.mxu0 %v1200
  %v3552 = vpop.f32.mrf.mxu0
  %v3553 = vadd.f32 0.0, %v3552
  %3554 = vmatmul.f32.gmra.mxu0 %v1203
  %v3555 = vpop.f32.mrf.mxu0
  %v3556 = vadd.f32 0.0, %v3555
  %3557 = vmatmul.f32.gmra.mxu0 %v1206
  %v3558 = vpop.f32.mrf.mxu0
  %v3559 = vadd.f32 0.0, %v3558
  %3560 = vmatmul.f32.gmra.mxu0 %v1209
  %v3561 = vpop.f32.mrf.mxu0
  %v3562 = vadd.f32 0.0, %v3561
  %3563 = vmatmul.f32.gmra.mxu0 %v1212
  %v3564 = vpop.f32.mrf.mxu0
  %v3565 = vadd.f32 0.0, %v3564
  %3566 = vmatmul.f32.gmra.mxu0 %v1215
  %v3567 = vpop.f32.mrf.mxu0
  %v3568 = vadd.f32 0.0, %v3567
  %3569 = vmatmul.f32.gmra.mxu0 %v1218
  %v3570 = vpop.f32.mrf.mxu0
  %v3571 = vadd.f32 0.0, %v3570
  %3572 = vmatmul.f32.gmra.mxu0 %v1221
  %v3573 = vpop.f32.mrf.mxu0
  %v3574 = vadd.f32 0.0, %v3573
  %3575 = vmatmul.f32.gmra.mxu0 %v1224
  %v3576 = vpop.f32.mrf.mxu0
  %v3577 = vadd.f32 0.0, %v3576
  %3578 = vmatmul.f32.gmra.mxu0 %v1227
  %v3579 = vpop.f32.mrf.mxu0
  %v3580 = vadd.f32 0.0, %v3579
  %3581 = vmatmul.f32.gmra.mxu0 %v1230
  %v3582 = vpop.f32.mrf.mxu0
  %v3583 = vadd.f32 0.0, %v3582
  %3584 = vmatmul.f32.gmra.mxu0 %v1233
  %v3585 = vpop.f32.mrf.mxu0
  %v3586 = vadd.f32 0.0, %v3585
  %3587 = vmatmul.f32.gmra.mxu0 %v1236
  %v3588 = vpop.f32.mrf.mxu0
  %v3589 = vadd.f32 0.0, %v3588
  %3590 = vmatmul.f32.gmra.mxu0 %v1239
  %v3591 = vpop.f32.mrf.mxu0
  %v3592 = vadd.f32 0.0, %v3591
  %3593 = vmatmul.f32.gmra.mxu0 %v1242
  %v3594 = vpop.f32.mrf.mxu0
  %v3595 = vadd.f32 0.0, %v3594
  %3596 = vmatmul.f32.gmra.mxu0 %v1245
  %v3597 = vpop.f32.mrf.mxu0
  %v3598 = vadd.f32 0.0, %v3597
  %3599 = vmatmul.f32.gmra.mxu0 %v1248
  %v3600 = vpop.f32.mrf.mxu0
  %v3601 = vadd.f32 0.0, %v3600
  %3602 = vmatmul.f32.gmra.mxu0 %v1251
  %v3603 = vpop.f32.mrf.mxu0
  %v3604 = vadd.f32 0.0, %v3603
  %3605 = vmatmul.f32.gmra.mxu0 %v1254
  %v3606 = vpop.f32.mrf.mxu0
  %v3607 = vadd.f32 0.0, %v3606
  %3608 = vmatmul.f32.gmra.mxu0 %v1257
  %v3609 = vpop.f32.mrf.mxu0
  %v3610 = vadd.f32 0.0, %v3609
  %3611 = vmatmul.f32.gmra.mxu0 %v1260
  %v3612 = vpop.f32.mrf.mxu0
  %3613 = vmatmul.f32.gmra.mxu0 %v1263
  %v3614 = vpop.f32.mrf.mxu0
  %3615 = vdwg.mxu0
  %vm3718 = vcmask 1041408
  %v3719 = vrot.slane %v3307, 6
  %v3720 = vrot.slane %v3310, 6
  %v3721 = vsel %vm3718, %v3719, %v3720
  %v3722 = vrot.slane %v3313, 6
  %v3723 = vsel %vm3718, %v3720, %v3722
  %v3724 = vrot.slane %v3316, 6
  %v3725 = vsel %vm3718, %v3722, %v3724
  %v3726 = vrot.slane %v3319, 6
  %v3727 = vsel %vm3718, %v3724, %v3726
  %v3728 = vrot.slane %v3322, 6
  %v3729 = vsel %vm3718, %v3726, %v3728
  %v3730 = vrot.slane %v3325, 6
  %v3731 = vsel %vm3718, %v3728, %v3730
  %v3732 = vrot.slane %v3328, 6
  %v3733 = vsel %vm3718, %v3730, %v3732
  %v3734 = vrot.slane %v3331, 6
  %v3735 = vsel %vm3718, %v3732, %v3734
  %v3736 = vrot.slane %v3334, 6
  %v3737 = vsel %vm3718, %v3734, %v3736
  %v3738 = vrot.slane %v3337, 6
  %v3739 = vsel %vm3718, %v3736, %v3738
  %v3740 = vrot.slane %v3340, 6
  %v3741 = vsel %vm3718, %v3738, %v3740
  %v3742 = vrot.slane %v3343, 6
  %v3743 = vsel %vm3718, %v3740, %v3742
  %v3744 = vrot.slane %v3346, 6
  %v3745 = vsel %vm3718, %v3742, %v3744
  %v3746 = vrot.slane %v3349, 6
  %v3747 = vsel %vm3718, %v3744, %v3746
  %v3748 = vrot.slane %v3352, 6
  %v3749 = vsel %vm3718, %v3746, %v3748
  %v3750 = vrot.slane %v3355, 6
  %v3751 = vsel %vm3718, %v3748, %v3750
  %v3752 = vrot.slane %v3358, 6
  %v3753 = vsel %vm3718, %v3750, %v3752
  %v3754 = vrot.slane %v3361, 6
  %v3755 = vsel %vm3718, %v3752, %v3754
  %v3756 = vrot.slane %v3364, 6
  %v3757 = vsel %vm3718, %v3754, %v3756
  %v3758 = vrot.slane %v3367, 6
  %v3759 = vsel %vm3718, %v3756, %v3758
  %v3760 = vrot.slane %v3370, 6
  %v3761 = vsel %vm3718, %v3758, %v3760
  %v3762 = vrot.slane %v3373, 6
  %v3763 = vsel %vm3718, %v3760, %v3762
  %v3764 = vrot.slane %v3376, 6
  %v3765 = vsel %vm3718, %v3762, %v3764
  %v3766 = vrot.slane %v3379, 6
  %v3767 = vsel %vm3718, %v3764, %v3766
  %v3768 = vrot.slane %v3382, 6
  %v3769 = vsel %vm3718, %v3766, %v3768
  %v3770 = vrot.slane %v3385, 6
  %v3771 = vsel %vm3718, %v3768, %v3770
  %v3772 = vrot.slane %v3388, 6
  %v3773 = vsel %vm3718, %v3770, %v3772
  %v3774 = vrot.slane %v3391, 6
  %v3775 = vsel %vm3718, %v3772, %v3774
  %v3776 = vrot.slane %v3394, 6
  %v3777 = vsel %vm3718, %v3774, %v3776
  %v3778 = vrot.slane %v3397, 6
  %v3779 = vsel %vm3718, %v3776, %v3778
  %v3780 = vrot.slane %v3400, 6
  %v3781 = vsel %vm3718, %v3778, %v3780
  %v3782 = vrot.slane %v3403, 6
  %v3783 = vsel %vm3718, %v3780, %v3782
  %v3784 = vrot.slane %v3406, 6
  %v3785 = vsel %vm3718, %v3782, %v3784
  %v3786 = vrot.slane %v3409, 6
  %v3787 = vsel %vm3718, %v3784, %v3786
  %v3788 = vrot.slane %v3412, 6
  %v3789 = vsel %vm3718, %v3786, %v3788
  %v3790 = vrot.slane %v3415, 6
  %v3791 = vsel %vm3718, %v3788, %v3790
  %v3792 = vrot.slane %v3418, 6
  %v3793 = vsel %vm3718, %v3790, %v3792
  %v3794 = vrot.slane %v3421, 6
  %v3795 = vsel %vm3718, %v3792, %v3794
  %v3796 = vrot.slane %v3424, 6
  %v3797 = vsel %vm3718, %v3794, %v3796
  %v3798 = vrot.slane %v3427, 6
  %v3799 = vsel %vm3718, %v3796, %v3798
  %v3800 = vrot.slane %v3430, 6
  %v3801 = vsel %vm3718, %v3798, %v3800
  %v3802 = vrot.slane %v3433, 6
  %v3803 = vsel %vm3718, %v3800, %v3802
  %v3804 = vrot.slane %v3436, 6
  %v3805 = vsel %vm3718, %v3802, %v3804
  %v3806 = vrot.slane %v3439, 6
  %v3807 = vsel %vm3718, %v3804, %v3806
  %v3808 = vrot.slane %v3442, 6
  %v3809 = vsel %vm3718, %v3806, %v3808
  %v3810 = vrot.slane %v3445, 6
  %v3811 = vsel %vm3718, %v3808, %v3810
  %v3812 = vrot.slane %v3448, 6
  %v3813 = vsel %vm3718, %v3810, %v3812
  %v3814 = vrot.slane %v3451, 6
  %v3815 = vsel %vm3718, %v3812, %v3814
  %v3816 = vrot.slane %v3454, 6
  %v3817 = vsel %vm3718, %v3814, %v3816
  %v3818 = vrot.slane %v3457, 6
  %v3819 = vsel %vm3718, %v3816, %v3818
  %v3820 = vrot.slane %v3460, 6
  %v3821 = vsel %vm3718, %v3818, %v3820
  %v3822 = vrot.slane %v3463, 6
  %v3823 = vsel %vm3718, %v3820, %v3822
  %v3824 = vrot.slane %v3466, 6
  %v3825 = vsel %vm3718, %v3822, %v3824
  %v3826 = vrot.slane %v3469, 6
  %v3827 = vsel %vm3718, %v3824, %v3826
  %v3828 = vrot.slane %v3472, 6
  %v3829 = vsel %vm3718, %v3826, %v3828
  %v3830 = vrot.slane %v3475, 6
  %v3831 = vsel %vm3718, %v3828, %v3830
  %v3832 = vrot.slane %v3478, 6
  %v3833 = vsel %vm3718, %v3830, %v3832
  %v3834 = vrot.slane %v3481, 6
  %v3835 = vsel %vm3718, %v3832, %v3834
  %v3836 = vrot.slane %v3484, 6
  %v3837 = vsel %vm3718, %v3834, %v3836
  %v3838 = vrot.slane %v3487, 6
  %v3839 = vsel %vm3718, %v3836, %v3838
  %v3840 = vrot.slane %v3490, 6
  %v3841 = vsel %vm3718, %v3838, %v3840
  %v3842 = vrot.slane %v3493, 6
  %v3843 = vsel %vm3718, %v3840, %v3842
  %v3844 = vrot.slane %v3496, 6
  %v3845 = vsel %vm3718, %v3842, %v3844
  %v3846 = vrot.slane %v3499, 6
  %v3847 = vsel %vm3718, %v3844, %v3846
  %v3848 = vrot.slane %v3502, 6
  %v3849 = vsel %vm3718, %v3846, %v3848
  %v3850 = vrot.slane %v3505, 6
  %v3851 = vsel %vm3718, %v3848, %v3850
  %v3852 = vrot.slane %v3508, 6
  %v3853 = vsel %vm3718, %v3850, %v3852
  %v3854 = vrot.slane %v3511, 6
  %v3855 = vsel %vm3718, %v3852, %v3854
  %v3856 = vrot.slane %v3514, 6
  %v3857 = vsel %vm3718, %v3854, %v3856
  %v3858 = vrot.slane %v3517, 6
  %v3859 = vsel %vm3718, %v3856, %v3858
  %v3860 = vrot.slane %v3520, 6
  %v3861 = vsel %vm3718, %v3858, %v3860
  %v3862 = vrot.slane %v3523, 6
  %v3863 = vsel %vm3718, %v3860, %v3862
  %v3864 = vrot.slane %v3526, 6
  %v3865 = vsel %vm3718, %v3862, %v3864
  %v3866 = vrot.slane %v3529, 6
  %v3867 = vsel %vm3718, %v3864, %v3866
  %v3868 = vrot.slane %v3532, 6
  %v3869 = vsel %vm3718, %v3866, %v3868
  %v3870 = vrot.slane %v3535, 6
  %v3871 = vsel %vm3718, %v3868, %v3870
  %v3872 = vrot.slane %v3538, 6
  %v3873 = vsel %vm3718, %v3870, %v3872
  %v3874 = vrot.slane %v3541, 6
  %v3875 = vsel %vm3718, %v3872, %v3874
  %v3876 = vrot.slane %v3544, 6
  %v3877 = vsel %vm3718, %v3874, %v3876
  %v3878 = vrot.slane %v3547, 6
  %v3879 = vsel %vm3718, %v3876, %v3878
  %v3880 = vrot.slane %v3550, 6
  %v3881 = vsel %vm3718, %v3878, %v3880
  %v3882 = vrot.slane %v3553, 6
  %v3883 = vsel %vm3718, %v3880, %v3882
  %v3884 = vrot.slane %v3556, 6
  %v3885 = vsel %vm3718, %v3882, %v3884
  %v3886 = vrot.slane %v3559, 6
  %v3887 = vsel %vm3718, %v3884, %v3886
  %v3888 = vrot.slane %v3562, 6
  %v3889 = vsel %vm3718, %v3886, %v3888
  %v3890 = vrot.slane %v3565, 6
  %v3891 = vsel %vm3718, %v3888, %v3890
  %v3892 = vrot.slane %v3568, 6
  %v3893 = vsel %vm3718, %v3890, %v3892
  %v3894 = vrot.slane %v3571, 6
  %v3895 = vsel %vm3718, %v3892, %v3894
  %v3896 = vrot.slane %v3574, 6
  %v3897 = vsel %vm3718, %v3894, %v3896
  %v3898 = vrot.slane %v3577, 6
  %v3899 = vsel %vm3718, %v3896, %v3898
  %v3900 = vrot.slane %v3580, 6
  %v3901 = vsel %vm3718, %v3898, %v3900
  %v3902 = vrot.slane %v3583, 6
  %v3903 = vsel %vm3718, %v3900, %v3902
  %v3904 = vrot.slane %v3586, 6
  %v3905 = vsel %vm3718, %v3902, %v3904
  %v3906 = vrot.slane %v3589, 6
  %v3907 = vsel %vm3718, %v3904, %v3906
  %v3908 = vrot.slane %v3592, 6
  %v3909 = vsel %vm3718, %v3906, %v3908
  %v3910 = vrot.slane %v3595, 6
  %v3911 = vsel %vm3718, %v3908, %v3910
  %v3912 = vrot.slane %v3598, 6
  %v3913 = vsel %vm3718, %v3910, %v3912
  %v3914 = vrot.slane %v3601, 6
  %v3915 = vsel %vm3718, %v3912, %v3914
  %v3916 = vrot.slane %v3604, 6
  %v3917 = vsel %vm3718, %v3914, %v3916
  %v3918 = vrot.slane %v3607, 6
  %v3919 = vsel %vm3718, %v3916, %v3918
  %v3920 = vrot.slane %v3610, 6
  %v3921 = vsel %vm3718, %v3918, %v3920
  %v4024 = vadd.f32 %v3180, %v3721
  %v4025 = vadd.f32 %v3181, %v3723
  %v4026 = vadd.f32 %v3182, %v3725
  %v4027 = vadd.f32 %v3183, %v3727
  %v4028 = vadd.f32 %v3184, %v3729
  %v4029 = vadd.f32 %v3185, %v3731
  %v4030 = vadd.f32 %v3186, %v3733
  %v4031 = vadd.f32 %v3187, %v3735
  %v4032 = vadd.f32 %v3188, %v3737
  %v4033 = vadd.f32 %v3189, %v3739
  %v4034 = vadd.f32 %v3190, %v3741
  %v4035 = vadd.f32 %v3191, %v3743
  %v4036 = vadd.f32 %v3192, %v3745
  %v4037 = vadd.f32 %v3193, %v3747
  %v4038 = vadd.f32 %v3194, %v3749
  %v4039 = vadd.f32 %v3195, %v3751
  %v4040 = vadd.f32 %v3196, %v3753
  %v4041 = vadd.f32 %v3197, %v3755
  %v4042 = vadd.f32 %v3198, %v3757
  %v4043 = vadd.f32 %v3199, %v3759
  %v4044 = vadd.f32 %v3200, %v3761
  %v4045 = vadd.f32 %v3201, %v3763
  %v4046 = vadd.f32 %v3202, %v3765
  %v4047 = vadd.f32 %v3203, %v3767
  %v4048 = vadd.f32 %v3204, %v3769
  %v4049 = vadd.f32 %v3205, %v3771
  %v4050 = vadd.f32 %v3206, %v3773
  %v4051 = vadd.f32 %v3207, %v3775
  %v4052 = vadd.f32 %v3208, %v3777
  %v4053 = vadd.f32 %v3209, %v3779
  %v4054 = vadd.f32 %v3210, %v3781
  %v4055 = vadd.f32 %v3211, %v3783
  %v4056 = vadd.f32 %v3212, %v3785
  %v4057 = vadd.f32 %v3213, %v3787
  %v4058 = vadd.f32 %v3214, %v3789
  %v4059 = vadd.f32 %v3215, %v3791
  %v4060 = vadd.f32 %v3216, %v3793
  %v4061 = vadd.f32 %v3217, %v3795
  %v4062 = vadd.f32 %v3218, %v3797
  %v4063 = vadd.f32 %v3219, %v3799
  %v4064 = vadd.f32 %v3220, %v3801
  %v4065 = vadd.f32 %v3221, %v3803
  %v4066 = vadd.f32 %v3222, %v3805
  %v4067 = vadd.f32 %v3223, %v3807
  %v4068 = vadd.f32 %v3224, %v3809
  %v4069 = vadd.f32 %v3225, %v3811
  %v4070 = vadd.f32 %v3226, %v3813
  %v4071 = vadd.f32 %v3227, %v3815
  %v4072 = vadd.f32 %v3228, %v3817
  %v4073 = vadd.f32 %v3229, %v3819
  %v4074 = vadd.f32 %v3230, %v3821
  %v4075 = vadd.f32 %v3231, %v3823
  %v4076 = vadd.f32 %v3232, %v3825
  %v4077 = vadd.f32 %v3233, %v3827
  %v4078 = vadd.f32 %v3234, %v3829
  %v4079 = vadd.f32 %v3235, %v3831
  %v4080 = vadd.f32 %v3236, %v3833
  %v4081 = vadd.f32 %v3237, %v3835
  %v4082 = vadd.f32 %v3238, %v3837
  %v4083 = vadd.f32 %v3239, %v3839
  %v4084 = vadd.f32 %v3240, %v3841
  %v4085 = vadd.f32 %v3241, %v3843
  %v4086 = vadd.f32 %v3242, %v3845
  %v4087 = vadd.f32 %v3243, %v3847
  %v4088 = vadd.f32 %v3244, %v3849
  %v4089 = vadd.f32 %v3245, %v3851
  %v4090 = vadd.f32 %v3246, %v3853
  %v4091 = vadd.f32 %v3247, %v3855
  %v4092 = vadd.f32 %v3248, %v3857
  %v4093 = vadd.f32 %v3249, %v3859
  %v4094 = vadd.f32 %v3250, %v3861
  %v4095 = vadd.f32 %v3251, %v3863
  %v4096 = vadd.f32 %v3252, %v3865
  %v4097 = vadd.f32 %v3253, %v3867
  %v4098 = vadd.f32 %v3254, %v3869
  %v4099 = vadd.f32 %v3255, %v3871
  %v4100 = vadd.f32 %v3256, %v3873
  %v4101 = vadd.f32 %v3257, %v3875
  %v4102 = vadd.f32 %v3258, %v3877
  %v4103 = vadd.f32 %v3259, %v3879
  %v4104 = vadd.f32 %v3260, %v3881
  %v4105 = vadd.f32 %v3261, %v3883
  %v4106 = vadd.f32 %v3262, %v3885
  %v4107 = vadd.f32 %v3263, %v3887
  %v4108 = vadd.f32 %v3264, %v3889
  %v4109 = vadd.f32 %v3265, %v3891
  %v4110 = vadd.f32 %v3266, %v3893
  %v4111 = vadd.f32 %v3267, %v3895
  %v4112 = vadd.f32 %v3268, %v3897
  %v4113 = vadd.f32 %v3269, %v3899
  %v4114 = vadd.f32 %v3270, %v3901
  %v4115 = vadd.f32 %v3271, %v3903
  %v4116 = vadd.f32 %v3272, %v3905
  %v4117 = vadd.f32 %v3273, %v3907
  %v4118 = vadd.f32 %v3274, %v3909
  %v4119 = vadd.f32 %v3275, %v3911
  %v4120 = vadd.f32 %v3276, %v3913
  %v4121 = vadd.f32 %v3277, %v3915
  %v4122 = vadd.f32 %v3278, %v3917
  %v4123 = vadd.f32 %v3279, %v3919
  %v4124 = vadd.f32 %v3280, %v3921
  %v4125 = vadd.f32 %v3281, %v3920
  %s4126 = scalar_lea.vmem %s3, 128
  %v4127 = vld [vmem:[%s4126] sm:$0xff]
  %v4128 = vld [vmem:[%s4126 + $0x8] sm:$0xff]
  %v4129 = vld [vmem:[%s4126 + $0x10] sm:$0xff]
  %v4130 = vld [vmem:[%s4126 + $0x18] sm:$0xff]
  %4131 = vmatpush.msra.mxu0 0.0
  %4132 = vmatpush.msra.mxu0 0.0
  %4133 = vmatpush.msra.mxu0 0.0
  %4134 = vmatpush.msra.mxu0 0.0
  %4135 = vmatpush.msra.mxu0 0.0
  %4136 = vmatpush.msra.mxu0 0.0
  %4137 = vmatpush.msra.mxu0 0.0
  %4138 = vmatpush.msra.mxu0 0.0
  %4139 = vmatpush.msra.mxu0 0.0
  %4140 = vmatpush.msra.mxu0 0.0
  %4141 = vmatpush.msra.mxu0 0.0
  %4142 = vmatpush.msra.mxu0 0.0
  %4143 = vmatpush.msra.mxu0 %v4130
  %4144 = vmatpush.msra.mxu0 %v4129
  %4145 = vmatpush.msra.mxu0 %v4128
  %4146 = vmatpush.msra.mxu0 %v4127
  %4147 = vmatmul.f32.gmra.mxu0 %v951
  %v4148 = vpop.f32.mrf.mxu0
  %4149 = vmatmul.f32.gmra.mxu0 %v954
  %v4150 = vpop.f32.mrf.mxu0
  %v4151 = vadd.f32 0.0, %v4150
  %4152 = vmatmul.f32.gmra.mxu0 %v957
  %v4153 = vpop.f32.mrf.mxu0
  %v4154 = vadd.f32 0.0, %v4153
  %4155 = vmatmul.f32.gmra.mxu0 %v960
  %v4156 = vpop.f32.mrf.mxu0
  %v4157 = vadd.f32 0.0, %v4156
  %4158 = vmatmul.f32.gmra.mxu0 %v963
  %v4159 = vpop.f32.mrf.mxu0
  %v4160 = vadd.f32 0.0, %v4159
  %4161 = vmatmul.f32.gmra.mxu0 %v966
  %v4162 = vpop.f32.mrf.mxu0
  %v4163 = vadd.f32 0.0, %v4162
  %4164 = vmatmul.f32.gmra.mxu0 %v969
  %v4165 = vpop.f32.mrf.mxu0
  %v4166 = vadd.f32 0.0, %v4165
  %4167 = vmatmul.f32.gmra.mxu0 %v972
  %v4168 = vpop.f32.mrf.mxu0
  %v4169 = vadd.f32 0.0, %v4168
  %4170 = vmatmul.f32.gmra.mxu0 %v975
  %v4171 = vpop.f32.mrf.mxu0
  %v4172 = vadd.f32 0.0, %v4171
  %4173 = vmatmul.f32.gmra.mxu0 %v978
  %v4174 = vpop.f32.mrf.mxu0
  %v4175 = vadd.f32 0.0, %v4174
  %4176 = vmatmul.f32.gmra.mxu0 %v981
  %v4177 = vpop.f32.mrf.mxu0
  %v4178 = vadd.f32 0.0, %v4177
  %4179 = vmatmul.f32.gmra.mxu0 %v984
  %v4180 = vpop.f32.mrf.mxu0
  %v4181 = vadd.f32 0.0, %v4180
  %4182 = vmatmul.f32.gmra.mxu0 %v987
  %v4183 = vpop.f32.mrf.mxu0
  %v4184 = vadd.f32 0.0, %v4183
  %4185 = vmatmul.f32.gmra.mxu0 %v990
  %v4186 = vpop.f32.mrf.mxu0
  %v4187 = vadd.f32 0.0, %v4186
  %4188 = vmatmul.f32.gmra.mxu0 %v993
  %v4189 = vpop.f32.mrf.mxu0
  %v4190 = vadd.f32 0.0, %v4189
  %4191 = vmatmul.f32.gmra.mxu0 %v996
  %v4192 = vpop.f32.mrf.mxu0
  %v4193 = vadd.f32 0.0, %v4192
  %4194 = vmatmul.f32.gmra.mxu0 %v999
  %v4195 = vpop.f32.mrf.mxu0
  %v4196 = vadd.f32 0.0, %v4195
  %4197 = vmatmul.f32.gmra.mxu0 %v1002
  %v4198 = vpop.f32.mrf.mxu0
  %v4199 = vadd.f32 0.0, %v4198
  %4200 = vmatmul.f32.gmra.mxu0 %v1005
  %v4201 = vpop.f32.mrf.mxu0
  %v4202 = vadd.f32 0.0, %v4201
  %4203 = vmatmul.f32.gmra.mxu0 %v1008
  %v4204 = vpop.f32.mrf.mxu0
  %v4205 = vadd.f32 0.0, %v4204
  %4206 = vmatmul.f32.gmra.mxu0 %v1011
  %v4207 = vpop.f32.mrf.mxu0
  %v4208 = vadd.f32 0.0, %v4207
  %4209 = vmatmul.f32.gmra.mxu0 %v1014
  %v4210 = vpop.f32.mrf.mxu0
  %v4211 = vadd.f32 0.0, %v4210
  %4212 = vmatmul.f32.gmra.mxu0 %v1017
  %v4213 = vpop.f32.mrf.mxu0
  %v4214 = vadd.f32 0.0, %v4213
  %4215 = vmatmul.f32.gmra.mxu0 %v1020
  %v4216 = vpop.f32.mrf.mxu0
  %v4217 = vadd.f32 0.0, %v4216
  %4218 = vmatmul.f32.gmra.mxu0 %v1023
  %v4219 = vpop.f32.mrf.mxu0
  %v4220 = vadd.f32 0.0, %v4219
  %4221 = vmatmul.f32.gmra.mxu0 %v1026
  %v4222 = vpop.f32.mrf.mxu0
  %v4223 = vadd.f32 0.0, %v4222
  %4224 = vmatmul.f32.gmra.mxu0 %v1029
  %v4225 = vpop.f32.mrf.mxu0
  %v4226 = vadd.f32 0.0, %v4225
  %4227 = vmatmul.f32.gmra.mxu0 %v1032
  %v4228 = vpop.f32.mrf.mxu0
  %v4229 = vadd.f32 0.0, %v4228
  %4230 = vmatmul.f32.gmra.mxu0 %v1035
  %v4231 = vpop.f32.mrf.mxu0
  %v4232 = vadd.f32 0.0, %v4231
  %4233 = vmatmul.f32.gmra.mxu0 %v1038
  %v4234 = vpop.f32.mrf.mxu0
  %v4235 = vadd.f32 0.0, %v4234
  %4236 = vmatmul.f32.gmra.mxu0 %v1041
  %v4237 = vpop.f32.mrf.mxu0
  %v4238 = vadd.f32 0.0, %v4237
  %4239 = vmatmul.f32.gmra.mxu0 %v1044
  %v4240 = vpop.f32.mrf.mxu0
  %v4241 = vadd.f32 0.0, %v4240
  %4242 = vmatmul.f32.gmra.mxu0 %v1047
  %v4243 = vpop.f32.mrf.mxu0
  %v4244 = vadd.f32 0.0, %v4243
  %4245 = vmatmul.f32.gmra.mxu0 %v1050
  %v4246 = vpop.f32.mrf.mxu0
  %v4247 = vadd.f32 0.0, %v4246
  %4248 = vmatmul.f32.gmra.mxu0 %v1053
  %v4249 = vpop.f32.mrf.mxu0
  %v4250 = vadd.f32 0.0, %v4249
  %4251 = vmatmul.f32.gmra.mxu0 %v1056
  %v4252 = vpop.f32.mrf.mxu0
  %v4253 = vadd.f32 0.0, %v4252
  %4254 = vmatmul.f32.gmra.mxu0 %v1059
  %v4255 = vpop.f32.mrf.mxu0
  %v4256 = vadd.f32 0.0, %v4255
  %4257 = vmatmul.f32.gmra.mxu0 %v1062
  %v4258 = vpop.f32.mrf.mxu0
  %v4259 = vadd.f32 0.0, %v4258
  %4260 = vmatmul.f32.gmra.mxu0 %v1065
  %v4261 = vpop.f32.mrf.mxu0
  %v4262 = vadd.f32 0.0, %v4261
  %4263 = vmatmul.f32.gmra.mxu0 %v1068
  %v4264 = vpop.f32.mrf.mxu0
  %v4265 = vadd.f32 0.0, %v4264
  %4266 = vmatmul.f32.gmra.mxu0 %v1071
  %v4267 = vpop.f32.mrf.mxu0
  %v4268 = vadd.f32 0.0, %v4267
  %4269 = vmatmul.f32.gmra.mxu0 %v1074
  %v4270 = vpop.f32.mrf.mxu0
  %v4271 = vadd.f32 0.0, %v4270
  %4272 = vmatmul.f32.gmra.mxu0 %v1077
  %v4273 = vpop.f32.mrf.mxu0
  %v4274 = vadd.f32 0.0, %v4273
  %4275 = vmatmul.f32.gmra.mxu0 %v1080
  %v4276 = vpop.f32.mrf.mxu0
  %v4277 = vadd.f32 0.0, %v4276
  %4278 = vmatmul.f32.gmra.mxu0 %v1083
  %v4279 = vpop.f32.mrf.mxu0
  %v4280 = vadd.f32 0.0, %v4279
  %4281 = vmatmul.f32.gmra.mxu0 %v1086
  %v4282 = vpop.f32.mrf.mxu0
  %v4283 = vadd.f32 0.0, %v4282
  %4284 = vmatmul.f32.gmra.mxu0 %v1089
  %v4285 = vpop.f32.mrf.mxu0
  %v4286 = vadd.f32 0.0, %v4285
  %4287 = vmatmul.f32.gmra.mxu0 %v1092
  %v4288 = vpop.f32.mrf.mxu0
  %v4289 = vadd.f32 0.0, %v4288
  %4290 = vmatmul.f32.gmra.mxu0 %v1095
  %v4291 = vpop.f32.mrf.mxu0
  %v4292 = vadd.f32 0.0, %v4291
  %4293 = vmatmul.f32.gmra.mxu0 %v1098
  %v4294 = vpop.f32.mrf.mxu0
  %v4295 = vadd.f32 0.0, %v4294
  %4296 = vmatmul.f32.gmra.mxu0 %v1101
  %v4297 = vpop.f32.mrf.mxu0
  %v4298 = vadd.f32 0.0, %v4297
  %4299 = vmatmul.f32.gmra.mxu0 %v1104
  %v4300 = vpop.f32.mrf.mxu0
  %v4301 = vadd.f32 0.0, %v4300
  %4302 = vmatmul.f32.gmra.mxu0 %v1107
  %v4303 = vpop.f32.mrf.mxu0
  %v4304 = vadd.f32 0.0, %v4303
  %4305 = vmatmul.f32.gmra.mxu0 %v1110
  %v4306 = vpop.f32.mrf.mxu0
  %v4307 = vadd.f32 0.0, %v4306
  %4308 = vmatmul.f32.gmra.mxu0 %v1113
  %v4309 = vpop.f32.mrf.mxu0
  %v4310 = vadd.f32 0.0, %v4309
  %4311 = vmatmul.f32.gmra.mxu0 %v1116
  %v4312 = vpop.f32.mrf.mxu0
  %v4313 = vadd.f32 0.0, %v4312
  %4314 = vmatmul.f32.gmra.mxu0 %v1119
  %v4315 = vpop.f32.mrf.mxu0
  %v4316 = vadd.f32 0.0, %v4315
  %4317 = vmatmul.f32.gmra.mxu0 %v1122
  %v4318 = vpop.f32.mrf.mxu0
  %v4319 = vadd.f32 0.0, %v4318
  %4320 = vmatmul.f32.gmra.mxu0 %v1125
  %v4321 = vpop.f32.mrf.mxu0
  %v4322 = vadd.f32 0.0, %v4321
  %4323 = vmatmul.f32.gmra.mxu0 %v1128
  %v4324 = vpop.f32.mrf.mxu0
  %v4325 = vadd.f32 0.0, %v4324
  %4326 = vmatmul.f32.gmra.mxu0 %v1131
  %v4327 = vpop.f32.mrf.mxu0
  %v4328 = vadd.f32 0.0, %v4327
  %4329 = vmatmul.f32.gmra.mxu0 %v1134
  %v4330 = vpop.f32.mrf.mxu0
  %v4331 = vadd.f32 0.0, %v4330
  %4332 = vmatmul.f32.gmra.mxu0 %v1137
  %v4333 = vpop.f32.mrf.mxu0
  %v4334 = vadd.f32 0.0, %v4333
  %4335 = vmatmul.f32.gmra.mxu0 %v1140
  %v4336 = vpop.f32.mrf.mxu0
  %v4337 = vadd.f32 0.0, %v4336
  %4338 = vmatmul.f32.gmra.mxu0 %v1143
  %v4339 = vpop.f32.mrf.mxu0
  %v4340 = vadd.f32 0.0, %v4339
  %4341 = vmatmul.f32.gmra.mxu0 %v1146
  %v4342 = vpop.f32.mrf.mxu0
  %v4343 = vadd.f32 0.0, %v4342
  %4344 = vmatmul.f32.gmra.mxu0 %v1149
  %v4345 = vpop.f32.mrf.mxu0
  %v4346 = vadd.f32 0.0, %v4345
  %4347 = vmatmul.f32.gmra.mxu0 %v1152
  %v4348 = vpop.f32.mrf.mxu0
  %v4349 = vadd.f32 0.0, %v4348
  %4350 = vmatmul.f32.gmra.mxu0 %v1155
  %v4351 = vpop.f32.mrf.mxu0
  %v4352 = vadd.f32 0.0, %v4351
  %4353 = vmatmul.f32.gmra.mxu0 %v1158
  %v4354 = vpop.f32.mrf.mxu0
  %v4355 = vadd.f32 0.0, %v4354
  %4356 = vmatmul.f32.gmra.mxu0 %v1161
  %v4357 = vpop.f32.mrf.mxu0
  %v4358 = vadd.f32 0.0, %v4357
  %4359 = vmatmul.f32.gmra.mxu0 %v1164
  %v4360 = vpop.f32.mrf.mxu0
  %v4361 = vadd.f32 0.0, %v4360
  %4362 = vmatmul.f32.gmra.mxu0 %v1167
  %v4363 = vpop.f32.mrf.mxu0
  %v4364 = vadd.f32 0.0, %v4363
  %4365 = vmatmul.f32.gmra.mxu0 %v1170
  %v4366 = vpop.f32.mrf.mxu0
  %v4367 = vadd.f32 0.0, %v4366
  %4368 = vmatmul.f32.gmra.mxu0 %v1173
  %v4369 = vpop.f32.mrf.mxu0
  %v4370 = vadd.f32 0.0, %v4369
  %4371 = vmatmul.f32.gmra.mxu0 %v1176
  %v4372 = vpop.f32.mrf.mxu0
  %v4373 = vadd.f32 0.0, %v4372
  %4374 = vmatmul.f32.gmra.mxu0 %v1179
  %v4375 = vpop.f32.mrf.mxu0
  %v4376 = vadd.f32 0.0, %v4375
  %4377 = vmatmul.f32.gmra.mxu0 %v1182
  %v4378 = vpop.f32.mrf.mxu0
  %v4379 = vadd.f32 0.0, %v4378
  %4380 = vmatmul.f32.gmra.mxu0 %v1185
  %v4381 = vpop.f32.mrf.mxu0
  %v4382 = vadd.f32 0.0, %v4381
  %4383 = vmatmul.f32.gmra.mxu0 %v1188
  %v4384 = vpop.f32.mrf.mxu0
  %v4385 = vadd.f32 0.0, %v4384
  %4386 = vmatmul.f32.gmra.mxu0 %v1191
  %v4387 = vpop.f32.mrf.mxu0
  %v4388 = vadd.f32 0.0, %v4387
  %4389 = vmatmul.f32.gmra.mxu0 %v1194
  %v4390 = vpop.f32.mrf.mxu0
  %v4391 = vadd.f32 0.0, %v4390
  %4392 = vmatmul.f32.gmra.mxu0 %v1197
  %v4393 = vpop.f32.mrf.mxu0
  %v4394 = vadd.f32 0.0, %v4393
  %4395 = vmatmul.f32.gmra.mxu0 %v1200
  %v4396 = vpop.f32.mrf.mxu0
  %v4397 = vadd.f32 0.0, %v4396
  %4398 = vmatmul.f32.gmra.mxu0 %v1203
  %v4399 = vpop.f32.mrf.mxu0
  %v4400 = vadd.f32 0.0, %v4399
  %4401 = vmatmul.f32.gmra.mxu0 %v1206
  %v4402 = vpop.f32.mrf.mxu0
  %v4403 = vadd.f32 0.0, %v4402
  %4404 = vmatmul.f32.gmra.mxu0 %v1209
  %v4405 = vpop.f32.mrf.mxu0
  %v4406 = vadd.f32 0.0, %v4405
  %4407 = vmatmul.f32.gmra.mxu0 %v1212
  %v4408 = vpop.f32.mrf.mxu0
  %v4409 = vadd.f32 0.0, %v4408
  %4410 = vmatmul.f32.gmra.mxu0 %v1215
  %v4411 = vpop.f32.mrf.mxu0
  %v4412 = vadd.f32 0.0, %v4411
  %4413 = vmatmul.f32.gmra.mxu0 %v1218
  %v4414 = vpop.f32.mrf.mxu0
  %v4415 = vadd.f32 0.0, %v4414
  %4416 = vmatmul.f32.gmra.mxu0 %v1221
  %v4417 = vpop.f32.mrf.mxu0
  %v4418 = vadd.f32 0.0, %v4417
  %4419 = vmatmul.f32.gmra.mxu0 %v1224
  %v4420 = vpop.f32.mrf.mxu0
  %v4421 = vadd.f32 0.0, %v4420
  %4422 = vmatmul.f32.gmra.mxu0 %v1227
  %v4423 = vpop.f32.mrf.mxu0
  %v4424 = vadd.f32 0.0, %v4423
  %4425 = vmatmul.f32.gmra.mxu0 %v1230
  %v4426 = vpop.f32.mrf.mxu0
  %v4427 = vadd.f32 0.0, %v4426
  %4428 = vmatmul.f32.gmra.mxu0 %v1233
  %v4429 = vpop.f32.mrf.mxu0
  %v4430 = vadd.f32 0.0, %v4429
  %4431 = vmatmul.f32.gmra.mxu0 %v1236
  %v4432 = vpop.f32.mrf.mxu0
  %v4433 = vadd.f32 0.0, %v4432
  %4434 = vmatmul.f32.gmra.mxu0 %v1239
  %v4435 = vpop.f32.mrf.mxu0
  %v4436 = vadd.f32 0.0, %v4435
  %4437 = vmatmul.f32.gmra.mxu0 %v1242
  %v4438 = vpop.f32.mrf.mxu0
  %v4439 = vadd.f32 0.0, %v4438
  %4440 = vmatmul.f32.gmra.mxu0 %v1245
  %v4441 = vpop.f32.mrf.mxu0
  %v4442 = vadd.f32 0.0, %v4441
  %4443 = vmatmul.f32.gmra.mxu0 %v1248
  %v4444 = vpop.f32.mrf.mxu0
  %v4445 = vadd.f32 0.0, %v4444
  %4446 = vmatmul.f32.gmra.mxu0 %v1251
  %v4447 = vpop.f32.mrf.mxu0
  %v4448 = vadd.f32 0.0, %v4447
  %4449 = vmatmul.f32.gmra.mxu0 %v1254
  %v4450 = vpop.f32.mrf.mxu0
  %v4451 = vadd.f32 0.0, %v4450
  %4452 = vmatmul.f32.gmra.mxu0 %v1257
  %v4453 = vpop.f32.mrf.mxu0
  %v4454 = vadd.f32 0.0, %v4453
  %4455 = vmatmul.f32.gmra.mxu0 %v1260
  %v4456 = vpop.f32.mrf.mxu0
  %v4457 = vadd.f32 0.0, %v4456
  %4458 = vmatmul.f32.gmra.mxu0 %v1263
  %v4459 = vpop.f32.mrf.mxu0
  %4460 = vdwg.mxu0
  %v4564 = vrot.slane %v4151, 7
  %v4565 = vrot.slane %v4154, 7
  %v4566 = vsel %vm504, %v4564, %v4565
  %v4567 = vrot.slane %v4157, 7
  %v4568 = vsel %vm504, %v4565, %v4567
  %v4569 = vrot.slane %v4160, 7
  %v4570 = vsel %vm504, %v4567, %v4569
  %v4571 = vrot.slane %v4163, 7
  %v4572 = vsel %vm504, %v4569, %v4571
  %v4573 = vrot.slane %v4166, 7
  %v4574 = vsel %vm504, %v4571, %v4573
  %v4575 = vrot.slane %v4169, 7
  %v4576 = vsel %vm504, %v4573, %v4575
  %v4577 = vrot.slane %v4172, 7
  %v4578 = vsel %vm504, %v4575, %v4577
  %v4579 = vrot.slane %v4175, 7
  %v4580 = vsel %vm504, %v4577, %v4579
  %v4581 = vrot.slane %v4178, 7
  %v4582 = vsel %vm504, %v4579, %v4581
  %v4583 = vrot.slane %v4181, 7
  %v4584 = vsel %vm504, %v4581, %v4583
  %v4585 = vrot.slane %v4184, 7
  %v4586 = vsel %vm504, %v4583, %v4585
  %v4587 = vrot.slane %v4187, 7
  %v4588 = vsel %vm504, %v4585, %v4587
  %v4589 = vrot.slane %v4190, 7
  %v4590 = vsel %vm504, %v4587, %v4589
  %v4591 = vrot.slane %v4193, 7
  %v4592 = vsel %vm504, %v4589, %v4591
  %v4593 = vrot.slane %v4196, 7
  %v4594 = vsel %vm504, %v4591, %v4593
  %v4595 = vrot.slane %v4199, 7
  %v4596 = vsel %vm504, %v4593, %v4595
  %v4597 = vrot.slane %v4202, 7
  %v4598 = vsel %vm504, %v4595, %v4597
  %v4599 = vrot.slane %v4205, 7
  %v4600 = vsel %vm504, %v4597, %v4599
  %v4601 = vrot.slane %v4208, 7
  %v4602 = vsel %vm504, %v4599, %v4601
  %v4603 = vrot.slane %v4211, 7
  %v4604 = vsel %vm504, %v4601, %v4603
  %v4605 = vrot.slane %v4214, 7
  %v4606 = vsel %vm504, %v4603, %v4605
  %v4607 = vrot.slane %v4217, 7
  %v4608 = vsel %vm504, %v4605, %v4607
  %v4609 = vrot.slane %v4220, 7
  %v4610 = vsel %vm504, %v4607, %v4609
  %v4611 = vrot.slane %v4223, 7
  %v4612 = vsel %vm504, %v4609, %v4611
  %v4613 = vrot.slane %v4226, 7
  %v4614 = vsel %vm504, %v4611, %v4613
  %v4615 = vrot.slane %v4229, 7
  %v4616 = vsel %vm504, %v4613, %v4615
  %v4617 = vrot.slane %v4232, 7
  %v4618 = vsel %vm504, %v4615, %v4617
  %v4619 = vrot.slane %v4235, 7
  %v4620 = vsel %vm504, %v4617, %v4619
  %v4621 = vrot.slane %v4238, 7
  %v4622 = vsel %vm504, %v4619, %v4621
  %v4623 = vrot.slane %v4241, 7
  %v4624 = vsel %vm504, %v4621, %v4623
  %v4625 = vrot.slane %v4244, 7
  %v4626 = vsel %vm504, %v4623, %v4625
  %v4627 = vrot.slane %v4247, 7
  %v4628 = vsel %vm504, %v4625, %v4627
  %v4629 = vrot.slane %v4250, 7
  %v4630 = vsel %vm504, %v4627, %v4629
  %v4631 = vrot.slane %v4253, 7
  %v4632 = vsel %vm504, %v4629, %v4631
  %v4633 = vrot.slane %v4256, 7
  %v4634 = vsel %vm504, %v4631, %v4633
  %v4635 = vrot.slane %v4259, 7
  %v4636 = vsel %vm504, %v4633, %v4635
  %v4637 = vrot.slane %v4262, 7
  %v4638 = vsel %vm504, %v4635, %v4637
  %v4639 = vrot.slane %v4265, 7
  %v4640 = vsel %vm504, %v4637, %v4639
  %v4641 = vrot.slane %v4268, 7
  %v4642 = vsel %vm504, %v4639, %v4641
  %v4643 = vrot.slane %v4271, 7
  %v4644 = vsel %vm504, %v4641, %v4643
  %v4645 = vrot.slane %v4274, 7
  %v4646 = vsel %vm504, %v4643, %v4645
  %v4647 = vrot.slane %v4277, 7
  %v4648 = vsel %vm504, %v4645, %v4647
  %v4649 = vrot.slane %v4280, 7
  %v4650 = vsel %vm504, %v4647, %v4649
  %v4651 = vrot.slane %v4283, 7
  %v4652 = vsel %vm504, %v4649, %v4651
  %v4653 = vrot.slane %v4286, 7
  %v4654 = vsel %vm504, %v4651, %v4653
  %v4655 = vrot.slane %v4289, 7
  %v4656 = vsel %vm504, %v4653, %v4655
  %v4657 = vrot.slane %v4292, 7
  %v4658 = vsel %vm504, %v4655, %v4657
  %v4659 = vrot.slane %v4295, 7
  %v4660 = vsel %vm504, %v4657, %v4659
  %v4661 = vrot.slane %v4298, 7
  %v4662 = vsel %vm504, %v4659, %v4661
  %v4663 = vrot.slane %v4301, 7
  %v4664 = vsel %vm504, %v4661, %v4663
  %v4665 = vrot.slane %v4304, 7
  %v4666 = vsel %vm504, %v4663, %v4665
  %v4667 = vrot.slane %v4307, 7
  %v4668 = vsel %vm504, %v4665, %v4667
  %v4669 = vrot.slane %v4310, 7
  %v4670 = vsel %vm504, %v4667, %v4669
  %v4671 = vrot.slane %v4313, 7
  %v4672 = vsel %vm504, %v4669, %v4671
  %v4673 = vrot.slane %v4316, 7
  %v4674 = vsel %vm504, %v4671, %v4673
  %v4675 = vrot.slane %v4319, 7
  %v4676 = vsel %vm504, %v4673, %v4675
  %v4677 = vrot.slane %v4322, 7
  %v4678 = vsel %vm504, %v4675, %v4677
  %v4679 = vrot.slane %v4325, 7
  %v4680 = vsel %vm504, %v4677, %v4679
  %v4681 = vrot.slane %v4328, 7
  %v4682 = vsel %vm504, %v4679, %v4681
  %v4683 = vrot.slane %v4331, 7
  %v4684 = vsel %vm504, %v4681, %v4683
  %v4685 = vrot.slane %v4334, 7
  %v4686 = vsel %vm504, %v4683, %v4685
  %v4687 = vrot.slane %v4337, 7
  %v4688 = vsel %vm504, %v4685, %v4687
  %v4689 = vrot.slane %v4340, 7
  %v4690 = vsel %vm504, %v4687, %v4689
  %v4691 = vrot.slane %v4343, 7
  %v4692 = vsel %vm504, %v4689, %v4691
  %v4693 = vrot.slane %v4346, 7
  %v4694 = vsel %vm504, %v4691, %v4693
  %v4695 = vrot.slane %v4349, 7
  %v4696 = vsel %vm504, %v4693, %v4695
  %v4697 = vrot.slane %v4352, 7
  %v4698 = vsel %vm504, %v4695, %v4697
  %v4699 = vrot.slane %v4355, 7
  %v4700 = vsel %vm504, %v4697, %v4699
  %v4701 = vrot.slane %v4358, 7
  %v4702 = vsel %vm504, %v4699, %v4701
  %v4703 = vrot.slane %v4361, 7
  %v4704 = vsel %vm504, %v4701, %v4703
  %v4705 = vrot.slane %v4364, 7
  %v4706 = vsel %vm504, %v4703, %v4705
  %v4707 = vrot.slane %v4367, 7
  %v4708 = vsel %vm504, %v4705, %v4707
  %v4709 = vrot.slane %v4370, 7
  %v4710 = vsel %vm504, %v4707, %v4709
  %v4711 = vrot.slane %v4373, 7
  %v4712 = vsel %vm504, %v4709, %v4711
  %v4713 = vrot.slane %v4376, 7
  %v4714 = vsel %vm504, %v4711, %v4713
  %v4715 = vrot.slane %v4379, 7
  %v4716 = vsel %vm504, %v4713, %v4715
  %v4717 = vrot.slane %v4382, 7
  %v4718 = vsel %vm504, %v4715, %v4717
  %v4719 = vrot.slane %v4385, 7
  %v4720 = vsel %vm504, %v4717, %v4719
  %v4721 = vrot.slane %v4388, 7
  %v4722 = vsel %vm504, %v4719, %v4721
  %v4723 = vrot.slane %v4391, 7
  %v4724 = vsel %vm504, %v4721, %v4723
  %v4725 = vrot.slane %v4394, 7
  %v4726 = vsel %vm504, %v4723, %v4725
  %v4727 = vrot.slane %v4397, 7
  %v4728 = vsel %vm504, %v4725, %v4727
  %v4729 = vrot.slane %v4400, 7
  %v4730 = vsel %vm504, %v4727, %v4729
  %v4731 = vrot.slane %v4403, 7
  %v4732 = vsel %vm504, %v4729, %v4731
  %v4733 = vrot.slane %v4406, 7
  %v4734 = vsel %vm504, %v4731, %v4733
  %v4735 = vrot.slane %v4409, 7
  %v4736 = vsel %vm504, %v4733, %v4735
  %v4737 = vrot.slane %v4412, 7
  %v4738 = vsel %vm504, %v4735, %v4737
  %v4739 = vrot.slane %v4415, 7
  %v4740 = vsel %vm504, %v4737, %v4739
  %v4741 = vrot.slane %v4418, 7
  %v4742 = vsel %vm504, %v4739, %v4741
  %v4743 = vrot.slane %v4421, 7
  %v4744 = vsel %vm504, %v4741, %v4743
  %v4745 = vrot.slane %v4424, 7
  %v4746 = vsel %vm504, %v4743, %v4745
  %v4747 = vrot.slane %v4427, 7
  %v4748 = vsel %vm504, %v4745, %v4747
  %v4749 = vrot.slane %v4430, 7
  %v4750 = vsel %vm504, %v4747, %v4749
  %v4751 = vrot.slane %v4433, 7
  %v4752 = vsel %vm504, %v4749, %v4751
  %v4753 = vrot.slane %v4436, 7
  %v4754 = vsel %vm504, %v4751, %v4753
  %v4755 = vrot.slane %v4439, 7
  %v4756 = vsel %vm504, %v4753, %v4755
  %v4757 = vrot.slane %v4442, 7
  %v4758 = vsel %vm504, %v4755, %v4757
  %v4759 = vrot.slane %v4445, 7
  %v4760 = vsel %vm504, %v4757, %v4759
  %v4761 = vrot.slane %v4448, 7
  %v4762 = vsel %vm504, %v4759, %v4761
  %v4763 = vrot.slane %v4451, 7
  %v4764 = vsel %vm504, %v4761, %v4763
  %v4765 = vrot.slane %v4454, 7
  %v4766 = vsel %vm504, %v4763, %v4765
  %v4767 = vrot.slane %v4457, 7
  %v4768 = vsel %vm504, %v4765, %v4767
  %v4871 = vadd.f32 %v4024, %v4566
  %v4872 = vadd.f32 %v4025, %v4568
  %v4873 = vadd.f32 %v4026, %v4570
  %v4874 = vadd.f32 %v4027, %v4572
  %v4875 = vadd.f32 %v4028, %v4574
  %v4876 = vadd.f32 %v4029, %v4576
  %v4877 = vadd.f32 %v4030, %v4578
  %v4878 = vadd.f32 %v4031, %v4580
  %v4879 = vadd.f32 %v4032, %v4582
  %v4880 = vadd.f32 %v4033, %v4584
  %v4881 = vadd.f32 %v4034, %v4586
  %v4882 = vadd.f32 %v4035, %v4588
  %v4883 = vadd.f32 %v4036, %v4590
  %v4884 = vadd.f32 %v4037, %v4592
  %v4885 = vadd.f32 %v4038, %v4594
  %v4886 = vadd.f32 %v4039, %v4596
  %v4887 = vadd.f32 %v4040, %v4598
  %v4888 = vadd.f32 %v4041, %v4600
  %v4889 = vadd.f32 %v4042, %v4602
  %v4890 = vadd.f32 %v4043, %v4604
  %v4891 = vadd.f32 %v4044, %v4606
  %v4892 = vadd.f32 %v4045, %v4608
  %v4893 = vadd.f32 %v4046, %v4610
  %v4894 = vadd.f32 %v4047, %v4612
  %v4895 = vadd.f32 %v4048, %v4614
  %v4896 = vadd.f32 %v4049, %v4616
  %v4897 = vadd.f32 %v4050, %v4618
  %v4898 = vadd.f32 %v4051, %v4620
  %v4899 = vadd.f32 %v4052, %v4622
  %v4900 = vadd.f32 %v4053, %v4624
  %v4901 = vadd.f32 %v4054, %v4626
  %v4902 = vadd.f32 %v4055, %v4628
  %v4903 = vadd.f32 %v4056, %v4630
  %v4904 = vadd.f32 %v4057, %v4632
  %v4905 = vadd.f32 %v4058, %v4634
  %v4906 = vadd.f32 %v4059, %v4636
  %v4907 = vadd.f32 %v4060, %v4638
  %v4908 = vadd.f32 %v4061, %v4640
  %v4909 = vadd.f32 %v4062, %v4642
  %v4910 = vadd.f32 %v4063, %v4644
  %v4911 = vadd.f32 %v4064, %v4646
  %v4912 = vadd.f32 %v4065, %v4648
  %v4913 = vadd.f32 %v4066, %v4650
  %v4914 = vadd.f32 %v4067, %v4652
  %v4915 = vadd.f32 %v4068, %v4654
  %v4916 = vadd.f32 %v4069, %v4656
  %v4917 = vadd.f32 %v4070, %v4658
  %v4918 = vadd.f32 %v4071, %v4660
  %v4919 = vadd.f32 %v4072, %v4662
  %v4920 = vadd.f32 %v4073, %v4664
  %v4921 = vadd.f32 %v4074, %v4666
  %v4922 = vadd.f32 %v4075, %v4668
  %v4923 = vadd.f32 %v4076, %v4670
  %v4924 = vadd.f32 %v4077, %v4672
  %v4925 = vadd.f32 %v4078, %v4674
  %v4926 = vadd.f32 %v4079, %v4676
  %v4927 = vadd.f32 %v4080, %v4678
  %v4928 = vadd.f32 %v4081, %v4680
  %v4929 = vadd.f32 %v4082, %v4682
  %v4930 = vadd.f32 %v4083, %v4684
  %v4931 = vadd.f32 %v4084, %v4686
  %v4932 = vadd.f32 %v4085, %v4688
  %v4933 = vadd.f32 %v4086, %v4690
  %v4934 = vadd.f32 %v4087, %v4692
  %v4935 = vadd.f32 %v4088, %v4694
  %v4936 = vadd.f32 %v4089, %v4696
  %v4937 = vadd.f32 %v4090, %v4698
  %v4938 = vadd.f32 %v4091, %v4700
  %v4939 = vadd.f32 %v4092, %v4702
  %v4940 = vadd.f32 %v4093, %v4704
  %v4941 = vadd.f32 %v4094, %v4706
  %v4942 = vadd.f32 %v4095, %v4708
  %v4943 = vadd.f32 %v4096, %v4710
  %v4944 = vadd.f32 %v4097, %v4712
  %v4945 = vadd.f32 %v4098, %v4714
  %v4946 = vadd.f32 %v4099, %v4716
  %v4947 = vadd.f32 %v4100, %v4718
  %v4948 = vadd.f32 %v4101, %v4720
  %v4949 = vadd.f32 %v4102, %v4722
  %v4950 = vadd.f32 %v4103, %v4724
  %v4951 = vadd.f32 %v4104, %v4726
  %v4952 = vadd.f32 %v4105, %v4728
  %v4953 = vadd.f32 %v4106, %v4730
  %v4954 = vadd.f32 %v4107, %v4732
  %v4955 = vadd.f32 %v4108, %v4734
  %v4956 = vadd.f32 %v4109, %v4736
  %v4957 = vadd.f32 %v4110, %v4738
  %v4958 = vadd.f32 %v4111, %v4740
  %v4959 = vadd.f32 %v4112, %v4742
  %v4960 = vadd.f32 %v4113, %v4744
  %v4961 = vadd.f32 %v4114, %v4746
  %v4962 = vadd.f32 %v4115, %v4748
  %v4963 = vadd.f32 %v4116, %v4750
  %v4964 = vadd.f32 %v4117, %v4752
  %v4965 = vadd.f32 %v4118, %v4754
  %v4966 = vadd.f32 %v4119, %v4756
  %v4967 = vadd.f32 %v4120, %v4758
  %v4968 = vadd.f32 %v4121, %v4760
  %v4969 = vadd.f32 %v4122, %v4762
  %v4970 = vadd.f32 %v4123, %v4764
  %v4971 = vadd.f32 %v4124, %v4766
  %v4972 = vadd.f32 %v4125, %v4768
  %s4973 = scalar_lea.vmem %s3, 160
  %v4974 = vld [vmem:[%s4973] sm:$0xff]
  %v4975 = vld [vmem:[%s4973 + $0x8] sm:$0xff]
  %v4976 = vld [vmem:[%s4973 + $0x10] sm:$0xff]
  %v4977 = vld [vmem:[%s4973 + $0x18] sm:$0xff]
  %4978 = vmatpush.msra.mxu0 0.0
  %4979 = vmatpush.msra.mxu0 0.0
  %4980 = vmatpush.msra.mxu0 0.0
  %4981 = vmatpush.msra.mxu0 0.0
  %4982 = vmatpush.msra.mxu0 0.0
  %4983 = vmatpush.msra.mxu0 0.0
  %4984 = vmatpush.msra.mxu0 0.0
  %4985 = vmatpush.msra.mxu0 0.0
  %4986 = vmatpush.msra.mxu0 0.0
  %4987 = vmatpush.msra.mxu0 0.0
  %4988 = vmatpush.msra.mxu0 0.0
  %4989 = vmatpush.msra.mxu0 0.0
  %4990 = vmatpush.msra.mxu0 %v4977
  %4991 = vmatpush.msra.mxu0 %v4976
  %4992 = vmatpush.msra.mxu0 %v4975
  %4993 = vmatpush.msra.mxu0 %v4974
  %4994 = vmatmul.f32.gmra.mxu0 %v951
  %v4995 = vpop.f32.mrf.mxu0
  %4996 = vmatmul.f32.gmra.mxu0 %v954
  %v4997 = vpop.f32.mrf.mxu0
  %4998 = vmatmul.f32.gmra.mxu0 %v957
  %v4999 = vpop.f32.mrf.mxu0
  %v5000 = vadd.f32 0.0, %v4999
  %5001 = vmatmul.f32.gmra.mxu0 %v960
  %v5002 = vpop.f32.mrf.mxu0
  %v5003 = vadd.f32 0.0, %v5002
  %5004 = vmatmul.f32.gmra.mxu0 %v963
  %v5005 = vpop.f32.mrf.mxu0
  %v5006 = vadd.f32 0.0, %v5005
  %5007 = vmatmul.f32.gmra.mxu0 %v966
  %v5008 = vpop.f32.mrf.mxu0
  %v5009 = vadd.f32 0.0, %v5008
  %5010 = vmatmul.f32.gmra.mxu0 %v969
  %v5011 = vpop.f32.mrf.mxu0
  %v5012 = vadd.f32 0.0, %v5011
  %5013 = vmatmul.f32.gmra.mxu0 %v972
  %v5014 = vpop.f32.mrf.mxu0
  %v5015 = vadd.f32 0.0, %v5014
  %5016 = vmatmul.f32.gmra.mxu0 %v975
  %v5017 = vpop.f32.mrf.mxu0
  %v5018 = vadd.f32 0.0, %v5017
  %5019 = vmatmul.f32.gmra.mxu0 %v978
  %v5020 = vpop.f32.mrf.mxu0
  %v5021 = vadd.f32 0.0, %v5020
  %5022 = vmatmul.f32.gmra.mxu0 %v981
  %v5023 = vpop.f32.mrf.mxu0
  %v5024 = vadd.f32 0.0, %v5023
  %5025 = vmatmul.f32.gmra.mxu0 %v984
  %v5026 = vpop.f32.mrf.mxu0
  %v5027 = vadd.f32 0.0, %v5026
  %5028 = vmatmul.f32.gmra.mxu0 %v987
  %v5029 = vpop.f32.mrf.mxu0
  %v5030 = vadd.f32 0.0, %v5029
  %5031 = vmatmul.f32.gmra.mxu0 %v990
  %v5032 = vpop.f32.mrf.mxu0
  %v5033 = vadd.f32 0.0, %v5032
  %5034 = vmatmul.f32.gmra.mxu0 %v993
  %v5035 = vpop.f32.mrf.mxu0
  %v5036 = vadd.f32 0.0, %v5035
  %5037 = vmatmul.f32.gmra.mxu0 %v996
  %v5038 = vpop.f32.mrf.mxu0
  %v5039 = vadd.f32 0.0, %v5038
  %5040 = vmatmul.f32.gmra.mxu0 %v999
  %v5041 = vpop.f32.mrf.mxu0
  %v5042 = vadd.f32 0.0, %v5041
  %5043 = vmatmul.f32.gmra.mxu0 %v1002
  %v5044 = vpop.f32.mrf.mxu0
  %v5045 = vadd.f32 0.0, %v5044
  %5046 = vmatmul.f32.gmra.mxu0 %v1005
  %v5047 = vpop.f32.mrf.mxu0
  %v5048 = vadd.f32 0.0, %v5047
  %5049 = vmatmul.f32.gmra.mxu0 %v1008
  %v5050 = vpop.f32.mrf.mxu0
  %v5051 = vadd.f32 0.0, %v5050
  %5052 = vmatmul.f32.gmra.mxu0 %v1011
  %v5053 = vpop.f32.mrf.mxu0
  %v5054 = vadd.f32 0.0, %v5053
  %5055 = vmatmul.f32.gmra.mxu0 %v1014
  %v5056 = vpop.f32.mrf.mxu0
  %v5057 = vadd.f32 0.0, %v5056
  %5058 = vmatmul.f32.gmra.mxu0 %v1017
  %v5059 = vpop.f32.mrf.mxu0
  %v5060 = vadd.f32 0.0, %v5059
  %5061 = vmatmul.f32.gmra.mxu0 %v1020
  %v5062 = vpop.f32.mrf.mxu0
  %v5063 = vadd.f32 0.0, %v5062
  %5064 = vmatmul.f32.gmra.mxu0 %v1023
  %v5065 = vpop.f32.mrf.mxu0
  %v5066 = vadd.f32 0.0, %v5065
  %5067 = vmatmul.f32.gmra.mxu0 %v1026
  %v5068 = vpop.f32.mrf.mxu0
  %v5069 = vadd.f32 0.0, %v5068
  %5070 = vmatmul.f32.gmra.mxu0 %v1029
  %v5071 = vpop.f32.mrf.mxu0
  %v5072 = vadd.f32 0.0, %v5071
  %5073 = vmatmul.f32.gmra.mxu0 %v1032
  %v5074 = vpop.f32.mrf.mxu0
  %v5075 = vadd.f32 0.0, %v5074
  %5076 = vmatmul.f32.gmra.mxu0 %v1035
  %v5077 = vpop.f32.mrf.mxu0
  %v5078 = vadd.f32 0.0, %v5077
  %5079 = vmatmul.f32.gmra.mxu0 %v1038
  %v5080 = vpop.f32.mrf.mxu0
  %v5081 = vadd.f32 0.0, %v5080
  %5082 = vmatmul.f32.gmra.mxu0 %v1041
  %v5083 = vpop.f32.mrf.mxu0
  %v5084 = vadd.f32 0.0, %v5083
  %5085 = vmatmul.f32.gmra.mxu0 %v1044
  %v5086 = vpop.f32.mrf.mxu0
  %v5087 = vadd.f32 0.0, %v5086
  %5088 = vmatmul.f32.gmra.mxu0 %v1047
  %v5089 = vpop.f32.mrf.mxu0
  %v5090 = vadd.f32 0.0, %v5089
  %5091 = vmatmul.f32.gmra.mxu0 %v1050
  %v5092 = vpop.f32.mrf.mxu0
  %v5093 = vadd.f32 0.0, %v5092
  %5094 = vmatmul.f32.gmra.mxu0 %v1053
  %v5095 = vpop.f32.mrf.mxu0
  %v5096 = vadd.f32 0.0, %v5095
  %5097 = vmatmul.f32.gmra.mxu0 %v1056
  %v5098 = vpop.f32.mrf.mxu0
  %v5099 = vadd.f32 0.0, %v5098
  %5100 = vmatmul.f32.gmra.mxu0 %v1059
  %v5101 = vpop.f32.mrf.mxu0
  %v5102 = vadd.f32 0.0, %v5101
  %5103 = vmatmul.f32.gmra.mxu0 %v1062
  %v5104 = vpop.f32.mrf.mxu0
  %v5105 = vadd.f32 0.0, %v5104
  %5106 = vmatmul.f32.gmra.mxu0 %v1065
  %v5107 = vpop.f32.mrf.mxu0
  %v5108 = vadd.f32 0.0, %v5107
  %5109 = vmatmul.f32.gmra.mxu0 %v1068
  %v5110 = vpop.f32.mrf.mxu0
  %v5111 = vadd.f32 0.0, %v5110
  %5112 = vmatmul.f32.gmra.mxu0 %v1071
  %v5113 = vpop.f32.mrf.mxu0
  %v5114 = vadd.f32 0.0, %v5113
  %5115 = vmatmul.f32.gmra.mxu0 %v1074
  %v5116 = vpop.f32.mrf.mxu0
  %v5117 = vadd.f32 0.0, %v5116
  %5118 = vmatmul.f32.gmra.mxu0 %v1077
  %v5119 = vpop.f32.mrf.mxu0
  %v5120 = vadd.f32 0.0, %v5119
  %5121 = vmatmul.f32.gmra.mxu0 %v1080
  %v5122 = vpop.f32.mrf.mxu0
  %v5123 = vadd.f32 0.0, %v5122
  %5124 = vmatmul.f32.gmra.mxu0 %v1083
  %v5125 = vpop.f32.mrf.mxu0
  %v5126 = vadd.f32 0.0, %v5125
  %5127 = vmatmul.f32.gmra.mxu0 %v1086
  %v5128 = vpop.f32.mrf.mxu0
  %v5129 = vadd.f32 0.0, %v5128
  %5130 = vmatmul.f32.gmra.mxu0 %v1089
  %v5131 = vpop.f32.mrf.mxu0
  %v5132 = vadd.f32 0.0, %v5131
  %5133 = vmatmul.f32.gmra.mxu0 %v1092
  %v5134 = vpop.f32.mrf.mxu0
  %v5135 = vadd.f32 0.0, %v5134
  %5136 = vmatmul.f32.gmra.mxu0 %v1095
  %v5137 = vpop.f32.mrf.mxu0
  %v5138 = vadd.f32 0.0, %v5137
  %5139 = vmatmul.f32.gmra.mxu0 %v1098
  %v5140 = vpop.f32.mrf.mxu0
  %v5141 = vadd.f32 0.0, %v5140
  %5142 = vmatmul.f32.gmra.mxu0 %v1101
  %v5143 = vpop.f32.mrf.mxu0
  %v5144 = vadd.f32 0.0, %v5143
  %5145 = vmatmul.f32.gmra.mxu0 %v1104
  %v5146 = vpop.f32.mrf.mxu0
  %v5147 = vadd.f32 0.0, %v5146
  %5148 = vmatmul.f32.gmra.mxu0 %v1107
  %v5149 = vpop.f32.mrf.mxu0
  %v5150 = vadd.f32 0.0, %v5149
  %5151 = vmatmul.f32.gmra.mxu0 %v1110
  %v5152 = vpop.f32.mrf.mxu0
  %v5153 = vadd.f32 0.0, %v5152
  %5154 = vmatmul.f32.gmra.mxu0 %v1113
  %v5155 = vpop.f32.mrf.mxu0
  %v5156 = vadd.f32 0.0, %v5155
  %5157 = vmatmul.f32.gmra.mxu0 %v1116
  %v5158 = vpop.f32.mrf.mxu0
  %v5159 = vadd.f32 0.0, %v5158
  %5160 = vmatmul.f32.gmra.mxu0 %v1119
  %v5161 = vpop.f32.mrf.mxu0
  %v5162 = vadd.f32 0.0, %v5161
  %5163 = vmatmul.f32.gmra.mxu0 %v1122
  %v5164 = vpop.f32.mrf.mxu0
  %v5165 = vadd.f32 0.0, %v5164
  %5166 = vmatmul.f32.gmra.mxu0 %v1125
  %v5167 = vpop.f32.mrf.mxu0
  %v5168 = vadd.f32 0.0, %v5167
  %5169 = vmatmul.f32.gmra.mxu0 %v1128
  %v5170 = vpop.f32.mrf.mxu0
  %v5171 = vadd.f32 0.0, %v5170
  %5172 = vmatmul.f32.gmra.mxu0 %v1131
  %v5173 = vpop.f32.mrf.mxu0
  %v5174 = vadd.f32 0.0, %v5173
  %5175 = vmatmul.f32.gmra.mxu0 %v1134
  %v5176 = vpop.f32.mrf.mxu0
  %v5177 = vadd.f32 0.0, %v5176
  %5178 = vmatmul.f32.gmra.mxu0 %v1137
  %v5179 = vpop.f32.mrf.mxu0
  %v5180 = vadd.f32 0.0, %v5179
  %5181 = vmatmul.f32.gmra.mxu0 %v1140
  %v5182 = vpop.f32.mrf.mxu0
  %v5183 = vadd.f32 0.0, %v5182
  %5184 = vmatmul.f32.gmra.mxu0 %v1143
  %v5185 = vpop.f32.mrf.mxu0
  %v5186 = vadd.f32 0.0, %v5185
  %5187 = vmatmul.f32.gmra.mxu0 %v1146
  %v5188 = vpop.f32.mrf.mxu0
  %v5189 = vadd.f32 0.0, %v5188
  %5190 = vmatmul.f32.gmra.mxu0 %v1149
  %v5191 = vpop.f32.mrf.mxu0
  %v5192 = vadd.f32 0.0, %v5191
  %5193 = vmatmul.f32.gmra.mxu0 %v1152
  %v5194 = vpop.f32.mrf.mxu0
  %v5195 = vadd.f32 0.0, %v5194
  %5196 = vmatmul.f32.gmra.mxu0 %v1155
  %v5197 = vpop.f32.mrf.mxu0
  %v5198 = vadd.f32 0.0, %v5197
  %5199 = vmatmul.f32.gmra.mxu0 %v1158
  %v5200 = vpop.f32.mrf.mxu0
  %v5201 = vadd.f32 0.0, %v5200
  %5202 = vmatmul.f32.gmra.mxu0 %v1161
  %v5203 = vpop.f32.mrf.mxu0
  %v5204 = vadd.f32 0.0, %v5203
  %5205 = vmatmul.f32.gmra.mxu0 %v1164
  %v5206 = vpop.f32.mrf.mxu0
  %v5207 = vadd.f32 0.0, %v5206
  %5208 = vmatmul.f32.gmra.mxu0 %v1167
  %v5209 = vpop.f32.mrf.mxu0
  %v5210 = vadd.f32 0.0, %v5209
  %5211 = vmatmul.f32.gmra.mxu0 %v1170
  %v5212 = vpop.f32.mrf.mxu0
  %v5213 = vadd.f32 0.0, %v5212
  %5214 = vmatmul.f32.gmra.mxu0 %v1173
  %v5215 = vpop.f32.mrf.mxu0
  %v5216 = vadd.f32 0.0, %v5215
  %5217 = vmatmul.f32.gmra.mxu0 %v1176
  %v5218 = vpop.f32.mrf.mxu0
  %v5219 = vadd.f32 0.0, %v5218
  %5220 = vmatmul.f32.gmra.mxu0 %v1179
  %v5221 = vpop.f32.mrf.mxu0
  %v5222 = vadd.f32 0.0, %v5221
  %5223 = vmatmul.f32.gmra.mxu0 %v1182
  %v5224 = vpop.f32.mrf.mxu0
  %v5225 = vadd.f32 0.0, %v5224
  %5226 = vmatmul.f32.gmra.mxu0 %v1185
  %v5227 = vpop.f32.mrf.mxu0
  %v5228 = vadd.f32 0.0, %v5227
  %5229 = vmatmul.f32.gmra.mxu0 %v1188
  %v5230 = vpop.f32.mrf.mxu0
  %v5231 = vadd.f32 0.0, %v5230
  %5232 = vmatmul.f32.gmra.mxu0 %v1191
  %v5233 = vpop.f32.mrf.mxu0
  %v5234 = vadd.f32 0.0, %v5233
  %5235 = vmatmul.f32.gmra.mxu0 %v1194
  %v5236 = vpop.f32.mrf.mxu0
  %v5237 = vadd.f32 0.0, %v5236
  %5238 = vmatmul.f32.gmra.mxu0 %v1197
  %v5239 = vpop.f32.mrf.mxu0
  %v5240 = vadd.f32 0.0, %v5239
  %5241 = vmatmul.f32.gmra.mxu0 %v1200
  %v5242 = vpop.f32.mrf.mxu0
  %v5243 = vadd.f32 0.0, %v5242
  %5244 = vmatmul.f32.gmra.mxu0 %v1203
  %v5245 = vpop.f32.mrf.mxu0
  %v5246 = vadd.f32 0.0, %v5245
  %5247 = vmatmul.f32.gmra.mxu0 %v1206
  %v5248 = vpop.f32.mrf.mxu0
  %v5249 = vadd.f32 0.0, %v5248
  %5250 = vmatmul.f32.gmra.mxu0 %v1209
  %v5251 = vpop.f32.mrf.mxu0
  %v5252 = vadd.f32 0.0, %v5251
  %5253 = vmatmul.f32.gmra.mxu0 %v1212
  %v5254 = vpop.f32.mrf.mxu0
  %v5255 = vadd.f32 0.0, %v5254
  %5256 = vmatmul.f32.gmra.mxu0 %v1215
  %v5257 = vpop.f32.mrf.mxu0
  %v5258 = vadd.f32 0.0, %v5257
  %5259 = vmatmul.f32.gmra.mxu0 %v1218
  %v5260 = vpop.f32.mrf.mxu0
  %v5261 = vadd.f32 0.0, %v5260
  %5262 = vmatmul.f32.gmra.mxu0 %v1221
  %v5263 = vpop.f32.mrf.mxu0
  %v5264 = vadd.f32 0.0, %v5263
  %5265 = vmatmul.f32.gmra.mxu0 %v1224
  %v5266 = vpop.f32.mrf.mxu0
  %v5267 = vadd.f32 0.0, %v5266
  %5268 = vmatmul.f32.gmra.mxu0 %v1227
  %v5269 = vpop.f32.mrf.mxu0
  %v5270 = vadd.f32 0.0, %v5269
  %5271 = vmatmul.f32.gmra.mxu0 %v1230
  %v5272 = vpop.f32.mrf.mxu0
  %v5273 = vadd.f32 0.0, %v5272
  %5274 = vmatmul.f32.gmra.mxu0 %v1233
  %v5275 = vpop.f32.mrf.mxu0
  %v5276 = vadd.f32 0.0, %v5275
  %5277 = vmatmul.f32.gmra.mxu0 %v1236
  %v5278 = vpop.f32.mrf.mxu0
  %v5279 = vadd.f32 0.0, %v5278
  %5280 = vmatmul.f32.gmra.mxu0 %v1239
  %v5281 = vpop.f32.mrf.mxu0
  %v5282 = vadd.f32 0.0, %v5281
  %5283 = vmatmul.f32.gmra.mxu0 %v1242
  %v5284 = vpop.f32.mrf.mxu0
  %v5285 = vadd.f32 0.0, %v5284
  %5286 = vmatmul.f32.gmra.mxu0 %v1245
  %v5287 = vpop.f32.mrf.mxu0
  %v5288 = vadd.f32 0.0, %v5287
  %5289 = vmatmul.f32.gmra.mxu0 %v1248
  %v5290 = vpop.f32.mrf.mxu0
  %v5291 = vadd.f32 0.0, %v5290
  %5292 = vmatmul.f32.gmra.mxu0 %v1251
  %v5293 = vpop.f32.mrf.mxu0
  %v5294 = vadd.f32 0.0, %v5293
  %5295 = vmatmul.f32.gmra.mxu0 %v1254
  %v5296 = vpop.f32.mrf.mxu0
  %v5297 = vadd.f32 0.0, %v5296
  %5298 = vmatmul.f32.gmra.mxu0 %v1257
  %v5299 = vpop.f32.mrf.mxu0
  %v5300 = vadd.f32 0.0, %v5299
  %5301 = vmatmul.f32.gmra.mxu0 %v1260
  %v5302 = vpop.f32.mrf.mxu0
  %v5303 = vadd.f32 0.0, %v5302
  %5304 = vmatmul.f32.gmra.mxu0 %v1263
  %v5305 = vpop.f32.mrf.mxu0
  %5306 = vdwg.mxu0
  %v5307 = vadd.f32 %v4871, %v5000
  %v5308 = vadd.f32 %v4872, %v5003
  %v5309 = vadd.f32 %v4873, %v5006
  %v5310 = vadd.f32 %v4874, %v5009
  %v5311 = vadd.f32 %v4875, %v5012
  %v5312 = vadd.f32 %v4876, %v5015
  %v5313 = vadd.f32 %v4877, %v5018
  %v5314 = vadd.f32 %v4878, %v5021
  %v5315 = vadd.f32 %v4879, %v5024
  %v5316 = vadd.f32 %v4880, %v5027
  %v5317 = vadd.f32 %v4881, %v5030
  %v5318 = vadd.f32 %v4882, %v5033
  %v5319 = vadd.f32 %v4883, %v5036
  %v5320 = vadd.f32 %v4884, %v5039
  %v5321 = vadd.f32 %v4885, %v5042
  %v5322 = vadd.f32 %v4886, %v5045
  %v5323 = vadd.f32 %v4887, %v5048
  %v5324 = vadd.f32 %v4888, %v5051
  %v5325 = vadd.f32 %v4889, %v5054
  %v5326 = vadd.f32 %v4890, %v5057
  %v5327 = vadd.f32 %v4891, %v5060
  %v5328 = vadd.f32 %v4892, %v5063
  %v5329 = vadd.f32 %v4893, %v5066
  %v5330 = vadd.f32 %v4894, %v5069
  %v5331 = vadd.f32 %v4895, %v5072
  %v5332 = vadd.f32 %v4896, %v5075
  %v5333 = vadd.f32 %v4897, %v5078
  %v5334 = vadd.f32 %v4898, %v5081
  %v5335 = vadd.f32 %v4899, %v5084
  %v5336 = vadd.f32 %v4900, %v5087
  %v5337 = vadd.f32 %v4901, %v5090
  %v5338 = vadd.f32 %v4902, %v5093
  %v5339 = vadd.f32 %v4903, %v5096
  %v5340 = vadd.f32 %v4904, %v5099
  %v5341 = vadd.f32 %v4905, %v5102
  %v5342 = vadd.f32 %v4906, %v5105
  %v5343 = vadd.f32 %v4907, %v5108
  %v5344 = vadd.f32 %v4908, %v5111
  %v5345 = vadd.f32 %v4909, %v5114
  %v5346 = vadd.f32 %v4910, %v5117
  %v5347 = vadd.f32 %v4911, %v5120
  %v5348 = vadd.f32 %v4912, %v5123
  %v5349 = vadd.f32 %v4913, %v5126
  %v5350 = vadd.f32 %v4914, %v5129
  %v5351 = vadd.f32 %v4915, %v5132
  %v5352 = vadd.f32 %v4916, %v5135
  %v5353 = vadd.f32 %v4917, %v5138
  %v5354 = vadd.f32 %v4918, %v5141
  %v5355 = vadd.f32 %v4919, %v5144
  %v5356 = vadd.f32 %v4920, %v5147
  %v5357 = vadd.f32 %v4921, %v5150
  %v5358 = vadd.f32 %v4922, %v5153
  %v5359 = vadd.f32 %v4923, %v5156
  %v5360 = vadd.f32 %v4924, %v5159
  %v5361 = vadd.f32 %v4925, %v5162
  %v5362 = vadd.f32 %v4926, %v5165
  %v5363 = vadd.f32 %v4927, %v5168
  %v5364 = vadd.f32 %v4928, %v5171
  %v5365 = vadd.f32 %v4929, %v5174
  %v5366 = vadd.f32 %v4930, %v5177
  %v5367 = vadd.f32 %v4931, %v5180
  %v5368 = vadd.f32 %v4932, %v5183
  %v5369 = vadd.f32 %v4933, %v5186
  %v5370 = vadd.f32 %v4934, %v5189
  %v5371 = vadd.f32 %v4935, %v5192
  %v5372 = vadd.f32 %v4936, %v5195
  %v5373 = vadd.f32 %v4937, %v5198
  %v5374 = vadd.f32 %v4938, %v5201
  %v5375 = vadd.f32 %v4939, %v5204
  %v5376 = vadd.f32 %v4940, %v5207
  %v5377 = vadd.f32 %v4941, %v5210
  %v5378 = vadd.f32 %v4942, %v5213
  %v5379 = vadd.f32 %v4943, %v5216
  %v5380 = vadd.f32 %v4944, %v5219
  %v5381 = vadd.f32 %v4945, %v5222
  %v5382 = vadd.f32 %v4946, %v5225
  %v5383 = vadd.f32 %v4947, %v5228
  %v5384 = vadd.f32 %v4948, %v5231
  %v5385 = vadd.f32 %v4949, %v5234
  %v5386 = vadd.f32 %v4950, %v5237
  %v5387 = vadd.f32 %v4951, %v5240
  %v5388 = vadd.f32 %v4952, %v5243
  %v5389 = vadd.f32 %v4953, %v5246
  %v5390 = vadd.f32 %v4954, %v5249
  %v5391 = vadd.f32 %v4955, %v5252
  %v5392 = vadd.f32 %v4956, %v5255
  %v5393 = vadd.f32 %v4957, %v5258
  %v5394 = vadd.f32 %v4958, %v5261
  %v5395 = vadd.f32 %v4959, %v5264
  %v5396 = vadd.f32 %v4960, %v5267
  %v5397 = vadd.f32 %v4961, %v5270
  %v5398 = vadd.f32 %v4962, %v5273
  %v5399 = vadd.f32 %v4963, %v5276
  %v5400 = vadd.f32 %v4964, %v5279
  %v5401 = vadd.f32 %v4965, %v5282
  %v5402 = vadd.f32 %v4966, %v5285
  %v5403 = vadd.f32 %v4967, %v5288
  %v5404 = vadd.f32 %v4968, %v5291
  %v5405 = vadd.f32 %v4969, %v5294
  %v5406 = vadd.f32 %v4970, %v5297
  %v5407 = vadd.f32 %v4971, %v5300
  %v5408 = vadd.f32 %v4972, %v5303
  %s5409 = scalar_lea.vmem %s3, 192
  %v5410 = vld [vmem:[%s5409] sm:$0xff]
  %v5411 = vld [vmem:[%s5409 + $0x8] sm:$0xff]
  %v5412 = vld [vmem:[%s5409 + $0x10] sm:$0xff]
  %v5413 = vld [vmem:[%s5409 + $0x18] sm:$0xff]
  %5414 = vmatpush.msra.mxu0 0.0
  %5415 = vmatpush.msra.mxu0 0.0
  %5416 = vmatpush.msra.mxu0 0.0
  %5417 = vmatpush.msra.mxu0 0.0
  %5418 = vmatpush.msra.mxu0 0.0
  %5419 = vmatpush.msra.mxu0 0.0
  %5420 = vmatpush.msra.mxu0 0.0
  %5421 = vmatpush.msra.mxu0 0.0
  %5422 = vmatpush.msra.mxu0 0.0
  %5423 = vmatpush.msra.mxu0 0.0
  %5424 = vmatpush.msra.mxu0 0.0
  %5425 = vmatpush.msra.mxu0 0.0
  %5426 = vmatpush.msra.mxu0 %v5413
  %5427 = vmatpush.msra.mxu0 %v5412
  %5428 = vmatpush.msra.mxu0 %v5411
  %5429 = vmatpush.msra.mxu0 %v5410
  %5430 = vmatmul.f32.gmra.mxu0 %v951
  %v5431 = vpop.f32.mrf.mxu0
  %5432 = vmatmul.f32.gmra.mxu0 %v954
  %v5433 = vpop.f32.mrf.mxu0
  %5434 = vmatmul.f32.gmra.mxu0 %v957
  %v5435 = vpop.f32.mrf.mxu0
  %5436 = vmatmul.f32.gmra.mxu0 %v960
  %v5437 = vpop.f32.mrf.mxu0
  %v5438 = vadd.f32 0.0, %v5437
  %5439 = vmatmul.f32.gmra.mxu0 %v963
  %v5440 = vpop.f32.mrf.mxu0
  %v5441 = vadd.f32 0.0, %v5440
  %5442 = vmatmul.f32.gmra.mxu0 %v966
  %v5443 = vpop.f32.mrf.mxu0
  %v5444 = vadd.f32 0.0, %v5443
  %5445 = vmatmul.f32.gmra.mxu0 %v969
  %v5446 = vpop.f32.mrf.mxu0
  %v5447 = vadd.f32 0.0, %v5446
  %5448 = vmatmul.f32.gmra.mxu0 %v972
  %v5449 = vpop.f32.mrf.mxu0
  %v5450 = vadd.f32 0.0, %v5449
  %5451 = vmatmul.f32.gmra.mxu0 %v975
  %v5452 = vpop.f32.mrf.mxu0
  %v5453 = vadd.f32 0.0, %v5452
  %5454 = vmatmul.f32.gmra.mxu0 %v978
  %v5455 = vpop.f32.mrf.mxu0
  %v5456 = vadd.f32 0.0, %v5455
  %5457 = vmatmul.f32.gmra.mxu0 %v981
  %v5458 = vpop.f32.mrf.mxu0
  %v5459 = vadd.f32 0.0, %v5458
  %5460 = vmatmul.f32.gmra.mxu0 %v984
  %v5461 = vpop.f32.mrf.mxu0
  %v5462 = vadd.f32 0.0, %v5461
  %5463 = vmatmul.f32.gmra.mxu0 %v987
  %v5464 = vpop.f32.mrf.mxu0
  %v5465 = vadd.f32 0.0, %v5464
  %5466 = vmatmul.f32.gmra.mxu0 %v990
  %v5467 = vpop.f32.mrf.mxu0
  %v5468 = vadd.f32 0.0, %v5467
  %5469 = vmatmul.f32.gmra.mxu0 %v993
  %v5470 = vpop.f32.mrf.mxu0
  %v5471 = vadd.f32 0.0, %v5470
  %5472 = vmatmul.f32.gmra.mxu0 %v996
  %v5473 = vpop.f32.mrf.mxu0
  %v5474 = vadd.f32 0.0, %v5473
  %5475 = vmatmul.f32.gmra.mxu0 %v999
  %v5476 = vpop.f32.mrf.mxu0
  %v5477 = vadd.f32 0.0, %v5476
  %5478 = vmatmul.f32.gmra.mxu0 %v1002
  %v5479 = vpop.f32.mrf.mxu0
  %v5480 = vadd.f32 0.0, %v5479
  %5481 = vmatmul.f32.gmra.mxu0 %v1005
  %v5482 = vpop.f32.mrf.mxu0
  %v5483 = vadd.f32 0.0, %v5482
  %5484 = vmatmul.f32.gmra.mxu0 %v1008
  %v5485 = vpop.f32.mrf.mxu0
  %v5486 = vadd.f32 0.0, %v5485
  %5487 = vmatmul.f32.gmra.mxu0 %v1011
  %v5488 = vpop.f32.mrf.mxu0
  %v5489 = vadd.f32 0.0, %v5488
  %5490 = vmatmul.f32.gmra.mxu0 %v1014
  %v5491 = vpop.f32.mrf.mxu0
  %v5492 = vadd.f32 0.0, %v5491
  %5493 = vmatmul.f32.gmra.mxu0 %v1017
  %v5494 = vpop.f32.mrf.mxu0
  %v5495 = vadd.f32 0.0, %v5494
  %5496 = vmatmul.f32.gmra.mxu0 %v1020
  %v5497 = vpop.f32.mrf.mxu0
  %v5498 = vadd.f32 0.0, %v5497
  %5499 = vmatmul.f32.gmra.mxu0 %v1023
  %v5500 = vpop.f32.mrf.mxu0
  %v5501 = vadd.f32 0.0, %v5500
  %5502 = vmatmul.f32.gmra.mxu0 %v1026
  %v5503 = vpop.f32.mrf.mxu0
  %v5504 = vadd.f32 0.0, %v5503
  %5505 = vmatmul.f32.gmra.mxu0 %v1029
  %v5506 = vpop.f32.mrf.mxu0
  %v5507 = vadd.f32 0.0, %v5506
  %5508 = vmatmul.f32.gmra.mxu0 %v1032
  %v5509 = vpop.f32.mrf.mxu0
  %v5510 = vadd.f32 0.0, %v5509
  %5511 = vmatmul.f32.gmra.mxu0 %v1035
  %v5512 = vpop.f32.mrf.mxu0
  %v5513 = vadd.f32 0.0, %v5512
  %5514 = vmatmul.f32.gmra.mxu0 %v1038
  %v5515 = vpop.f32.mrf.mxu0
  %v5516 = vadd.f32 0.0, %v5515
  %5517 = vmatmul.f32.gmra.mxu0 %v1041
  %v5518 = vpop.f32.mrf.mxu0
  %v5519 = vadd.f32 0.0, %v5518
  %5520 = vmatmul.f32.gmra.mxu0 %v1044
  %v5521 = vpop.f32.mrf.mxu0
  %v5522 = vadd.f32 0.0, %v5521
  %5523 = vmatmul.f32.gmra.mxu0 %v1047
  %v5524 = vpop.f32.mrf.mxu0
  %v5525 = vadd.f32 0.0, %v5524
  %5526 = vmatmul.f32.gmra.mxu0 %v1050
  %v5527 = vpop.f32.mrf.mxu0
  %v5528 = vadd.f32 0.0, %v5527
  %5529 = vmatmul.f32.gmra.mxu0 %v1053
  %v5530 = vpop.f32.mrf.mxu0
  %v5531 = vadd.f32 0.0, %v5530
  %5532 = vmatmul.f32.gmra.mxu0 %v1056
  %v5533 = vpop.f32.mrf.mxu0
  %v5534 = vadd.f32 0.0, %v5533
  %5535 = vmatmul.f32.gmra.mxu0 %v1059
  %v5536 = vpop.f32.mrf.mxu0
  %v5537 = vadd.f32 0.0, %v5536
  %5538 = vmatmul.f32.gmra.mxu0 %v1062
  %v5539 = vpop.f32.mrf.mxu0
  %v5540 = vadd.f32 0.0, %v5539
  %5541 = vmatmul.f32.gmra.mxu0 %v1065
  %v5542 = vpop.f32.mrf.mxu0
  %v5543 = vadd.f32 0.0, %v5542
  %5544 = vmatmul.f32.gmra.mxu0 %v1068
  %v5545 = vpop.f32.mrf.mxu0
  %v5546 = vadd.f32 0.0, %v5545
  %5547 = vmatmul.f32.gmra.mxu0 %v1071
  %v5548 = vpop.f32.mrf.mxu0
  %v5549 = vadd.f32 0.0, %v5548
  %5550 = vmatmul.f32.gmra.mxu0 %v1074
  %v5551 = vpop.f32.mrf.mxu0
  %v5552 = vadd.f32 0.0, %v5551
  %5553 = vmatmul.f32.gmra.mxu0 %v1077
  %v5554 = vpop.f32.mrf.mxu0
  %v5555 = vadd.f32 0.0, %v5554
  %5556 = vmatmul.f32.gmra.mxu0 %v1080
  %v5557 = vpop.f32.mrf.mxu0
  %v5558 = vadd.f32 0.0, %v5557
  %5559 = vmatmul.f32.gmra.mxu0 %v1083
  %v5560 = vpop.f32.mrf.mxu0
  %v5561 = vadd.f32 0.0, %v5560
  %5562 = vmatmul.f32.gmra.mxu0 %v1086
  %v5563 = vpop.f32.mrf.mxu0
  %v5564 = vadd.f32 0.0, %v5563
  %5565 = vmatmul.f32.gmra.mxu0 %v1089
  %v5566 = vpop.f32.mrf.mxu0
  %v5567 = vadd.f32 0.0, %v5566
  %5568 = vmatmul.f32.gmra.mxu0 %v1092
  %v5569 = vpop.f32.mrf.mxu0
  %v5570 = vadd.f32 0.0, %v5569
  %5571 = vmatmul.f32.gmra.mxu0 %v1095
  %v5572 = vpop.f32.mrf.mxu0
  %v5573 = vadd.f32 0.0, %v5572
  %5574 = vmatmul.f32.gmra.mxu0 %v1098
  %v5575 = vpop.f32.mrf.mxu0
  %v5576 = vadd.f32 0.0, %v5575
  %5577 = vmatmul.f32.gmra.mxu0 %v1101
  %v5578 = vpop.f32.mrf.mxu0
  %v5579 = vadd.f32 0.0, %v5578
  %5580 = vmatmul.f32.gmra.mxu0 %v1104
  %v5581 = vpop.f32.mrf.mxu0
  %v5582 = vadd.f32 0.0, %v5581
  %5583 = vmatmul.f32.gmra.mxu0 %v1107
  %v5584 = vpop.f32.mrf.mxu0
  %v5585 = vadd.f32 0.0, %v5584
  %5586 = vmatmul.f32.gmra.mxu0 %v1110
  %v5587 = vpop.f32.mrf.mxu0
  %v5588 = vadd.f32 0.0, %v5587
  %5589 = vmatmul.f32.gmra.mxu0 %v1113
  %v5590 = vpop.f32.mrf.mxu0
  %v5591 = vadd.f32 0.0, %v5590
  %5592 = vmatmul.f32.gmra.mxu0 %v1116
  %v5593 = vpop.f32.mrf.mxu0
  %v5594 = vadd.f32 0.0, %v5593
  %5595 = vmatmul.f32.gmra.mxu0 %v1119
  %v5596 = vpop.f32.mrf.mxu0
  %v5597 = vadd.f32 0.0, %v5596
  %5598 = vmatmul.f32.gmra.mxu0 %v1122
  %v5599 = vpop.f32.mrf.mxu0
  %v5600 = vadd.f32 0.0, %v5599
  %5601 = vmatmul.f32.gmra.mxu0 %v1125
  %v5602 = vpop.f32.mrf.mxu0
  %v5603 = vadd.f32 0.0, %v5602
  %5604 = vmatmul.f32.gmra.mxu0 %v1128
  %v5605 = vpop.f32.mrf.mxu0
  %v5606 = vadd.f32 0.0, %v5605
  %5607 = vmatmul.f32.gmra.mxu0 %v1131
  %v5608 = vpop.f32.mrf.mxu0
  %v5609 = vadd.f32 0.0, %v5608
  %5610 = vmatmul.f32.gmra.mxu0 %v1134
  %v5611 = vpop.f32.mrf.mxu0
  %v5612 = vadd.f32 0.0, %v5611
  %5613 = vmatmul.f32.gmra.mxu0 %v1137
  %v5614 = vpop.f32.mrf.mxu0
  %v5615 = vadd.f32 0.0, %v5614
  %5616 = vmatmul.f32.gmra.mxu0 %v1140
  %v5617 = vpop.f32.mrf.mxu0
  %v5618 = vadd.f32 0.0, %v5617
  %5619 = vmatmul.f32.gmra.mxu0 %v1143
  %v5620 = vpop.f32.mrf.mxu0
  %v5621 = vadd.f32 0.0, %v5620
  %5622 = vmatmul.f32.gmra.mxu0 %v1146
  %v5623 = vpop.f32.mrf.mxu0
  %v5624 = vadd.f32 0.0, %v5623
  %5625 = vmatmul.f32.gmra.mxu0 %v1149
  %v5626 = vpop.f32.mrf.mxu0
  %v5627 = vadd.f32 0.0, %v5626
  %5628 = vmatmul.f32.gmra.mxu0 %v1152
  %v5629 = vpop.f32.mrf.mxu0
  %v5630 = vadd.f32 0.0, %v5629
  %5631 = vmatmul.f32.gmra.mxu0 %v1155
  %v5632 = vpop.f32.mrf.mxu0
  %v5633 = vadd.f32 0.0, %v5632
  %5634 = vmatmul.f32.gmra.mxu0 %v1158
  %v5635 = vpop.f32.mrf.mxu0
  %v5636 = vadd.f32 0.0, %v5635
  %5637 = vmatmul.f32.gmra.mxu0 %v1161
  %v5638 = vpop.f32.mrf.mxu0
  %v5639 = vadd.f32 0.0, %v5638
  %5640 = vmatmul.f32.gmra.mxu0 %v1164
  %v5641 = vpop.f32.mrf.mxu0
  %v5642 = vadd.f32 0.0, %v5641
  %5643 = vmatmul.f32.gmra.mxu0 %v1167
  %v5644 = vpop.f32.mrf.mxu0
  %v5645 = vadd.f32 0.0, %v5644
  %5646 = vmatmul.f32.gmra.mxu0 %v1170
  %v5647 = vpop.f32.mrf.mxu0
  %v5648 = vadd.f32 0.0, %v5647
  %5649 = vmatmul.f32.gmra.mxu0 %v1173
  %v5650 = vpop.f32.mrf.mxu0
  %v5651 = vadd.f32 0.0, %v5650
  %5652 = vmatmul.f32.gmra.mxu0 %v1176
  %v5653 = vpop.f32.mrf.mxu0
  %v5654 = vadd.f32 0.0, %v5653
  %5655 = vmatmul.f32.gmra.mxu0 %v1179
  %v5656 = vpop.f32.mrf.mxu0
  %v5657 = vadd.f32 0.0, %v5656
  %5658 = vmatmul.f32.gmra.mxu0 %v1182
  %v5659 = vpop.f32.mrf.mxu0
  %v5660 = vadd.f32 0.0, %v5659
  %5661 = vmatmul.f32.gmra.mxu0 %v1185
  %v5662 = vpop.f32.mrf.mxu0
  %v5663 = vadd.f32 0.0, %v5662
  %5664 = vmatmul.f32.gmra.mxu0 %v1188
  %v5665 = vpop.f32.mrf.mxu0
  %v5666 = vadd.f32 0.0, %v5665
  %5667 = vmatmul.f32.gmra.mxu0 %v1191
  %v5668 = vpop.f32.mrf.mxu0
  %v5669 = vadd.f32 0.0, %v5668
  %5670 = vmatmul.f32.gmra.mxu0 %v1194
  %v5671 = vpop.f32.mrf.mxu0
  %v5672 = vadd.f32 0.0, %v5671
  %5673 = vmatmul.f32.gmra.mxu0 %v1197
  %v5674 = vpop.f32.mrf.mxu0
  %v5675 = vadd.f32 0.0, %v5674
  %5676 = vmatmul.f32.gmra.mxu0 %v1200
  %v5677 = vpop.f32.mrf.mxu0
  %v5678 = vadd.f32 0.0, %v5677
  %5679 = vmatmul.f32.gmra.mxu0 %v1203
  %v5680 = vpop.f32.mrf.mxu0
  %v5681 = vadd.f32 0.0, %v5680
  %5682 = vmatmul.f32.gmra.mxu0 %v1206
  %v5683 = vpop.f32.mrf.mxu0
  %v5684 = vadd.f32 0.0, %v5683
  %5685 = vmatmul.f32.gmra.mxu0 %v1209
  %v5686 = vpop.f32.mrf.mxu0
  %v5687 = vadd.f32 0.0, %v5686
  %5688 = vmatmul.f32.gmra.mxu0 %v1212
  %v5689 = vpop.f32.mrf.mxu0
  %v5690 = vadd.f32 0.0, %v5689
  %5691 = vmatmul.f32.gmra.mxu0 %v1215
  %v5692 = vpop.f32.mrf.mxu0
  %v5693 = vadd.f32 0.0, %v5692
  %5694 = vmatmul.f32.gmra.mxu0 %v1218
  %v5695 = vpop.f32.mrf.mxu0
  %v5696 = vadd.f32 0.0, %v5695
  %5697 = vmatmul.f32.gmra.mxu0 %v1221
  %v5698 = vpop.f32.mrf.mxu0
  %v5699 = vadd.f32 0.0, %v5698
  %5700 = vmatmul.f32.gmra.mxu0 %v1224
  %v5701 = vpop.f32.mrf.mxu0
  %v5702 = vadd.f32 0.0, %v5701
  %5703 = vmatmul.f32.gmra.mxu0 %v1227
  %v5704 = vpop.f32.mrf.mxu0
  %v5705 = vadd.f32 0.0, %v5704
  %5706 = vmatmul.f32.gmra.mxu0 %v1230
  %v5707 = vpop.f32.mrf.mxu0
  %v5708 = vadd.f32 0.0, %v5707
  %5709 = vmatmul.f32.gmra.mxu0 %v1233
  %v5710 = vpop.f32.mrf.mxu0
  %v5711 = vadd.f32 0.0, %v5710
  %5712 = vmatmul.f32.gmra.mxu0 %v1236
  %v5713 = vpop.f32.mrf.mxu0
  %v5714 = vadd.f32 0.0, %v5713
  %5715 = vmatmul.f32.gmra.mxu0 %v1239
  %v5716 = vpop.f32.mrf.mxu0
  %v5717 = vadd.f32 0.0, %v5716
  %5718 = vmatmul.f32.gmra.mxu0 %v1242
  %v5719 = vpop.f32.mrf.mxu0
  %v5720 = vadd.f32 0.0, %v5719
  %5721 = vmatmul.f32.gmra.mxu0 %v1245
  %v5722 = vpop.f32.mrf.mxu0
  %v5723 = vadd.f32 0.0, %v5722
  %5724 = vmatmul.f32.gmra.mxu0 %v1248
  %v5725 = vpop.f32.mrf.mxu0
  %v5726 = vadd.f32 0.0, %v5725
  %5727 = vmatmul.f32.gmra.mxu0 %v1251
  %v5728 = vpop.f32.mrf.mxu0
  %v5729 = vadd.f32 0.0, %v5728
  %5730 = vmatmul.f32.gmra.mxu0 %v1254
  %v5731 = vpop.f32.mrf.mxu0
  %v5732 = vadd.f32 0.0, %v5731
  %5733 = vmatmul.f32.gmra.mxu0 %v1257
  %v5734 = vpop.f32.mrf.mxu0
  %v5735 = vadd.f32 0.0, %v5734
  %5736 = vmatmul.f32.gmra.mxu0 %v1260
  %v5737 = vpop.f32.mrf.mxu0
  %v5738 = vadd.f32 0.0, %v5737
  %5739 = vmatmul.f32.gmra.mxu0 %v1263
  %v5740 = vpop.f32.mrf.mxu0
  %v5741 = vadd.f32 0.0, %v5740
  %5742 = vdwg.mxu0
  %vm5845 = vcmask 1043456
  %v5846 = vrot.slane %v5438, 4
  %v5847 = vrot.slane %v5441, 4
  %v5848 = vsel %vm5845, %v5846, %v5847
  %v5849 = vrot.slane %v5444, 4
  %v5850 = vsel %vm5845, %v5847, %v5849
  %v5851 = vrot.slane %v5447, 4
  %v5852 = vsel %vm5845, %v5849, %v5851
  %v5853 = vrot.slane %v5450, 4
  %v5854 = vsel %vm5845, %v5851, %v5853
  %v5855 = vrot.slane %v5453, 4
  %v5856 = vsel %vm5845, %v5853, %v5855
  %v5857 = vrot.slane %v5456, 4
  %v5858 = vsel %vm5845, %v5855, %v5857
  %v5859 = vrot.slane %v5459, 4
  %v5860 = vsel %vm5845, %v5857, %v5859
  %v5861 = vrot.slane %v5462, 4
  %v5862 = vsel %vm5845, %v5859, %v5861
  %v5863 = vrot.slane %v5465, 4
  %v5864 = vsel %vm5845, %v5861, %v5863
  %v5865 = vrot.slane %v5468, 4
  %v5866 = vsel %vm5845, %v5863, %v5865
  %v5867 = vrot.slane %v5471, 4
  %v5868 = vsel %vm5845, %v5865, %v5867
  %v5869 = vrot.slane %v5474, 4
  %v5870 = vsel %vm5845, %v5867, %v5869
  %v5871 = vrot.slane %v5477, 4
  %v5872 = vsel %vm5845, %v5869, %v5871
  %v5873 = vrot.slane %v5480, 4
  %v5874 = vsel %vm5845, %v5871, %v5873
  %v5875 = vrot.slane %v5483, 4
  %v5876 = vsel %vm5845, %v5873, %v5875
  %v5877 = vrot.slane %v5486, 4
  %v5878 = vsel %vm5845, %v5875, %v5877
  %v5879 = vrot.slane %v5489, 4
  %v5880 = vsel %vm5845, %v5877, %v5879
  %v5881 = vrot.slane %v5492, 4
  %v5882 = vsel %vm5845, %v5879, %v5881
  %v5883 = vrot.slane %v5495, 4
  %v5884 = vsel %vm5845, %v5881, %v5883
  %v5885 = vrot.slane %v5498, 4
  %v5886 = vsel %vm5845, %v5883, %v5885
  %v5887 = vrot.slane %v5501, 4
  %v5888 = vsel %vm5845, %v5885, %v5887
  %v5889 = vrot.slane %v5504, 4
  %v5890 = vsel %vm5845, %v5887, %v5889
  %v5891 = vrot.slane %v5507, 4
  %v5892 = vsel %vm5845, %v5889, %v5891
  %v5893 = vrot.slane %v5510, 4
  %v5894 = vsel %vm5845, %v5891, %v5893
  %v5895 = vrot.slane %v5513, 4
  %v5896 = vsel %vm5845, %v5893, %v5895
  %v5897 = vrot.slane %v5516, 4
  %v5898 = vsel %vm5845, %v5895, %v5897
  %v5899 = vrot.slane %v5519, 4
  %v5900 = vsel %vm5845, %v5897, %v5899
  %v5901 = vrot.slane %v5522, 4
  %v5902 = vsel %vm5845, %v5899, %v5901
  %v5903 = vrot.slane %v5525, 4
  %v5904 = vsel %vm5845, %v5901, %v5903
  %v5905 = vrot.slane %v5528, 4
  %v5906 = vsel %vm5845, %v5903, %v5905
  %v5907 = vrot.slane %v5531, 4
  %v5908 = vsel %vm5845, %v5905, %v5907
  %v5909 = vrot.slane %v5534, 4
  %v5910 = vsel %vm5845, %v5907, %v5909
  %v5911 = vrot.slane %v5537, 4
  %v5912 = vsel %vm5845, %v5909, %v5911
  %v5913 = vrot.slane %v5540, 4
  %v5914 = vsel %vm5845, %v5911, %v5913
  %v5915 = vrot.slane %v5543, 4
  %v5916 = vsel %vm5845, %v5913, %v5915
  %v5917 = vrot.slane %v5546, 4
  %v5918 = vsel %vm5845, %v5915, %v5917
  %v5919 = vrot.slane %v5549, 4
  %v5920 = vsel %vm5845, %v5917, %v5919
  %v5921 = vrot.slane %v5552, 4
  %v5922 = vsel %vm5845, %v5919, %v5921
  %v5923 = vrot.slane %v5555, 4
  %v5924 = vsel %vm5845, %v5921, %v5923
  %v5925 = vrot.slane %v5558, 4
  %v5926 = vsel %vm5845, %v5923, %v5925
  %v5927 = vrot.slane %v5561, 4
  %v5928 = vsel %vm5845, %v5925, %v5927
  %v5929 = vrot.slane %v5564, 4
  %v5930 = vsel %vm5845, %v5927, %v5929
  %v5931 = vrot.slane %v5567, 4
  %v5932 = vsel %vm5845, %v5929, %v5931
  %v5933 = vrot.slane %v5570, 4
  %v5934 = vsel %vm5845, %v5931, %v5933
  %v5935 = vrot.slane %v5573, 4
  %v5936 = vsel %vm5845, %v5933, %v5935
  %v5937 = vrot.slane %v5576, 4
  %v5938 = vsel %vm5845, %v5935, %v5937
  %v5939 = vrot.slane %v5579, 4
  %v5940 = vsel %vm5845, %v5937, %v5939
  %v5941 = vrot.slane %v5582, 4
  %v5942 = vsel %vm5845, %v5939, %v5941
  %v5943 = vrot.slane %v5585, 4
  %v5944 = vsel %vm5845, %v5941, %v5943
  %v5945 = vrot.slane %v5588, 4
  %v5946 = vsel %vm5845, %v5943, %v5945
  %v5947 = vrot.slane %v5591, 4
  %v5948 = vsel %vm5845, %v5945, %v5947
  %v5949 = vrot.slane %v5594, 4
  %v5950 = vsel %vm5845, %v5947, %v5949
  %v5951 = vrot.slane %v5597, 4
  %v5952 = vsel %vm5845, %v5949, %v5951
  %v5953 = vrot.slane %v5600, 4
  %v5954 = vsel %vm5845, %v5951, %v5953
  %v5955 = vrot.slane %v5603, 4
  %v5956 = vsel %vm5845, %v5953, %v5955
  %v5957 = vrot.slane %v5606, 4
  %v5958 = vsel %vm5845, %v5955, %v5957
  %v5959 = vrot.slane %v5609, 4
  %v5960 = vsel %vm5845, %v5957, %v5959
  %v5961 = vrot.slane %v5612, 4
  %v5962 = vsel %vm5845, %v5959, %v5961
  %v5963 = vrot.slane %v5615, 4
  %v5964 = vsel %vm5845, %v5961, %v5963
  %v5965 = vrot.slane %v5618, 4
  %v5966 = vsel %vm5845, %v5963, %v5965
  %v5967 = vrot.slane %v5621, 4
  %v5968 = vsel %vm5845, %v5965, %v5967
  %v5969 = vrot.slane %v5624, 4
  %v5970 = vsel %vm5845, %v5967, %v5969
  %v5971 = vrot.slane %v5627, 4
  %v5972 = vsel %vm5845, %v5969, %v5971
  %v5973 = vrot.slane %v5630, 4
  %v5974 = vsel %vm5845, %v5971, %v5973
  %v5975 = vrot.slane %v5633, 4
  %v5976 = vsel %vm5845, %v5973, %v5975
  %v5977 = vrot.slane %v5636, 4
  %v5978 = vsel %vm5845, %v5975, %v5977
  %v5979 = vrot.slane %v5639, 4
  %v5980 = vsel %vm5845, %v5977, %v5979
  %v5981 = vrot.slane %v5642, 4
  %v5982 = vsel %vm5845, %v5979, %v5981
  %v5983 = vrot.slane %v5645, 4
  %v5984 = vsel %vm5845, %v5981, %v5983
  %v5985 = vrot.slane %v5648, 4
  %v5986 = vsel %vm5845, %v5983, %v5985
  %v5987 = vrot.slane %v5651, 4
  %v5988 = vsel %vm5845, %v5985, %v5987
  %v5989 = vrot.slane %v5654, 4
  %v5990 = vsel %vm5845, %v5987, %v5989
  %v5991 = vrot.slane %v5657, 4
  %v5992 = vsel %vm5845, %v5989, %v5991
  %v5993 = vrot.slane %v5660, 4
  %v5994 = vsel %vm5845, %v5991, %v5993
  %v5995 = vrot.slane %v5663, 4
  %v5996 = vsel %vm5845, %v5993, %v5995
  %v5997 = vrot.slane %v5666, 4
  %v5998 = vsel %vm5845, %v5995, %v5997
  %v5999 = vrot.slane %v5669, 4
  %v6000 = vsel %vm5845, %v5997, %v5999
  %v6001 = vrot.slane %v5672, 4
  %v6002 = vsel %vm5845, %v5999, %v6001
  %v6003 = vrot.slane %v5675, 4
  %v6004 = vsel %vm5845, %v6001, %v6003
  %v6005 = vrot.slane %v5678, 4
  %v6006 = vsel %vm5845, %v6003, %v6005
  %v6007 = vrot.slane %v5681, 4
  %v6008 = vsel %vm5845, %v6005, %v6007
  %v6009 = vrot.slane %v5684, 4
  %v6010 = vsel %vm5845, %v6007, %v6009
  %v6011 = vrot.slane %v5687, 4
  %v6012 = vsel %vm5845, %v6009, %v6011
  %v6013 = vrot.slane %v5690, 4
  %v6014 = vsel %vm5845, %v6011, %v6013
  %v6015 = vrot.slane %v5693, 4
  %v6016 = vsel %vm5845, %v6013, %v6015
  %v6017 = vrot.slane %v5696, 4
  %v6018 = vsel %vm5845, %v6015, %v6017
  %v6019 = vrot.slane %v5699, 4
  %v6020 = vsel %vm5845, %v6017, %v6019
  %v6021 = vrot.slane %v5702, 4
  %v6022 = vsel %vm5845, %v6019, %v6021
  %v6023 = vrot.slane %v5705, 4
  %v6024 = vsel %vm5845, %v6021, %v6023
  %v6025 = vrot.slane %v5708, 4
  %v6026 = vsel %vm5845, %v6023, %v6025
  %v6027 = vrot.slane %v5711, 4
  %v6028 = vsel %vm5845, %v6025, %v6027
  %v6029 = vrot.slane %v5714, 4
  %v6030 = vsel %vm5845, %v6027, %v6029
  %v6031 = vrot.slane %v5717, 4
  %v6032 = vsel %vm5845, %v6029, %v6031
  %v6033 = vrot.slane %v5720, 4
  %v6034 = vsel %vm5845, %v6031, %v6033
  %v6035 = vrot.slane %v5723, 4
  %v6036 = vsel %vm5845, %v6033, %v6035
  %v6037 = vrot.slane %v5726, 4
  %v6038 = vsel %vm5845, %v6035, %v6037
  %v6039 = vrot.slane %v5729, 4
  %v6040 = vsel %vm5845, %v6037, %v6039
  %v6041 = vrot.slane %v5732, 4
  %v6042 = vsel %vm5845, %v6039, %v6041
  %v6043 = vrot.slane %v5735, 4
  %v6044 = vsel %vm5845, %v6041, %v6043
  %v6045 = vrot.slane %v5738, 4
  %v6046 = vsel %vm5845, %v6043, %v6045
  %v6047 = vrot.slane %v5741, 4
  %v6048 = vsel %vm5845, %v6045, %v6047
  %v6151 = vadd.f32 %v5307, %v5848
  %v6152 = vadd.f32 %v5308, %v5850
  %v6153 = vadd.f32 %v5309, %v5852
  %v6154 = vadd.f32 %v5310, %v5854
  %v6155 = vadd.f32 %v5311, %v5856
  %v6156 = vadd.f32 %v5312, %v5858
  %v6157 = vadd.f32 %v5313, %v5860
  %v6158 = vadd.f32 %v5314, %v5862
  %v6159 = vadd.f32 %v5315, %v5864
  %v6160 = vadd.f32 %v5316, %v5866
  %v6161 = vadd.f32 %v5317, %v5868
  %v6162 = vadd.f32 %v5318, %v5870
  %v6163 = vadd.f32 %v5319, %v5872
  %v6164 = vadd.f32 %v5320, %v5874
  %v6165 = vadd.f32 %v5321, %v5876
  %v6166 = vadd.f32 %v5322, %v5878
  %v6167 = vadd.f32 %v5323, %v5880
  %v6168 = vadd.f32 %v5324, %v5882
  %v6169 = vadd.f32 %v5325, %v5884
  %v6170 = vadd.f32 %v5326, %v5886
  %v6171 = vadd.f32 %v5327, %v5888
  %v6172 = vadd.f32 %v5328, %v5890
  %v6173 = vadd.f32 %v5329, %v5892
  %v6174 = vadd.f32 %v5330, %v5894
  %v6175 = vadd.f32 %v5331, %v5896
  %v6176 = vadd.f32 %v5332, %v5898
  %v6177 = vadd.f32 %v5333, %v5900
  %v6178 = vadd.f32 %v5334, %v5902
  %v6179 = vadd.f32 %v5335, %v5904
  %v6180 = vadd.f32 %v5336, %v5906
  %v6181 = vadd.f32 %v5337, %v5908
  %v6182 = vadd.f32 %v5338, %v5910
  %v6183 = vadd.f32 %v5339, %v5912
  %v6184 = vadd.f32 %v5340, %v5914
  %v6185 = vadd.f32 %v5341, %v5916
  %v6186 = vadd.f32 %v5342, %v5918
  %v6187 = vadd.f32 %v5343, %v5920
  %v6188 = vadd.f32 %v5344, %v5922
  %v6189 = vadd.f32 %v5345, %v5924
  %v6190 = vadd.f32 %v5346, %v5926
  %v6191 = vadd.f32 %v5347, %v5928
  %v6192 = vadd.f32 %v5348, %v5930
  %v6193 = vadd.f32 %v5349, %v5932
  %v6194 = vadd.f32 %v5350, %v5934
  %v6195 = vadd.f32 %v5351, %v5936
  %v6196 = vadd.f32 %v5352, %v5938
  %v6197 = vadd.f32 %v5353, %v5940
  %v6198 = vadd.f32 %v5354, %v5942
  %v6199 = vadd.f32 %v5355, %v5944
  %v6200 = vadd.f32 %v5356, %v5946
  %v6201 = vadd.f32 %v5357, %v5948
  %v6202 = vadd.f32 %v5358, %v5950
  %v6203 = vadd.f32 %v5359, %v5952
  %v6204 = vadd.f32 %v5360, %v5954
  %v6205 = vadd.f32 %v5361, %v5956
  %v6206 = vadd.f32 %v5362, %v5958
  %v6207 = vadd.f32 %v5363, %v5960
  %v6208 = vadd.f32 %v5364, %v5962
  %v6209 = vadd.f32 %v5365, %v5964
  %v6210 = vadd.f32 %v5366, %v5966
  %v6211 = vadd.f32 %v5367, %v5968
  %v6212 = vadd.f32 %v5368, %v5970
  %v6213 = vadd.f32 %v5369, %v5972
  %v6214 = vadd.f32 %v5370, %v5974
  %v6215 = vadd.f32 %v5371, %v5976
  %v6216 = vadd.f32 %v5372, %v5978
  %v6217 = vadd.f32 %v5373, %v5980
  %v6218 = vadd.f32 %v5374, %v5982
  %v6219 = vadd.f32 %v5375, %v5984
  %v6220 = vadd.f32 %v5376, %v5986
  %v6221 = vadd.f32 %v5377, %v5988
  %v6222 = vadd.f32 %v5378, %v5990
  %v6223 = vadd.f32 %v5379, %v5992
  %v6224 = vadd.f32 %v5380, %v5994
  %v6225 = vadd.f32 %v5381, %v5996
  %v6226 = vadd.f32 %v5382, %v5998
  %v6227 = vadd.f32 %v5383, %v6000
  %v6228 = vadd.f32 %v5384, %v6002
  %v6229 = vadd.f32 %v5385, %v6004
  %v6230 = vadd.f32 %v5386, %v6006
  %v6231 = vadd.f32 %v5387, %v6008
  %v6232 = vadd.f32 %v5388, %v6010
  %v6233 = vadd.f32 %v5389, %v6012
  %v6234 = vadd.f32 %v5390, %v6014
  %v6235 = vadd.f32 %v5391, %v6016
  %v6236 = vadd.f32 %v5392, %v6018
  %v6237 = vadd.f32 %v5393, %v6020
  %v6238 = vadd.f32 %v5394, %v6022
  %v6239 = vadd.f32 %v5395, %v6024
  %v6240 = vadd.f32 %v5396, %v6026
  %v6241 = vadd.f32 %v5397, %v6028
  %v6242 = vadd.f32 %v5398, %v6030
  %v6243 = vadd.f32 %v5399, %v6032
  %v6244 = vadd.f32 %v5400, %v6034
  %v6245 = vadd.f32 %v5401, %v6036
  %v6246 = vadd.f32 %v5402, %v6038
  %v6247 = vadd.f32 %v5403, %v6040
  %v6248 = vadd.f32 %v5404, %v6042
  %v6249 = vadd.f32 %v5405, %v6044
  %v6250 = vadd.f32 %v5406, %v6046
  %v6251 = vadd.f32 %v5407, %v6048
  %v6252 = vadd.f32 %v5408, %v6047
  %s6253 = scalar_lea.vmem %s3, 224
  %v6254 = vld [vmem:[%s6253] sm:$0xff]
  %v6255 = vld [vmem:[%s6253 + $0x8] sm:$0xff]
  %v6256 = vld [vmem:[%s6253 + $0x10] sm:$0xff]
  %v6257 = vld [vmem:[%s6253 + $0x18] sm:$0xff]
  %6258 = vmatpush.msra.mxu0 0.0
  %6259 = vmatpush.msra.mxu0 0.0
  %6260 = vmatpush.msra.mxu0 0.0
  %6261 = vmatpush.msra.mxu0 0.0
  %6262 = vmatpush.msra.mxu0 0.0
  %6263 = vmatpush.msra.mxu0 0.0
  %6264 = vmatpush.msra.mxu0 0.0
  %6265 = vmatpush.msra.mxu0 0.0
  %6266 = vmatpush.msra.mxu0 0.0
  %6267 = vmatpush.msra.mxu0 0.0
  %6268 = vmatpush.msra.mxu0 0.0
  %6269 = vmatpush.msra.mxu0 0.0
  %6270 = vmatpush.msra.mxu0 %v6257
  %6271 = vmatpush.msra.mxu0 %v6256
  %6272 = vmatpush.msra.mxu0 %v6255
  %6273 = vmatpush.msra.mxu0 %v6254
  %6274 = vmatmul.f32.gmra.mxu0 %v951
  %v6275 = vpop.f32.mrf.mxu0
  %6276 = vmatmul.f32.gmra.mxu0 %v954
  %v6277 = vpop.f32.mrf.mxu0
  %6278 = vmatmul.f32.gmra.mxu0 %v957
  %v6279 = vpop.f32.mrf.mxu0
  %6280 = vmatmul.f32.gmra.mxu0 %v960
  %v6281 = vpop.f32.mrf.mxu0
  %v6282 = vadd.f32 0.0, %v6281
  %6283 = vmatmul.f32.gmra.mxu0 %v963
  %v6284 = vpop.f32.mrf.mxu0
  %v6285 = vadd.f32 0.0, %v6284
  %6286 = vmatmul.f32.gmra.mxu0 %v966
  %v6287 = vpop.f32.mrf.mxu0
  %v6288 = vadd.f32 0.0, %v6287
  %6289 = vmatmul.f32.gmra.mxu0 %v969
  %v6290 = vpop.f32.mrf.mxu0
  %v6291 = vadd.f32 0.0, %v6290
  %6292 = vmatmul.f32.gmra.mxu0 %v972
  %v6293 = vpop.f32.mrf.mxu0
  %v6294 = vadd.f32 0.0, %v6293
  %6295 = vmatmul.f32.gmra.mxu0 %v975
  %v6296 = vpop.f32.mrf.mxu0
  %v6297 = vadd.f32 0.0, %v6296
  %6298 = vmatmul.f32.gmra.mxu0 %v978
  %v6299 = vpop.f32.mrf.mxu0
  %v6300 = vadd.f32 0.0, %v6299
  %6301 = vmatmul.f32.gmra.mxu0 %v981
  %v6302 = vpop.f32.mrf.mxu0
  %v6303 = vadd.f32 0.0, %v6302
  %6304 = vmatmul.f32.gmra.mxu0 %v984
  %v6305 = vpop.f32.mrf.mxu0
  %v6306 = vadd.f32 0.0, %v6305
  %6307 = vmatmul.f32.gmra.mxu0 %v987
  %v6308 = vpop.f32.mrf.mxu0
  %v6309 = vadd.f32 0.0, %v6308
  %6310 = vmatmul.f32.gmra.mxu0 %v990
  %v6311 = vpop.f32.mrf.mxu0
  %v6312 = vadd.f32 0.0, %v6311
  %6313 = vmatmul.f32.gmra.mxu0 %v993
  %v6314 = vpop.f32.mrf.mxu0
  %v6315 = vadd.f32 0.0, %v6314
  %6316 = vmatmul.f32.gmra.mxu0 %v996
  %v6317 = vpop.f32.mrf.mxu0
  %v6318 = vadd.f32 0.0, %v6317
  %6319 = vmatmul.f32.gmra.mxu0 %v999
  %v6320 = vpop.f32.mrf.mxu0
  %v6321 = vadd.f32 0.0, %v6320
  %6322 = vmatmul.f32.gmra.mxu0 %v1002
  %v6323 = vpop.f32.mrf.mxu0
  %v6324 = vadd.f32 0.0, %v6323
  %6325 = vmatmul.f32.gmra.mxu0 %v1005
  %v6326 = vpop.f32.mrf.mxu0
  %v6327 = vadd.f32 0.0, %v6326
  %6328 = vmatmul.f32.gmra.mxu0 %v1008
  %v6329 = vpop.f32.mrf.mxu0
  %v6330 = vadd.f32 0.0, %v6329
  %6331 = vmatmul.f32.gmra.mxu0 %v1011
  %v6332 = vpop.f32.mrf.mxu0
  %v6333 = vadd.f32 0.0, %v6332
  %6334 = vmatmul.f32.gmra.mxu0 %v1014
  %v6335 = vpop.f32.mrf.mxu0
  %v6336 = vadd.f32 0.0, %v6335
  %6337 = vmatmul.f32.gmra.mxu0 %v1017
  %v6338 = vpop.f32.mrf.mxu0
  %v6339 = vadd.f32 0.0, %v6338
  %6340 = vmatmul.f32.gmra.mxu0 %v1020
  %v6341 = vpop.f32.mrf.mxu0
  %v6342 = vadd.f32 0.0, %v6341
  %6343 = vmatmul.f32.gmra.mxu0 %v1023
  %v6344 = vpop.f32.mrf.mxu0
  %v6345 = vadd.f32 0.0, %v6344
  %6346 = vmatmul.f32.gmra.mxu0 %v1026
  %v6347 = vpop.f32.mrf.mxu0
  %v6348 = vadd.f32 0.0, %v6347
  %6349 = vmatmul.f32.gmra.mxu0 %v1029
  %v6350 = vpop.f32.mrf.mxu0
  %v6351 = vadd.f32 0.0, %v6350
  %6352 = vmatmul.f32.gmra.mxu0 %v1032
  %v6353 = vpop.f32.mrf.mxu0
  %v6354 = vadd.f32 0.0, %v6353
  %6355 = vmatmul.f32.gmra.mxu0 %v1035
  %v6356 = vpop.f32.mrf.mxu0
  %v6357 = vadd.f32 0.0, %v6356
  %6358 = vmatmul.f32.gmra.mxu0 %v1038
  %v6359 = vpop.f32.mrf.mxu0
  %v6360 = vadd.f32 0.0, %v6359
  %6361 = vmatmul.f32.gmra.mxu0 %v1041
  %v6362 = vpop.f32.mrf.mxu0
  %v6363 = vadd.f32 0.0, %v6362
  %6364 = vmatmul.f32.gmra.mxu0 %v1044
  %v6365 = vpop.f32.mrf.mxu0
  %v6366 = vadd.f32 0.0, %v6365
  %6367 = vmatmul.f32.gmra.mxu0 %v1047
  %v6368 = vpop.f32.mrf.mxu0
  %v6369 = vadd.f32 0.0, %v6368
  %6370 = vmatmul.f32.gmra.mxu0 %v1050
  %v6371 = vpop.f32.mrf.mxu0
  %v6372 = vadd.f32 0.0, %v6371
  %6373 = vmatmul.f32.gmra.mxu0 %v1053
  %v6374 = vpop.f32.mrf.mxu0
  %v6375 = vadd.f32 0.0, %v6374
  %6376 = vmatmul.f32.gmra.mxu0 %v1056
  %v6377 = vpop.f32.mrf.mxu0
  %v6378 = vadd.f32 0.0, %v6377
  %6379 = vmatmul.f32.gmra.mxu0 %v1059
  %v6380 = vpop.f32.mrf.mxu0
  %v6381 = vadd.f32 0.0, %v6380
  %6382 = vmatmul.f32.gmra.mxu0 %v1062
  %v6383 = vpop.f32.mrf.mxu0
  %v6384 = vadd.f32 0.0, %v6383
  %6385 = vmatmul.f32.gmra.mxu0 %v1065
  %v6386 = vpop.f32.mrf.mxu0
  %v6387 = vadd.f32 0.0, %v6386
  %6388 = vmatmul.f32.gmra.mxu0 %v1068
  %v6389 = vpop.f32.mrf.mxu0
  %v6390 = vadd.f32 0.0, %v6389
  %6391 = vmatmul.f32.gmra.mxu0 %v1071
  %v6392 = vpop.f32.mrf.mxu0
  %v6393 = vadd.f32 0.0, %v6392
  %6394 = vmatmul.f32.gmra.mxu0 %v1074
  %v6395 = vpop.f32.mrf.mxu0
  %v6396 = vadd.f32 0.0, %v6395
  %6397 = vmatmul.f32.gmra.mxu0 %v1077
  %v6398 = vpop.f32.mrf.mxu0
  %v6399 = vadd.f32 0.0, %v6398
  %6400 = vmatmul.f32.gmra.mxu0 %v1080
  %v6401 = vpop.f32.mrf.mxu0
  %v6402 = vadd.f32 0.0, %v6401
  %6403 = vmatmul.f32.gmra.mxu0 %v1083
  %v6404 = vpop.f32.mrf.mxu0
  %v6405 = vadd.f32 0.0, %v6404
  %6406 = vmatmul.f32.gmra.mxu0 %v1086
  %v6407 = vpop.f32.mrf.mxu0
  %v6408 = vadd.f32 0.0, %v6407
  %6409 = vmatmul.f32.gmra.mxu0 %v1089
  %v6410 = vpop.f32.mrf.mxu0
  %v6411 = vadd.f32 0.0, %v6410
  %6412 = vmatmul.f32.gmra.mxu0 %v1092
  %v6413 = vpop.f32.mrf.mxu0
  %v6414 = vadd.f32 0.0, %v6413
  %6415 = vmatmul.f32.gmra.mxu0 %v1095
  %v6416 = vpop.f32.mrf.mxu0
  %v6417 = vadd.f32 0.0, %v6416
  %6418 = vmatmul.f32.gmra.mxu0 %v1098
  %v6419 = vpop.f32.mrf.mxu0
  %v6420 = vadd.f32 0.0, %v6419
  %6421 = vmatmul.f32.gmra.mxu0 %v1101
  %v6422 = vpop.f32.mrf.mxu0
  %v6423 = vadd.f32 0.0, %v6422
  %6424 = vmatmul.f32.gmra.mxu0 %v1104
  %v6425 = vpop.f32.mrf.mxu0
  %v6426 = vadd.f32 0.0, %v6425
  %6427 = vmatmul.f32.gmra.mxu0 %v1107
  %v6428 = vpop.f32.mrf.mxu0
  %v6429 = vadd.f32 0.0, %v6428
  %6430 = vmatmul.f32.gmra.mxu0 %v1110
  %v6431 = vpop.f32.mrf.mxu0
  %v6432 = vadd.f32 0.0, %v6431
  %6433 = vmatmul.f32.gmra.mxu0 %v1113
  %v6434 = vpop.f32.mrf.mxu0
  %v6435 = vadd.f32 0.0, %v6434
  %6436 = vmatmul.f32.gmra.mxu0 %v1116
  %v6437 = vpop.f32.mrf.mxu0
  %v6438 = vadd.f32 0.0, %v6437
  %6439 = vmatmul.f32.gmra.mxu0 %v1119
  %v6440 = vpop.f32.mrf.mxu0
  %v6441 = vadd.f32 0.0, %v6440
  %6442 = vmatmul.f32.gmra.mxu0 %v1122
  %v6443 = vpop.f32.mrf.mxu0
  %v6444 = vadd.f32 0.0, %v6443
  %6445 = vmatmul.f32.gmra.mxu0 %v1125
  %v6446 = vpop.f32.mrf.mxu0
  %v6447 = vadd.f32 0.0, %v6446
  %6448 = vmatmul.f32.gmra.mxu0 %v1128
  %v6449 = vpop.f32.mrf.mxu0
  %v6450 = vadd.f32 0.0, %v6449
  %6451 = vmatmul.f32.gmra.mxu0 %v1131
  %v6452 = vpop.f32.mrf.mxu0
  %v6453 = vadd.f32 0.0, %v6452
  %6454 = vmatmul.f32.gmra.mxu0 %v1134
  %v6455 = vpop.f32.mrf.mxu0
  %v6456 = vadd.f32 0.0, %v6455
  %6457 = vmatmul.f32.gmra.mxu0 %v1137
  %v6458 = vpop.f32.mrf.mxu0
  %v6459 = vadd.f32 0.0, %v6458
  %6460 = vmatmul.f32.gmra.mxu0 %v1140
  %v6461 = vpop.f32.mrf.mxu0
  %v6462 = vadd.f32 0.0, %v6461
  %6463 = vmatmul.f32.gmra.mxu0 %v1143
  %v6464 = vpop.f32.mrf.mxu0
  %v6465 = vadd.f32 0.0, %v6464
  %6466 = vmatmul.f32.gmra.mxu0 %v1146
  %v6467 = vpop.f32.mrf.mxu0
  %v6468 = vadd.f32 0.0, %v6467
  %6469 = vmatmul.f32.gmra.mxu0 %v1149
  %v6470 = vpop.f32.mrf.mxu0
  %v6471 = vadd.f32 0.0, %v6470
  %6472 = vmatmul.f32.gmra.mxu0 %v1152
  %v6473 = vpop.f32.mrf.mxu0
  %v6474 = vadd.f32 0.0, %v6473
  %6475 = vmatmul.f32.gmra.mxu0 %v1155
  %v6476 = vpop.f32.mrf.mxu0
  %v6477 = vadd.f32 0.0, %v6476
  %6478 = vmatmul.f32.gmra.mxu0 %v1158
  %v6479 = vpop.f32.mrf.mxu0
  %v6480 = vadd.f32 0.0, %v6479
  %6481 = vmatmul.f32.gmra.mxu0 %v1161
  %v6482 = vpop.f32.mrf.mxu0
  %v6483 = vadd.f32 0.0, %v6482
  %6484 = vmatmul.f32.gmra.mxu0 %v1164
  %v6485 = vpop.f32.mrf.mxu0
  %v6486 = vadd.f32 0.0, %v6485
  %6487 = vmatmul.f32.gmra.mxu0 %v1167
  %v6488 = vpop.f32.mrf.mxu0
  %v6489 = vadd.f32 0.0, %v6488
  %6490 = vmatmul.f32.gmra.mxu0 %v1170
  %v6491 = vpop.f32.mrf.mxu0
  %v6492 = vadd.f32 0.0, %v6491
  %6493 = vmatmul.f32.gmra.mxu0 %v1173
  %v6494 = vpop.f32.mrf.mxu0
  %v6495 = vadd.f32 0.0, %v6494
  %6496 = vmatmul.f32.gmra.mxu0 %v1176
  %v6497 = vpop.f32.mrf.mxu0
  %v6498 = vadd.f32 0.0, %v6497
  %6499 = vmatmul.f32.gmra.mxu0 %v1179
  %v6500 = vpop.f32.mrf.mxu0
  %v6501 = vadd.f32 0.0, %v6500
  %6502 = vmatmul.f32.gmra.mxu0 %v1182
  %v6503 = vpop.f32.mrf.mxu0
  %v6504 = vadd.f32 0.0, %v6503
  %6505 = vmatmul.f32.gmra.mxu0 %v1185
  %v6506 = vpop.f32.mrf.mxu0
  %v6507 = vadd.f32 0.0, %v6506
  %6508 = vmatmul.f32.gmra.mxu0 %v1188
  %v6509 = vpop.f32.mrf.mxu0
  %v6510 = vadd.f32 0.0, %v6509
  %6511 = vmatmul.f32.gmra.mxu0 %v1191
  %v6512 = vpop.f32.mrf.mxu0
  %v6513 = vadd.f32 0.0, %v6512
  %6514 = vmatmul.f32.gmra.mxu0 %v1194
  %v6515 = vpop.f32.mrf.mxu0
  %v6516 = vadd.f32 0.0, %v6515
  %6517 = vmatmul.f32.gmra.mxu0 %v1197
  %v6518 = vpop.f32.mrf.mxu0
  %v6519 = vadd.f32 0.0, %v6518
  %6520 = vmatmul.f32.gmra.mxu0 %v1200
  %v6521 = vpop.f32.mrf.mxu0
  %v6522 = vadd.f32 0.0, %v6521
  %6523 = vmatmul.f32.gmra.mxu0 %v1203
  %v6524 = vpop.f32.mrf.mxu0
  %v6525 = vadd.f32 0.0, %v6524
  %6526 = vmatmul.f32.gmra.mxu0 %v1206
  %v6527 = vpop.f32.mrf.mxu0
  %v6528 = vadd.f32 0.0, %v6527
  %6529 = vmatmul.f32.gmra.mxu0 %v1209
  %v6530 = vpop.f32.mrf.mxu0
  %v6531 = vadd.f32 0.0, %v6530
  %6532 = vmatmul.f32.gmra.mxu0 %v1212
  %v6533 = vpop.f32.mrf.mxu0
  %v6534 = vadd.f32 0.0, %v6533
  %6535 = vmatmul.f32.gmra.mxu0 %v1215
  %v6536 = vpop.f32.mrf.mxu0
  %v6537 = vadd.f32 0.0, %v6536
  %6538 = vmatmul.f32.gmra.mxu0 %v1218
  %v6539 = vpop.f32.mrf.mxu0
  %v6540 = vadd.f32 0.0, %v6539
  %6541 = vmatmul.f32.gmra.mxu0 %v1221
  %v6542 = vpop.f32.mrf.mxu0
  %v6543 = vadd.f32 0.0, %v6542
  %6544 = vmatmul.f32.gmra.mxu0 %v1224
  %v6545 = vpop.f32.mrf.mxu0
  %v6546 = vadd.f32 0.0, %v6545
  %6547 = vmatmul.f32.gmra.mxu0 %v1227
  %v6548 = vpop.f32.mrf.mxu0
  %v6549 = vadd.f32 0.0, %v6548
  %6550 = vmatmul.f32.gmra.mxu0 %v1230
  %v6551 = vpop.f32.mrf.mxu0
  %v6552 = vadd.f32 0.0, %v6551
  %6553 = vmatmul.f32.gmra.mxu0 %v1233
  %v6554 = vpop.f32.mrf.mxu0
  %v6555 = vadd.f32 0.0, %v6554
  %6556 = vmatmul.f32.gmra.mxu0 %v1236
  %v6557 = vpop.f32.mrf.mxu0
  %v6558 = vadd.f32 0.0, %v6557
  %6559 = vmatmul.f32.gmra.mxu0 %v1239
  %v6560 = vpop.f32.mrf.mxu0
  %v6561 = vadd.f32 0.0, %v6560
  %6562 = vmatmul.f32.gmra.mxu0 %v1242
  %v6563 = vpop.f32.mrf.mxu0
  %v6564 = vadd.f32 0.0, %v6563
  %6565 = vmatmul.f32.gmra.mxu0 %v1245
  %v6566 = vpop.f32.mrf.mxu0
  %v6567 = vadd.f32 0.0, %v6566
  %6568 = vmatmul.f32.gmra.mxu0 %v1248
  %v6569 = vpop.f32.mrf.mxu0
  %v6570 = vadd.f32 0.0, %v6569
  %6571 = vmatmul.f32.gmra.mxu0 %v1251
  %v6572 = vpop.f32.mrf.mxu0
  %v6573 = vadd.f32 0.0, %v6572
  %6574 = vmatmul.f32.gmra.mxu0 %v1254
  %v6575 = vpop.f32.mrf.mxu0
  %v6576 = vadd.f32 0.0, %v6575
  %6577 = vmatmul.f32.gmra.mxu0 %v1257
  %v6578 = vpop.f32.mrf.mxu0
  %v6579 = vadd.f32 0.0, %v6578
  %6580 = vmatmul.f32.gmra.mxu0 %v1260
  %v6581 = vpop.f32.mrf.mxu0
  %v6582 = vadd.f32 0.0, %v6581
  %6583 = vmatmul.f32.gmra.mxu0 %v1263
  %v6584 = vpop.f32.mrf.mxu0
  %v6585 = vadd.f32 0.0, %v6584
  %6586 = vdwg.mxu0
  %vm6689 = vcmask 1042432
  %v6690 = vrot.slane %v6282, 5
  %v6691 = vrot.slane %v6285, 5
  %v6692 = vsel %vm6689, %v6690, %v6691
  %v6693 = vrot.slane %v6288, 5
  %v6694 = vsel %vm6689, %v6691, %v6693
  %v6695 = vrot.slane %v6291, 5
  %v6696 = vsel %vm6689, %v6693, %v6695
  %v6697 = vrot.slane %v6294, 5
  %v6698 = vsel %vm6689, %v6695, %v6697
  %v6699 = vrot.slane %v6297, 5
  %v6700 = vsel %vm6689, %v6697, %v6699
  %v6701 = vrot.slane %v6300, 5
  %v6702 = vsel %vm6689, %v6699, %v6701
  %v6703 = vrot.slane %v6303, 5
  %v6704 = vsel %vm6689, %v6701, %v6703
  %v6705 = vrot.slane %v6306, 5
  %v6706 = vsel %vm6689, %v6703, %v6705
  %v6707 = vrot.slane %v6309, 5
  %v6708 = vsel %vm6689, %v6705, %v6707
  %v6709 = vrot.slane %v6312, 5
  %v6710 = vsel %vm6689, %v6707, %v6709
  %v6711 = vrot.slane %v6315, 5
  %v6712 = vsel %vm6689, %v6709, %v6711
  %v6713 = vrot.slane %v6318, 5
  %v6714 = vsel %vm6689, %v6711, %v6713
  %v6715 = vrot.slane %v6321, 5
  %v6716 = vsel %vm6689, %v6713, %v6715
  %v6717 = vrot.slane %v6324, 5
  %v6718 = vsel %vm6689, %v6715, %v6717
  %v6719 = vrot.slane %v6327, 5
  %v6720 = vsel %vm6689, %v6717, %v6719
  %v6721 = vrot.slane %v6330, 5
  %v6722 = vsel %vm6689, %v6719, %v6721
  %v6723 = vrot.slane %v6333, 5
  %v6724 = vsel %vm6689, %v6721, %v6723
  %v6725 = vrot.slane %v6336, 5
  %v6726 = vsel %vm6689, %v6723, %v6725
  %v6727 = vrot.slane %v6339, 5
  %v6728 = vsel %vm6689, %v6725, %v6727
  %v6729 = vrot.slane %v6342, 5
  %v6730 = vsel %vm6689, %v6727, %v6729
  %v6731 = vrot.slane %v6345, 5
  %v6732 = vsel %vm6689, %v6729, %v6731
  %v6733 = vrot.slane %v6348, 5
  %v6734 = vsel %vm6689, %v6731, %v6733
  %v6735 = vrot.slane %v6351, 5
  %v6736 = vsel %vm6689, %v6733, %v6735
  %v6737 = vrot.slane %v6354, 5
  %v6738 = vsel %vm6689, %v6735, %v6737
  %v6739 = vrot.slane %v6357, 5
  %v6740 = vsel %vm6689, %v6737, %v6739
  %v6741 = vrot.slane %v6360, 5
  %v6742 = vsel %vm6689, %v6739, %v6741
  %v6743 = vrot.slane %v6363, 5
  %v6744 = vsel %vm6689, %v6741, %v6743
  %v6745 = vrot.slane %v6366, 5
  %v6746 = vsel %vm6689, %v6743, %v6745
  %v6747 = vrot.slane %v6369, 5
  %v6748 = vsel %vm6689, %v6745, %v6747
  %v6749 = vrot.slane %v6372, 5
  %v6750 = vsel %vm6689, %v6747, %v6749
  %v6751 = vrot.slane %v6375, 5
  %v6752 = vsel %vm6689, %v6749, %v6751
  %v6753 = vrot.slane %v6378, 5
  %v6754 = vsel %vm6689, %v6751, %v6753
  %v6755 = vrot.slane %v6381, 5
  %v6756 = vsel %vm6689, %v6753, %v6755
  %v6757 = vrot.slane %v6384, 5
  %v6758 = vsel %vm6689, %v6755, %v6757
  %v6759 = vrot.slane %v6387, 5
  %v6760 = vsel %vm6689, %v6757, %v6759
  %v6761 = vrot.slane %v6390, 5
  %v6762 = vsel %vm6689, %v6759, %v6761
  %v6763 = vrot.slane %v6393, 5
  %v6764 = vsel %vm6689, %v6761, %v6763
  %v6765 = vrot.slane %v6396, 5
  %v6766 = vsel %vm6689, %v6763, %v6765
  %v6767 = vrot.slane %v6399, 5
  %v6768 = vsel %vm6689, %v6765, %v6767
  %v6769 = vrot.slane %v6402, 5
  %v6770 = vsel %vm6689, %v6767, %v6769
  %v6771 = vrot.slane %v6405, 5
  %v6772 = vsel %vm6689, %v6769, %v6771
  %v6773 = vrot.slane %v6408, 5
  %v6774 = vsel %vm6689, %v6771, %v6773
  %v6775 = vrot.slane %v6411, 5
  %v6776 = vsel %vm6689, %v6773, %v6775
  %v6777 = vrot.slane %v6414, 5
  %v6778 = vsel %vm6689, %v6775, %v6777
  %v6779 = vrot.slane %v6417, 5
  %v6780 = vsel %vm6689, %v6777, %v6779
  %v6781 = vrot.slane %v6420, 5
  %v6782 = vsel %vm6689, %v6779, %v6781
  %v6783 = vrot.slane %v6423, 5
  %v6784 = vsel %vm6689, %v6781, %v6783
  %v6785 = vrot.slane %v6426, 5
  %v6786 = vsel %vm6689, %v6783, %v6785
  %v6787 = vrot.slane %v6429, 5
  %v6788 = vsel %vm6689, %v6785, %v6787
  %v6789 = vrot.slane %v6432, 5
  %v6790 = vsel %vm6689, %v6787, %v6789
  %v6791 = vrot.slane %v6435, 5
  %v6792 = vsel %vm6689, %v6789, %v6791
  %v6793 = vrot.slane %v6438, 5
  %v6794 = vsel %vm6689, %v6791, %v6793
  %v6795 = vrot.slane %v6441, 5
  %v6796 = vsel %vm6689, %v6793, %v6795
  %v6797 = vrot.slane %v6444, 5
  %v6798 = vsel %vm6689, %v6795, %v6797
  %v6799 = vrot.slane %v6447, 5
  %v6800 = vsel %vm6689, %v6797, %v6799
  %v6801 = vrot.slane %v6450, 5
  %v6802 = vsel %vm6689, %v6799, %v6801
  %v6803 = vrot.slane %v6453, 5
  %v6804 = vsel %vm6689, %v6801, %v6803
  %v6805 = vrot.slane %v6456, 5
  %v6806 = vsel %vm6689, %v6803, %v6805
  %v6807 = vrot.slane %v6459, 5
  %v6808 = vsel %vm6689, %v6805, %v6807
  %v6809 = vrot.slane %v6462, 5
  %v6810 = vsel %vm6689, %v6807, %v6809
  %v6811 = vrot.slane %v6465, 5
  %v6812 = vsel %vm6689, %v6809, %v6811
  %v6813 = vrot.slane %v6468, 5
  %v6814 = vsel %vm6689, %v6811, %v6813
  %v6815 = vrot.slane %v6471, 5
  %v6816 = vsel %vm6689, %v6813, %v6815
  %v6817 = vrot.slane %v6474, 5
  %v6818 = vsel %vm6689, %v6815, %v6817
  %v6819 = vrot.slane %v6477, 5
  %v6820 = vsel %vm6689, %v6817, %v6819
  %v6821 = vrot.slane %v6480, 5
  %v6822 = vsel %vm6689, %v6819, %v6821
  %v6823 = vrot.slane %v6483, 5
  %v6824 = vsel %vm6689, %v6821, %v6823
  %v6825 = vrot.slane %v6486, 5
  %v6826 = vsel %vm6689, %v6823, %v6825
  %v6827 = vrot.slane %v6489, 5
  %v6828 = vsel %vm6689, %v6825, %v6827
  %v6829 = vrot.slane %v6492, 5
  %v6830 = vsel %vm6689, %v6827, %v6829
  %v6831 = vrot.slane %v6495, 5
  %v6832 = vsel %vm6689, %v6829, %v6831
  %v6833 = vrot.slane %v6498, 5
  %v6834 = vsel %vm6689, %v6831, %v6833
  %v6835 = vrot.slane %v6501, 5
  %v6836 = vsel %vm6689, %v6833, %v6835
  %v6837 = vrot.slane %v6504, 5
  %v6838 = vsel %vm6689, %v6835, %v6837
  %v6839 = vrot.slane %v6507, 5
  %v6840 = vsel %vm6689, %v6837, %v6839
  %v6841 = vrot.slane %v6510, 5
  %v6842 = vsel %vm6689, %v6839, %v6841
  %v6843 = vrot.slane %v6513, 5
  %v6844 = vsel %vm6689, %v6841, %v6843
  %v6845 = vrot.slane %v6516, 5
  %v6846 = vsel %vm6689, %v6843, %v6845
  %v6847 = vrot.slane %v6519, 5
  %v6848 = vsel %vm6689, %v6845, %v6847
  %v6849 = vrot.slane %v6522, 5
  %v6850 = vsel %vm6689, %v6847, %v6849
  %v6851 = vrot.slane %v6525, 5
  %v6852 = vsel %vm6689, %v6849, %v6851
  %v6853 = vrot.slane %v6528, 5
  %v6854 = vsel %vm6689, %v6851, %v6853
  %v6855 = vrot.slane %v6531, 5
  %v6856 = vsel %vm6689, %v6853, %v6855
  %v6857 = vrot.slane %v6534, 5
  %v6858 = vsel %vm6689, %v6855, %v6857
  %v6859 = vrot.slane %v6537, 5
  %v6860 = vsel %vm6689, %v6857, %v6859
  %v6861 = vrot.slane %v6540, 5
  %v6862 = vsel %vm6689, %v6859, %v6861
  %v6863 = vrot.slane %v6543, 5
  %v6864 = vsel %vm6689, %v6861, %v6863
  %v6865 = vrot.slane %v6546, 5
  %v6866 = vsel %vm6689, %v6863, %v6865
  %v6867 = vrot.slane %v6549, 5
  %v6868 = vsel %vm6689, %v6865, %v6867
  %v6869 = vrot.slane %v6552, 5
  %v6870 = vsel %vm6689, %v6867, %v6869
  %v6871 = vrot.slane %v6555, 5
  %v6872 = vsel %vm6689, %v6869, %v6871
  %v6873 = vrot.slane %v6558, 5
  %v6874 = vsel %vm6689, %v6871, %v6873
  %v6875 = vrot.slane %v6561, 5
  %v6876 = vsel %vm6689, %v6873, %v6875
  %v6877 = vrot.slane %v6564, 5
  %v6878 = vsel %vm6689, %v6875, %v6877
  %v6879 = vrot.slane %v6567, 5
  %v6880 = vsel %vm6689, %v6877, %v6879
  %v6881 = vrot.slane %v6570, 5
  %v6882 = vsel %vm6689, %v6879, %v6881
  %v6883 = vrot.slane %v6573, 5
  %v6884 = vsel %vm6689, %v6881, %v6883
  %v6885 = vrot.slane %v6576, 5
  %v6886 = vsel %vm6689, %v6883, %v6885
  %v6887 = vrot.slane %v6579, 5
  %v6888 = vsel %vm6689, %v6885, %v6887
  %v6889 = vrot.slane %v6582, 5
  %v6890 = vsel %vm6689, %v6887, %v6889
  %v6891 = vrot.slane %v6585, 5
  %v6892 = vsel %vm6689, %v6889, %v6891
  %v6995 = vadd.f32 %v6151, %v6692
  %v6996 = vadd.f32 %v6152, %v6694
  %v6997 = vadd.f32 %v6153, %v6696
  %v6998 = vadd.f32 %v6154, %v6698
  %v6999 = vadd.f32 %v6155, %v6700
  %v7000 = vadd.f32 %v6156, %v6702
  %v7001 = vadd.f32 %v6157, %v6704
  %v7002 = vadd.f32 %v6158, %v6706
  %v7003 = vadd.f32 %v6159, %v6708
  %v7004 = vadd.f32 %v6160, %v6710
  %v7005 = vadd.f32 %v6161, %v6712
  %v7006 = vadd.f32 %v6162, %v6714
  %v7007 = vadd.f32 %v6163, %v6716
  %v7008 = vadd.f32 %v6164, %v6718
  %v7009 = vadd.f32 %v6165, %v6720
  %v7010 = vadd.f32 %v6166, %v6722
  %v7011 = vadd.f32 %v6167, %v6724
  %v7012 = vadd.f32 %v6168, %v6726
  %v7013 = vadd.f32 %v6169, %v6728
  %v7014 = vadd.f32 %v6170, %v6730
  %v7015 = vadd.f32 %v6171, %v6732
  %v7016 = vadd.f32 %v6172, %v6734
  %v7017 = vadd.f32 %v6173, %v6736
  %v7018 = vadd.f32 %v6174, %v6738
  %v7019 = vadd.f32 %v6175, %v6740
  %v7020 = vadd.f32 %v6176, %v6742
  %v7021 = vadd.f32 %v6177, %v6744
  %v7022 = vadd.f32 %v6178, %v6746
  %v7023 = vadd.f32 %v6179, %v6748
  %v7024 = vadd.f32 %v6180, %v6750
  %v7025 = vadd.f32 %v6181, %v6752
  %v7026 = vadd.f32 %v6182, %v6754
  %v7027 = vadd.f32 %v6183, %v6756
  %v7028 = vadd.f32 %v6184, %v6758
  %v7029 = vadd.f32 %v6185, %v6760
  %v7030 = vadd.f32 %v6186, %v6762
  %v7031 = vadd.f32 %v6187, %v6764
  %v7032 = vadd.f32 %v6188, %v6766
  %v7033 = vadd.f32 %v6189, %v6768
  %v7034 = vadd.f32 %v6190, %v6770
  %v7035 = vadd.f32 %v6191, %v6772
  %v7036 = vadd.f32 %v6192, %v6774
  %v7037 = vadd.f32 %v6193, %v6776
  %v7038 = vadd.f32 %v6194, %v6778
  %v7039 = vadd.f32 %v6195, %v6780
  %v7040 = vadd.f32 %v6196, %v6782
  %v7041 = vadd.f32 %v6197, %v6784
  %v7042 = vadd.f32 %v6198, %v6786
  %v7043 = vadd.f32 %v6199, %v6788
  %v7044 = vadd.f32 %v6200, %v6790
  %v7045 = vadd.f32 %v6201, %v6792
  %v7046 = vadd.f32 %v6202, %v6794
  %v7047 = vadd.f32 %v6203, %v6796
  %v7048 = vadd.f32 %v6204, %v6798
  %v7049 = vadd.f32 %v6205, %v6800
  %v7050 = vadd.f32 %v6206, %v6802
  %v7051 = vadd.f32 %v6207, %v6804
  %v7052 = vadd.f32 %v6208, %v6806
  %v7053 = vadd.f32 %v6209, %v6808
  %v7054 = vadd.f32 %v6210, %v6810
  %v7055 = vadd.f32 %v6211, %v6812
  %v7056 = vadd.f32 %v6212, %v6814
  %v7057 = vadd.f32 %v6213, %v6816
  %v7058 = vadd.f32 %v6214, %v6818
  %v7059 = vadd.f32 %v6215, %v6820
  %v7060 = vadd.f32 %v6216, %v6822
  %v7061 = vadd.f32 %v6217, %v6824
  %v7062 = vadd.f32 %v6218, %v6826
  %v7063 = vadd.f32 %v6219, %v6828
  %v7064 = vadd.f32 %v6220, %v6830
  %v7065 = vadd.f32 %v6221, %v6832
  %v7066 = vadd.f32 %v6222, %v6834
  %v7067 = vadd.f32 %v6223, %v6836
  %v7068 = vadd.f32 %v6224, %v6838
  %v7069 = vadd.f32 %v6225, %v6840
  %v7070 = vadd.f32 %v6226, %v6842
  %v7071 = vadd.f32 %v6227, %v6844
  %v7072 = vadd.f32 %v6228, %v6846
  %v7073 = vadd.f32 %v6229, %v6848
  %v7074 = vadd.f32 %v6230, %v6850
  %v7075 = vadd.f32 %v6231, %v6852
  %v7076 = vadd.f32 %v6232, %v6854
  %v7077 = vadd.f32 %v6233, %v6856
  %v7078 = vadd.f32 %v6234, %v6858
  %v7079 = vadd.f32 %v6235, %v6860
  %v7080 = vadd.f32 %v6236, %v6862
  %v7081 = vadd.f32 %v6237, %v6864
  %v7082 = vadd.f32 %v6238, %v6866
  %v7083 = vadd.f32 %v6239, %v6868
  %v7084 = vadd.f32 %v6240, %v6870
  %v7085 = vadd.f32 %v6241, %v6872
  %v7086 = vadd.f32 %v6242, %v6874
  %v7087 = vadd.f32 %v6243, %v6876
  %v7088 = vadd.f32 %v6244, %v6878
  %v7089 = vadd.f32 %v6245, %v6880
  %v7090 = vadd.f32 %v6246, %v6882
  %v7091 = vadd.f32 %v6247, %v6884
  %v7092 = vadd.f32 %v6248, %v6886
  %v7093 = vadd.f32 %v6249, %v6888
  %v7094 = vadd.f32 %v6250, %v6890
  %v7095 = vadd.f32 %v6251, %v6892
  %v7096 = vadd.f32 %v6252, %v6891
  %s7097 = scalar_lea.vmem %s3, 256
  %v7098 = vld [vmem:[%s7097] sm:$0xff]
  %v7099 = vld [vmem:[%s7097 + $0x8] sm:$0xff]
  %v7100 = vld [vmem:[%s7097 + $0x10] sm:$0xff]
  %v7101 = vld [vmem:[%s7097 + $0x18] sm:$0xff]
  %7102 = vmatpush.msra.mxu0 0.0
  %7103 = vmatpush.msra.mxu0 0.0
  %7104 = vmatpush.msra.mxu0 0.0
  %7105 = vmatpush.msra.mxu0 0.0
  %7106 = vmatpush.msra.mxu0 0.0
  %7107 = vmatpush.msra.mxu0 0.0
  %7108 = vmatpush.msra.mxu0 0.0
  %7109 = vmatpush.msra.mxu0 0.0
  %7110 = vmatpush.msra.mxu0 0.0
  %7111 = vmatpush.msra.mxu0 0.0
  %7112 = vmatpush.msra.mxu0 0.0
  %7113 = vmatpush.msra.mxu0 0.0
  %7114 = vmatpush.msra.mxu0 %v7101
  %7115 = vmatpush.msra.mxu0 %v7100
  %7116 = vmatpush.msra.mxu0 %v7099
  %7117 = vmatpush.msra.mxu0 %v7098
  %7118 = vmatmul.f32.gmra.mxu0 %v951
  %v7119 = vpop.f32.mrf.mxu0
  %7120 = vmatmul.f32.gmra.mxu0 %v954
  %v7121 = vpop.f32.mrf.mxu0
  %7122 = vmatmul.f32.gmra.mxu0 %v957
  %v7123 = vpop.f32.mrf.mxu0
  %7124 = vmatmul.f32.gmra.mxu0 %v960
  %v7125 = vpop.f32.mrf.mxu0
  %v7126 = vadd.f32 0.0, %v7125
  %7127 = vmatmul.f32.gmra.mxu0 %v963
  %v7128 = vpop.f32.mrf.mxu0
  %v7129 = vadd.f32 0.0, %v7128
  %7130 = vmatmul.f32.gmra.mxu0 %v966
  %v7131 = vpop.f32.mrf.mxu0
  %v7132 = vadd.f32 0.0, %v7131
  %7133 = vmatmul.f32.gmra.mxu0 %v969
  %v7134 = vpop.f32.mrf.mxu0
  %v7135 = vadd.f32 0.0, %v7134
  %7136 = vmatmul.f32.gmra.mxu0 %v972
  %v7137 = vpop.f32.mrf.mxu0
  %v7138 = vadd.f32 0.0, %v7137
  %7139 = vmatmul.f32.gmra.mxu0 %v975
  %v7140 = vpop.f32.mrf.mxu0
  %v7141 = vadd.f32 0.0, %v7140
  %7142 = vmatmul.f32.gmra.mxu0 %v978
  %v7143 = vpop.f32.mrf.mxu0
  %v7144 = vadd.f32 0.0, %v7143
  %7145 = vmatmul.f32.gmra.mxu0 %v981
  %v7146 = vpop.f32.mrf.mxu0
  %v7147 = vadd.f32 0.0, %v7146
  %7148 = vmatmul.f32.gmra.mxu0 %v984
  %v7149 = vpop.f32.mrf.mxu0
  %v7150 = vadd.f32 0.0, %v7149
  %7151 = vmatmul.f32.gmra.mxu0 %v987
  %v7152 = vpop.f32.mrf.mxu0
  %v7153 = vadd.f32 0.0, %v7152
  %7154 = vmatmul.f32.gmra.mxu0 %v990
  %v7155 = vpop.f32.mrf.mxu0
  %v7156 = vadd.f32 0.0, %v7155
  %7157 = vmatmul.f32.gmra.mxu0 %v993
  %v7158 = vpop.f32.mrf.mxu0
  %v7159 = vadd.f32 0.0, %v7158
  %7160 = vmatmul.f32.gmra.mxu0 %v996
  %v7161 = vpop.f32.mrf.mxu0
  %v7162 = vadd.f32 0.0, %v7161
  %7163 = vmatmul.f32.gmra.mxu0 %v999
  %v7164 = vpop.f32.mrf.mxu0
  %v7165 = vadd.f32 0.0, %v7164
  %7166 = vmatmul.f32.gmra.mxu0 %v1002
  %v7167 = vpop.f32.mrf.mxu0
  %v7168 = vadd.f32 0.0, %v7167
  %7169 = vmatmul.f32.gmra.mxu0 %v1005
  %v7170 = vpop.f32.mrf.mxu0
  %v7171 = vadd.f32 0.0, %v7170
  %7172 = vmatmul.f32.gmra.mxu0 %v1008
  %v7173 = vpop.f32.mrf.mxu0
  %v7174 = vadd.f32 0.0, %v7173
  %7175 = vmatmul.f32.gmra.mxu0 %v1011
  %v7176 = vpop.f32.mrf.mxu0
  %v7177 = vadd.f32 0.0, %v7176
  %7178 = vmatmul.f32.gmra.mxu0 %v1014
  %v7179 = vpop.f32.mrf.mxu0
  %v7180 = vadd.f32 0.0, %v7179
  %7181 = vmatmul.f32.gmra.mxu0 %v1017
  %v7182 = vpop.f32.mrf.mxu0
  %v7183 = vadd.f32 0.0, %v7182
  %7184 = vmatmul.f32.gmra.mxu0 %v1020
  %v7185 = vpop.f32.mrf.mxu0
  %v7186 = vadd.f32 0.0, %v7185
  %7187 = vmatmul.f32.gmra.mxu0 %v1023
  %v7188 = vpop.f32.mrf.mxu0
  %v7189 = vadd.f32 0.0, %v7188
  %7190 = vmatmul.f32.gmra.mxu0 %v1026
  %v7191 = vpop.f32.mrf.mxu0
  %v7192 = vadd.f32 0.0, %v7191
  %7193 = vmatmul.f32.gmra.mxu0 %v1029
  %v7194 = vpop.f32.mrf.mxu0
  %v7195 = vadd.f32 0.0, %v7194
  %7196 = vmatmul.f32.gmra.mxu0 %v1032
  %v7197 = vpop.f32.mrf.mxu0
  %v7198 = vadd.f32 0.0, %v7197
  %7199 = vmatmul.f32.gmra.mxu0 %v1035
  %v7200 = vpop.f32.mrf.mxu0
  %v7201 = vadd.f32 0.0, %v7200
  %7202 = vmatmul.f32.gmra.mxu0 %v1038
  %v7203 = vpop.f32.mrf.mxu0
  %v7204 = vadd.f32 0.0, %v7203
  %7205 = vmatmul.f32.gmra.mxu0 %v1041
  %v7206 = vpop.f32.mrf.mxu0
  %v7207 = vadd.f32 0.0, %v7206
  %7208 = vmatmul.f32.gmra.mxu0 %v1044
  %v7209 = vpop.f32.mrf.mxu0
  %v7210 = vadd.f32 0.0, %v7209
  %7211 = vmatmul.f32.gmra.mxu0 %v1047
  %v7212 = vpop.f32.mrf.mxu0
  %v7213 = vadd.f32 0.0, %v7212
  %7214 = vmatmul.f32.gmra.mxu0 %v1050
  %v7215 = vpop.f32.mrf.mxu0
  %v7216 = vadd.f32 0.0, %v7215
  %7217 = vmatmul.f32.gmra.mxu0 %v1053
  %v7218 = vpop.f32.mrf.mxu0
  %v7219 = vadd.f32 0.0, %v7218
  %7220 = vmatmul.f32.gmra.mxu0 %v1056
  %v7221 = vpop.f32.mrf.mxu0
  %v7222 = vadd.f32 0.0, %v7221
  %7223 = vmatmul.f32.gmra.mxu0 %v1059
  %v7224 = vpop.f32.mrf.mxu0
  %v7225 = vadd.f32 0.0, %v7224
  %7226 = vmatmul.f32.gmra.mxu0 %v1062
  %v7227 = vpop.f32.mrf.mxu0
  %v7228 = vadd.f32 0.0, %v7227
  %7229 = vmatmul.f32.gmra.mxu0 %v1065
  %v7230 = vpop.f32.mrf.mxu0
  %v7231 = vadd.f32 0.0, %v7230
  %7232 = vmatmul.f32.gmra.mxu0 %v1068
  %v7233 = vpop.f32.mrf.mxu0
  %v7234 = vadd.f32 0.0, %v7233
  %7235 = vmatmul.f32.gmra.mxu0 %v1071
  %v7236 = vpop.f32.mrf.mxu0
  %v7237 = vadd.f32 0.0, %v7236
  %7238 = vmatmul.f32.gmra.mxu0 %v1074
  %v7239 = vpop.f32.mrf.mxu0
  %v7240 = vadd.f32 0.0, %v7239
  %7241 = vmatmul.f32.gmra.mxu0 %v1077
  %v7242 = vpop.f32.mrf.mxu0
  %v7243 = vadd.f32 0.0, %v7242
  %7244 = vmatmul.f32.gmra.mxu0 %v1080
  %v7245 = vpop.f32.mrf.mxu0
  %v7246 = vadd.f32 0.0, %v7245
  %7247 = vmatmul.f32.gmra.mxu0 %v1083
  %v7248 = vpop.f32.mrf.mxu0
  %v7249 = vadd.f32 0.0, %v7248
  %7250 = vmatmul.f32.gmra.mxu0 %v1086
  %v7251 = vpop.f32.mrf.mxu0
  %v7252 = vadd.f32 0.0, %v7251
  %7253 = vmatmul.f32.gmra.mxu0 %v1089
  %v7254 = vpop.f32.mrf.mxu0
  %v7255 = vadd.f32 0.0, %v7254
  %7256 = vmatmul.f32.gmra.mxu0 %v1092
  %v7257 = vpop.f32.mrf.mxu0
  %v7258 = vadd.f32 0.0, %v7257
  %7259 = vmatmul.f32.gmra.mxu0 %v1095
  %v7260 = vpop.f32.mrf.mxu0
  %v7261 = vadd.f32 0.0, %v7260
  %7262 = vmatmul.f32.gmra.mxu0 %v1098
  %v7263 = vpop.f32.mrf.mxu0
  %v7264 = vadd.f32 0.0, %v7263
  %7265 = vmatmul.f32.gmra.mxu0 %v1101
  %v7266 = vpop.f32.mrf.mxu0
  %v7267 = vadd.f32 0.0, %v7266
  %7268 = vmatmul.f32.gmra.mxu0 %v1104
  %v7269 = vpop.f32.mrf.mxu0
  %v7270 = vadd.f32 0.0, %v7269
  %7271 = vmatmul.f32.gmra.mxu0 %v1107
  %v7272 = vpop.f32.mrf.mxu0
  %v7273 = vadd.f32 0.0, %v7272
  %7274 = vmatmul.f32.gmra.mxu0 %v1110
  %v7275 = vpop.f32.mrf.mxu0
  %v7276 = vadd.f32 0.0, %v7275
  %7277 = vmatmul.f32.gmra.mxu0 %v1113
  %v7278 = vpop.f32.mrf.mxu0
  %v7279 = vadd.f32 0.0, %v7278
  %7280 = vmatmul.f32.gmra.mxu0 %v1116
  %v7281 = vpop.f32.mrf.mxu0
  %v7282 = vadd.f32 0.0, %v7281
  %7283 = vmatmul.f32.gmra.mxu0 %v1119
  %v7284 = vpop.f32.mrf.mxu0
  %v7285 = vadd.f32 0.0, %v7284
  %7286 = vmatmul.f32.gmra.mxu0 %v1122
  %v7287 = vpop.f32.mrf.mxu0
  %v7288 = vadd.f32 0.0, %v7287
  %7289 = vmatmul.f32.gmra.mxu0 %v1125
  %v7290 = vpop.f32.mrf.mxu0
  %v7291 = vadd.f32 0.0, %v7290
  %7292 = vmatmul.f32.gmra.mxu0 %v1128
  %v7293 = vpop.f32.mrf.mxu0
  %v7294 = vadd.f32 0.0, %v7293
  %7295 = vmatmul.f32.gmra.mxu0 %v1131
  %v7296 = vpop.f32.mrf.mxu0
  %v7297 = vadd.f32 0.0, %v7296
  %7298 = vmatmul.f32.gmra.mxu0 %v1134
  %v7299 = vpop.f32.mrf.mxu0
  %v7300 = vadd.f32 0.0, %v7299
  %7301 = vmatmul.f32.gmra.mxu0 %v1137
  %v7302 = vpop.f32.mrf.mxu0
  %v7303 = vadd.f32 0.0, %v7302
  %7304 = vmatmul.f32.gmra.mxu0 %v1140
  %v7305 = vpop.f32.mrf.mxu0
  %v7306 = vadd.f32 0.0, %v7305
  %7307 = vmatmul.f32.gmra.mxu0 %v1143
  %v7308 = vpop.f32.mrf.mxu0
  %v7309 = vadd.f32 0.0, %v7308
  %7310 = vmatmul.f32.gmra.mxu0 %v1146
  %v7311 = vpop.f32.mrf.mxu0
  %v7312 = vadd.f32 0.0, %v7311
  %7313 = vmatmul.f32.gmra.mxu0 %v1149
  %v7314 = vpop.f32.mrf.mxu0
  %v7315 = vadd.f32 0.0, %v7314
  %7316 = vmatmul.f32.gmra.mxu0 %v1152
  %v7317 = vpop.f32.mrf.mxu0
  %v7318 = vadd.f32 0.0, %v7317
  %7319 = vmatmul.f32.gmra.mxu0 %v1155
  %v7320 = vpop.f32.mrf.mxu0
  %v7321 = vadd.f32 0.0, %v7320
  %7322 = vmatmul.f32.gmra.mxu0 %v1158
  %v7323 = vpop.f32.mrf.mxu0
  %v7324 = vadd.f32 0.0, %v7323
  %7325 = vmatmul.f32.gmra.mxu0 %v1161
  %v7326 = vpop.f32.mrf.mxu0
  %v7327 = vadd.f32 0.0, %v7326
  %7328 = vmatmul.f32.gmra.mxu0 %v1164
  %v7329 = vpop.f32.mrf.mxu0
  %v7330 = vadd.f32 0.0, %v7329
  %7331 = vmatmul.f32.gmra.mxu0 %v1167
  %v7332 = vpop.f32.mrf.mxu0
  %v7333 = vadd.f32 0.0, %v7332
  %7334 = vmatmul.f32.gmra.mxu0 %v1170
  %v7335 = vpop.f32.mrf.mxu0
  %v7336 = vadd.f32 0.0, %v7335
  %7337 = vmatmul.f32.gmra.mxu0 %v1173
  %v7338 = vpop.f32.mrf.mxu0
  %v7339 = vadd.f32 0.0, %v7338
  %7340 = vmatmul.f32.gmra.mxu0 %v1176
  %v7341 = vpop.f32.mrf.mxu0
  %v7342 = vadd.f32 0.0, %v7341
  %7343 = vmatmul.f32.gmra.mxu0 %v1179
  %v7344 = vpop.f32.mrf.mxu0
  %v7345 = vadd.f32 0.0, %v7344
  %7346 = vmatmul.f32.gmra.mxu0 %v1182
  %v7347 = vpop.f32.mrf.mxu0
  %v7348 = vadd.f32 0.0, %v7347
  %7349 = vmatmul.f32.gmra.mxu0 %v1185
  %v7350 = vpop.f32.mrf.mxu0
  %v7351 = vadd.f32 0.0, %v7350
  %7352 = vmatmul.f32.gmra.mxu0 %v1188
  %v7353 = vpop.f32.mrf.mxu0
  %v7354 = vadd.f32 0.0, %v7353
  %7355 = vmatmul.f32.gmra.mxu0 %v1191
  %v7356 = vpop.f32.mrf.mxu0
  %v7357 = vadd.f32 0.0, %v7356
  %7358 = vmatmul.f32.gmra.mxu0 %v1194
  %v7359 = vpop.f32.mrf.mxu0
  %v7360 = vadd.f32 0.0, %v7359
  %7361 = vmatmul.f32.gmra.mxu0 %v1197
  %v7362 = vpop.f32.mrf.mxu0
  %v7363 = vadd.f32 0.0, %v7362
  %7364 = vmatmul.f32.gmra.mxu0 %v1200
  %v7365 = vpop.f32.mrf.mxu0
  %v7366 = vadd.f32 0.0, %v7365
  %7367 = vmatmul.f32.gmra.mxu0 %v1203
  %v7368 = vpop.f32.mrf.mxu0
  %v7369 = vadd.f32 0.0, %v7368
  %7370 = vmatmul.f32.gmra.mxu0 %v1206
  %v7371 = vpop.f32.mrf.mxu0
  %v7372 = vadd.f32 0.0, %v7371
  %7373 = vmatmul.f32.gmra.mxu0 %v1209
  %v7374 = vpop.f32.mrf.mxu0
  %v7375 = vadd.f32 0.0, %v7374
  %7376 = vmatmul.f32.gmra.mxu0 %v1212
  %v7377 = vpop.f32.mrf.mxu0
  %v7378 = vadd.f32 0.0, %v7377
  %7379 = vmatmul.f32.gmra.mxu0 %v1215
  %v7380 = vpop.f32.mrf.mxu0
  %v7381 = vadd.f32 0.0, %v7380
  %7382 = vmatmul.f32.gmra.mxu0 %v1218
  %v7383 = vpop.f32.mrf.mxu0
  %v7384 = vadd.f32 0.0, %v7383
  %7385 = vmatmul.f32.gmra.mxu0 %v1221
  %v7386 = vpop.f32.mrf.mxu0
  %v7387 = vadd.f32 0.0, %v7386
  %7388 = vmatmul.f32.gmra.mxu0 %v1224
  %v7389 = vpop.f32.mrf.mxu0
  %v7390 = vadd.f32 0.0, %v7389
  %7391 = vmatmul.f32.gmra.mxu0 %v1227
  %v7392 = vpop.f32.mrf.mxu0
  %v7393 = vadd.f32 0.0, %v7392
  %7394 = vmatmul.f32.gmra.mxu0 %v1230
  %v7395 = vpop.f32.mrf.mxu0
  %v7396 = vadd.f32 0.0, %v7395
  %7397 = vmatmul.f32.gmra.mxu0 %v1233
  %v7398 = vpop.f32.mrf.mxu0
  %v7399 = vadd.f32 0.0, %v7398
  %7400 = vmatmul.f32.gmra.mxu0 %v1236
  %v7401 = vpop.f32.mrf.mxu0
  %v7402 = vadd.f32 0.0, %v7401
  %7403 = vmatmul.f32.gmra.mxu0 %v1239
  %v7404 = vpop.f32.mrf.mxu0
  %v7405 = vadd.f32 0.0, %v7404
  %7406 = vmatmul.f32.gmra.mxu0 %v1242
  %v7407 = vpop.f32.mrf.mxu0
  %v7408 = vadd.f32 0.0, %v7407
  %7409 = vmatmul.f32.gmra.mxu0 %v1245
  %v7410 = vpop.f32.mrf.mxu0
  %v7411 = vadd.f32 0.0, %v7410
  %7412 = vmatmul.f32.gmra.mxu0 %v1248
  %v7413 = vpop.f32.mrf.mxu0
  %v7414 = vadd.f32 0.0, %v7413
  %7415 = vmatmul.f32.gmra.mxu0 %v1251
  %v7416 = vpop.f32.mrf.mxu0
  %v7417 = vadd.f32 0.0, %v7416
  %7418 = vmatmul.f32.gmra.mxu0 %v1254
  %v7419 = vpop.f32.mrf.mxu0
  %v7420 = vadd.f32 0.0, %v7419
  %7421 = vmatmul.f32.gmra.mxu0 %v1257
  %v7422 = vpop.f32.mrf.mxu0
  %v7423 = vadd.f32 0.0, %v7422
  %7424 = vmatmul.f32.gmra.mxu0 %v1260
  %v7425 = vpop.f32.mrf.mxu0
  %v7426 = vadd.f32 0.0, %v7425
  %7427 = vmatmul.f32.gmra.mxu0 %v1263
  %v7428 = vpop.f32.mrf.mxu0
  %v7429 = vadd.f32 0.0, %v7428
  %7430 = vdwg.mxu0
  %v7533 = vrot.slane %v7126, 6
  %v7534 = vrot.slane %v7129, 6
  %v7535 = vsel %vm3718, %v7533, %v7534
  %v7536 = vrot.slane %v7132, 6
  %v7537 = vsel %vm3718, %v7534, %v7536
  %v7538 = vrot.slane %v7135, 6
  %v7539 = vsel %vm3718, %v7536, %v7538
  %v7540 = vrot.slane %v7138, 6
  %v7541 = vsel %vm3718, %v7538, %v7540
  %v7542 = vrot.slane %v7141, 6
  %v7543 = vsel %vm3718, %v7540, %v7542
  %v7544 = vrot.slane %v7144, 6
  %v7545 = vsel %vm3718, %v7542, %v7544
  %v7546 = vrot.slane %v7147, 6
  %v7547 = vsel %vm3718, %v7544, %v7546
  %v7548 = vrot.slane %v7150, 6
  %v7549 = vsel %vm3718, %v7546, %v7548
  %v7550 = vrot.slane %v7153, 6
  %v7551 = vsel %vm3718, %v7548, %v7550
  %v7552 = vrot.slane %v7156, 6
  %v7553 = vsel %vm3718, %v7550, %v7552
  %v7554 = vrot.slane %v7159, 6
  %v7555 = vsel %vm3718, %v7552, %v7554
  %v7556 = vrot.slane %v7162, 6
  %v7557 = vsel %vm3718, %v7554, %v7556
  %v7558 = vrot.slane %v7165, 6
  %v7559 = vsel %vm3718, %v7556, %v7558
  %v7560 = vrot.slane %v7168, 6
  %v7561 = vsel %vm3718, %v7558, %v7560
  %v7562 = vrot.slane %v7171, 6
  %v7563 = vsel %vm3718, %v7560, %v7562
  %v7564 = vrot.slane %v7174, 6
  %v7565 = vsel %vm3718, %v7562, %v7564
  %v7566 = vrot.slane %v7177, 6
  %v7567 = vsel %vm3718, %v7564, %v7566
  %v7568 = vrot.slane %v7180, 6
  %v7569 = vsel %vm3718, %v7566, %v7568
  %v7570 = vrot.slane %v7183, 6
  %v7571 = vsel %vm3718, %v7568, %v7570
  %v7572 = vrot.slane %v7186, 6
  %v7573 = vsel %vm3718, %v7570, %v7572
  %v7574 = vrot.slane %v7189, 6
  %v7575 = vsel %vm3718, %v7572, %v7574
  %v7576 = vrot.slane %v7192, 6
  %v7577 = vsel %vm3718, %v7574, %v7576
  %v7578 = vrot.slane %v7195, 6
  %v7579 = vsel %vm3718, %v7576, %v7578
  %v7580 = vrot.slane %v7198, 6
  %v7581 = vsel %vm3718, %v7578, %v7580
  %v7582 = vrot.slane %v7201, 6
  %v7583 = vsel %vm3718, %v7580, %v7582
  %v7584 = vrot.slane %v7204, 6
  %v7585 = vsel %vm3718, %v7582, %v7584
  %v7586 = vrot.slane %v7207, 6
  %v7587 = vsel %vm3718, %v7584, %v7586
  %v7588 = vrot.slane %v7210, 6
  %v7589 = vsel %vm3718, %v7586, %v7588
  %v7590 = vrot.slane %v7213, 6
  %v7591 = vsel %vm3718, %v7588, %v7590
  %v7592 = vrot.slane %v7216, 6
  %v7593 = vsel %vm3718, %v7590, %v7592
  %v7594 = vrot.slane %v7219, 6
  %v7595 = vsel %vm3718, %v7592, %v7594
  %v7596 = vrot.slane %v7222, 6
  %v7597 = vsel %vm3718, %v7594, %v7596
  %v7598 = vrot.slane %v7225, 6
  %v7599 = vsel %vm3718, %v7596, %v7598
  %v7600 = vrot.slane %v7228, 6
  %v7601 = vsel %vm3718, %v7598, %v7600
  %v7602 = vrot.slane %v7231, 6
  %v7603 = vsel %vm3718, %v7600, %v7602
  %v7604 = vrot.slane %v7234, 6
  %v7605 = vsel %vm3718, %v7602, %v7604
  %v7606 = vrot.slane %v7237, 6
  %v7607 = vsel %vm3718, %v7604, %v7606
  %v7608 = vrot.slane %v7240, 6
  %v7609 = vsel %vm3718, %v7606, %v7608
  %v7610 = vrot.slane %v7243, 6
  %v7611 = vsel %vm3718, %v7608, %v7610
  %v7612 = vrot.slane %v7246, 6
  %v7613 = vsel %vm3718, %v7610, %v7612
  %v7614 = vrot.slane %v7249, 6
  %v7615 = vsel %vm3718, %v7612, %v7614
  %v7616 = vrot.slane %v7252, 6
  %v7617 = vsel %vm3718, %v7614, %v7616
  %v7618 = vrot.slane %v7255, 6
  %v7619 = vsel %vm3718, %v7616, %v7618
  %v7620 = vrot.slane %v7258, 6
  %v7621 = vsel %vm3718, %v7618, %v7620
  %v7622 = vrot.slane %v7261, 6
  %v7623 = vsel %vm3718, %v7620, %v7622
  %v7624 = vrot.slane %v7264, 6
  %v7625 = vsel %vm3718, %v7622, %v7624
  %v7626 = vrot.slane %v7267, 6
  %v7627 = vsel %vm3718, %v7624, %v7626
  %v7628 = vrot.slane %v7270, 6
  %v7629 = vsel %vm3718, %v7626, %v7628
  %v7630 = vrot.slane %v7273, 6
  %v7631 = vsel %vm3718, %v7628, %v7630
  %v7632 = vrot.slane %v7276, 6
  %v7633 = vsel %vm3718, %v7630, %v7632
  %v7634 = vrot.slane %v7279, 6
  %v7635 = vsel %vm3718, %v7632, %v7634
  %v7636 = vrot.slane %v7282, 6
  %v7637 = vsel %vm3718, %v7634, %v7636
  %v7638 = vrot.slane %v7285, 6
  %v7639 = vsel %vm3718, %v7636, %v7638
  %v7640 = vrot.slane %v7288, 6
  %v7641 = vsel %vm3718, %v7638, %v7640
  %v7642 = vrot.slane %v7291, 6
  %v7643 = vsel %vm3718, %v7640, %v7642
  %v7644 = vrot.slane %v7294, 6
  %v7645 = vsel %vm3718, %v7642, %v7644
  %v7646 = vrot.slane %v7297, 6
  %v7647 = vsel %vm3718, %v7644, %v7646
  %v7648 = vrot.slane %v7300, 6
  %v7649 = vsel %vm3718, %v7646, %v7648
  %v7650 = vrot.slane %v7303, 6
  %v7651 = vsel %vm3718, %v7648, %v7650
  %v7652 = vrot.slane %v7306, 6
  %v7653 = vsel %vm3718, %v7650, %v7652
  %v7654 = vrot.slane %v7309, 6
  %v7655 = vsel %vm3718, %v7652, %v7654
  %v7656 = vrot.slane %v7312, 6
  %v7657 = vsel %vm3718, %v7654, %v7656
  %v7658 = vrot.slane %v7315, 6
  %v7659 = vsel %vm3718, %v7656, %v7658
  %v7660 = vrot.slane %v7318, 6
  %v7661 = vsel %vm3718, %v7658, %v7660
  %v7662 = vrot.slane %v7321, 6
  %v7663 = vsel %vm3718, %v7660, %v7662
  %v7664 = vrot.slane %v7324, 6
  %v7665 = vsel %vm3718, %v7662, %v7664
  %v7666 = vrot.slane %v7327, 6
  %v7667 = vsel %vm3718, %v7664, %v7666
  %v7668 = vrot.slane %v7330, 6
  %v7669 = vsel %vm3718, %v7666, %v7668
  %v7670 = vrot.slane %v7333, 6
  %v7671 = vsel %vm3718, %v7668, %v7670
  %v7672 = vrot.slane %v7336, 6
  %v7673 = vsel %vm3718, %v7670, %v7672
  %v7674 = vrot.slane %v7339, 6
  %v7675 = vsel %vm3718, %v7672, %v7674
  %v7676 = vrot.slane %v7342, 6
  %v7677 = vsel %vm3718, %v7674, %v7676
  %v7678 = vrot.slane %v7345, 6
  %v7679 = vsel %vm3718, %v7676, %v7678
  %v7680 = vrot.slane %v7348, 6
  %v7681 = vsel %vm3718, %v7678, %v7680
  %v7682 = vrot.slane %v7351, 6
  %v7683 = vsel %vm3718, %v7680, %v7682
  %v7684 = vrot.slane %v7354, 6
  %v7685 = vsel %vm3718, %v7682, %v7684
  %v7686 = vrot.slane %v7357, 6
  %v7687 = vsel %vm3718, %v7684, %v7686
  %v7688 = vrot.slane %v7360, 6
  %v7689 = vsel %vm3718, %v7686, %v7688
  %v7690 = vrot.slane %v7363, 6
  %v7691 = vsel %vm3718, %v7688, %v7690
  %v7692 = vrot.slane %v7366, 6
  %v7693 = vsel %vm3718, %v7690, %v7692
  %v7694 = vrot.slane %v7369, 6
  %v7695 = vsel %vm3718, %v7692, %v7694
  %v7696 = vrot.slane %v7372, 6
  %v7697 = vsel %vm3718, %v7694, %v7696
  %v7698 = vrot.slane %v7375, 6
  %v7699 = vsel %vm3718, %v7696, %v7698
  %v7700 = vrot.slane %v7378, 6
  %v7701 = vsel %vm3718, %v7698, %v7700
  %v7702 = vrot.slane %v7381, 6
  %v7703 = vsel %vm3718, %v7700, %v7702
  %v7704 = vrot.slane %v7384, 6
  %v7705 = vsel %vm3718, %v7702, %v7704
  %v7706 = vrot.slane %v7387, 6
  %v7707 = vsel %vm3718, %v7704, %v7706
  %v7708 = vrot.slane %v7390, 6
  %v7709 = vsel %vm3718, %v7706, %v7708
  %v7710 = vrot.slane %v7393, 6
  %v7711 = vsel %vm3718, %v7708, %v7710
  %v7712 = vrot.slane %v7396, 6
  %v7713 = vsel %vm3718, %v7710, %v7712
  %v7714 = vrot.slane %v7399, 6
  %v7715 = vsel %vm3718, %v7712, %v7714
  %v7716 = vrot.slane %v7402, 6
  %v7717 = vsel %vm3718, %v7714, %v7716
  %v7718 = vrot.slane %v7405, 6
  %v7719 = vsel %vm3718, %v7716, %v7718
  %v7720 = vrot.slane %v7408, 6
  %v7721 = vsel %vm3718, %v7718, %v7720
  %v7722 = vrot.slane %v7411, 6
  %v7723 = vsel %vm3718, %v7720, %v7722
  %v7724 = vrot.slane %v7414, 6
  %v7725 = vsel %vm3718, %v7722, %v7724
  %v7726 = vrot.slane %v7417, 6
  %v7727 = vsel %vm3718, %v7724, %v7726
  %v7728 = vrot.slane %v7420, 6
  %v7729 = vsel %vm3718, %v7726, %v7728
  %v7730 = vrot.slane %v7423, 6
  %v7731 = vsel %vm3718, %v7728, %v7730
  %v7732 = vrot.slane %v7426, 6
  %v7733 = vsel %vm3718, %v7730, %v7732
  %v7734 = vrot.slane %v7429, 6
  %v7735 = vsel %vm3718, %v7732, %v7734
  %v7838 = vadd.f32 %v6995, %v7535
  %v7839 = vadd.f32 %v6996, %v7537
  %v7840 = vadd.f32 %v6997, %v7539
  %v7841 = vadd.f32 %v6998, %v7541
  %v7842 = vadd.f32 %v6999, %v7543
  %v7843 = vadd.f32 %v7000, %v7545
  %v7844 = vadd.f32 %v7001, %v7547
  %v7845 = vadd.f32 %v7002, %v7549
  %v7846 = vadd.f32 %v7003, %v7551
  %v7847 = vadd.f32 %v7004, %v7553
  %v7848 = vadd.f32 %v7005, %v7555
  %v7849 = vadd.f32 %v7006, %v7557
  %v7850 = vadd.f32 %v7007, %v7559
  %v7851 = vadd.f32 %v7008, %v7561
  %v7852 = vadd.f32 %v7009, %v7563
  %v7853 = vadd.f32 %v7010, %v7565
  %v7854 = vadd.f32 %v7011, %v7567
  %v7855 = vadd.f32 %v7012, %v7569
  %v7856 = vadd.f32 %v7013, %v7571
  %v7857 = vadd.f32 %v7014, %v7573
  %v7858 = vadd.f32 %v7015, %v7575
  %v7859 = vadd.f32 %v7016, %v7577
  %v7860 = vadd.f32 %v7017, %v7579
  %v7861 = vadd.f32 %v7018, %v7581
  %v7862 = vadd.f32 %v7019, %v7583
  %v7863 = vadd.f32 %v7020, %v7585
  %v7864 = vadd.f32 %v7021, %v7587
  %v7865 = vadd.f32 %v7022, %v7589
  %v7866 = vadd.f32 %v7023, %v7591
  %v7867 = vadd.f32 %v7024, %v7593
  %v7868 = vadd.f32 %v7025, %v7595
  %v7869 = vadd.f32 %v7026, %v7597
  %v7870 = vadd.f32 %v7027, %v7599
  %v7871 = vadd.f32 %v7028, %v7601
  %v7872 = vadd.f32 %v7029, %v7603
  %v7873 = vadd.f32 %v7030, %v7605
  %v7874 = vadd.f32 %v7031, %v7607
  %v7875 = vadd.f32 %v7032, %v7609
  %v7876 = vadd.f32 %v7033, %v7611
  %v7877 = vadd.f32 %v7034, %v7613
  %v7878 = vadd.f32 %v7035, %v7615
  %v7879 = vadd.f32 %v7036, %v7617
  %v7880 = vadd.f32 %v7037, %v7619
  %v7881 = vadd.f32 %v7038, %v7621
  %v7882 = vadd.f32 %v7039, %v7623
  %v7883 = vadd.f32 %v7040, %v7625
  %v7884 = vadd.f32 %v7041, %v7627
  %v7885 = vadd.f32 %v7042, %v7629
  %v7886 = vadd.f32 %v7043, %v7631
  %v7887 = vadd.f32 %v7044, %v7633
  %v7888 = vadd.f32 %v7045, %v7635
  %v7889 = vadd.f32 %v7046, %v7637
  %v7890 = vadd.f32 %v7047, %v7639
  %v7891 = vadd.f32 %v7048, %v7641
  %v7892 = vadd.f32 %v7049, %v7643
  %v7893 = vadd.f32 %v7050, %v7645
  %v7894 = vadd.f32 %v7051, %v7647
  %v7895 = vadd.f32 %v7052, %v7649
  %v7896 = vadd.f32 %v7053, %v7651
  %v7897 = vadd.f32 %v7054, %v7653
  %v7898 = vadd.f32 %v7055, %v7655
  %v7899 = vadd.f32 %v7056, %v7657
  %v7900 = vadd.f32 %v7057, %v7659
  %v7901 = vadd.f32 %v7058, %v7661
  %v7902 = vadd.f32 %v7059, %v7663
  %v7903 = vadd.f32 %v7060, %v7665
  %v7904 = vadd.f32 %v7061, %v7667
  %v7905 = vadd.f32 %v7062, %v7669
  %v7906 = vadd.f32 %v7063, %v7671
  %v7907 = vadd.f32 %v7064, %v7673
  %v7908 = vadd.f32 %v7065, %v7675
  %v7909 = vadd.f32 %v7066, %v7677
  %v7910 = vadd.f32 %v7067, %v7679
  %v7911 = vadd.f32 %v7068, %v7681
  %v7912 = vadd.f32 %v7069, %v7683
  %v7913 = vadd.f32 %v7070, %v7685
  %v7914 = vadd.f32 %v7071, %v7687
  %v7915 = vadd.f32 %v7072, %v7689
  %v7916 = vadd.f32 %v7073, %v7691
  %v7917 = vadd.f32 %v7074, %v7693
  %v7918 = vadd.f32 %v7075, %v7695
  %v7919 = vadd.f32 %v7076, %v7697
  %v7920 = vadd.f32 %v7077, %v7699
  %v7921 = vadd.f32 %v7078, %v7701
  %v7922 = vadd.f32 %v7079, %v7703
  %v7923 = vadd.f32 %v7080, %v7705
  %v7924 = vadd.f32 %v7081, %v7707
  %v7925 = vadd.f32 %v7082, %v7709
  %v7926 = vadd.f32 %v7083, %v7711
  %v7927 = vadd.f32 %v7084, %v7713
  %v7928 = vadd.f32 %v7085, %v7715
  %v7929 = vadd.f32 %v7086, %v7717
  %v7930 = vadd.f32 %v7087, %v7719
  %v7931 = vadd.f32 %v7088, %v7721
  %v7932 = vadd.f32 %v7089, %v7723
  %v7933 = vadd.f32 %v7090, %v7725
  %v7934 = vadd.f32 %v7091, %v7727
  %v7935 = vadd.f32 %v7092, %v7729
  %v7936 = vadd.f32 %v7093, %v7731
  %v7937 = vadd.f32 %v7094, %v7733
  %v7938 = vadd.f32 %v7095, %v7735
  %v7939 = vadd.f32 %v7096, %v7734
  %v7940 = vld [vmem:[%s5] sm:$0xff]
  %v7941 = vld [vmem:[%s5 + $0x8] sm:$0xff]
  %v7942 = vld [vmem:[%s5 + $0x10] sm:$0xff]
  %v7943 = vld [vmem:[%s5 + $0x18] sm:$0xff]
  %v7944 = vld [vmem:[%s5 + $0x20] sm:$0xff]
  %v7945 = vld [vmem:[%s5 + $0x28] sm:$0xff]
  %v7946 = vld [vmem:[%s5 + $0x30] sm:$0xff]
  %v7947 = vld [vmem:[%s5 + $0x38] sm:$0xff]
  %v7948 = vld [vmem:[%s5 + $0x40] sm:$0xff]
  %v7949 = vld [vmem:[%s5 + $0x48] sm:$0xff]
  %v7950 = vld [vmem:[%s5 + $0x50] sm:$0xff]
  %v7951 = vld [vmem:[%s5 + $0x58] sm:$0xff]
  %v7952 = vld [vmem:[%s5 + $0x60] sm:$0xff]
  %v7953 = vld [vmem:[%s5 + $0x68] sm:$0xff]
  %v7954 = vld [vmem:[%s5 + $0x70] sm:$0xff]
  %v7955 = vld [vmem:[%s5 + $0x78] sm:$0xff]
  %v7956 = vld [vmem:[%s5 + $0x80] sm:$0xff]
  %v7957 = vld [vmem:[%s5 + $0x88] sm:$0xff]
  %v7958 = vld [vmem:[%s5 + $0x90] sm:$0xff]
  %v7959 = vld [vmem:[%s5 + $0x98] sm:$0xff]
  %v7960 = vld [vmem:[%s5 + $0xa0] sm:$0xff]
  %v7961 = vld [vmem:[%s5 + $0xa8] sm:$0xff]
  %v7962 = vld [vmem:[%s5 + $0xb0] sm:$0xff]
  %v7963 = vld [vmem:[%s5 + $0xb8] sm:$0xff]
  %v7964 = vld [vmem:[%s5 + $0xc0] sm:$0xff]
  %v7965 = vld [vmem:[%s5 + $0xc8] sm:$0xff]
  %v7966 = vld [vmem:[%s5 + $0xd0] sm:$0xff]
  %v7967 = vld [vmem:[%s5 + $0xd8] sm:$0xff]
  %v7968 = vld [vmem:[%s5 + $0xe0] sm:$0xff]
  %v7969 = vld [vmem:[%s5 + $0xe8] sm:$0xff]
  %v7970 = vld [vmem:[%s5 + $0xf0] sm:$0xff]
  %v7971 = vld [vmem:[%s5 + $0xf8] sm:$0xff]
  %v7972 = vld [vmem:[%s5 + $0x100] sm:$0xff]
  %v7973 = vld [vmem:[%s5 + $0x108] sm:$0xff]
  %v7974 = vld [vmem:[%s5 + $0x110] sm:$0xff]
  %v7975 = vld [vmem:[%s5 + $0x118] sm:$0xff]
  %v7976 = vld [vmem:[%s5 + $0x120] sm:$0xff]
  %v7977 = vld [vmem:[%s5 + $0x128] sm:$0xff]
  %v7978 = vld [vmem:[%s5 + $0x130] sm:$0xff]
  %v7979 = vld [vmem:[%s5 + $0x138] sm:$0xff]
  %v7980 = vld [vmem:[%s5 + $0x140] sm:$0xff]
  %v7981 = vld [vmem:[%s5 + $0x148] sm:$0xff]
  %v7982 = vld [vmem:[%s5 + $0x150] sm:$0xff]
  %v7983 = vld [vmem:[%s5 + $0x158] sm:$0xff]
  %v7984 = vld [vmem:[%s5 + $0x160] sm:$0xff]
  %v7985 = vld [vmem:[%s5 + $0x168] sm:$0xff]
  %v7986 = vld [vmem:[%s5 + $0x170] sm:$0xff]
  %v7987 = vld [vmem:[%s5 + $0x178] sm:$0xff]
  %v7988 = vld [vmem:[%s5 + $0x180] sm:$0xff]
  %v7989 = vld [vmem:[%s5 + $0x188] sm:$0xff]
  %v7990 = vld [vmem:[%s5 + $0x190] sm:$0xff]
  %v7991 = vld [vmem:[%s5 + $0x198] sm:$0xff]
  %v7992 = vld [vmem:[%s5 + $0x1a0] sm:$0xff]
  %v7993 = vld [vmem:[%s5 + $0x1a8] sm:$0xff]
  %v7994 = vld [vmem:[%s5 + $0x1b0] sm:$0xff]
  %v7995 = vld [vmem:[%s5 + $0x1b8] sm:$0xff]
  %v7996 = vld [vmem:[%s5 + $0x1c0] sm:$0xff]
  %v7997 = vld [vmem:[%s5 + $0x1c8] sm:$0xff]
  %v7998 = vld [vmem:[%s5 + $0x1d0] sm:$0xff]
  %v7999 = vld [vmem:[%s5 + $0x1d8] sm:$0xff]
  %v8000 = vld [vmem:[%s5 + $0x1e0] sm:$0xff]
  %v8001 = vld [vmem:[%s5 + $0x1e8] sm:$0xff]
  %v8002 = vld [vmem:[%s5 + $0x1f0] sm:$0xff]
  %v8003 = vld [vmem:[%s5 + $0x1f8] sm:$0xff]
  %v8004 = vld [vmem:[%s5 + $0x200] sm:$0xff]
  %v8005 = vld [vmem:[%s5 + $0x208] sm:$0xff]
  %v8006 = vld [vmem:[%s5 + $0x210] sm:$0xff]
  %v8007 = vld [vmem:[%s5 + $0x218] sm:$0xff]
  %v8008 = vld [vmem:[%s5 + $0x220] sm:$0xff]
  %v8009 = vld [vmem:[%s5 + $0x228] sm:$0xff]
  %v8010 = vld [vmem:[%s5 + $0x230] sm:$0xff]
  %v8011 = vld [vmem:[%s5 + $0x238] sm:$0xff]
  %v8012 = vld [vmem:[%s5 + $0x240] sm:$0xff]
  %v8013 = vld [vmem:[%s5 + $0x248] sm:$0xff]
  %v8014 = vld [vmem:[%s5 + $0x250] sm:$0xff]
  %v8015 = vld [vmem:[%s5 + $0x258] sm:$0xff]
  %v8016 = vld [vmem:[%s5 + $0x260] sm:$0xff]
  %v8017 = vld [vmem:[%s5 + $0x268] sm:$0xff]
  %v8018 = vld [vmem:[%s5 + $0x270] sm:$0xff]
  %v8019 = vld [vmem:[%s5 + $0x278] sm:$0xff]
  %v8020 = vld [vmem:[%s5 + $0x280] sm:$0xff]
  %v8021 = vld [vmem:[%s5 + $0x288] sm:$0xff]
  %v8022 = vld [vmem:[%s5 + $0x290] sm:$0xff]
  %v8023 = vld [vmem:[%s5 + $0x298] sm:$0xff]
  %v8024 = vld [vmem:[%s5 + $0x2a0] sm:$0xff]
  %v8025 = vld [vmem:[%s5 + $0x2a8] sm:$0xff]
  %v8026 = vld [vmem:[%s5 + $0x2b0] sm:$0xff]
  %v8027 = vld [vmem:[%s5 + $0x2b8] sm:$0xff]
  %v8028 = vld [vmem:[%s5 + $0x2c0] sm:$0xff]
  %v8029 = vld [vmem:[%s5 + $0x2c8] sm:$0xff]
  %v8030 = vld [vmem:[%s5 + $0x2d0] sm:$0xff]
  %v8031 = vld [vmem:[%s5 + $0x2d8] sm:$0xff]
  %v8032 = vld [vmem:[%s5 + $0x2e0] sm:$0xff]
  %v8033 = vld [vmem:[%s5 + $0x2e8] sm:$0xff]
  %v8034 = vld [vmem:[%s5 + $0x2f0] sm:$0xff]
  %v8035 = vld [vmem:[%s5 + $0x2f8] sm:$0xff]
  %v8036 = vld [vmem:[%s5 + $0x300] sm:$0xff]
  %v8037 = vld [vmem:[%s5 + $0x308] sm:$0xff]
  %v8038 = vld [vmem:[%s5 + $0x310] sm:$0xff]
  %v8039 = vld [vmem:[%s5 + $0x318] sm:$0xff]
  %v8040 = vld [vmem:[%s5 + $0x320] sm:$0xff]
  %v8041 = vld [vmem:[%s5 + $0x328] sm:$0xff]
  %v8042 = vld [vmem:[%s5 + $0x330] sm:$0xff]
  %v8043 = vld [vmem:[%s5 + $0x338] sm:$0xff]
  %v8044 = vld [vmem:[%s5 + $0x340] sm:$0xff]
  %v8045 = vld [vmem:[%s5 + $0x348] sm:$0xff]
  %v8046 = vld [vmem:[%s5 + $0x350] sm:$0xff]
  %v8047 = vld [vmem:[%s5 + $0x358] sm:$0xff]
  %v8048 = vld [vmem:[%s5 + $0x360] sm:$0xff]
  %v8049 = vld [vmem:[%s5 + $0x368] sm:$0xff]
  %v8050 = vld [vmem:[%s5 + $0x370] sm:$0xff]
  %v8051 = vld [vmem:[%s5 + $0x378] sm:$0xff]
  %v8052 = vld [vmem:[%s5 + $0x380] sm:$0xff]
  %v8053 = vld [vmem:[%s5 + $0x388] sm:$0xff]
  %v8054 = vld [vmem:[%s5 + $0x390] sm:$0xff]
  %v8055 = vld [vmem:[%s5 + $0x398] sm:$0xff]
  %v8056 = vld [vmem:[%s5 + $0x3a0] sm:$0xff]
  %v8057 = vld [vmem:[%s5 + $0x3a8] sm:$0xff]
  %v8058 = vld [vmem:[%s5 + $0x3b0] sm:$0xff]
  %v8059 = vld [vmem:[%s5 + $0x3b8] sm:$0xff]
  %v8060 = vld [vmem:[%s5 + $0x3c0] sm:$0xff]
  %v8061 = vld [vmem:[%s5 + $0x3c8] sm:$0xff]
  %v8062 = vld [vmem:[%s5 + $0x3d0] sm:$0xff]
  %v8063 = vld [vmem:[%s5 + $0x3d8] sm:$0xff]
  %v8064 = vld [vmem:[%s5 + $0x3e0] sm:$0xff]
  %v8065 = vld [vmem:[%s5 + $0x3e8] sm:$0xff]
  %v8066 = vld [vmem:[%s5 + $0x3f0] sm:$0xff]
  %v8067 = vld [vmem:[%s5 + $0x3f8] sm:$0xff]
  %v8068 = vld [vmem:[%s5 + $0x400] sm:$0xff]
  %v8069 = vld [vmem:[%s5 + $0x408] sm:$0xff]
  %v8070 = vld [vmem:[%s5 + $0x410] sm:$0xff]
  %v8071 = vld [vmem:[%s5 + $0x418] sm:$0xff]
  %v8072 = vld [vmem:[%s5 + $0x420] sm:$0xff]
  %v8073 = vld [vmem:[%s5 + $0x428] sm:$0xff]
  %v8074 = vld [vmem:[%s5 + $0x430] sm:$0xff]
  %v8075 = vld [vmem:[%s5 + $0x438] sm:$0xff]
  %v8076 = vld [vmem:[%s5 + $0x440] sm:$0xff]
  %v8077 = vld [vmem:[%s5 + $0x448] sm:$0xff]
  %v8078 = vld [vmem:[%s5 + $0x450] sm:$0xff]
  %v8079 = vld [vmem:[%s5 + $0x458] sm:$0xff]
  %v8080 = vld [vmem:[%s5 + $0x460] sm:$0xff]
  %v8081 = vld [vmem:[%s5 + $0x468] sm:$0xff]
  %v8082 = vld [vmem:[%s5 + $0x470] sm:$0xff]
  %v8083 = vld [vmem:[%s5 + $0x478] sm:$0xff]
  %v8084 = vld [vmem:[%s5 + $0x480] sm:$0xff]
  %v8085 = vld [vmem:[%s5 + $0x488] sm:$0xff]
  %v8086 = vld [vmem:[%s5 + $0x490] sm:$0xff]
  %v8087 = vld [vmem:[%s4] sm:$0x1]
  %v8089 = vperm.slane %v8087, 0
  %vm8091 = vcmask 343040
  %v8093 = vsel %vm8091, %v7946, 0
  %v8096 = vsel %vm8091, %v7953, 0
  %v8099 = vsel %vm8091, %v7960, 0
  %v8102 = vsel %vm8091, %v7967, 0
  %v8105 = vsel %vm8091, %v7974, 0
  %v8108 = vsel %vm8091, %v7981, 0
  %v8111 = vsel %vm8091, %v7988, 0
  %v8114 = vsel %vm8091, %v7995, 0
  %v8117 = vsel %vm8091, %v8002, 0
  %v8120 = vsel %vm8091, %v8009, 0
  %v8123 = vsel %vm8091, %v8016, 0
  %v8126 = vsel %vm8091, %v8023, 0
  %v8129 = vsel %vm8091, %v8030, 0
  %v8132 = vsel %vm8091, %v8037, 0
  %v8135 = vsel %vm8091, %v8044, 0
  %v8138 = vsel %vm8091, %v8051, 0
  %v8141 = vsel %vm8091, %v8058, 0
  %v8144 = vsel %vm8091, %v8065, 0
  %v8147 = vsel %vm8091, %v8072, 0
  %v8150 = vsel %vm8091, %v8079, 0
  %v8153 = vsel %vm8091, %v8086, 0
  %v8156 = vsel %vm3718, %v7939, 0
  %8158 = vmatpush.msra.mxu0 %v7853
  %8159 = vmatpush.msra.mxu0 %v7852
  %8160 = vmatpush.msra.mxu0 %v7851
  %8161 = vmatpush.msra.mxu0 %v7850
  %8162 = vmatpush.msra.mxu0 %v7849
  %8163 = vmatpush.msra.mxu0 %v7848
  %8164 = vmatpush.msra.mxu0 %v7847
  %8165 = vmatpush.msra.mxu0 %v7846
  %8166 = vmatpush.msra.mxu0 %v7845
  %8167 = vmatpush.msra.mxu0 %v7844
  %8168 = vmatpush.msra.mxu0 %v7843
  %8169 = vmatpush.msra.mxu0 %v7842
  %8170 = vmatpush.msra.mxu0 %v7841
  %8171 = vmatpush.msra.mxu0 %v7840
  %8172 = vmatpush.msra.mxu0 %v7839
  %8173 = vmatpush.msra.mxu0 %v7838
  %8174 = vmatmul.f32.gmra.mxu0 %v7940
  %v8175 = vpop.f32.mrf.mxu0
  %v8176 = vadd.f32 %v8089, %v8175
  %8177 = vmatmul.f32.gmra.mxu0 %v7947
  %v8178 = vpop.f32.mrf.mxu0
  %v8179 = vadd.f32 %v8089, %v8178
  %8180 = vmatmul.f32.gmra.mxu0 %v7954
  %v8181 = vpop.f32.mrf.mxu0
  %v8182 = vadd.f32 %v8089, %v8181
  %8183 = vmatmul.f32.gmra.mxu0 %v7961
  %v8184 = vpop.f32.mrf.mxu0
  %v8185 = vadd.f32 %v8089, %v8184
  %8186 = vmatmul.f32.gmra.mxu0 %v7968
  %v8187 = vpop.f32.mrf.mxu0
  %v8188 = vadd.f32 %v8089, %v8187
  %8189 = vmatmul.f32.gmra.mxu0 %v7975
  %v8190 = vpop.f32.mrf.mxu0
  %v8191 = vadd.f32 %v8089, %v8190
  %8192 = vmatmul.f32.gmra.mxu0 %v7982
  %v8193 = vpop.f32.mrf.mxu0
  %v8194 = vadd.f32 %v8089, %v8193
  %8195 = vmatmul.f32.gmra.mxu0 %v7989
  %v8196 = vpop.f32.mrf.mxu0
  %v8197 = vadd.f32 %v8089, %v8196
  %8198 = vmatmul.f32.gmra.mxu0 %v7996
  %v8199 = vpop.f32.mrf.mxu0
  %v8200 = vadd.f32 %v8089, %v8199
  %8201 = vmatmul.f32.gmra.mxu0 %v8003
  %v8202 = vpop.f32.mrf.mxu0
  %v8203 = vadd.f32 %v8089, %v8202
  %8204 = vmatmul.f32.gmra.mxu0 %v8010
  %v8205 = vpop.f32.mrf.mxu0
  %v8206 = vadd.f32 %v8089, %v8205
  %8207 = vmatmul.f32.gmra.mxu0 %v8017
  %v8208 = vpop.f32.mrf.mxu0
  %v8209 = vadd.f32 %v8089, %v8208
  %8210 = vmatmul.f32.gmra.mxu0 %v8024
  %v8211 = vpop.f32.mrf.mxu0
  %v8212 = vadd.f32 %v8089, %v8211
  %8213 = vmatmul.f32.gmra.mxu0 %v8031
  %v8214 = vpop.f32.mrf.mxu0
  %v8215 = vadd.f32 %v8089, %v8214
  %8216 = vmatmul.f32.gmra.mxu0 %v8038
  %v8217 = vpop.f32.mrf.mxu0
  %v8218 = vadd.f32 %v8089, %v8217
  %8219 = vmatmul.f32.gmra.mxu0 %v8045
  %v8220 = vpop.f32.mrf.mxu0
  %v8221 = vadd.f32 %v8089, %v8220
  %8222 = vmatmul.f32.gmra.mxu0 %v8052
  %v8223 = vpop.f32.mrf.mxu0
  %v8224 = vadd.f32 %v8089, %v8223
  %8225 = vmatmul.f32.gmra.mxu0 %v8059
  %v8226 = vpop.f32.mrf.mxu0
  %v8227 = vadd.f32 %v8089, %v8226
  %8228 = vmatmul.f32.gmra.mxu0 %v8066
  %v8229 = vpop.f32.mrf.mxu0
  %v8230 = vadd.f32 %v8089, %v8229
  %8231 = vmatmul.f32.gmra.mxu0 %v8073
  %v8232 = vpop.f32.mrf.mxu0
  %v8233 = vadd.f32 %v8089, %v8232
  %8234 = vmatmul.f32.gmra.mxu0 %v8080
  %v8235 = vpop.f32.mrf.mxu0
  %v8236 = vadd.f32 %v8089, %v8235
  %8237 = vdwg.mxu0
  %8238 = vmatpush.msra.mxu0 %v7869
  %8239 = vmatpush.msra.mxu0 %v7868
  %8240 = vmatpush.msra.mxu0 %v7867
  %8241 = vmatpush.msra.mxu0 %v7866
  %8242 = vmatpush.msra.mxu0 %v7865
  %8243 = vmatpush.msra.mxu0 %v7864
  %8244 = vmatpush.msra.mxu0 %v7863
  %8245 = vmatpush.msra.mxu0 %v7862
  %8246 = vmatpush.msra.mxu0 %v7861
  %8247 = vmatpush.msra.mxu0 %v7860
  %8248 = vmatpush.msra.mxu0 %v7859
  %8249 = vmatpush.msra.mxu0 %v7858
  %8250 = vmatpush.msra.mxu0 %v7857
  %8251 = vmatpush.msra.mxu0 %v7856
  %8252 = vmatpush.msra.mxu0 %v7855
  %8253 = vmatpush.msra.mxu0 %v7854
  %8254 = vmatmul.f32.gmra.mxu0 %v7941
  %v8255 = vpop.f32.mrf.mxu0
  %v8256 = vadd.f32 %v8176, %v8255
  %8257 = vmatmul.f32.gmra.mxu0 %v7948
  %v8258 = vpop.f32.mrf.mxu0
  %v8259 = vadd.f32 %v8179, %v8258
  %8260 = vmatmul.f32.gmra.mxu0 %v7955
  %v8261 = vpop.f32.mrf.mxu0
  %v8262 = vadd.f32 %v8182, %v8261
  %8263 = vmatmul.f32.gmra.mxu0 %v7962
  %v8264 = vpop.f32.mrf.mxu0
  %v8265 = vadd.f32 %v8185, %v8264
  %8266 = vmatmul.f32.gmra.mxu0 %v7969
  %v8267 = vpop.f32.mrf.mxu0
  %v8268 = vadd.f32 %v8188, %v8267
  %8269 = vmatmul.f32.gmra.mxu0 %v7976
  %v8270 = vpop.f32.mrf.mxu0
  %v8271 = vadd.f32 %v8191, %v8270
  %8272 = vmatmul.f32.gmra.mxu0 %v7983
  %v8273 = vpop.f32.mrf.mxu0
  %v8274 = vadd.f32 %v8194, %v8273
  %8275 = vmatmul.f32.gmra.mxu0 %v7990
  %v8276 = vpop.f32.mrf.mxu0
  %v8277 = vadd.f32 %v8197, %v8276
  %8278 = vmatmul.f32.gmra.mxu0 %v7997
  %v8279 = vpop.f32.mrf.mxu0
  %v8280 = vadd.f32 %v8200, %v8279
  %8281 = vmatmul.f32.gmra.mxu0 %v8004
  %v8282 = vpop.f32.mrf.mxu0
  %v8283 = vadd.f32 %v8203, %v8282
  %8284 = vmatmul.f32.gmra.mxu0 %v8011
  %v8285 = vpop.f32.mrf.mxu0
  %v8286 = vadd.f32 %v8206, %v8285
  %8287 = vmatmul.f32.gmra.mxu0 %v8018
  %v8288 = vpop.f32.mrf.mxu0
  %v8289 = vadd.f32 %v8209, %v8288
  %8290 = vmatmul.f32.gmra.mxu0 %v8025
  %v8291 = vpop.f32.mrf.mxu0
  %v8292 = vadd.f32 %v8212, %v8291
  %8293 = vmatmul.f32.gmra.mxu0 %v8032
  %v8294 = vpop.f32.mrf.mxu0
  %v8295 = vadd.f32 %v8215, %v8294
  %8296 = vmatmul.f32.gmra.mxu0 %v8039
  %v8297 = vpop.f32.mrf.mxu0
  %v8298 = vadd.f32 %v8218, %v8297
  %8299 = vmatmul.f32.gmra.mxu0 %v8046
  %v8300 = vpop.f32.mrf.mxu0
  %v8301 = vadd.f32 %v8221, %v8300
  %8302 = vmatmul.f32.gmra.mxu0 %v8053
  %v8303 = vpop.f32.mrf.mxu0
  %v8304 = vadd.f32 %v8224, %v8303
  %8305 = vmatmul.f32.gmra.mxu0 %v8060
  %v8306 = vpop.f32.mrf.mxu0
  %v8307 = vadd.f32 %v8227, %v8306
  %8308 = vmatmul.f32.gmra.mxu0 %v8067
  %v8309 = vpop.f32.mrf.mxu0
  %v8310 = vadd.f32 %v8230, %v8309
  %8311 = vmatmul.f32.gmra.mxu0 %v8074
  %v8312 = vpop.f32.mrf.mxu0
  %v8313 = vadd.f32 %v8233, %v8312
  %8314 = vmatmul.f32.gmra.mxu0 %v8081
  %v8315 = vpop.f32.mrf.mxu0
  %v8316 = vadd.f32 %v8236, %v8315
  %8317 = vdwg.mxu0
  %8318 = vmatpush.msra.mxu0 %v7885
  %8319 = vmatpush.msra.mxu0 %v7884
  %8320 = vmatpush.msra.mxu0 %v7883
  %8321 = vmatpush.msra.mxu0 %v7882
  %8322 = vmatpush.msra.mxu0 %v7881
  %8323 = vmatpush.msra.mxu0 %v7880
  %8324 = vmatpush.msra.mxu0 %v7879
  %8325 = vmatpush.msra.mxu0 %v7878
  %8326 = vmatpush.msra.mxu0 %v7877
  %8327 = vmatpush.msra.mxu0 %v7876
  %8328 = vmatpush.msra.mxu0 %v7875
  %8329 = vmatpush.msra.mxu0 %v7874
  %8330 = vmatpush.msra.mxu0 %v7873
  %8331 = vmatpush.msra.mxu0 %v7872
  %8332 = vmatpush.msra.mxu0 %v7871
  %8333 = vmatpush.msra.mxu0 %v7870
  %8334 = vmatmul.f32.gmra.mxu0 %v7942
  %v8335 = vpop.f32.mrf.mxu0
  %v8336 = vadd.f32 %v8256, %v8335
  %8337 = vmatmul.f32.gmra.mxu0 %v7949
  %v8338 = vpop.f32.mrf.mxu0
  %v8339 = vadd.f32 %v8259, %v8338
  %8340 = vmatmul.f32.gmra.mxu0 %v7956
  %v8341 = vpop.f32.mrf.mxu0
  %v8342 = vadd.f32 %v8262, %v8341
  %8343 = vmatmul.f32.gmra.mxu0 %v7963
  %v8344 = vpop.f32.mrf.mxu0
  %v8345 = vadd.f32 %v8265, %v8344
  %8346 = vmatmul.f32.gmra.mxu0 %v7970
  %v8347 = vpop.f32.mrf.mxu0
  %v8348 = vadd.f32 %v8268, %v8347
  %8349 = vmatmul.f32.gmra.mxu0 %v7977
  %v8350 = vpop.f32.mrf.mxu0
  %v8351 = vadd.f32 %v8271, %v8350
  %8352 = vmatmul.f32.gmra.mxu0 %v7984
  %v8353 = vpop.f32.mrf.mxu0
  %v8354 = vadd.f32 %v8274, %v8353
  %8355 = vmatmul.f32.gmra.mxu0 %v7991
  %v8356 = vpop.f32.mrf.mxu0
  %v8357 = vadd.f32 %v8277, %v8356
  %8358 = vmatmul.f32.gmra.mxu0 %v7998
  %v8359 = vpop.f32.mrf.mxu0
  %v8360 = vadd.f32 %v8280, %v8359
  %8361 = vmatmul.f32.gmra.mxu0 %v8005
  %v8362 = vpop.f32.mrf.mxu0
  %v8363 = vadd.f32 %v8283, %v8362
  %8364 = vmatmul.f32.gmra.mxu0 %v8012
  %v8365 = vpop.f32.mrf.mxu0
  %v8366 = vadd.f32 %v8286, %v8365
  %8367 = vmatmul.f32.gmra.mxu0 %v8019
  %v8368 = vpop.f32.mrf.mxu0
  %v8369 = vadd.f32 %v8289, %v8368
  %8370 = vmatmul.f32.gmra.mxu0 %v8026
  %v8371 = vpop.f32.mrf.mxu0
  %v8372 = vadd.f32 %v8292, %v8371
  %8373 = vmatmul.f32.gmra.mxu0 %v8033
  %v8374 = vpop.f32.mrf.mxu0
  %v8375 = vadd.f32 %v8295, %v8374
  %8376 = vmatmul.f32.gmra.mxu0 %v8040
  %v8377 = vpop.f32.mrf.mxu0
  %v8378 = vadd.f32 %v8298, %v8377
  %8379 = vmatmul.f32.gmra.mxu0 %v8047
  %v8380 = vpop.f32.mrf.mxu0
  %v8381 = vadd.f32 %v8301, %v8380
  %8382 = vmatmul.f32.gmra.mxu0 %v8054
  %v8383 = vpop.f32.mrf.mxu0
  %v8384 = vadd.f32 %v8304, %v8383
  %8385 = vmatmul.f32.gmra.mxu0 %v8061
  %v8386 = vpop.f32.mrf.mxu0
  %v8387 = vadd.f32 %v8307, %v8386
  %8388 = vmatmul.f32.gmra.mxu0 %v8068
  %v8389 = vpop.f32.mrf.mxu0
  %v8390 = vadd.f32 %v8310, %v8389
  %8391 = vmatmul.f32.gmra.mxu0 %v8075
  %v8392 = vpop.f32.mrf.mxu0
  %v8393 = vadd.f32 %v8313, %v8392
  %8394 = vmatmul.f32.gmra.mxu0 %v8082
  %v8395 = vpop.f32.mrf.mxu0
  %v8396 = vadd.f32 %v8316, %v8395
  %8397 = vdwg.mxu0
  %8398 = vmatpush.msra.mxu0 %v7901
  %8399 = vmatpush.msra.mxu0 %v7900
  %8400 = vmatpush.msra.mxu0 %v7899
  %8401 = vmatpush.msra.mxu0 %v7898
  %8402 = vmatpush.msra.mxu0 %v7897
  %8403 = vmatpush.msra.mxu0 %v7896
  %8404 = vmatpush.msra.mxu0 %v7895
  %8405 = vmatpush.msra.mxu0 %v7894
  %8406 = vmatpush.msra.mxu0 %v7893
  %8407 = vmatpush.msra.mxu0 %v7892
  %8408 = vmatpush.msra.mxu0 %v7891
  %8409 = vmatpush.msra.mxu0 %v7890
  %8410 = vmatpush.msra.mxu0 %v7889
  %8411 = vmatpush.msra.mxu0 %v7888
  %8412 = vmatpush.msra.mxu0 %v7887
  %8413 = vmatpush.msra.mxu0 %v7886
  %8414 = vmatmul.f32.gmra.mxu0 %v7943
  %v8415 = vpop.f32.mrf.mxu0
  %v8416 = vadd.f32 %v8336, %v8415
  %8417 = vmatmul.f32.gmra.mxu0 %v7950
  %v8418 = vpop.f32.mrf.mxu0
  %v8419 = vadd.f32 %v8339, %v8418
  %8420 = vmatmul.f32.gmra.mxu0 %v7957
  %v8421 = vpop.f32.mrf.mxu0
  %v8422 = vadd.f32 %v8342, %v8421
  %8423 = vmatmul.f32.gmra.mxu0 %v7964
  %v8424 = vpop.f32.mrf.mxu0
  %v8425 = vadd.f32 %v8345, %v8424
  %8426 = vmatmul.f32.gmra.mxu0 %v7971
  %v8427 = vpop.f32.mrf.mxu0
  %v8428 = vadd.f32 %v8348, %v8427
  %8429 = vmatmul.f32.gmra.mxu0 %v7978
  %v8430 = vpop.f32.mrf.mxu0
  %v8431 = vadd.f32 %v8351, %v8430
  %8432 = vmatmul.f32.gmra.mxu0 %v7985
  %v8433 = vpop.f32.mrf.mxu0
  %v8434 = vadd.f32 %v8354, %v8433
  %8435 = vmatmul.f32.gmra.mxu0 %v7992
  %v8436 = vpop.f32.mrf.mxu0
  %v8437 = vadd.f32 %v8357, %v8436
  %8438 = vmatmul.f32.gmra.mxu0 %v7999
  %v8439 = vpop.f32.mrf.mxu0
  %v8440 = vadd.f32 %v8360, %v8439
  %8441 = vmatmul.f32.gmra.mxu0 %v8006
  %v8442 = vpop.f32.mrf.mxu0
  %v8443 = vadd.f32 %v8363, %v8442
  %8444 = vmatmul.f32.gmra.mxu0 %v8013
  %v8445 = vpop.f32.mrf.mxu0
  %v8446 = vadd.f32 %v8366, %v8445
  %8447 = vmatmul.f32.gmra.mxu0 %v8020
  %v8448 = vpop.f32.mrf.mxu0
  %v8449 = vadd.f32 %v8369, %v8448
  %8450 = vmatmul.f32.gmra.mxu0 %v8027
  %v8451 = vpop.f32.mrf.mxu0
  %v8452 = vadd.f32 %v8372, %v8451
  %8453 = vmatmul.f32.gmra.mxu0 %v8034
  %v8454 = vpop.f32.mrf.mxu0
  %v8455 = vadd.f32 %v8375, %v8454
  %8456 = vmatmul.f32.gmra.mxu0 %v8041
  %v8457 = vpop.f32.mrf.mxu0
  %v8458 = vadd.f32 %v8378, %v8457
  %8459 = vmatmul.f32.gmra.mxu0 %v8048
  %v8460 = vpop.f32.mrf.mxu0
  %v8461 = vadd.f32 %v8381, %v8460
  %8462 = vmatmul.f32.gmra.mxu0 %v8055
  %v8463 = vpop.f32.mrf.mxu0
  %v8464 = vadd.f32 %v8384, %v8463
  %8465 = vmatmul.f32.gmra.mxu0 %v8062
  %v8466 = vpop.f32.mrf.mxu0
  %v8467 = vadd.f32 %v8387, %v8466
  %8468 = vmatmul.f32.gmra.mxu0 %v8069
  %v8469 = vpop.f32.mrf.mxu0
  %v8470 = vadd.f32 %v8390, %v8469
  %8471 = vmatmul.f32.gmra.mxu0 %v8076
  %v8472 = vpop.f32.mrf.mxu0
  %v8473 = vadd.f32 %v8393, %v8472
  %8474 = vmatmul.f32.gmra.mxu0 %v8083
  %v8475 = vpop.f32.mrf.mxu0
  %v8476 = vadd.f32 %v8396, %v8475
  %8477 = vdwg.mxu0
  %8478 = vmatpush.msra.mxu0 %v7917
  %8479 = vmatpush.msra.mxu0 %v7916
  %8480 = vmatpush.msra.mxu0 %v7915
  %8481 = vmatpush.msra.mxu0 %v7914
  %8482 = vmatpush.msra.mxu0 %v7913
  %8483 = vmatpush.msra.mxu0 %v7912
  %8484 = vmatpush.msra.mxu0 %v7911
  %8485 = vmatpush.msra.mxu0 %v7910
  %8486 = vmatpush.msra.mxu0 %v7909
  %8487 = vmatpush.msra.mxu0 %v7908
  %8488 = vmatpush.msra.mxu0 %v7907
  %8489 = vmatpush.msra.mxu0 %v7906
  %8490 = vmatpush.msra.mxu0 %v7905
  %8491 = vmatpush.msra.mxu0 %v7904
  %8492 = vmatpush.msra.mxu0 %v7903
  %8493 = vmatpush.msra.mxu0 %v7902
  %8494 = vmatmul.f32.gmra.mxu0 %v7944
  %v8495 = vpop.f32.mrf.mxu0
  %v8496 = vadd.f32 %v8416, %v8495
  %8497 = vmatmul.f32.gmra.mxu0 %v7951
  %v8498 = vpop.f32.mrf.mxu0
  %v8499 = vadd.f32 %v8419, %v8498
  %8500 = vmatmul.f32.gmra.mxu0 %v7958
  %v8501 = vpop.f32.mrf.mxu0
  %v8502 = vadd.f32 %v8422, %v8501
  %8503 = vmatmul.f32.gmra.mxu0 %v7965
  %v8504 = vpop.f32.mrf.mxu0
  %v8505 = vadd.f32 %v8425, %v8504
  %8506 = vmatmul.f32.gmra.mxu0 %v7972
  %v8507 = vpop.f32.mrf.mxu0
  %v8508 = vadd.f32 %v8428, %v8507
  %8509 = vmatmul.f32.gmra.mxu0 %v7979
  %v8510 = vpop.f32.mrf.mxu0
  %v8511 = vadd.f32 %v8431, %v8510
  %8512 = vmatmul.f32.gmra.mxu0 %v7986
  %v8513 = vpop.f32.mrf.mxu0
  %v8514 = vadd.f32 %v8434, %v8513
  %8515 = vmatmul.f32.gmra.mxu0 %v7993
  %v8516 = vpop.f32.mrf.mxu0
  %v8517 = vadd.f32 %v8437, %v8516
  %8518 = vmatmul.f32.gmra.mxu0 %v8000
  %v8519 = vpop.f32.mrf.mxu0
  %v8520 = vadd.f32 %v8440, %v8519
  %8521 = vmatmul.f32.gmra.mxu0 %v8007
  %v8522 = vpop.f32.mrf.mxu0
  %v8523 = vadd.f32 %v8443, %v8522
  %8524 = vmatmul.f32.gmra.mxu0 %v8014
  %v8525 = vpop.f32.mrf.mxu0
  %v8526 = vadd.f32 %v8446, %v8525
  %8527 = vmatmul.f32.gmra.mxu0 %v8021
  %v8528 = vpop.f32.mrf.mxu0
  %v8529 = vadd.f32 %v8449, %v8528
  %8530 = vmatmul.f32.gmra.mxu0 %v8028
  %v8531 = vpop.f32.mrf.mxu0
  %v8532 = vadd.f32 %v8452, %v8531
  %8533 = vmatmul.f32.gmra.mxu0 %v8035
  %v8534 = vpop.f32.mrf.mxu0
  %v8535 = vadd.f32 %v8455, %v8534
  %8536 = vmatmul.f32.gmra.mxu0 %v8042
  %v8537 = vpop.f32.mrf.mxu0
  %v8538 = vadd.f32 %v8458, %v8537
  %8539 = vmatmul.f32.gmra.mxu0 %v8049
  %v8540 = vpop.f32.mrf.mxu0
  %v8541 = vadd.f32 %v8461, %v8540
  %8542 = vmatmul.f32.gmra.mxu0 %v8056
  %v8543 = vpop.f32.mrf.mxu0
  %v8544 = vadd.f32 %v8464, %v8543
  %8545 = vmatmul.f32.gmra.mxu0 %v8063
  %v8546 = vpop.f32.mrf.mxu0
  %v8547 = vadd.f32 %v8467, %v8546
  %8548 = vmatmul.f32.gmra.mxu0 %v8070
  %v8549 = vpop.f32.mrf.mxu0
  %v8550 = vadd.f32 %v8470, %v8549
  %8551 = vmatmul.f32.gmra.mxu0 %v8077
  %v8552 = vpop.f32.mrf.mxu0
  %v8553 = vadd.f32 %v8473, %v8552
  %8554 = vmatmul.f32.gmra.mxu0 %v8084
  %v8555 = vpop.f32.mrf.mxu0
  %v8556 = vadd.f32 %v8476, %v8555
  %8557 = vdwg.mxu0
  %8558 = vmatpush.msra.mxu0 %v7933
  %8559 = vmatpush.msra.mxu0 %v7932
  %8560 = vmatpush.msra.mxu0 %v7931
  %8561 = vmatpush.msra.mxu0 %v7930
  %8562 = vmatpush.msra.mxu0 %v7929
  %8563 = vmatpush.msra.mxu0 %v7928
  %8564 = vmatpush.msra.mxu0 %v7927
  %8565 = vmatpush.msra.mxu0 %v7926
  %8566 = vmatpush.msra.mxu0 %v7925
  %8567 = vmatpush.msra.mxu0 %v7924
  %8568 = vmatpush.msra.mxu0 %v7923
  %8569 = vmatpush.msra.mxu0 %v7922
  %8570 = vmatpush.msra.mxu0 %v7921
  %8571 = vmatpush.msra.mxu0 %v7920
  %8572 = vmatpush.msra.mxu0 %v7919
  %8573 = vmatpush.msra.mxu0 %v7918
  %8574 = vmatmul.f32.gmra.mxu0 %v7945
  %v8575 = vpop.f32.mrf.mxu0
  %v8576 = vadd.f32 %v8496, %v8575
  %8577 = vmatmul.f32.gmra.mxu0 %v7952
  %v8578 = vpop.f32.mrf.mxu0
  %v8579 = vadd.f32 %v8499, %v8578
  %8580 = vmatmul.f32.gmra.mxu0 %v7959
  %v8581 = vpop.f32.mrf.mxu0
  %v8582 = vadd.f32 %v8502, %v8581
  %8583 = vmatmul.f32.gmra.mxu0 %v7966
  %v8584 = vpop.f32.mrf.mxu0
  %v8585 = vadd.f32 %v8505, %v8584
  %8586 = vmatmul.f32.gmra.mxu0 %v7973
  %v8587 = vpop.f32.mrf.mxu0
  %v8588 = vadd.f32 %v8508, %v8587
  %8589 = vmatmul.f32.gmra.mxu0 %v7980
  %v8590 = vpop.f32.mrf.mxu0
  %v8591 = vadd.f32 %v8511, %v8590
  %8592 = vmatmul.f32.gmra.mxu0 %v7987
  %v8593 = vpop.f32.mrf.mxu0
  %v8594 = vadd.f32 %v8514, %v8593
  %8595 = vmatmul.f32.gmra.mxu0 %v7994
  %v8596 = vpop.f32.mrf.mxu0
  %v8597 = vadd.f32 %v8517, %v8596
  %8598 = vmatmul.f32.gmra.mxu0 %v8001
  %v8599 = vpop.f32.mrf.mxu0
  %v8600 = vadd.f32 %v8520, %v8599
  %8601 = vmatmul.f32.gmra.mxu0 %v8008
  %v8602 = vpop.f32.mrf.mxu0
  %v8603 = vadd.f32 %v8523, %v8602
  %8604 = vmatmul.f32.gmra.mxu0 %v8015
  %v8605 = vpop.f32.mrf.mxu0
  %v8606 = vadd.f32 %v8526, %v8605
  %8607 = vmatmul.f32.gmra.mxu0 %v8022
  %v8608 = vpop.f32.mrf.mxu0
  %v8609 = vadd.f32 %v8529, %v8608
  %8610 = vmatmul.f32.gmra.mxu0 %v8029
  %v8611 = vpop.f32.mrf.mxu0
  %v8612 = vadd.f32 %v8532, %v8611
  %8613 = vmatmul.f32.gmra.mxu0 %v8036
  %v8614 = vpop.f32.mrf.mxu0
  %v8615 = vadd.f32 %v8535, %v8614
  %8616 = vmatmul.f32.gmra.mxu0 %v8043
  %v8617 = vpop.f32.mrf.mxu0
  %v8618 = vadd.f32 %v8538, %v8617
  %8619 = vmatmul.f32.gmra.mxu0 %v8050
  %v8620 = vpop.f32.mrf.mxu0
  %v8621 = vadd.f32 %v8541, %v8620
  %8622 = vmatmul.f32.gmra.mxu0 %v8057
  %v8623 = vpop.f32.mrf.mxu0
  %v8624 = vadd.f32 %v8544, %v8623
  %8625 = vmatmul.f32.gmra.mxu0 %v8064
  %v8626 = vpop.f32.mrf.mxu0
  %v8627 = vadd.f32 %v8547, %v8626
  %8628 = vmatmul.f32.gmra.mxu0 %v8071
  %v8629 = vpop.f32.mrf.mxu0
  %v8630 = vadd.f32 %v8550, %v8629
  %8631 = vmatmul.f32.gmra.mxu0 %v8078
  %v8632 = vpop.f32.mrf.mxu0
  %v8633 = vadd.f32 %v8553, %v8632
  %8634 = vmatmul.f32.gmra.mxu0 %v8085
  %v8635 = vpop.f32.mrf.mxu0
  %v8636 = vadd.f32 %v8556, %v8635
  %8637 = vdwg.mxu0
  %8638 = vmatpush.msra.mxu0 0.0
  %8639 = vmatpush.msra.mxu0 0.0
  %8640 = vmatpush.msra.mxu0 0.0
  %8641 = vmatpush.msra.mxu0 0.0
  %8642 = vmatpush.msra.mxu0 0.0
  %8643 = vmatpush.msra.mxu0 0.0
  %8644 = vmatpush.msra.mxu0 0.0
  %8645 = vmatpush.msra.mxu0 0.0
  %8646 = vmatpush.msra.mxu0 0.0
  %8647 = vmatpush.msra.mxu0 0.0
  %8648 = vmatpush.msra.mxu0 %v8156
  %8649 = vmatpush.msra.mxu0 %v7938
  %8650 = vmatpush.msra.mxu0 %v7937
  %8651 = vmatpush.msra.mxu0 %v7936
  %8652 = vmatpush.msra.mxu0 %v7935
  %8653 = vmatpush.msra.mxu0 %v7934
  %8654 = vmatmul.f32.gmra.mxu0 %v8093
  %v8655 = vpop.f32.mrf.mxu0
  %v8656 = vadd.f32 %v8576, %v8655
  %8657 = vmatmul.f32.gmra.mxu0 %v8096
  %v8658 = vpop.f32.mrf.mxu0
  %v8659 = vadd.f32 %v8579, %v8658
  %8660 = vmatmul.f32.gmra.mxu0 %v8099
  %v8661 = vpop.f32.mrf.mxu0
  %v8662 = vadd.f32 %v8582, %v8661
  %8663 = vmatmul.f32.gmra.mxu0 %v8102
  %v8664 = vpop.f32.mrf.mxu0
  %v8665 = vadd.f32 %v8585, %v8664
  %8666 = vmatmul.f32.gmra.mxu0 %v8105
  %v8667 = vpop.f32.mrf.mxu0
  %v8668 = vadd.f32 %v8588, %v8667
  %8669 = vmatmul.f32.gmra.mxu0 %v8108
  %v8670 = vpop.f32.mrf.mxu0
  %v8671 = vadd.f32 %v8591, %v8670
  %8672 = vmatmul.f32.gmra.mxu0 %v8111
  %v8673 = vpop.f32.mrf.mxu0
  %v8674 = vadd.f32 %v8594, %v8673
  %8675 = vmatmul.f32.gmra.mxu0 %v8114
  %v8676 = vpop.f32.mrf.mxu0
  %v8677 = vadd.f32 %v8597, %v8676
  %8678 = vmatmul.f32.gmra.mxu0 %v8117
  %v8679 = vpop.f32.mrf.mxu0
  %v8680 = vadd.f32 %v8600, %v8679
  %8681 = vmatmul.f32.gmra.mxu0 %v8120
  %v8682 = vpop.f32.mrf.mxu0
  %v8683 = vadd.f32 %v8603, %v8682
  %8684 = vmatmul.f32.gmra.mxu0 %v8123
  %v8685 = vpop.f32.mrf.mxu0
  %v8686 = vadd.f32 %v8606, %v8685
  %8687 = vmatmul.f32.gmra.mxu0 %v8126
  %v8688 = vpop.f32.mrf.mxu0
  %v8689 = vadd.f32 %v8609, %v8688
  %8690 = vmatmul.f32.gmra.mxu0 %v8129
  %v8691 = vpop.f32.mrf.mxu0
  %v8692 = vadd.f32 %v8612, %v8691
  %8693 = vmatmul.f32.gmra.mxu0 %v8132
  %v8694 = vpop.f32.mrf.mxu0
  %v8695 = vadd.f32 %v8615, %v8694
  %8696 = vmatmul.f32.gmra.mxu0 %v8135
  %v8697 = vpop.f32.mrf.mxu0
  %v8698 = vadd.f32 %v8618, %v8697
  %8699 = vmatmul.f32.gmra.mxu0 %v8138
  %v8700 = vpop.f32.mrf.mxu0
  %v8701 = vadd.f32 %v8621, %v8700
  %8702 = vmatmul.f32.gmra.mxu0 %v8141
  %v8703 = vpop.f32.mrf.mxu0
  %v8704 = vadd.f32 %v8624, %v8703
  %8705 = vmatmul.f32.gmra.mxu0 %v8144
  %v8706 = vpop.f32.mrf.mxu0
  %v8707 = vadd.f32 %v8627, %v8706
  %8708 = vmatmul.f32.gmra.mxu0 %v8147
  %v8709 = vpop.f32.mrf.mxu0
  %v8710 = vadd.f32 %v8630, %v8709
  %8711 = vmatmul.f32.gmra.mxu0 %v8150
  %v8712 = vpop.f32.mrf.mxu0
  %v8713 = vadd.f32 %v8633, %v8712
  %8714 = vmatmul.f32.gmra.mxu0 %v8153
  %v8715 = vpop.f32.mrf.mxu0
  %v8716 = vadd.f32 %v8636, %v8715
  %8717 = vdwg.mxu0
  %v8718 = vmax.f32 %v8656, 0.0
  %v8719 = vmax.f32 %v8659, 0.0
  %v8720 = vmax.f32 %v8662, 0.0
  %v8721 = vmax.f32 %v8665, 0.0
  %v8722 = vmax.f32 %v8668, 0.0
  %v8723 = vmax.f32 %v8671, 0.0
  %v8724 = vmax.f32 %v8674, 0.0
  %v8725 = vmax.f32 %v8677, 0.0
  %v8726 = vmax.f32 %v8680, 0.0
  %v8727 = vmax.f32 %v8683, 0.0
  %v8728 = vmax.f32 %v8686, 0.0
  %v8729 = vmax.f32 %v8689, 0.0
  %v8730 = vmax.f32 %v8692, 0.0
  %v8731 = vmax.f32 %v8695, 0.0
  %v8732 = vmax.f32 %v8698, 0.0
  %v8733 = vmax.f32 %v8701, 0.0
  %v8734 = vmax.f32 %v8704, 0.0
  %v8735 = vmax.f32 %v8707, 0.0
  %v8736 = vmax.f32 %v8710, 0.0
  %v8737 = vmax.f32 %v8713, 0.0
  %v8738 = vmax.f32 %v8716, 0.0
  %v8740 = vsel %vm949, %v8718, 0
  %v8743 = vsel %vm949, %v8719, 0
  %v8746 = vsel %vm949, %v8720, 0
  %v8749 = vsel %vm949, %v8721, 0
  %v8752 = vsel %vm949, %v8722, 0
  %v8755 = vsel %vm949, %v8723, 0
  %v8758 = vsel %vm949, %v8724, 0
  %v8761 = vsel %vm949, %v8725, 0
  %v8764 = vsel %vm949, %v8726, 0
  %v8767 = vsel %vm949, %v8727, 0
  %v8770 = vsel %vm949, %v8728, 0
  %v8773 = vsel %vm949, %v8729, 0
  %v8776 = vsel %vm949, %v8730, 0
  %v8779 = vsel %vm949, %v8731, 0
  %v8782 = vsel %vm949, %v8732, 0
  %v8785 = vsel %vm949, %v8733, 0
  %v8788 = vsel %vm949, %v8734, 0
  %v8791 = vsel %vm949, %v8735, 0
  %v8794 = vsel %vm949, %v8736, 0
  %v8797 = vsel %vm949, %v8737, 0
  %v8800 = vsel %vm949, %v8738, 0
  %8802 = vmatpush.msra.mxu0 0.0
  %8803 = vmatpush.msra.mxu0 0.0
  %8804 = vmatpush.msra.mxu0 0.0
  %8805 = vmatpush.msra.mxu0 0.0
  %8806 = vmatpush.msra.mxu0 0.0
  %8807 = vmatpush.msra.mxu0 0.0
  %8808 = vmatpush.msra.mxu0 0.0
  %8809 = vmatpush.msra.mxu0 0.0
  %8810 = vmatpush.msra.mxu0 0.0
  %8811 = vmatpush.msra.mxu0 0.0
  %8812 = vmatpush.msra.mxu0 0.0
  %8813 = vmatpush.msra.mxu0 0.0
  %8814 = vmatpush.msra.mxu0 %v948
  %8815 = vmatpush.msra.mxu0 %v947
  %8816 = vmatpush.msra.mxu0 %v946
  %8817 = vmatpush.msra.mxu0 %v945
  %8818 = vmatmul.f32.gmra.mxu0 %v8740
  %v8819 = vpop.f32.mrf.mxu0
  %v8820 = vadd.f32 0.0, %v8819
  %8821 = vmatmul.f32.gmra.mxu0 %v8743
  %v8822 = vpop.f32.mrf.mxu0
  %v8823 = vadd.f32 0.0, %v8822
  %8824 = vmatmul.f32.gmra.mxu0 %v8746
  %v8825 = vpop.f32.mrf.mxu0
  %v8826 = vadd.f32 0.0, %v8825
  %8827 = vmatmul.f32.gmra.mxu0 %v8749
  %v8828 = vpop.f32.mrf.mxu0
  %v8829 = vadd.f32 0.0, %v8828
  %8830 = vmatmul.f32.gmra.mxu0 %v8752
  %v8831 = vpop.f32.mrf.mxu0
  %v8832 = vadd.f32 0.0, %v8831
  %8833 = vmatmul.f32.gmra.mxu0 %v8755
  %v8834 = vpop.f32.mrf.mxu0
  %v8835 = vadd.f32 0.0, %v8834
  %8836 = vmatmul.f32.gmra.mxu0 %v8758
  %v8837 = vpop.f32.mrf.mxu0
  %v8838 = vadd.f32 0.0, %v8837
  %8839 = vmatmul.f32.gmra.mxu0 %v8761
  %v8840 = vpop.f32.mrf.mxu0
  %v8841 = vadd.f32 0.0, %v8840
  %8842 = vmatmul.f32.gmra.mxu0 %v8764
  %v8843 = vpop.f32.mrf.mxu0
  %v8844 = vadd.f32 0.0, %v8843
  %8845 = vmatmul.f32.gmra.mxu0 %v8767
  %v8846 = vpop.f32.mrf.mxu0
  %v8847 = vadd.f32 0.0, %v8846
  %8848 = vmatmul.f32.gmra.mxu0 %v8770
  %v8849 = vpop.f32.mrf.mxu0
  %v8850 = vadd.f32 0.0, %v8849
  %8851 = vmatmul.f32.gmra.mxu0 %v8773
  %v8852 = vpop.f32.mrf.mxu0
  %v8853 = vadd.f32 0.0, %v8852
  %8854 = vmatmul.f32.gmra.mxu0 %v8776
  %v8855 = vpop.f32.mrf.mxu0
  %v8856 = vadd.f32 0.0, %v8855
  %8857 = vmatmul.f32.gmra.mxu0 %v8779
  %v8858 = vpop.f32.mrf.mxu0
  %v8859 = vadd.f32 0.0, %v8858
  %8860 = vmatmul.f32.gmra.mxu0 %v8782
  %v8861 = vpop.f32.mrf.mxu0
  %v8862 = vadd.f32 0.0, %v8861
  %8863 = vmatmul.f32.gmra.mxu0 %v8785
  %v8864 = vpop.f32.mrf.mxu0
  %v8865 = vadd.f32 0.0, %v8864
  %8866 = vmatmul.f32.gmra.mxu0 %v8788
  %v8867 = vpop.f32.mrf.mxu0
  %v8868 = vadd.f32 0.0, %v8867
  %8869 = vmatmul.f32.gmra.mxu0 %v8791
  %v8870 = vpop.f32.mrf.mxu0
  %v8871 = vadd.f32 0.0, %v8870
  %8872 = vmatmul.f32.gmra.mxu0 %v8794
  %v8873 = vpop.f32.mrf.mxu0
  %v8874 = vadd.f32 0.0, %v8873
  %8875 = vmatmul.f32.gmra.mxu0 %v8797
  %v8876 = vpop.f32.mrf.mxu0
  %v8877 = vadd.f32 0.0, %v8876
  %8878 = vmatmul.f32.gmra.mxu0 %v8800
  %v8879 = vpop.f32.mrf.mxu0
  %8880 = vdwg.mxu0
  %8881 = vmatpush.msra.mxu0 0.0
  %8882 = vmatpush.msra.mxu0 0.0
  %8883 = vmatpush.msra.mxu0 0.0
  %8884 = vmatpush.msra.mxu0 0.0
  %8885 = vmatpush.msra.mxu0 0.0
  %8886 = vmatpush.msra.mxu0 0.0
  %8887 = vmatpush.msra.mxu0 0.0
  %8888 = vmatpush.msra.mxu0 0.0
  %8889 = vmatpush.msra.mxu0 0.0
  %8890 = vmatpush.msra.mxu0 0.0
  %8891 = vmatpush.msra.mxu0 0.0
  %8892 = vmatpush.msra.mxu0 0.0
  %8893 = vmatpush.msra.mxu0 %v1598
  %8894 = vmatpush.msra.mxu0 %v1597
  %8895 = vmatpush.msra.mxu0 %v1596
  %8896 = vmatpush.msra.mxu0 %v1595
  %8897 = vmatmul.f32.gmra.mxu0 %v8740
  %v8898 = vpop.f32.mrf.mxu0
  %v8899 = vadd.f32 0.0, %v8898
  %8900 = vmatmul.f32.gmra.mxu0 %v8743
  %v8901 = vpop.f32.mrf.mxu0
  %v8902 = vadd.f32 0.0, %v8901
  %8903 = vmatmul.f32.gmra.mxu0 %v8746
  %v8904 = vpop.f32.mrf.mxu0
  %v8905 = vadd.f32 0.0, %v8904
  %8906 = vmatmul.f32.gmra.mxu0 %v8749
  %v8907 = vpop.f32.mrf.mxu0
  %v8908 = vadd.f32 0.0, %v8907
  %8909 = vmatmul.f32.gmra.mxu0 %v8752
  %v8910 = vpop.f32.mrf.mxu0
  %v8911 = vadd.f32 0.0, %v8910
  %8912 = vmatmul.f32.gmra.mxu0 %v8755
  %v8913 = vpop.f32.mrf.mxu0
  %v8914 = vadd.f32 0.0, %v8913
  %8915 = vmatmul.f32.gmra.mxu0 %v8758
  %v8916 = vpop.f32.mrf.mxu0
  %v8917 = vadd.f32 0.0, %v8916
  %8918 = vmatmul.f32.gmra.mxu0 %v8761
  %v8919 = vpop.f32.mrf.mxu0
  %v8920 = vadd.f32 0.0, %v8919
  %8921 = vmatmul.f32.gmra.mxu0 %v8764
  %v8922 = vpop.f32.mrf.mxu0
  %v8923 = vadd.f32 0.0, %v8922
  %8924 = vmatmul.f32.gmra.mxu0 %v8767
  %v8925 = vpop.f32.mrf.mxu0
  %v8926 = vadd.f32 0.0, %v8925
  %8927 = vmatmul.f32.gmra.mxu0 %v8770
  %v8928 = vpop.f32.mrf.mxu0
  %v8929 = vadd.f32 0.0, %v8928
  %8930 = vmatmul.f32.gmra.mxu0 %v8773
  %v8931 = vpop.f32.mrf.mxu0
  %v8932 = vadd.f32 0.0, %v8931
  %8933 = vmatmul.f32.gmra.mxu0 %v8776
  %v8934 = vpop.f32.mrf.mxu0
  %v8935 = vadd.f32 0.0, %v8934
  %8936 = vmatmul.f32.gmra.mxu0 %v8779
  %v8937 = vpop.f32.mrf.mxu0
  %v8938 = vadd.f32 0.0, %v8937
  %8939 = vmatmul.f32.gmra.mxu0 %v8782
  %v8940 = vpop.f32.mrf.mxu0
  %v8941 = vadd.f32 0.0, %v8940
  %8942 = vmatmul.f32.gmra.mxu0 %v8785
  %v8943 = vpop.f32.mrf.mxu0
  %v8944 = vadd.f32 0.0, %v8943
  %8945 = vmatmul.f32.gmra.mxu0 %v8788
  %v8946 = vpop.f32.mrf.mxu0
  %v8947 = vadd.f32 0.0, %v8946
  %8948 = vmatmul.f32.gmra.mxu0 %v8791
  %v8949 = vpop.f32.mrf.mxu0
  %v8950 = vadd.f32 0.0, %v8949
  %8951 = vmatmul.f32.gmra.mxu0 %v8794
  %v8952 = vpop.f32.mrf.mxu0
  %v8953 = vadd.f32 0.0, %v8952
  %8954 = vmatmul.f32.gmra.mxu0 %v8797
  %v8955 = vpop.f32.mrf.mxu0
  %v8956 = vadd.f32 0.0, %v8955
  %8957 = vmatmul.f32.gmra.mxu0 %v8800
  %v8958 = vpop.f32.mrf.mxu0
  %8959 = vdwg.mxu0
  %v8980 = vrot.slane %v8899, 1
  %v8981 = vrot.slane %v8902, 1
  %v8982 = vsel %vm2030, %v8980, %v8981
  %v8983 = vrot.slane %v8905, 1
  %v8984 = vsel %vm2030, %v8981, %v8983
  %v8985 = vrot.slane %v8908, 1
  %v8986 = vsel %vm2030, %v8983, %v8985
  %v8987 = vrot.slane %v8911, 1
  %v8988 = vsel %vm2030, %v8985, %v8987
  %v8989 = vrot.slane %v8914, 1
  %v8990 = vsel %vm2030, %v8987, %v8989
  %v8991 = vrot.slane %v8917, 1
  %v8992 = vsel %vm2030, %v8989, %v8991
  %v8993 = vrot.slane %v8920, 1
  %v8994 = vsel %vm2030, %v8991, %v8993
  %v8995 = vrot.slane %v8923, 1
  %v8996 = vsel %vm2030, %v8993, %v8995
  %v8997 = vrot.slane %v8926, 1
  %v8998 = vsel %vm2030, %v8995, %v8997
  %v8999 = vrot.slane %v8929, 1
  %v9000 = vsel %vm2030, %v8997, %v8999
  %v9001 = vrot.slane %v8932, 1
  %v9002 = vsel %vm2030, %v8999, %v9001
  %v9003 = vrot.slane %v8935, 1
  %v9004 = vsel %vm2030, %v9001, %v9003
  %v9005 = vrot.slane %v8938, 1
  %v9006 = vsel %vm2030, %v9003, %v9005
  %v9007 = vrot.slane %v8941, 1
  %v9008 = vsel %vm2030, %v9005, %v9007
  %v9009 = vrot.slane %v8944, 1
  %v9010 = vsel %vm2030, %v9007, %v9009
  %v9011 = vrot.slane %v8947, 1
  %v9012 = vsel %vm2030, %v9009, %v9011
  %v9013 = vrot.slane %v8950, 1
  %v9014 = vsel %vm2030, %v9011, %v9013
  %v9015 = vrot.slane %v8953, 1
  %v9016 = vsel %vm2030, %v9013, %v9015
  %v9017 = vrot.slane %v8956, 1
  %v9018 = vsel %vm2030, %v9015, %v9017
  %v9039 = vadd.f32 %v8820, %v8982
  %v9040 = vadd.f32 %v8823, %v8984
  %v9041 = vadd.f32 %v8826, %v8986
  %v9042 = vadd.f32 %v8829, %v8988
  %v9043 = vadd.f32 %v8832, %v8990
  %v9044 = vadd.f32 %v8835, %v8992
  %v9045 = vadd.f32 %v8838, %v8994
  %v9046 = vadd.f32 %v8841, %v8996
  %v9047 = vadd.f32 %v8844, %v8998
  %v9048 = vadd.f32 %v8847, %v9000
  %v9049 = vadd.f32 %v8850, %v9002
  %v9050 = vadd.f32 %v8853, %v9004
  %v9051 = vadd.f32 %v8856, %v9006
  %v9052 = vadd.f32 %v8859, %v9008
  %v9053 = vadd.f32 %v8862, %v9010
  %v9054 = vadd.f32 %v8865, %v9012
  %v9055 = vadd.f32 %v8868, %v9014
  %v9056 = vadd.f32 %v8871, %v9016
  %v9057 = vadd.f32 %v8874, %v9018
  %v9058 = vadd.f32 %v8877, %v9017
  %9059 = vmatpush.msra.mxu0 0.0
  %9060 = vmatpush.msra.mxu0 0.0
  %9061 = vmatpush.msra.mxu0 0.0
  %9062 = vmatpush.msra.mxu0 0.0
  %9063 = vmatpush.msra.mxu0 0.0
  %9064 = vmatpush.msra.mxu0 0.0
  %9065 = vmatpush.msra.mxu0 0.0
  %9066 = vmatpush.msra.mxu0 0.0
  %9067 = vmatpush.msra.mxu0 0.0
  %9068 = vmatpush.msra.mxu0 0.0
  %9069 = vmatpush.msra.mxu0 0.0
  %9070 = vmatpush.msra.mxu0 0.0
  %9071 = vmatpush.msra.mxu0 %v2442
  %9072 = vmatpush.msra.mxu0 %v2441
  %9073 = vmatpush.msra.mxu0 %v2440
  %9074 = vmatpush.msra.mxu0 %v2439
  %9075 = vmatmul.f32.gmra.mxu0 %v8740
  %v9076 = vpop.f32.mrf.mxu0
  %v9077 = vadd.f32 0.0, %v9076
  %9078 = vmatmul.f32.gmra.mxu0 %v8743
  %v9079 = vpop.f32.mrf.mxu0
  %v9080 = vadd.f32 0.0, %v9079
  %9081 = vmatmul.f32.gmra.mxu0 %v8746
  %v9082 = vpop.f32.mrf.mxu0
  %v9083 = vadd.f32 0.0, %v9082
  %9084 = vmatmul.f32.gmra.mxu0 %v8749
  %v9085 = vpop.f32.mrf.mxu0
  %v9086 = vadd.f32 0.0, %v9085
  %9087 = vmatmul.f32.gmra.mxu0 %v8752
  %v9088 = vpop.f32.mrf.mxu0
  %v9089 = vadd.f32 0.0, %v9088
  %9090 = vmatmul.f32.gmra.mxu0 %v8755
  %v9091 = vpop.f32.mrf.mxu0
  %v9092 = vadd.f32 0.0, %v9091
  %9093 = vmatmul.f32.gmra.mxu0 %v8758
  %v9094 = vpop.f32.mrf.mxu0
  %v9095 = vadd.f32 0.0, %v9094
  %9096 = vmatmul.f32.gmra.mxu0 %v8761
  %v9097 = vpop.f32.mrf.mxu0
  %v9098 = vadd.f32 0.0, %v9097
  %9099 = vmatmul.f32.gmra.mxu0 %v8764
  %v9100 = vpop.f32.mrf.mxu0
  %v9101 = vadd.f32 0.0, %v9100
  %9102 = vmatmul.f32.gmra.mxu0 %v8767
  %v9103 = vpop.f32.mrf.mxu0
  %v9104 = vadd.f32 0.0, %v9103
  %9105 = vmatmul.f32.gmra.mxu0 %v8770
  %v9106 = vpop.f32.mrf.mxu0
  %v9107 = vadd.f32 0.0, %v9106
  %9108 = vmatmul.f32.gmra.mxu0 %v8773
  %v9109 = vpop.f32.mrf.mxu0
  %v9110 = vadd.f32 0.0, %v9109
  %9111 = vmatmul.f32.gmra.mxu0 %v8776
  %v9112 = vpop.f32.mrf.mxu0
  %v9113 = vadd.f32 0.0, %v9112
  %9114 = vmatmul.f32.gmra.mxu0 %v8779
  %v9115 = vpop.f32.mrf.mxu0
  %v9116 = vadd.f32 0.0, %v9115
  %9117 = vmatmul.f32.gmra.mxu0 %v8782
  %v9118 = vpop.f32.mrf.mxu0
  %v9119 = vadd.f32 0.0, %v9118
  %9120 = vmatmul.f32.gmra.mxu0 %v8785
  %v9121 = vpop.f32.mrf.mxu0
  %v9122 = vadd.f32 0.0, %v9121
  %9123 = vmatmul.f32.gmra.mxu0 %v8788
  %v9124 = vpop.f32.mrf.mxu0
  %v9125 = vadd.f32 0.0, %v9124
  %9126 = vmatmul.f32.gmra.mxu0 %v8791
  %v9127 = vpop.f32.mrf.mxu0
  %v9128 = vadd.f32 0.0, %v9127
  %9129 = vmatmul.f32.gmra.mxu0 %v8794
  %v9130 = vpop.f32.mrf.mxu0
  %v9131 = vadd.f32 0.0, %v9130
  %9132 = vmatmul.f32.gmra.mxu0 %v8797
  %v9133 = vpop.f32.mrf.mxu0
  %v9134 = vadd.f32 0.0, %v9133
  %9135 = vmatmul.f32.gmra.mxu0 %v8800
  %v9136 = vpop.f32.mrf.mxu0
  %9137 = vdwg.mxu0
  %v9158 = vrot.slane %v9077, 2
  %v9159 = vrot.slane %v9080, 2
  %v9160 = vsel %vm2874, %v9158, %v9159
  %v9161 = vrot.slane %v9083, 2
  %v9162 = vsel %vm2874, %v9159, %v9161
  %v9163 = vrot.slane %v9086, 2
  %v9164 = vsel %vm2874, %v9161, %v9163
  %v9165 = vrot.slane %v9089, 2
  %v9166 = vsel %vm2874, %v9163, %v9165
  %v9167 = vrot.slane %v9092, 2
  %v9168 = vsel %vm2874, %v9165, %v9167
  %v9169 = vrot.slane %v9095, 2
  %v9170 = vsel %vm2874, %v9167, %v9169
  %v9171 = vrot.slane %v9098, 2
  %v9172 = vsel %vm2874, %v9169, %v9171
  %v9173 = vrot.slane %v9101, 2
  %v9174 = vsel %vm2874, %v9171, %v9173
  %v9175 = vrot.slane %v9104, 2
  %v9176 = vsel %vm2874, %v9173, %v9175
  %v9177 = vrot.slane %v9107, 2
  %v9178 = vsel %vm2874, %v9175, %v9177
  %v9179 = vrot.slane %v9110, 2
  %v9180 = vsel %vm2874, %v9177, %v9179
  %v9181 = vrot.slane %v9113, 2
  %v9182 = vsel %vm2874, %v9179, %v9181
  %v9183 = vrot.slane %v9116, 2
  %v9184 = vsel %vm2874, %v9181, %v9183
  %v9185 = vrot.slane %v9119, 2
  %v9186 = vsel %vm2874, %v9183, %v9185
  %v9187 = vrot.slane %v9122, 2
  %v9188 = vsel %vm2874, %v9185, %v9187
  %v9189 = vrot.slane %v9125, 2
  %v9190 = vsel %vm2874, %v9187, %v9189
  %v9191 = vrot.slane %v9128, 2
  %v9192 = vsel %vm2874, %v9189, %v9191
  %v9193 = vrot.slane %v9131, 2
  %v9194 = vsel %vm2874, %v9191, %v9193
  %v9195 = vrot.slane %v9134, 2
  %v9196 = vsel %vm2874, %v9193, %v9195
  %v9217 = vadd.f32 %v9039, %v9160
  %v9218 = vadd.f32 %v9040, %v9162
  %v9219 = vadd.f32 %v9041, %v9164
  %v9220 = vadd.f32 %v9042, %v9166
  %v9221 = vadd.f32 %v9043, %v9168
  %v9222 = vadd.f32 %v9044, %v9170
  %v9223 = vadd.f32 %v9045, %v9172
  %v9224 = vadd.f32 %v9046, %v9174
  %v9225 = vadd.f32 %v9047, %v9176
  %v9226 = vadd.f32 %v9048, %v9178
  %v9227 = vadd.f32 %v9049, %v9180
  %v9228 = vadd.f32 %v9050, %v9182
  %v9229 = vadd.f32 %v9051, %v9184
  %v9230 = vadd.f32 %v9052, %v9186
  %v9231 = vadd.f32 %v9053, %v9188
  %v9232 = vadd.f32 %v9054, %v9190
  %v9233 = vadd.f32 %v9055, %v9192
  %v9234 = vadd.f32 %v9056, %v9194
  %v9235 = vadd.f32 %v9057, %v9196
  %v9236 = vadd.f32 %v9058, %v9195
  %9237 = vmatpush.msra.mxu0 0.0
  %9238 = vmatpush.msra.mxu0 0.0
  %9239 = vmatpush.msra.mxu0 0.0
  %9240 = vmatpush.msra.mxu0 0.0
  %9241 = vmatpush.msra.mxu0 0.0
  %9242 = vmatpush.msra.mxu0 0.0
  %9243 = vmatpush.msra.mxu0 0.0
  %9244 = vmatpush.msra.mxu0 0.0
  %9245 = vmatpush.msra.mxu0 0.0
  %9246 = vmatpush.msra.mxu0 0.0
  %9247 = vmatpush.msra.mxu0 0.0
  %9248 = vmatpush.msra.mxu0 0.0
  %9249 = vmatpush.msra.mxu0 %v3286
  %9250 = vmatpush.msra.mxu0 %v3285
  %9251 = vmatpush.msra.mxu0 %v3284
  %9252 = vmatpush.msra.mxu0 %v3283
  %9253 = vmatmul.f32.gmra.mxu0 %v8740
  %v9254 = vpop.f32.mrf.mxu0
  %v9255 = vadd.f32 0.0, %v9254
  %9256 = vmatmul.f32.gmra.mxu0 %v8743
  %v9257 = vpop.f32.mrf.mxu0
  %v9258 = vadd.f32 0.0, %v9257
  %9259 = vmatmul.f32.gmra.mxu0 %v8746
  %v9260 = vpop.f32.mrf.mxu0
  %v9261 = vadd.f32 0.0, %v9260
  %9262 = vmatmul.f32.gmra.mxu0 %v8749
  %v9263 = vpop.f32.mrf.mxu0
  %v9264 = vadd.f32 0.0, %v9263
  %9265 = vmatmul.f32.gmra.mxu0 %v8752
  %v9266 = vpop.f32.mrf.mxu0
  %v9267 = vadd.f32 0.0, %v9266
  %9268 = vmatmul.f32.gmra.mxu0 %v8755
  %v9269 = vpop.f32.mrf.mxu0
  %v9270 = vadd.f32 0.0, %v9269
  %9271 = vmatmul.f32.gmra.mxu0 %v8758
  %v9272 = vpop.f32.mrf.mxu0
  %v9273 = vadd.f32 0.0, %v9272
  %9274 = vmatmul.f32.gmra.mxu0 %v8761
  %v9275 = vpop.f32.mrf.mxu0
  %v9276 = vadd.f32 0.0, %v9275
  %9277 = vmatmul.f32.gmra.mxu0 %v8764
  %v9278 = vpop.f32.mrf.mxu0
  %v9279 = vadd.f32 0.0, %v9278
  %9280 = vmatmul.f32.gmra.mxu0 %v8767
  %v9281 = vpop.f32.mrf.mxu0
  %v9282 = vadd.f32 0.0, %v9281
  %9283 = vmatmul.f32.gmra.mxu0 %v8770
  %v9284 = vpop.f32.mrf.mxu0
  %v9285 = vadd.f32 0.0, %v9284
  %9286 = vmatmul.f32.gmra.mxu0 %v8773
  %v9287 = vpop.f32.mrf.mxu0
  %v9288 = vadd.f32 0.0, %v9287
  %9289 = vmatmul.f32.gmra.mxu0 %v8776
  %v9290 = vpop.f32.mrf.mxu0
  %v9291 = vadd.f32 0.0, %v9290
  %9292 = vmatmul.f32.gmra.mxu0 %v8779
  %v9293 = vpop.f32.mrf.mxu0
  %v9294 = vadd.f32 0.0, %v9293
  %9295 = vmatmul.f32.gmra.mxu0 %v8782
  %v9296 = vpop.f32.mrf.mxu0
  %v9297 = vadd.f32 0.0, %v9296
  %9298 = vmatmul.f32.gmra.mxu0 %v8785
  %v9299 = vpop.f32.mrf.mxu0
  %v9300 = vadd.f32 0.0, %v9299
  %9301 = vmatmul.f32.gmra.mxu0 %v8788
  %v9302 = vpop.f32.mrf.mxu0
  %v9303 = vadd.f32 0.0, %v9302
  %9304 = vmatmul.f32.gmra.mxu0 %v8791
  %v9305 = vpop.f32.mrf.mxu0
  %v9306 = vadd.f32 0.0, %v9305
  %9307 = vmatmul.f32.gmra.mxu0 %v8794
  %v9308 = vpop.f32.mrf.mxu0
  %v9309 = vadd.f32 0.0, %v9308
  %9310 = vmatmul.f32.gmra.mxu0 %v8797
  %v9311 = vpop.f32.mrf.mxu0
  %v9312 = vadd.f32 0.0, %v9311
  %9313 = vmatmul.f32.gmra.mxu0 %v8800
  %v9314 = vpop.f32.mrf.mxu0
  %9315 = vdwg.mxu0
  %v9336 = vrot.slane %v9255, 6
  %v9337 = vrot.slane %v9258, 6
  %v9338 = vsel %vm3718, %v9336, %v9337
  %v9339 = vrot.slane %v9261, 6
  %v9340 = vsel %vm3718, %v9337, %v9339
  %v9341 = vrot.slane %v9264, 6
  %v9342 = vsel %vm3718, %v9339, %v9341
  %v9343 = vrot.slane %v9267, 6
  %v9344 = vsel %vm3718, %v9341, %v9343
  %v9345 = vrot.slane %v9270, 6
  %v9346 = vsel %vm3718, %v9343, %v9345
  %v9347 = vrot.slane %v9273, 6
  %v9348 = vsel %vm3718, %v9345, %v9347
  %v9349 = vrot.slane %v9276, 6
  %v9350 = vsel %vm3718, %v9347, %v9349
  %v9351 = vrot.slane %v9279, 6
  %v9352 = vsel %vm3718, %v9349, %v9351
  %v9353 = vrot.slane %v9282, 6
  %v9354 = vsel %vm3718, %v9351, %v9353
  %v9355 = vrot.slane %v9285, 6
  %v9356 = vsel %vm3718, %v9353, %v9355
  %v9357 = vrot.slane %v9288, 6
  %v9358 = vsel %vm3718, %v9355, %v9357
  %v9359 = vrot.slane %v9291, 6
  %v9360 = vsel %vm3718, %v9357, %v9359
  %v9361 = vrot.slane %v9294, 6
  %v9362 = vsel %vm3718, %v9359, %v9361
  %v9363 = vrot.slane %v9297, 6
  %v9364 = vsel %vm3718, %v9361, %v9363
  %v9365 = vrot.slane %v9300, 6
  %v9366 = vsel %vm3718, %v9363, %v9365
  %v9367 = vrot.slane %v9303, 6
  %v9368 = vsel %vm3718, %v9365, %v9367
  %v9369 = vrot.slane %v9306, 6
  %v9370 = vsel %vm3718, %v9367, %v9369
  %v9371 = vrot.slane %v9309, 6
  %v9372 = vsel %vm3718, %v9369, %v9371
  %v9373 = vrot.slane %v9312, 6
  %v9374 = vsel %vm3718, %v9371, %v9373
  %v9395 = vadd.f32 %v9217, %v9338
  %v9396 = vadd.f32 %v9218, %v9340
  %v9397 = vadd.f32 %v9219, %v9342
  %v9398 = vadd.f32 %v9220, %v9344
  %v9399 = vadd.f32 %v9221, %v9346
  %v9400 = vadd.f32 %v9222, %v9348
  %v9401 = vadd.f32 %v9223, %v9350
  %v9402 = vadd.f32 %v9224, %v9352
  %v9403 = vadd.f32 %v9225, %v9354
  %v9404 = vadd.f32 %v9226, %v9356
  %v9405 = vadd.f32 %v9227, %v9358
  %v9406 = vadd.f32 %v9228, %v9360
  %v9407 = vadd.f32 %v9229, %v9362
  %v9408 = vadd.f32 %v9230, %v9364
  %v9409 = vadd.f32 %v9231, %v9366
  %v9410 = vadd.f32 %v9232, %v9368
  %v9411 = vadd.f32 %v9233, %v9370
  %v9412 = vadd.f32 %v9234, %v9372
  %v9413 = vadd.f32 %v9235, %v9374
  %v9414 = vadd.f32 %v9236, %v9373
  %9415 = vmatpush.msra.mxu0 0.0
  %9416 = vmatpush.msra.mxu0 0.0
  %9417 = vmatpush.msra.mxu0 0.0
  %9418 = vmatpush.msra.mxu0 0.0
  %9419 = vmatpush.msra.mxu0 0.0
  %9420 = vmatpush.msra.mxu0 0.0
  %9421 = vmatpush.msra.mxu0 0.0
  %9422 = vmatpush.msra.mxu0 0.0
  %9423 = vmatpush.msra.mxu0 0.0
  %9424 = vmatpush.msra.mxu0 0.0
  %9425 = vmatpush.msra.mxu0 0.0
  %9426 = vmatpush.msra.mxu0 0.0
  %9427 = vmatpush.msra.mxu0 %v4130
  %9428 = vmatpush.msra.mxu0 %v4129
  %9429 = vmatpush.msra.mxu0 %v4128
  %9430 = vmatpush.msra.mxu0 %v4127
  %9431 = vmatmul.f32.gmra.mxu0 %v8740
  %v9432 = vpop.f32.mrf.mxu0
  %v9433 = vadd.f32 0.0, %v9432
  %9434 = vmatmul.f32.gmra.mxu0 %v8743
  %v9435 = vpop.f32.mrf.mxu0
  %v9436 = vadd.f32 0.0, %v9435
  %9437 = vmatmul.f32.gmra.mxu0 %v8746
  %v9438 = vpop.f32.mrf.mxu0
  %v9439 = vadd.f32 0.0, %v9438
  %9440 = vmatmul.f32.gmra.mxu0 %v8749
  %v9441 = vpop.f32.mrf.mxu0
  %v9442 = vadd.f32 0.0, %v9441
  %9443 = vmatmul.f32.gmra.mxu0 %v8752
  %v9444 = vpop.f32.mrf.mxu0
  %v9445 = vadd.f32 0.0, %v9444
  %9446 = vmatmul.f32.gmra.mxu0 %v8755
  %v9447 = vpop.f32.mrf.mxu0
  %v9448 = vadd.f32 0.0, %v9447
  %9449 = vmatmul.f32.gmra.mxu0 %v8758
  %v9450 = vpop.f32.mrf.mxu0
  %v9451 = vadd.f32 0.0, %v9450
  %9452 = vmatmul.f32.gmra.mxu0 %v8761
  %v9453 = vpop.f32.mrf.mxu0
  %v9454 = vadd.f32 0.0, %v9453
  %9455 = vmatmul.f32.gmra.mxu0 %v8764
  %v9456 = vpop.f32.mrf.mxu0
  %v9457 = vadd.f32 0.0, %v9456
  %9458 = vmatmul.f32.gmra.mxu0 %v8767
  %v9459 = vpop.f32.mrf.mxu0
  %v9460 = vadd.f32 0.0, %v9459
  %9461 = vmatmul.f32.gmra.mxu0 %v8770
  %v9462 = vpop.f32.mrf.mxu0
  %v9463 = vadd.f32 0.0, %v9462
  %9464 = vmatmul.f32.gmra.mxu0 %v8773
  %v9465 = vpop.f32.mrf.mxu0
  %v9466 = vadd.f32 0.0, %v9465
  %9467 = vmatmul.f32.gmra.mxu0 %v8776
  %v9468 = vpop.f32.mrf.mxu0
  %v9469 = vadd.f32 0.0, %v9468
  %9470 = vmatmul.f32.gmra.mxu0 %v8779
  %v9471 = vpop.f32.mrf.mxu0
  %v9472 = vadd.f32 0.0, %v9471
  %9473 = vmatmul.f32.gmra.mxu0 %v8782
  %v9474 = vpop.f32.mrf.mxu0
  %v9475 = vadd.f32 0.0, %v9474
  %9476 = vmatmul.f32.gmra.mxu0 %v8785
  %v9477 = vpop.f32.mrf.mxu0
  %v9478 = vadd.f32 0.0, %v9477
  %9479 = vmatmul.f32.gmra.mxu0 %v8788
  %v9480 = vpop.f32.mrf.mxu0
  %v9481 = vadd.f32 0.0, %v9480
  %9482 = vmatmul.f32.gmra.mxu0 %v8791
  %v9483 = vpop.f32.mrf.mxu0
  %v9484 = vadd.f32 0.0, %v9483
  %9485 = vmatmul.f32.gmra.mxu0 %v8794
  %v9486 = vpop.f32.mrf.mxu0
  %v9487 = vadd.f32 0.0, %v9486
  %9488 = vmatmul.f32.gmra.mxu0 %v8797
  %v9489 = vpop.f32.mrf.mxu0
  %v9490 = vadd.f32 0.0, %v9489
  %9491 = vmatmul.f32.gmra.mxu0 %v8800
  %v9492 = vpop.f32.mrf.mxu0
  %v9493 = vadd.f32 0.0, %v9492
  %9494 = vdwg.mxu0
  %v9516 = vrot.slane %v9433, 7
  %v9517 = vrot.slane %v9436, 7
  %v9518 = vsel %vm504, %v9516, %v9517
  %v9519 = vrot.slane %v9439, 7
  %v9520 = vsel %vm504, %v9517, %v9519
  %v9521 = vrot.slane %v9442, 7
  %v9522 = vsel %vm504, %v9519, %v9521
  %v9523 = vrot.slane %v9445, 7
  %v9524 = vsel %vm504, %v9521, %v9523
  %v9525 = vrot.slane %v9448, 7
  %v9526 = vsel %vm504, %v9523, %v9525
  %v9527 = vrot.slane %v9451, 7
  %v9528 = vsel %vm504, %v9525, %v9527
  %v9529 = vrot.slane %v9454, 7
  %v9530 = vsel %vm504, %v9527, %v9529
  %v9531 = vrot.slane %v9457, 7
  %v9532 = vsel %vm504, %v9529, %v9531
  %v9533 = vrot.slane %v9460, 7
  %v9534 = vsel %vm504, %v9531, %v9533
  %v9535 = vrot.slane %v9463, 7
  %v9536 = vsel %vm504, %v9533, %v9535
  %v9537 = vrot.slane %v9466, 7
  %v9538 = vsel %vm504, %v9535, %v9537
  %v9539 = vrot.slane %v9469, 7
  %v9540 = vsel %vm504, %v9537, %v9539
  %v9541 = vrot.slane %v9472, 7
  %v9542 = vsel %vm504, %v9539, %v9541
  %v9543 = vrot.slane %v9475, 7
  %v9544 = vsel %vm504, %v9541, %v9543
  %v9545 = vrot.slane %v9478, 7
  %v9546 = vsel %vm504, %v9543, %v9545
  %v9547 = vrot.slane %v9481, 7
  %v9548 = vsel %vm504, %v9545, %v9547
  %v9549 = vrot.slane %v9484, 7
  %v9550 = vsel %vm504, %v9547, %v9549
  %v9551 = vrot.slane %v9487, 7
  %v9552 = vsel %vm504, %v9549, %v9551
  %v9553 = vrot.slane %v9490, 7
  %v9554 = vsel %vm504, %v9551, %v9553
  %v9555 = vrot.slane %v9493, 7
  %v9556 = vsel %vm504, %v9553, %v9555
  %v9577 = vadd.f32 %v9395, %v9518
  %v9578 = vadd.f32 %v9396, %v9520
  %v9579 = vadd.f32 %v9397, %v9522
  %v9580 = vadd.f32 %v9398, %v9524
  %v9581 = vadd.f32 %v9399, %v9526
  %v9582 = vadd.f32 %v9400, %v9528
  %v9583 = vadd.f32 %v9401, %v9530
  %v9584 = vadd.f32 %v9402, %v9532
  %v9585 = vadd.f32 %v9403, %v9534
  %v9586 = vadd.f32 %v9404, %v9536
  %v9587 = vadd.f32 %v9405, %v9538
  %v9588 = vadd.f32 %v9406, %v9540
  %v9589 = vadd.f32 %v9407, %v9542
  %v9590 = vadd.f32 %v9408, %v9544
  %v9591 = vadd.f32 %v9409, %v9546
  %v9592 = vadd.f32 %v9410, %v9548
  %v9593 = vadd.f32 %v9411, %v9550
  %v9594 = vadd.f32 %v9412, %v9552
  %v9595 = vadd.f32 %v9413, %v9554
  %v9596 = vadd.f32 %v9414, %v9556
  %9597 = vmatpush.msra.mxu0 0.0
  %9598 = vmatpush.msra.mxu0 0.0
  %9599 = vmatpush.msra.mxu0 0.0
  %9600 = vmatpush.msra.mxu0 0.0
  %9601 = vmatpush.msra.mxu0 0.0
  %9602 = vmatpush.msra.mxu0 0.0
  %9603 = vmatpush.msra.mxu0 0.0
  %9604 = vmatpush.msra.mxu0 0.0
  %9605 = vmatpush.msra.mxu0 0.0
  %9606 = vmatpush.msra.mxu0 0.0
  %9607 = vmatpush.msra.mxu0 0.0
  %9608 = vmatpush.msra.mxu0 0.0
  %9609 = vmatpush.msra.mxu0 %v4977
  %9610 = vmatpush.msra.mxu0 %v4976
  %9611 = vmatpush.msra.mxu0 %v4975
  %9612 = vmatpush.msra.mxu0 %v4974
  %9613 = vmatmul.f32.gmra.mxu0 %v8740
  %v9614 = vpop.f32.mrf.mxu0
  %9615 = vmatmul.f32.gmra.mxu0 %v8743
  %v9616 = vpop.f32.mrf.mxu0
  %v9617 = vadd.f32 0.0, %v9616
  %9618 = vmatmul.f32.gmra.mxu0 %v8746
  %v9619 = vpop.f32.mrf.mxu0
  %v9620 = vadd.f32 0.0, %v9619
  %9621 = vmatmul.f32.gmra.mxu0 %v8749
  %v9622 = vpop.f32.mrf.mxu0
  %v9623 = vadd.f32 0.0, %v9622
  %9624 = vmatmul.f32.gmra.mxu0 %v8752
  %v9625 = vpop.f32.mrf.mxu0
  %v9626 = vadd.f32 0.0, %v9625
  %9627 = vmatmul.f32.gmra.mxu0 %v8755
  %v9628 = vpop.f32.mrf.mxu0
  %v9629 = vadd.f32 0.0, %v9628
  %9630 = vmatmul.f32.gmra.mxu0 %v8758
  %v9631 = vpop.f32.mrf.mxu0
  %v9632 = vadd.f32 0.0, %v9631
  %9633 = vmatmul.f32.gmra.mxu0 %v8761
  %v9634 = vpop.f32.mrf.mxu0
  %v9635 = vadd.f32 0.0, %v9634
  %9636 = vmatmul.f32.gmra.mxu0 %v8764
  %v9637 = vpop.f32.mrf.mxu0
  %v9638 = vadd.f32 0.0, %v9637
  %9639 = vmatmul.f32.gmra.mxu0 %v8767
  %v9640 = vpop.f32.mrf.mxu0
  %v9641 = vadd.f32 0.0, %v9640
  %9642 = vmatmul.f32.gmra.mxu0 %v8770
  %v9643 = vpop.f32.mrf.mxu0
  %v9644 = vadd.f32 0.0, %v9643
  %9645 = vmatmul.f32.gmra.mxu0 %v8773
  %v9646 = vpop.f32.mrf.mxu0
  %v9647 = vadd.f32 0.0, %v9646
  %9648 = vmatmul.f32.gmra.mxu0 %v8776
  %v9649 = vpop.f32.mrf.mxu0
  %v9650 = vadd.f32 0.0, %v9649
  %9651 = vmatmul.f32.gmra.mxu0 %v8779
  %v9652 = vpop.f32.mrf.mxu0
  %v9653 = vadd.f32 0.0, %v9652
  %9654 = vmatmul.f32.gmra.mxu0 %v8782
  %v9655 = vpop.f32.mrf.mxu0
  %v9656 = vadd.f32 0.0, %v9655
  %9657 = vmatmul.f32.gmra.mxu0 %v8785
  %v9658 = vpop.f32.mrf.mxu0
  %v9659 = vadd.f32 0.0, %v9658
  %9660 = vmatmul.f32.gmra.mxu0 %v8788
  %v9661 = vpop.f32.mrf.mxu0
  %v9662 = vadd.f32 0.0, %v9661
  %9663 = vmatmul.f32.gmra.mxu0 %v8791
  %v9664 = vpop.f32.mrf.mxu0
  %v9665 = vadd.f32 0.0, %v9664
  %9666 = vmatmul.f32.gmra.mxu0 %v8794
  %v9667 = vpop.f32.mrf.mxu0
  %v9668 = vadd.f32 0.0, %v9667
  %9669 = vmatmul.f32.gmra.mxu0 %v8797
  %v9670 = vpop.f32.mrf.mxu0
  %v9671 = vadd.f32 0.0, %v9670
  %9672 = vmatmul.f32.gmra.mxu0 %v8800
  %v9673 = vpop.f32.mrf.mxu0
  %v9674 = vadd.f32 0.0, %v9673
  %9675 = vdwg.mxu0
  %v9676 = vadd.f32 %v9577, %v9617
  %v9677 = vadd.f32 %v9578, %v9620
  %v9678 = vadd.f32 %v9579, %v9623
  %v9679 = vadd.f32 %v9580, %v9626
  %v9680 = vadd.f32 %v9581, %v9629
  %v9681 = vadd.f32 %v9582, %v9632
  %v9682 = vadd.f32 %v9583, %v9635
  %v9683 = vadd.f32 %v9584, %v9638
  %v9684 = vadd.f32 %v9585, %v9641
  %v9685 = vadd.f32 %v9586, %v9644
  %v9686 = vadd.f32 %v9587, %v9647
  %v9687 = vadd.f32 %v9588, %v9650
  %v9688 = vadd.f32 %v9589, %v9653
  %v9689 = vadd.f32 %v9590, %v9656
  %v9690 = vadd.f32 %v9591, %v9659
  %v9691 = vadd.f32 %v9592, %v9662
  %v9692 = vadd.f32 %v9593, %v9665
  %v9693 = vadd.f32 %v9594, %v9668
  %v9694 = vadd.f32 %v9595, %v9671
  %v9695 = vadd.f32 %v9596, %v9674
  %9696 = vmatpush.msra.mxu0 0.0
  %9697 = vmatpush.msra.mxu0 0.0
  %9698 = vmatpush.msra.mxu0 0.0
  %9699 = vmatpush.msra.mxu0 0.0
  %9700 = vmatpush.msra.mxu0 0.0
  %9701 = vmatpush.msra.mxu0 0.0
  %9702 = vmatpush.msra.mxu0 0.0
  %9703 = vmatpush.msra.mxu0 0.0
  %9704 = vmatpush.msra.mxu0 0.0
  %9705 = vmatpush.msra.mxu0 0.0
  %9706 = vmatpush.msra.mxu0 0.0
  %9707 = vmatpush.msra.mxu0 0.0
  %9708 = vmatpush.msra.mxu0 %v5413
  %9709 = vmatpush.msra.mxu0 %v5412
  %9710 = vmatpush.msra.mxu0 %v5411
  %9711 = vmatpush.msra.mxu0 %v5410
  %9712 = vmatmul.f32.gmra.mxu0 %v8740
  %v9713 = vpop.f32.mrf.mxu0
  %9714 = vmatmul.f32.gmra.mxu0 %v8743
  %v9715 = vpop.f32.mrf.mxu0
  %v9716 = vadd.f32 0.0, %v9715
  %9717 = vmatmul.f32.gmra.mxu0 %v8746
  %v9718 = vpop.f32.mrf.mxu0
  %v9719 = vadd.f32 0.0, %v9718
  %9720 = vmatmul.f32.gmra.mxu0 %v8749
  %v9721 = vpop.f32.mrf.mxu0
  %v9722 = vadd.f32 0.0, %v9721
  %9723 = vmatmul.f32.gmra.mxu0 %v8752
  %v9724 = vpop.f32.mrf.mxu0
  %v9725 = vadd.f32 0.0, %v9724
  %9726 = vmatmul.f32.gmra.mxu0 %v8755
  %v9727 = vpop.f32.mrf.mxu0
  %v9728 = vadd.f32 0.0, %v9727
  %9729 = vmatmul.f32.gmra.mxu0 %v8758
  %v9730 = vpop.f32.mrf.mxu0
  %v9731 = vadd.f32 0.0, %v9730
  %9732 = vmatmul.f32.gmra.mxu0 %v8761
  %v9733 = vpop.f32.mrf.mxu0
  %v9734 = vadd.f32 0.0, %v9733
  %9735 = vmatmul.f32.gmra.mxu0 %v8764
  %v9736 = vpop.f32.mrf.mxu0
  %v9737 = vadd.f32 0.0, %v9736
  %9738 = vmatmul.f32.gmra.mxu0 %v8767
  %v9739 = vpop.f32.mrf.mxu0
  %v9740 = vadd.f32 0.0, %v9739
  %9741 = vmatmul.f32.gmra.mxu0 %v8770
  %v9742 = vpop.f32.mrf.mxu0
  %v9743 = vadd.f32 0.0, %v9742
  %9744 = vmatmul.f32.gmra.mxu0 %v8773
  %v9745 = vpop.f32.mrf.mxu0
  %v9746 = vadd.f32 0.0, %v9745
  %9747 = vmatmul.f32.gmra.mxu0 %v8776
  %v9748 = vpop.f32.mrf.mxu0
  %v9749 = vadd.f32 0.0, %v9748
  %9750 = vmatmul.f32.gmra.mxu0 %v8779
  %v9751 = vpop.f32.mrf.mxu0
  %v9752 = vadd.f32 0.0, %v9751
  %9753 = vmatmul.f32.gmra.mxu0 %v8782
  %v9754 = vpop.f32.mrf.mxu0
  %v9755 = vadd.f32 0.0, %v9754
  %9756 = vmatmul.f32.gmra.mxu0 %v8785
  %v9757 = vpop.f32.mrf.mxu0
  %v9758 = vadd.f32 0.0, %v9757
  %9759 = vmatmul.f32.gmra.mxu0 %v8788
  %v9760 = vpop.f32.mrf.mxu0
  %v9761 = vadd.f32 0.0, %v9760
  %9762 = vmatmul.f32.gmra.mxu0 %v8791
  %v9763 = vpop.f32.mrf.mxu0
  %v9764 = vadd.f32 0.0, %v9763
  %9765 = vmatmul.f32.gmra.mxu0 %v8794
  %v9766 = vpop.f32.mrf.mxu0
  %v9767 = vadd.f32 0.0, %v9766
  %9768 = vmatmul.f32.gmra.mxu0 %v8797
  %v9769 = vpop.f32.mrf.mxu0
  %v9770 = vadd.f32 0.0, %v9769
  %9771 = vmatmul.f32.gmra.mxu0 %v8800
  %v9772 = vpop.f32.mrf.mxu0
  %v9773 = vadd.f32 0.0, %v9772
  %9774 = vdwg.mxu0
  %v9795 = vrot.slane %v9716, 4
  %v9796 = vrot.slane %v9719, 4
  %v9797 = vsel %vm5845, %v9795, %v9796
  %v9798 = vrot.slane %v9722, 4
  %v9799 = vsel %vm5845, %v9796, %v9798
  %v9800 = vrot.slane %v9725, 4
  %v9801 = vsel %vm5845, %v9798, %v9800
  %v9802 = vrot.slane %v9728, 4
  %v9803 = vsel %vm5845, %v9800, %v9802
  %v9804 = vrot.slane %v9731, 4
  %v9805 = vsel %vm5845, %v9802, %v9804
  %v9806 = vrot.slane %v9734, 4
  %v9807 = vsel %vm5845, %v9804, %v9806
  %v9808 = vrot.slane %v9737, 4
  %v9809 = vsel %vm5845, %v9806, %v9808
  %v9810 = vrot.slane %v9740, 4
  %v9811 = vsel %vm5845, %v9808, %v9810
  %v9812 = vrot.slane %v9743, 4
  %v9813 = vsel %vm5845, %v9810, %v9812
  %v9814 = vrot.slane %v9746, 4
  %v9815 = vsel %vm5845, %v9812, %v9814
  %v9816 = vrot.slane %v9749, 4
  %v9817 = vsel %vm5845, %v9814, %v9816
  %v9818 = vrot.slane %v9752, 4
  %v9819 = vsel %vm5845, %v9816, %v9818
  %v9820 = vrot.slane %v9755, 4
  %v9821 = vsel %vm5845, %v9818, %v9820
  %v9822 = vrot.slane %v9758, 4
  %v9823 = vsel %vm5845, %v9820, %v9822
  %v9824 = vrot.slane %v9761, 4
  %v9825 = vsel %vm5845, %v9822, %v9824
  %v9826 = vrot.slane %v9764, 4
  %v9827 = vsel %vm5845, %v9824, %v9826
  %v9828 = vrot.slane %v9767, 4
  %v9829 = vsel %vm5845, %v9826, %v9828
  %v9830 = vrot.slane %v9770, 4
  %v9831 = vsel %vm5845, %v9828, %v9830
  %v9832 = vrot.slane %v9773, 4
  %v9833 = vsel %vm5845, %v9830, %v9832
  %v9854 = vadd.f32 %v9676, %v9797
  %v9855 = vadd.f32 %v9677, %v9799
  %v9856 = vadd.f32 %v9678, %v9801
  %v9857 = vadd.f32 %v9679, %v9803
  %v9858 = vadd.f32 %v9680, %v9805
  %v9859 = vadd.f32 %v9681, %v9807
  %v9860 = vadd.f32 %v9682, %v9809
  %v9861 = vadd.f32 %v9683, %v9811
  %v9862 = vadd.f32 %v9684, %v9813
  %v9863 = vadd.f32 %v9685, %v9815
  %v9864 = vadd.f32 %v9686, %v9817
  %v9865 = vadd.f32 %v9687, %v9819
  %v9866 = vadd.f32 %v9688, %v9821
  %v9867 = vadd.f32 %v9689, %v9823
  %v9868 = vadd.f32 %v9690, %v9825
  %v9869 = vadd.f32 %v9691, %v9827
  %v9870 = vadd.f32 %v9692, %v9829
  %v9871 = vadd.f32 %v9693, %v9831
  %v9872 = vadd.f32 %v9694, %v9833
  %v9873 = vadd.f32 %v9695, %v9832
  %9874 = vmatpush.msra.mxu0 0.0
  %9875 = vmatpush.msra.mxu0 0.0
  %9876 = vmatpush.msra.mxu0 0.0
  %9877 = vmatpush.msra.mxu0 0.0
  %9878 = vmatpush.msra.mxu0 0.0
  %9879 = vmatpush.msra.mxu0 0.0
  %9880 = vmatpush.msra.mxu0 0.0
  %9881 = vmatpush.msra.mxu0 0.0
  %9882 = vmatpush.msra.mxu0 0.0
  %9883 = vmatpush.msra.mxu0 0.0
  %9884 = vmatpush.msra.mxu0 0.0
  %9885 = vmatpush.msra.mxu0 0.0
  %9886 = vmatpush.msra.mxu0 %v6257
  %9887 = vmatpush.msra.mxu0 %v6256
  %9888 = vmatpush.msra.mxu0 %v6255
  %9889 = vmatpush.msra.mxu0 %v6254
  %9890 = vmatmul.f32.gmra.mxu0 %v8740
  %v9891 = vpop.f32.mrf.mxu0
  %9892 = vmatmul.f32.gmra.mxu0 %v8743
  %v9893 = vpop.f32.mrf.mxu0
  %v9894 = vadd.f32 0.0, %v9893
  %9895 = vmatmul.f32.gmra.mxu0 %v8746
  %v9896 = vpop.f32.mrf.mxu0
  %v9897 = vadd.f32 0.0, %v9896
  %9898 = vmatmul.f32.gmra.mxu0 %v8749
  %v9899 = vpop.f32.mrf.mxu0
  %v9900 = vadd.f32 0.0, %v9899
  %9901 = vmatmul.f32.gmra.mxu0 %v8752
  %v9902 = vpop.f32.mrf.mxu0
  %v9903 = vadd.f32 0.0, %v9902
  %9904 = vmatmul.f32.gmra.mxu0 %v8755
  %v9905 = vpop.f32.mrf.mxu0
  %v9906 = vadd.f32 0.0, %v9905
  %9907 = vmatmul.f32.gmra.mxu0 %v8758
  %v9908 = vpop.f32.mrf.mxu0
  %v9909 = vadd.f32 0.0, %v9908
  %9910 = vmatmul.f32.gmra.mxu0 %v8761
  %v9911 = vpop.f32.mrf.mxu0
  %v9912 = vadd.f32 0.0, %v9911
  %9913 = vmatmul.f32.gmra.mxu0 %v8764
  %v9914 = vpop.f32.mrf.mxu0
  %v9915 = vadd.f32 0.0, %v9914
  %9916 = vmatmul.f32.gmra.mxu0 %v8767
  %v9917 = vpop.f32.mrf.mxu0
  %v9918 = vadd.f32 0.0, %v9917
  %9919 = vmatmul.f32.gmra.mxu0 %v8770
  %v9920 = vpop.f32.mrf.mxu0
  %v9921 = vadd.f32 0.0, %v9920
  %9922 = vmatmul.f32.gmra.mxu0 %v8773
  %v9923 = vpop.f32.mrf.mxu0
  %v9924 = vadd.f32 0.0, %v9923
  %9925 = vmatmul.f32.gmra.mxu0 %v8776
  %v9926 = vpop.f32.mrf.mxu0
  %v9927 = vadd.f32 0.0, %v9926
  %9928 = vmatmul.f32.gmra.mxu0 %v8779
  %v9929 = vpop.f32.mrf.mxu0
  %v9930 = vadd.f32 0.0, %v9929
  %9931 = vmatmul.f32.gmra.mxu0 %v8782
  %v9932 = vpop.f32.mrf.mxu0
  %v9933 = vadd.f32 0.0, %v9932
  %9934 = vmatmul.f32.gmra.mxu0 %v8785
  %v9935 = vpop.f32.mrf.mxu0
  %v9936 = vadd.f32 0.0, %v9935
  %9937 = vmatmul.f32.gmra.mxu0 %v8788
  %v9938 = vpop.f32.mrf.mxu0
  %v9939 = vadd.f32 0.0, %v9938
  %9940 = vmatmul.f32.gmra.mxu0 %v8791
  %v9941 = vpop.f32.mrf.mxu0
  %v9942 = vadd.f32 0.0, %v9941
  %9943 = vmatmul.f32.gmra.mxu0 %v8794
  %v9944 = vpop.f32.mrf.mxu0
  %v9945 = vadd.f32 0.0, %v9944
  %9946 = vmatmul.f32.gmra.mxu0 %v8797
  %v9947 = vpop.f32.mrf.mxu0
  %v9948 = vadd.f32 0.0, %v9947
  %9949 = vmatmul.f32.gmra.mxu0 %v8800
  %v9950 = vpop.f32.mrf.mxu0
  %v9951 = vadd.f32 0.0, %v9950
  %9952 = vdwg.mxu0
  %v9973 = vrot.slane %v9894, 5
  %v9974 = vrot.slane %v9897, 5
  %v9975 = vsel %vm6689, %v9973, %v9974
  %v9976 = vrot.slane %v9900, 5
  %v9977 = vsel %vm6689, %v9974, %v9976
  %v9978 = vrot.slane %v9903, 5
  %v9979 = vsel %vm6689, %v9976, %v9978
  %v9980 = vrot.slane %v9906, 5
  %v9981 = vsel %vm6689, %v9978, %v9980
  %v9982 = vrot.slane %v9909, 5
  %v9983 = vsel %vm6689, %v9980, %v9982
  %v9984 = vrot.slane %v9912, 5
  %v9985 = vsel %vm6689, %v9982, %v9984
  %v9986 = vrot.slane %v9915, 5
  %v9987 = vsel %vm6689, %v9984, %v9986
  %v9988 = vrot.slane %v9918, 5
  %v9989 = vsel %vm6689, %v9986, %v9988
  %v9990 = vrot.slane %v9921, 5
  %v9991 = vsel %vm6689, %v9988, %v9990
  %v9992 = vrot.slane %v9924, 5
  %v9993 = vsel %vm6689, %v9990, %v9992
  %v9994 = vrot.slane %v9927, 5
  %v9995 = vsel %vm6689, %v9992, %v9994
  %v9996 = vrot.slane %v9930, 5
  %v9997 = vsel %vm6689, %v9994, %v9996
  %v9998 = vrot.slane %v9933, 5
  %v9999 = vsel %vm6689, %v9996, %v9998
  %v10000 = vrot.slane %v9936, 5
  %v10001 = vsel %vm6689, %v9998, %v10000
  %v10002 = vrot.slane %v9939, 5
  %v10003 = vsel %vm6689, %v10000, %v10002
  %v10004 = vrot.slane %v9942, 5
  %v10005 = vsel %vm6689, %v10002, %v10004
  %v10006 = vrot.slane %v9945, 5
  %v10007 = vsel %vm6689, %v10004, %v10006
  %v10008 = vrot.slane %v9948, 5
  %v10009 = vsel %vm6689, %v10006, %v10008
  %v10010 = vrot.slane %v9951, 5
  %v10011 = vsel %vm6689, %v10008, %v10010
  %v10032 = vadd.f32 %v9854, %v9975
  %v10033 = vadd.f32 %v9855, %v9977
  %v10034 = vadd.f32 %v9856, %v9979
  %v10035 = vadd.f32 %v9857, %v9981
  %v10036 = vadd.f32 %v9858, %v9983
  %v10037 = vadd.f32 %v9859, %v9985
  %v10038 = vadd.f32 %v9860, %v9987
  %v10039 = vadd.f32 %v9861, %v9989
  %v10040 = vadd.f32 %v9862, %v9991
  %v10041 = vadd.f32 %v9863, %v9993
  %v10042 = vadd.f32 %v9864, %v9995
  %v10043 = vadd.f32 %v9865, %v9997
  %v10044 = vadd.f32 %v9866, %v9999
  %v10045 = vadd.f32 %v9867, %v10001
  %v10046 = vadd.f32 %v9868, %v10003
  %v10047 = vadd.f32 %v9869, %v10005
  %v10048 = vadd.f32 %v9870, %v10007
  %v10049 = vadd.f32 %v9871, %v10009
  %v10050 = vadd.f32 %v9872, %v10011
  %v10051 = vadd.f32 %v9873, %v10010
  %10052 = vmatpush.msra.mxu0 0.0
  %10053 = vmatpush.msra.mxu0 0.0
  %10054 = vmatpush.msra.mxu0 0.0
  %10055 = vmatpush.msra.mxu0 0.0
  %10056 = vmatpush.msra.mxu0 0.0
  %10057 = vmatpush.msra.mxu0 0.0
  %10058 = vmatpush.msra.mxu0 0.0
  %10059 = vmatpush.msra.mxu0 0.0
  %10060 = vmatpush.msra.mxu0 0.0
  %10061 = vmatpush.msra.mxu0 0.0
  %10062 = vmatpush.msra.mxu0 0.0
  %10063 = vmatpush.msra.mxu0 0.0
  %10064 = vmatpush.msra.mxu0 %v7101
  %10065 = vmatpush.msra.mxu0 %v7100
  %10066 = vmatpush.msra.mxu0 %v7099
  %10067 = vmatpush.msra.mxu0 %v7098
  %10068 = vmatmul.f32.gmra.mxu0 %v8740
  %v10069 = vpop.f32.mrf.mxu0
  %10070 = vmatmul.f32.gmra.mxu0 %v8743
  %v10071 = vpop.f32.mrf.mxu0
  %v10072 = vadd.f32 0.0, %v10071
  %10073 = vmatmul.f32.gmra.mxu0 %v8746
  %v10074 = vpop.f32.mrf.mxu0
  %v10075 = vadd.f32 0.0, %v10074
  %10076 = vmatmul.f32.gmra.mxu0 %v8749
  %v10077 = vpop.f32.mrf.mxu0
  %v10078 = vadd.f32 0.0, %v10077
  %10079 = vmatmul.f32.gmra.mxu0 %v8752
  %v10080 = vpop.f32.mrf.mxu0
  %v10081 = vadd.f32 0.0, %v10080
  %10082 = vmatmul.f32.gmra.mxu0 %v8755
  %v10083 = vpop.f32.mrf.mxu0
  %v10084 = vadd.f32 0.0, %v10083
  %10085 = vmatmul.f32.gmra.mxu0 %v8758
  %v10086 = vpop.f32.mrf.mxu0
  %v10087 = vadd.f32 0.0, %v10086
  %10088 = vmatmul.f32.gmra.mxu0 %v8761
  %v10089 = vpop.f32.mrf.mxu0
  %v10090 = vadd.f32 0.0, %v10089
  %10091 = vmatmul.f32.gmra.mxu0 %v8764
  %v10092 = vpop.f32.mrf.mxu0
  %v10093 = vadd.f32 0.0, %v10092
  %10094 = vmatmul.f32.gmra.mxu0 %v8767
  %v10095 = vpop.f32.mrf.mxu0
  %v10096 = vadd.f32 0.0, %v10095
  %10097 = vmatmul.f32.gmra.mxu0 %v8770
  %v10098 = vpop.f32.mrf.mxu0
  %v10099 = vadd.f32 0.0, %v10098
  %10100 = vmatmul.f32.gmra.mxu0 %v8773
  %v10101 = vpop.f32.mrf.mxu0
  %v10102 = vadd.f32 0.0, %v10101
  %10103 = vmatmul.f32.gmra.mxu0 %v8776
  %v10104 = vpop.f32.mrf.mxu0
  %v10105 = vadd.f32 0.0, %v10104
  %10106 = vmatmul.f32.gmra.mxu0 %v8779
  %v10107 = vpop.f32.mrf.mxu0
  %v10108 = vadd.f32 0.0, %v10107
  %10109 = vmatmul.f32.gmra.mxu0 %v8782
  %v10110 = vpop.f32.mrf.mxu0
  %v10111 = vadd.f32 0.0, %v10110
  %10112 = vmatmul.f32.gmra.mxu0 %v8785
  %v10113 = vpop.f32.mrf.mxu0
  %v10114 = vadd.f32 0.0, %v10113
  %10115 = vmatmul.f32.gmra.mxu0 %v8788
  %v10116 = vpop.f32.mrf.mxu0
  %v10117 = vadd.f32 0.0, %v10116
  %10118 = vmatmul.f32.gmra.mxu0 %v8791
  %v10119 = vpop.f32.mrf.mxu0
  %v10120 = vadd.f32 0.0, %v10119
  %10121 = vmatmul.f32.gmra.mxu0 %v8794
  %v10122 = vpop.f32.mrf.mxu0
  %v10123 = vadd.f32 0.0, %v10122
  %10124 = vmatmul.f32.gmra.mxu0 %v8797
  %v10125 = vpop.f32.mrf.mxu0
  %v10126 = vadd.f32 0.0, %v10125
  %10127 = vmatmul.f32.gmra.mxu0 %v8800
  %v10128 = vpop.f32.mrf.mxu0
  %v10129 = vadd.f32 0.0, %v10128
  %10130 = vdwg.mxu0
  %v10151 = vrot.slane %v10072, 6
  %v10152 = vrot.slane %v10075, 6
  %v10153 = vsel %vm3718, %v10151, %v10152
  %v10154 = vrot.slane %v10078, 6
  %v10155 = vsel %vm3718, %v10152, %v10154
  %v10156 = vrot.slane %v10081, 6
  %v10157 = vsel %vm3718, %v10154, %v10156
  %v10158 = vrot.slane %v10084, 6
  %v10159 = vsel %vm3718, %v10156, %v10158
  %v10160 = vrot.slane %v10087, 6
  %v10161 = vsel %vm3718, %v10158, %v10160
  %v10162 = vrot.slane %v10090, 6
  %v10163 = vsel %vm3718, %v10160, %v10162
  %v10164 = vrot.slane %v10093, 6
  %v10165 = vsel %vm3718, %v10162, %v10164
  %v10166 = vrot.slane %v10096, 6
  %v10167 = vsel %vm3718, %v10164, %v10166
  %v10168 = vrot.slane %v10099, 6
  %v10169 = vsel %vm3718, %v10166, %v10168
  %v10170 = vrot.slane %v10102, 6
  %v10171 = vsel %vm3718, %v10168, %v10170
  %v10172 = vrot.slane %v10105, 6
  %v10173 = vsel %vm3718, %v10170, %v10172
  %v10174 = vrot.slane %v10108, 6
  %v10175 = vsel %vm3718, %v10172, %v10174
  %v10176 = vrot.slane %v10111, 6
  %v10177 = vsel %vm3718, %v10174, %v10176
  %v10178 = vrot.slane %v10114, 6
  %v10179 = vsel %vm3718, %v10176, %v10178
  %v10180 = vrot.slane %v10117, 6
  %v10181 = vsel %vm3718, %v10178, %v10180
  %v10182 = vrot.slane %v10120, 6
  %v10183 = vsel %vm3718, %v10180, %v10182
  %v10184 = vrot.slane %v10123, 6
  %v10185 = vsel %vm3718, %v10182, %v10184
  %v10186 = vrot.slane %v10126, 6
  %v10187 = vsel %vm3718, %v10184, %v10186
  %v10188 = vrot.slane %v10129, 6
  %v10189 = vsel %vm3718, %v10186, %v10188
  %v10210 = vadd.f32 %v10032, %v10153
  %v10211 = vadd.f32 %v10033, %v10155
  %v10212 = vadd.f32 %v10034, %v10157
  %v10213 = vadd.f32 %v10035, %v10159
  %v10214 = vadd.f32 %v10036, %v10161
  %v10215 = vadd.f32 %v10037, %v10163
  %v10216 = vadd.f32 %v10038, %v10165
  %v10217 = vadd.f32 %v10039, %v10167
  %v10218 = vadd.f32 %v10040, %v10169
  %v10219 = vadd.f32 %v10041, %v10171
  %v10220 = vadd.f32 %v10042, %v10173
  %v10221 = vadd.f32 %v10043, %v10175
  %v10222 = vadd.f32 %v10044, %v10177
  %v10223 = vadd.f32 %v10045, %v10179
  %v10224 = vadd.f32 %v10046, %v10181
  %v10225 = vadd.f32 %v10047, %v10183
  %v10226 = vadd.f32 %v10048, %v10185
  %v10227 = vadd.f32 %v10049, %v10187
  %v10228 = vadd.f32 %v10050, %v10189
  %v10229 = vadd.f32 %v10051, %v10188
  %v10230 = vld [vmem:[%s6] sm:$0xff]
  %v10231 = vld [vmem:[%s6 + $0x8] sm:$0xff]
  %v10232 = vld [vmem:[%s6 + $0x10] sm:$0xff]
  %v10233 = vld [vmem:[%s6 + $0x18] sm:$0xff]
  %v10234 = vld [vmem:[%s6 + $0x20] sm:$0xff]
  %v10235 = vld [vmem:[%s6 + $0x28] sm:$0xff]
  %vm10236 = vcmask 211968
  %v10238 = vsel %vm10236, %v10231, 0
  %v10241 = vsel %vm10236, %v10233, 0
  %v10244 = vsel %vm10236, %v10235, 0
  %v10247 = vsel %vm3718, %v10229, 0
  %10249 = vmatpush.msra.mxu0 %v10225
  %10250 = vmatpush.msra.mxu0 %v10224
  %10251 = vmatpush.msra.mxu0 %v10223
  %10252 = vmatpush.msra.mxu0 %v10222
  %10253 = vmatpush.msra.mxu0 %v10221
  %10254 = vmatpush.msra.mxu0 %v10220
  %10255 = vmatpush.msra.mxu0 %v10219
  %10256 = vmatpush.msra.mxu0 %v10218
  %10257 = vmatpush.msra.mxu0 %v10217
  %10258 = vmatpush.msra.mxu0 %v10216
  %10259 = vmatpush.msra.mxu0 %v10215
  %10260 = vmatpush.msra.mxu0 %v10214
  %10261 = vmatpush.msra.mxu0 %v10213
  %10262 = vmatpush.msra.mxu0 %v10212
  %10263 = vmatpush.msra.mxu0 %v10211
  %10264 = vmatpush.msra.mxu0 %v10210
  %10265 = vmatmul.f32.gmra.mxu0 %v10230
  %v10266 = vpop.f32.mrf.mxu0
  %v10267 = vadd.f32 %v8089, %v10266
  %10268 = vmatmul.f32.gmra.mxu0 %v10232
  %v10269 = vpop.f32.mrf.mxu0
  %v10270 = vadd.f32 %v8089, %v10269
  %10271 = vmatmul.f32.gmra.mxu0 %v10234
  %v10272 = vpop.f32.mrf.mxu0
  %v10273 = vadd.f32 %v8089, %v10272
  %10274 = vdwg.mxu0
  %10275 = vmatpush.msra.mxu0 0.0
  %10276 = vmatpush.msra.mxu0 0.0
  %10277 = vmatpush.msra.mxu0 0.0
  %10278 = vmatpush.msra.mxu0 0.0
  %10279 = vmatpush.msra.mxu0 0.0
  %10280 = vmatpush.msra.mxu0 0.0
  %10281 = vmatpush.msra.mxu0 0.0
  %10282 = vmatpush.msra.mxu0 0.0
  %10283 = vmatpush.msra.mxu0 0.0
  %10284 = vmatpush.msra.mxu0 0.0
  %10285 = vmatpush.msra.mxu0 0.0
  %10286 = vmatpush.msra.mxu0 0.0
  %10287 = vmatpush.msra.mxu0 %v10247
  %10288 = vmatpush.msra.mxu0 %v10228
  %10289 = vmatpush.msra.mxu0 %v10227
  %10290 = vmatpush.msra.mxu0 %v10226
  %10291 = vmatmul.f32.gmra.mxu0 %v10238
  %v10292 = vpop.f32.mrf.mxu0
  %v10293 = vadd.f32 %v10267, %v10292
  %10294 = vmatmul.f32.gmra.mxu0 %v10241
  %v10295 = vpop.f32.mrf.mxu0
  %v10296 = vadd.f32 %v10270, %v10295
  %10297 = vmatmul.f32.gmra.mxu0 %v10244
  %v10298 = vpop.f32.mrf.mxu0
  %v10299 = vadd.f32 %v10273, %v10298
  %10300 = vdwg.mxu0
  %v10301 = vmax.f32 %v10293, 0.0
  %v10302 = vmax.f32 %v10296, 0.0
  %v10303 = vmax.f32 %v10299, 0.0
  %v10304 = vld [vmem:[%s7] sm:$0xff]
  %v10305 = vld [vmem:[%s7 + $0x8] sm:$0xff]
  %v10306 = vld [vmem:[%s7 + $0x10] sm:$0xff]
  %v10307 = vld [vmem:[%s7 + $0x18] sm:$0xff]
  %v10308 = vld [vmem:[%s8] sm:$0xff]
  %v10309 = vld [vmem:[%s8 + $0x8] sm:$0xff]
  %v10310 = vld [vmem:[%s8 + $0x10] sm:$0xff]
  %v10311 = vld [vmem:[%s8 + $0x18] sm:$0xff]
  %v10314 = vrot.slane %v10302, 4
  %v10315 = vrot.slane %v10303, 4
  %v10316 = vsel %vm5845, %v10314, %v10315
  %v10317 = vsel %vm949, %v10316, 0
  %v10319 = vsel %vm949, %v10315, 0
  %10321 = vmatpush.msra.mxu0 0.0
  %10322 = vmatpush.msra.mxu0 0.0
  %10323 = vmatpush.msra.mxu0 0.0
  %10324 = vmatpush.msra.mxu0 0.0
  %10325 = vmatpush.msra.mxu0 0.0
  %10326 = vmatpush.msra.mxu0 0.0
  %10327 = vmatpush.msra.mxu0 0.0
  %10328 = vmatpush.msra.mxu0 0.0
  %10329 = vmatpush.msra.mxu0 0.0
  %10330 = vmatpush.msra.mxu0 0.0
  %10331 = vmatpush.msra.mxu0 0.0
  %10332 = vmatpush.msra.mxu0 0.0
  %10333 = vmatpush.msra.mxu0 %v10311
  %10334 = vmatpush.msra.mxu0 %v10310
  %10335 = vmatpush.msra.mxu0 %v10309
  %10336 = vmatpush.msra.mxu0 %v10308
  %10337 = vmatmul.f32.gmra.mxu0 %v10317
  %v10338 = vpop.f32.mrf.mxu0
  %v10339 = vadd.f32 0.0, %v10338
  %10340 = vmatmul.f32.gmra.mxu0 %v10319
  %v10341 = vpop.f32.mrf.mxu0
  %v10342 = vadd.f32 0.0, %v10341
  %10343 = vdwg.mxu0
  %v10345 = vsel %vm949, %v10301, 0
  %v10347 = vsel %vm949, %v10302, 0
  %10349 = vmatpush.msra.mxu0 0.0
  %10350 = vmatpush.msra.mxu0 0.0
  %10351 = vmatpush.msra.mxu0 0.0
  %10352 = vmatpush.msra.mxu0 0.0
  %10353 = vmatpush.msra.mxu0 0.0
  %10354 = vmatpush.msra.mxu0 0.0
  %10355 = vmatpush.msra.mxu0 0.0
  %10356 = vmatpush.msra.mxu0 0.0
  %10357 = vmatpush.msra.mxu0 0.0
  %10358 = vmatpush.msra.mxu0 0.0
  %10359 = vmatpush.msra.mxu0 0.0
  %10360 = vmatpush.msra.mxu0 0.0
  %10361 = vmatpush.msra.mxu0 %v10307
  %10362 = vmatpush.msra.mxu0 %v10306
  %10363 = vmatpush.msra.mxu0 %v10305
  %10364 = vmatpush.msra.mxu0 %v10304
  %10365 = vmatmul.f32.gmra.mxu0 %v10345
  %v10366 = vpop.f32.mrf.mxu0
  %v10367 = vadd.f32 %v10339, %v10366
  %10368 = vmatmul.f32.gmra.mxu0 %v10347
  %v10369 = vpop.f32.mrf.mxu0
  %v10370 = vadd.f32 %v10342, %v10369
  %10371 = vdwg.mxu0
  %v10372 = vld [vmem:[%s9] sm:$0x1]
  %v10374 = vperm.slane %v10372, 0
  %v10376 = vadd.f32 %v10367, %v10374
  %v10377 = vadd.f32 %v10370, %v10374
  %v10378 = vld [vmem:[%s10] sm:$0xff]
  %v10379 = vld [vmem:[%s10 + $0x8] sm:$0xf]
  %v10380 = vadd.f32 %v10376, %v10378
  %v10381 = vadd.f32 %v10377, %v10379
  %v10382 = vld [vmem:[%s11] sm:$0xff]
  %v10383 = vld [vmem:[%s11 + $0x8] sm:$0xf]
  %v10384 = vld [vmem:[%s12] sm:$0xff]
  %v10385 = vld [vmem:[%s12 + $0x8] sm:$0xff]
  %v10386 = vld [vmem:[%s12 + $0x10] sm:$0xff]
  %v10387 = vld [vmem:[%s12 + $0x18] sm:$0xff]
  %v10388 = vld [vmem:[%s13] sm:$0x1]
  %v10390 = vperm.slane %v10388, 0
  %v10393 = vsel %vm949, %v10380, 0
  %v10396 = vsel %vm949, %v10381, 0
  %10398 = vmatpush.msra.mxu0 0.0
  %10399 = vmatpush.msra.mxu0 0.0
  %10400 = vmatpush.msra.mxu0 0.0
  %10401 = vmatpush.msra.mxu0 0.0
  %10402 = vmatpush.msra.mxu0 0.0
  %10403 = vmatpush.msra.mxu0 0.0
  %10404 = vmatpush.msra.mxu0 0.0
  %10405 = vmatpush.msra.mxu0 0.0
  %10406 = vmatpush.msra.mxu0 0.0
  %10407 = vmatpush.msra.mxu0 0.0
  %10408 = vmatpush.msra.mxu0 0.0
  %10409 = vmatpush.msra.mxu0 0.0
  %10410 = vmatpush.msra.mxu0 %v10387
  %10411 = vmatpush.msra.mxu0 %v10386
  %10412 = vmatpush.msra.mxu0 %v10385
  %10413 = vmatpush.msra.mxu0 %v10384
  %10414 = vmatmul.f32.gmra.mxu0 %v10393
  %v10415 = vpop.f32.mrf.mxu0
  %v10416 = vadd.f32 %v10390, %v10415
  %10417 = vmatmul.f32.gmra.mxu0 %v10396
  %v10418 = vpop.f32.mrf.mxu0
  %v10419 = vadd.f32 %v10390, %v10418
  %10420 = vdwg.mxu0
  %10423 = vrot.lane.b32.xlu0 %v10416, 96
  %v10424 = vpop.permute.xlu0 %10423
  %10425 = vrot.lane.b32.xlu0 %v10419, 96
  %v10426 = vpop.permute.xlu0 %10425
  %vm10427 = vcmask 64512
  %v10428 = vsel %vm10427, %v10416, 0
  %v10430 = vsel %vm10427, %v10419, 0
  %v10432 = vsel %vm10427, %v10424, 0
  %v10434 = vsel %vm10427, %v10426, 0
  %10436 = vmatpush.xpose.msra.mxu0 0.0
  %10437 = vmatpush.xpose.msra.mxu0 0.0
  %10438 = vmatpush.xpose.msra.mxu0 0.0
  %10439 = vmatpush.xpose.msra.mxu0 0.0
  %10440 = vmatpush.xpose.msra.mxu0 0.0
  %10441 = vmatpush.xpose.msra.mxu0 0.0
  %10442 = vmatpush.xpose.msra.mxu0 0.0
  %10443 = vmatpush.xpose.msra.mxu0 0.0
  %10444 = vmatpush.xpose.msra.mxu0 0.0
  %10445 = vmatpush.xpose.msra.mxu0 0.0
  %10446 = vmatpush.xpose.msra.mxu0 0.0
  %10447 = vmatpush.xpose.msra.mxu0 0.0
  %10448 = vmatpush.xpose.msra.mxu0 0.0
  %10449 = vmatpush.xpose.msra.mxu0 0.0
  %10450 = vmatpush.xpose.msra.mxu0 %v10434
  %10451 = vmatpush.xpose.msra.mxu0 %v10432
  %10452 = vmatmul.f32.gmra.mxu0 %v10428
  %v10453 = vpop.f32.mrf.mxu0
  %v10454 = vadd.f32 0.0, %v10453
  %10455 = vmatmul.f32.gmra.mxu0 %v10430
  %v10456 = vpop.f32.mrf.mxu0
  %v10457 = vadd.f32 0.0, %v10456
  %10458 = vdwg.mxu0
  %v10459 = vmul.f32 %v10454, 0.35355338
  %v10460 = vmul.f32 %v10457, 0.35355338
  %v10461 = vadd.f32 %v10459, %v10382
  %v10462 = vadd.f32 %v10460, %v10383
  %vm10463 = vcmask 97280
  %v10464 = vsel %vm10463, %v10461, -inf
  %10465 = vmax.xlane.f32.xlu0 %v10464
  %v10466 = vpop.xlane.xlu0 %10465
  %vm10467 = vcmask 93184
  %v10468 = vsel %vm10467, %v10462, -inf
  %10469 = vmax.xlane.f32.xlu0 %v10468
  %v10470 = vpop.xlane.xlu0 %10469
  %v10471 = vsub.f32 %v10461, %v10466
  %v10472 = vsub.f32 %v10462, %v10470
  %v10473 = vmul.f32 %v10471, 1.442695
  %v10474 = vpow.pop %v10473
  %v10475 = vmul.f32 %v10472, 1.442695
  %v10476 = vpow.pop %v10475
  %v10477 = vsel %vm10463, %v10474, 0.0
  %10478 = vadd.xlane.f32.xlu0 %v10477
  %v10479 = vpop.xlane.xlu0 %10478
  %v10480 = vsel %vm10467, %v10476, 0.0
  %10481 = vadd.xlane.f32.xlu0 %v10480
  %v10482 = vpop.xlane.xlu0 %10481
  %v10483 = vrcp.pop %v10479
  %v10484 = vmul.f32 %v10479, %v10483
  %v10485 = vsub.f32 1.0, %v10484
  %v10486 = vmul.f32 %v10483, %v10485
  %v10487 = vadd.f32 %v10483, %v10486
  %vm10488 = vweird.f32 %v10479
  %vm10489 = vweird.f32 %v10483
  %vm10490 = vmor %vm10488, %vm10489
  %v10491 = vsel %vm10490, %v10483, %v10487
  %v10492 = vand.u32 2147483647, %v10479
  %vm10493 = vcmp.eq.f32.partialorder %v10492, 8.507059e+37
  %v10494 = vand.u32 %v10479, 2147483648
  %v10495 = vor.u32 1.1754944e-38, %v10494
  %v10496 = vsel %vm10493, %v10495, %v10491
  %v10497 = vmul.f32 %v10474, %v10496
  %v10498 = vrcp.pop %v10482
  %v10499 = vmul.f32 %v10482, %v10498
  %v10500 = vsub.f32 1.0, %v10499
  %v10501 = vmul.f32 %v10498, %v10500
  %v10502 = vadd.f32 %v10498, %v10501
  %vm10503 = vweird.f32 %v10482
  %vm10504 = vweird.f32 %v10498
  %vm10505 = vmor %vm10503, %vm10504
  %v10506 = vsel %vm10505, %v10498, %v10502
  %v10507 = vand.u32 2147483647, %v10482
  %vm10508 = vcmp.eq.f32.partialorder %v10507, 8.507059e+37
  %v10509 = vand.u32 %v10482, 2147483648
  %v10510 = vor.u32 1.1754944e-38, %v10509
  %v10511 = vsel %vm10508, %v10510, %v10506
  %v10512 = vmul.f32 %v10476, %v10511
  %10513 = vrot.lane.b32.xlu0 %v10416, 64
  %v10514 = vpop.permute.xlu0 %10513
  %10515 = vrot.lane.b32.xlu0 %v10419, 64
  %v10516 = vpop.permute.xlu0 %10515
  %v10519 = vsel %vm10463, %v10497, 0
  %v10522 = vsel %vm10463, %v10512, 0
  %v10524 = vsel %vm5845, %v10516, 0
  %10526 = vmatpush.msra.mxu0 0.0
  %10527 = vmatpush.msra.mxu0 0.0
  %10528 = vmatpush.msra.mxu0 0.0
  %10529 = vmatpush.msra.mxu0 0.0
  %10530 = vmatpush.msra.mxu0 0.0
  %10531 = vmatpush.msra.mxu0 0.0
  %10532 = vmatpush.msra.mxu0 0.0
  %10533 = vmatpush.msra.mxu0 0.0
  %10534 = vmatpush.msra.mxu0 0.0
  %10535 = vmatpush.msra.mxu0 0.0
  %10536 = vmatpush.msra.mxu0 0.0
  %10537 = vmatpush.msra.mxu0 0.0
  %10538 = vmatpush.msra.mxu0 0.0
  %10539 = vmatpush.msra.mxu0 0.0
  %10540 = vmatpush.msra.mxu0 %v10524
  %10541 = vmatpush.msra.mxu0 %v10514
  %10542 = vmatmul.f32.gmra.mxu0 %v10519
  %v10543 = vpop.f32.mrf.mxu0
  %v10544 = vadd.f32 0.0, %v10543
  %10545 = vmatmul.f32.gmra.mxu0 %v10522
  %v10546 = vpop.f32.mrf.mxu0
  %v10547 = vadd.f32 0.0, %v10546
  %10548 = vdwg.mxu0
  %10549 = vrot.lane.b32.xlu0 %v10416, 120
  %v10550 = vpop.permute.xlu0 %10549
  %10551 = vrot.lane.b32.xlu0 %v10419, 120
  %v10552 = vpop.permute.xlu0 %10551
  %10553 = vrot.lane.b32.xlu0 %v10416, 88
  %v10554 = vpop.permute.xlu0 %10553
  %10555 = vrot.lane.b32.xlu0 %v10419, 88
  %v10556 = vpop.permute.xlu0 %10555
  %v10557 = vsel %vm10427, %v10550, 0
  %v10559 = vsel %vm10427, %v10552, 0
  %v10561 = vsel %vm10427, %v10554, 0
  %v10563 = vsel %vm10427, %v10556, 0
  %10565 = vmatpush.xpose.msra.mxu0 0.0
  %10566 = vmatpush.xpose.msra.mxu0 0.0
  %10567 = vmatpush.xpose.msra.mxu0 0.0
  %10568 = vmatpush.xpose.msra.mxu0 0.0
  %10569 = vmatpush.xpose.msra.mxu0 0.0
  %10570 = vmatpush.xpose.msra.mxu0 0.0
  %10571 = vmatpush.xpose.msra.mxu0 0.0
  %10572 = vmatpush.xpose.msra.mxu0 0.0
  %10573 = vmatpush.xpose.msra.mxu0 0.0
  %10574 = vmatpush.xpose.msra.mxu0 0.0
  %10575 = vmatpush.xpose.msra.mxu0 0.0
  %10576 = vmatpush.xpose.msra.mxu0 0.0
  %10577 = vmatpush.xpose.msra.mxu0 0.0
  %10578 = vmatpush.xpose.msra.mxu0 0.0
  %10579 = vmatpush.xpose.msra.mxu0 %v10563
  %10580 = vmatpush.xpose.msra.mxu0 %v10561
  %10581 = vmatmul.f32.gmra.mxu0 %v10557
  %v10582 = vpop.f32.mrf.mxu0
  %v10583 = vadd.f32 0.0, %v10582
  %10584 = vmatmul.f32.gmra.mxu0 %v10559
  %v10585 = vpop.f32.mrf.mxu0
  %v10586 = vadd.f32 0.0, %v10585
  %10587 = vdwg.mxu0
  %v10588 = vmul.f32 %v10583, 0.35355338
  %v10589 = vmul.f32 %v10586, 0.35355338
  %v10590 = vadd.f32 %v10588, %v10382
  %v10591 = vadd.f32 %v10589, %v10383
  %v10592 = vsel %vm10463, %v10590, -inf
  %10593 = vmax.xlane.f32.xlu0 %v10592
  %v10594 = vpop.xlane.xlu0 %10593
  %v10595 = vsel %vm10467, %v10591, -inf
  %10596 = vmax.xlane.f32.xlu0 %v10595
  %v10597 = vpop.xlane.xlu0 %10596
  %v10598 = vsub.f32 %v10590, %v10594
  %v10599 = vsub.f32 %v10591, %v10597
  %v10600 = vmul.f32 %v10598, 1.442695
  %v10601 = vpow.pop %v10600
  %v10602 = vmul.f32 %v10599, 1.442695
  %v10603 = vpow.pop %v10602
  %v10604 = vsel %vm10463, %v10601, 0.0
  %10605 = vadd.xlane.f32.xlu0 %v10604
  %v10606 = vpop.xlane.xlu0 %10605
  %v10607 = vsel %vm10467, %v10603, 0.0
  %10608 = vadd.xlane.f32.xlu0 %v10607
  %v10609 = vpop.xlane.xlu0 %10608
  %v10610 = vrcp.pop %v10606
  %v10611 = vmul.f32 %v10606, %v10610
  %v10612 = vsub.f32 1.0, %v10611
  %v10613 = vmul.f32 %v10610, %v10612
  %v10614 = vadd.f32 %v10610, %v10613
  %vm10615 = vweird.f32 %v10606
  %vm10616 = vweird.f32 %v10610
  %vm10617 = vmor %vm10615, %vm10616
  %v10618 = vsel %vm10617, %v10610, %v10614
  %v10619 = vand.u32 2147483647, %v10606
  %vm10620 = vcmp.eq.f32.partialorder %v10619, 8.507059e+37
  %v10621 = vand.u32 %v10606, 2147483648
  %v10622 = vor.u32 1.1754944e-38, %v10621
  %v10623 = vsel %vm10620, %v10622, %v10618
  %v10624 = vmul.f32 %v10601, %v10623
  %v10625 = vrcp.pop %v10609
  %v10626 = vmul.f32 %v10609, %v10625
  %v10627 = vsub.f32 1.0, %v10626
  %v10628 = vmul.f32 %v10625, %v10627
  %v10629 = vadd.f32 %v10625, %v10628
  %vm10630 = vweird.f32 %v10609
  %vm10631 = vweird.f32 %v10625
  %vm10632 = vmor %vm10630, %vm10631
  %v10633 = vsel %vm10632, %v10625, %v10629
  %v10634 = vand.u32 2147483647, %v10609
  %vm10635 = vcmp.eq.f32.partialorder %v10634, 8.507059e+37
  %v10636 = vand.u32 %v10609, 2147483648
  %v10637 = vor.u32 1.1754944e-38, %v10636
  %v10638 = vsel %vm10635, %v10637, %v10633
  %v10639 = vmul.f32 %v10603, %v10638
  %10640 = vrot.lane.b32.xlu0 %v10416, 56
  %v10641 = vpop.permute.xlu0 %10640
  %10642 = vrot.lane.b32.xlu0 %v10419, 56
  %v10643 = vpop.permute.xlu0 %10642
  %v10646 = vsel %vm10463, %v10624, 0
  %v10649 = vsel %vm10463, %v10639, 0
  %v10651 = vsel %vm5845, %v10643, 0
  %10653 = vmatpush.msra.mxu0 0.0
  %10654 = vmatpush.msra.mxu0 0.0
  %10655 = vmatpush.msra.mxu0 0.0
  %10656 = vmatpush.msra.mxu0 0.0
  %10657 = vmatpush.msra.mxu0 0.0
  %10658 = vmatpush.msra.mxu0 0.0
  %10659 = vmatpush.msra.mxu0 0.0
  %10660 = vmatpush.msra.mxu0 0.0
  %10661 = vmatpush.msra.mxu0 0.0
  %10662 = vmatpush.msra.mxu0 0.0
  %10663 = vmatpush.msra.mxu0 0.0
  %10664 = vmatpush.msra.mxu0 0.0
  %10665 = vmatpush.msra.mxu0 0.0
  %10666 = vmatpush.msra.mxu0 0.0
  %10667 = vmatpush.msra.mxu0 %v10651
  %10668 = vmatpush.msra.mxu0 %v10641
  %10669 = vmatmul.f32.gmra.mxu0 %v10646
  %v10670 = vpop.f32.mrf.mxu0
  %v10671 = vadd.f32 0.0, %v10670
  %10672 = vmatmul.f32.gmra.mxu0 %v10649
  %v10673 = vpop.f32.mrf.mxu0
  %v10674 = vadd.f32 0.0, %v10673
  %10675 = vdwg.mxu0
  %10676 = vrot.lane.b32.xlu0 %v10416, 112
  %v10677 = vpop.permute.xlu0 %10676
  %10678 = vrot.lane.b32.xlu0 %v10419, 112
  %v10679 = vpop.permute.xlu0 %10678
  %10680 = vrot.lane.b32.xlu0 %v10416, 80
  %v10681 = vpop.permute.xlu0 %10680
  %10682 = vrot.lane.b32.xlu0 %v10419, 80
  %v10683 = vpop.permute.xlu0 %10682
  %v10684 = vsel %vm10427, %v10677, 0
  %v10686 = vsel %vm10427, %v10679, 0
  %v10688 = vsel %vm10427, %v10681, 0
  %v10690 = vsel %vm10427, %v10683, 0
  %10692 = vmatpush.xpose.msra.mxu0 0.0
  %10693 = vmatpush.xpose.msra.mxu0 0.0
  %10694 = vmatpush.xpose.msra.mxu0 0.0
  %10695 = vmatpush.xpose.msra.mxu0 0.0
  %10696 = vmatpush.xpose.msra.mxu0 0.0
  %10697 = vmatpush.xpose.msra.mxu0 0.0
  %10698 = vmatpush.xpose.msra.mxu0 0.0
  %10699 = vmatpush.xpose.msra.mxu0 0.0
  %10700 = vmatpush.xpose.msra.mxu0 0.0
  %10701 = vmatpush.xpose.msra.mxu0 0.0
  %10702 = vmatpush.xpose.msra.mxu0 0.0
  %10703 = vmatpush.xpose.msra.mxu0 0.0
  %10704 = vmatpush.xpose.msra.mxu0 0.0
  %10705 = vmatpush.xpose.msra.mxu0 0.0
  %10706 = vmatpush.xpose.msra.mxu0 %v10690
  %10707 = vmatpush.xpose.msra.mxu0 %v10688
  %10708 = vmatmul.f32.gmra.mxu0 %v10684
  %v10709 = vpop.f32.mrf.mxu0
  %v10710 = vadd.f32 0.0, %v10709
  %10711 = vmatmul.f32.gmra.mxu0 %v10686
  %v10712 = vpop.f32.mrf.mxu0
  %v10713 = vadd.f32 0.0, %v10712
  %10714 = vdwg.mxu0
  %v10715 = vmul.f32 %v10710, 0.35355338
  %v10716 = vmul.f32 %v10713, 0.35355338
  %v10717 = vadd.f32 %v10715, %v10382
  %v10718 = vadd.f32 %v10716, %v10383
  %v10719 = vsel %vm10463, %v10717, -inf
  %10720 = vmax.xlane.f32.xlu0 %v10719
  %v10721 = vpop.xlane.xlu0 %10720
  %v10722 = vsel %vm10467, %v10718, -inf
  %10723 = vmax.xlane.f32.xlu0 %v10722
  %v10724 = vpop.xlane.xlu0 %10723
  %v10725 = vsub.f32 %v10717, %v10721
  %v10726 = vsub.f32 %v10718, %v10724
  %v10727 = vmul.f32 %v10725, 1.442695
  %v10728 = vpow.pop %v10727
  %v10729 = vmul.f32 %v10726, 1.442695
  %v10730 = vpow.pop %v10729
  %v10731 = vsel %vm10463, %v10728, 0.0
  %10732 = vadd.xlane.f32.xlu0 %v10731
  %v10733 = vpop.xlane.xlu0 %10732
  %v10734 = vsel %vm10467, %v10730, 0.0
  %10735 = vadd.xlane.f32.xlu0 %v10734
  %v10736 = vpop.xlane.xlu0 %10735
  %v10737 = vrcp.pop %v10733
  %v10738 = vmul.f32 %v10733, %v10737
  %v10739 = vsub.f32 1.0, %v10738
  %v10740 = vmul.f32 %v10737, %v10739
  %v10741 = vadd.f32 %v10737, %v10740
  %vm10742 = vweird.f32 %v10733
  %vm10743 = vweird.f32 %v10737
  %vm10744 = vmor %vm10742, %vm10743
  %v10745 = vsel %vm10744, %v10737, %v10741
  %v10746 = vand.u32 2147483647, %v10733
  %vm10747 = vcmp.eq.f32.partialorder %v10746, 8.507059e+37
  %v10748 = vand.u32 %v10733, 2147483648
  %v10749 = vor.u32 1.1754944e-38, %v10748
  %v10750 = vsel %vm10747, %v10749, %v10745
  %v10751 = vmul.f32 %v10728, %v10750
  %v10752 = vrcp.pop %v10736
  %v10753 = vmul.f32 %v10736, %v10752
  %v10754 = vsub.f32 1.0, %v10753
  %v10755 = vmul.f32 %v10752, %v10754
  %v10756 = vadd.f32 %v10752, %v10755
  %vm10757 = vweird.f32 %v10736
  %vm10758 = vweird.f32 %v10752
  %vm10759 = vmor %vm10757, %vm10758
  %v10760 = vsel %vm10759, %v10752, %v10756
  %v10761 = vand.u32 2147483647, %v10736
  %vm10762 = vcmp.eq.f32.partialorder %v10761, 8.507059e+37
  %v10763 = vand.u32 %v10736, 2147483648
  %v10764 = vor.u32 1.1754944e-38, %v10763
  %v10765 = vsel %vm10762, %v10764, %v10760
  %v10766 = vmul.f32 %v10730, %v10765
  %10767 = vrot.lane.b32.xlu0 %v10416, 48
  %v10768 = vpop.permute.xlu0 %10767
  %10769 = vrot.lane.b32.xlu0 %v10419, 48
  %v10770 = vpop.permute.xlu0 %10769
  %v10773 = vsel %vm10463, %v10751, 0
  %v10776 = vsel %vm10463, %v10766, 0
  %v10778 = vsel %vm5845, %v10770, 0
  %10780 = vmatpush.msra.mxu0 0.0
  %10781 = vmatpush.msra.mxu0 0.0
  %10782 = vmatpush.msra.mxu0 0.0
  %10783 = vmatpush.msra.mxu0 0.0
  %10784 = vmatpush.msra.mxu0 0.0
  %10785 = vmatpush.msra.mxu0 0.0
  %10786 = vmatpush.msra.mxu0 0.0
  %10787 = vmatpush.msra.mxu0 0.0
  %10788 = vmatpush.msra.mxu0 0.0
  %10789 = vmatpush.msra.mxu0 0.0
  %10790 = vmatpush.msra.mxu0 0.0
  %10791 = vmatpush.msra.mxu0 0.0
  %10792 = vmatpush.msra.mxu0 0.0
  %10793 = vmatpush.msra.mxu0 0.0
  %10794 = vmatpush.msra.mxu0 %v10778
  %10795 = vmatpush.msra.mxu0 %v10768
  %10796 = vmatmul.f32.gmra.mxu0 %v10773
  %v10797 = vpop.f32.mrf.mxu0
  %v10798 = vadd.f32 0.0, %v10797
  %10799 = vmatmul.f32.gmra.mxu0 %v10776
  %v10800 = vpop.f32.mrf.mxu0
  %v10801 = vadd.f32 0.0, %v10800
  %10802 = vdwg.mxu0
  %10803 = vrot.lane.b32.xlu0 %v10416, 104
  %v10804 = vpop.permute.xlu0 %10803
  %10805 = vrot.lane.b32.xlu0 %v10419, 104
  %v10806 = vpop.permute.xlu0 %10805
  %10807 = vrot.lane.b32.xlu0 %v10416, 72
  %v10808 = vpop.permute.xlu0 %10807
  %10809 = vrot.lane.b32.xlu0 %v10419, 72
  %v10810 = vpop.permute.xlu0 %10809
  %v10811 = vsel %vm10427, %v10804, 0
  %v10813 = vsel %vm10427, %v10806, 0
  %v10815 = vsel %vm10427, %v10808, 0
  %v10817 = vsel %vm10427, %v10810, 0
  %10819 = vmatpush.xpose.msra.mxu0 0.0
  %10820 = vmatpush.xpose.msra.mxu0 0.0
  %10821 = vmatpush.xpose.msra.mxu0 0.0
  %10822 = vmatpush.xpose.msra.mxu0 0.0
  %10823 = vmatpush.xpose.msra.mxu0 0.0
  %10824 = vmatpush.xpose.msra.mxu0 0.0
  %10825 = vmatpush.xpose.msra.mxu0 0.0
  %10826 = vmatpush.xpose.msra.mxu0 0.0
  %10827 = vmatpush.xpose.msra.mxu0 0.0
  %10828 = vmatpush.xpose.msra.mxu0 0.0
  %10829 = vmatpush.xpose.msra.mxu0 0.0
  %10830 = vmatpush.xpose.msra.mxu0 0.0
  %10831 = vmatpush.xpose.msra.mxu0 0.0
  %10832 = vmatpush.xpose.msra.mxu0 0.0
  %10833 = vmatpush.xpose.msra.mxu0 %v10817
  %10834 = vmatpush.xpose.msra.mxu0 %v10815
  %10835 = vmatmul.f32.gmra.mxu0 %v10811
  %v10836 = vpop.f32.mrf.mxu0
  %v10837 = vadd.f32 0.0, %v10836
  %10838 = vmatmul.f32.gmra.mxu0 %v10813
  %v10839 = vpop.f32.mrf.mxu0
  %v10840 = vadd.f32 0.0, %v10839
  %10841 = vdwg.mxu0
  %v10842 = vmul.f32 %v10837, 0.35355338
  %v10843 = vmul.f32 %v10840, 0.35355338
  %v10844 = vadd.f32 %v10842, %v10382
  %v10845 = vadd.f32 %v10843, %v10383
  %v10846 = vsel %vm10463, %v10844, -inf
  %10847 = vmax.xlane.f32.xlu0 %v10846
  %v10848 = vpop.xlane.xlu0 %10847
  %v10849 = vsel %vm10467, %v10845, -inf
  %10850 = vmax.xlane.f32.xlu0 %v10849
  %v10851 = vpop.xlane.xlu0 %10850
  %v10852 = vsub.f32 %v10844, %v10848
  %v10853 = vsub.f32 %v10845, %v10851
  %v10854 = vmul.f32 %v10852, 1.442695
  %v10855 = vpow.pop %v10854
  %v10856 = vmul.f32 %v10853, 1.442695
  %v10857 = vpow.pop %v10856
  %v10858 = vsel %vm10463, %v10855, 0.0
  %10859 = vadd.xlane.f32.xlu0 %v10858
  %v10860 = vpop.xlane.xlu0 %10859
  %v10861 = vsel %vm10467, %v10857, 0.0
  %10862 = vadd.xlane.f32.xlu0 %v10861
  %v10863 = vpop.xlane.xlu0 %10862
  %v10864 = vrcp.pop %v10860
  %v10865 = vmul.f32 %v10860, %v10864
  %v10866 = vsub.f32 1.0, %v10865
  %v10867 = vmul.f32 %v10864, %v10866
  %v10868 = vadd.f32 %v10864, %v10867
  %vm10869 = vweird.f32 %v10860
  %vm10870 = vweird.f32 %v10864
  %vm10871 = vmor %vm10869, %vm10870
  %v10872 = vsel %vm10871, %v10864, %v10868
  %v10873 = vand.u32 2147483647, %v10860
  %vm10874 = vcmp.eq.f32.partialorder %v10873, 8.507059e+37
  %v10875 = vand.u32 %v10860, 2147483648
  %v10876 = vor.u32 1.1754944e-38, %v10875
  %v10877 = vsel %vm10874, %v10876, %v10872
  %v10878 = vmul.f32 %v10855, %v10877
  %v10879 = vrcp.pop %v10863
  %v10880 = vmul.f32 %v10863, %v10879
  %v10881 = vsub.f32 1.0, %v10880
  %v10882 = vmul.f32 %v10879, %v10881
  %v10883 = vadd.f32 %v10879, %v10882
  %vm10884 = vweird.f32 %v10863
  %vm10885 = vweird.f32 %v10879
  %vm10886 = vmor %vm10884, %vm10885
  %v10887 = vsel %vm10886, %v10879, %v10883
  %v10888 = vand.u32 2147483647, %v10863
  %vm10889 = vcmp.eq.f32.partialorder %v10888, 8.507059e+37
  %v10890 = vand.u32 %v10863, 2147483648
  %v10891 = vor.u32 1.1754944e-38, %v10890
  %v10892 = vsel %vm10889, %v10891, %v10887
  %v10893 = vmul.f32 %v10857, %v10892
  %10894 = vrot.lane.b32.xlu0 %v10416, 40
  %v10895 = vpop.permute.xlu0 %10894
  %10896 = vrot.lane.b32.xlu0 %v10419, 40
  %v10897 = vpop.permute.xlu0 %10896
  %v10900 = vsel %vm10463, %v10878, 0
  %v10903 = vsel %vm10463, %v10893, 0
  %v10905 = vsel %vm5845, %v10897, 0
  %10907 = vmatpush.msra.mxu0 0.0
  %10908 = vmatpush.msra.mxu0 0.0
  %10909 = vmatpush.msra.mxu0 0.0
  %10910 = vmatpush.msra.mxu0 0.0
  %10911 = vmatpush.msra.mxu0 0.0
  %10912 = vmatpush.msra.mxu0 0.0
  %10913 = vmatpush.msra.mxu0 0.0
  %10914 = vmatpush.msra.mxu0 0.0
  %10915 = vmatpush.msra.mxu0 0.0
  %10916 = vmatpush.msra.mxu0 0.0
  %10917 = vmatpush.msra.mxu0 0.0
  %10918 = vmatpush.msra.mxu0 0.0
  %10919 = vmatpush.msra.mxu0 0.0
  %10920 = vmatpush.msra.mxu0 0.0
  %10921 = vmatpush.msra.mxu0 %v10905
  %10922 = vmatpush.msra.mxu0 %v10895
  %10923 = vmatmul.f32.gmra.mxu0 %v10900
  %v10924 = vpop.f32.mrf.mxu0
  %v10925 = vadd.f32 0.0, %v10924
  %10926 = vmatmul.f32.gmra.mxu0 %v10903
  %v10927 = vpop.f32.mrf.mxu0
  %v10928 = vadd.f32 0.0, %v10927
  %10929 = vdwg.mxu0
  %10932 = vrot.lane.b32.xlu0 %v10671, 8
  %v10933 = vpop.permute.xlu0 %10932
  %10934 = vrot.lane.b32.xlu0 %v10674, 8
  %v10935 = vpop.permute.xlu0 %10934
  %10940 = vrot.lane.b32.xlu0 %v10798, 16
  %v10941 = vpop.permute.xlu0 %10940
  %10942 = vrot.lane.b32.xlu0 %v10801, 16
  %v10943 = vpop.permute.xlu0 %10942
  %10948 = vrot.lane.b32.xlu0 %v10925, 24
  %v10949 = vpop.permute.xlu0 %10948
  %10950 = vrot.lane.b32.xlu0 %v10928, 24
  %v10951 = vpop.permute.xlu0 %10950
  %v10954 = vsel %vm10427, %v10544, %v10933
  %v10955 = vsel %vm10427, %v10547, %v10935
  %vm10956 = vcmask 130048
  %v10957 = vsel %vm10956, %v10954, %v10941
  %v10958 = vsel %vm10956, %v10955, %v10943
  %vm10959 = vcmask 195584
  %v10960 = vsel %vm10959, %v10957, %v10949
  %v10961 = vsel %vm10959, %v10958, %v10951
  %v10962 = vld [vmem:[%s14] sm:$0xff]
  %v10963 = vld [vmem:[%s14 + $0x8] sm:$0xff]
  %v10964 = vld [vmem:[%s14 + $0x10] sm:$0xff]
  %v10965 = vld [vmem:[%s14 + $0x18] sm:$0xff]
  %v10966 = vld [vmem:[%s15] sm:$0x1]
  %v10968 = vperm.slane %v10966, 0
  %v10971 = vsel %vm949, %v10960, 0
  %v10974 = vsel %vm949, %v10961, 0
  %10976 = vmatpush.msra.mxu0 0.0
  %10977 = vmatpush.msra.mxu0 0.0
  %10978 = vmatpush.msra.mxu0 0.0
  %10979 = vmatpush.msra.mxu0 0.0
  %10980 = vmatpush.msra.mxu0 0.0
  %10981 = vmatpush.msra.mxu0 0.0
  %10982 = vmatpush.msra.mxu0 0.0
  %10983 = vmatpush.msra.mxu0 0.0
  %10984 = vmatpush.msra.mxu0 0.0
  %10985 = vmatpush.msra.mxu0 0.0
  %10986 = vmatpush.msra.mxu0 0.0
  %10987 = vmatpush.msra.mxu0 0.0
  %10988 = vmatpush.msra.mxu0 %v10965
  %10989 = vmatpush.msra.mxu0 %v10964
  %10990 = vmatpush.msra.mxu0 %v10963
  %10991 = vmatpush.msra.mxu0 %v10962
  %10992 = vmatmul.f32.gmra.mxu0 %v10971
  %v10993 = vpop.f32.mrf.mxu0
  %v10994 = vadd.f32 %v10968, %v10993
  %10995 = vmatmul.f32.gmra.mxu0 %v10974
  %v10996 = vpop.f32.mrf.mxu0
  %v10997 = vadd.f32 %v10968, %v10996
  %10998 = vdwg.mxu0
  %v10999 = vadd.f32 %v10380, %v10994
  %v11000 = vadd.f32 %v10381, %v10997
  %v11001 = vsel %vm949, %v10999, 0.0
  %11002 = vadd.xlane.f32.xlu0 %v11001
  %v11003 = vpop.xlane.xlu0 %11002
  %vm11004 = vcmask 257024
  %v11005 = vsel %vm11004, %v11000, 0.0
  %11006 = vadd.xlane.f32.xlu0 %v11005
  %v11007 = vpop.xlane.xlu0 %11006
  %v11008 = vrcp.pop 32.0
  %v11009 = vmul.f32 32.0, %v11008
  %v11010 = vsub.f32 1.0, %v11009
  %v11011 = vmul.f32 %v11008, %v11010
  %v11012 = vadd.f32 %v11008, %v11011
  %vm11013 = vweird.f32 %v11008
  %v11014 = vsel %vm11013, %v11008, %v11012
  %v11015 = vmul.f32 %v11003, %v11014
  %v11016 = vmul.f32 %v11007, %v11014
  %v11017 = vsub.f32 %v10999, %v11015
  %v11018 = vsub.f32 %v11000, %v11016
  %v11019 = vmul.f32 %v11017, %v11017
  %v11020 = vmul.f32 %v11018, %v11018
  %v11021 = vsel %vm949, %v11019, 0.0
  %11022 = vadd.xlane.f32.xlu0 %v11021
  %v11023 = vpop.xlane.xlu0 %11022
  %v11024 = vsel %vm11004, %v11020, 0.0
  %11025 = vadd.xlane.f32.xlu0 %v11024
  %v11026 = vpop.xlane.xlu0 %11025
  %v11027 = vmul.f32 %v11023, %v11014
  %v11028 = vmul.f32 %v11026, %v11014
  %v11029 = vadd.f32 %v11027, 1e-05
  %v11030 = vadd.f32 %v11028, 1e-05
  %v11031 = vrsqrt.pop %v11029
  %v11032 = vmul.f32 %v11031, %v11029
  %v11033 = vmul.f32 %v11032, %v11031
  %v11034 = vmul.f32 0.5, %v11033
  %v11035 = vsub.f32 1.5, %v11034
  %v11036 = vmul.f32 %v11031, %v11035
  %vm11037 = vweird.f32 %v11029
  %vm11038 = vweird.f32 %v11031
  %vm11039 = vmor %vm11037, %vm11038
  %v11040 = vsel %vm11039, %v11031, %v11036
  %v11041 = vrsqrt.pop %v11030
  %v11042 = vmul.f32 %v11041, %v11030
  %v11043 = vmul.f32 %v11042, %v11041
  %v11044 = vmul.f32 0.5, %v11043
  %v11045 = vsub.f32 1.5, %v11044
  %v11046 = vmul.f32 %v11041, %v11045
  %vm11047 = vweird.f32 %v11030
  %vm11048 = vweird.f32 %v11041
  %vm11049 = vmor %vm11047, %vm11048
  %v11050 = vsel %vm11049, %v11041, %v11046
  %v11051 = vmul.f32 %v11017, %v11040
  %v11052 = vmul.f32 %v11018, %v11050
  %v11053 = vld [vmem:[%s20] sm:$0x1]
  %v11055 = vperm.slane %v11053, 0
  %v11057 = vmul.f32 %v11051, %v11055
  %v11058 = vmul.f32 %v11052, %v11055
  %v11059 = vld [vmem:[%s21] sm:$0x1]
  %v11061 = vperm.slane %v11059, 0
  %v11063 = vadd.f32 %v11057, %v11061
  %v11064 = vadd.f32 %v11058, %v11061
  %v11065 = vld [vmem:[%s16] sm:$0xff]
  %v11066 = vld [vmem:[%s16 + $0x8] sm:$0xff]
  %v11067 = vld [vmem:[%s16 + $0x10] sm:$0xff]
  %v11068 = vld [vmem:[%s16 + $0x18] sm:$0xff]
  %v11069 = vld [vmem:[%s17] sm:$0x1]
  %v11071 = vperm.slane %v11069, 0
  %v11074 = vsel %vm949, %v11063, 0
  %v11077 = vsel %vm949, %v11064, 0
  %11079 = vmatpush.msra.mxu0 0.0
  %11080 = vmatpush.msra.mxu0 0.0
  %11081 = vmatpush.msra.mxu0 0.0
  %11082 = vmatpush.msra.mxu0 0.0
  %11083 = vmatpush.msra.mxu0 0.0
  %11084 = vmatpush.msra.mxu0 0.0
  %11085 = vmatpush.msra.mxu0 0.0
  %11086 = vmatpush.msra.mxu0 0.0
  %11087 = vmatpush.msra.mxu0 0.0
  %11088 = vmatpush.msra.mxu0 0.0
  %11089 = vmatpush.msra.mxu0 0.0
  %11090 = vmatpush.msra.mxu0 0.0
  %11091 = vmatpush.msra.mxu0 %v11068
  %11092 = vmatpush.msra.mxu0 %v11067
  %11093 = vmatpush.msra.mxu0 %v11066
  %11094 = vmatpush.msra.mxu0 %v11065
  %11095 = vmatmul.f32.gmra.mxu0 %v11074
  %v11096 = vpop.f32.mrf.mxu0
  %v11097 = vadd.f32 %v11071, %v11096
  %11098 = vmatmul.f32.gmra.mxu0 %v11077
  %v11099 = vpop.f32.mrf.mxu0
  %v11100 = vadd.f32 %v11071, %v11099
  %11101 = vdwg.mxu0
  %v11102 = vmax.f32 %v11097, 0.0
  %v11103 = vmax.f32 %v11100, 0.0
  %v11104 = vld [vmem:[%s18] sm:$0xff]
  %v11105 = vld [vmem:[%s18 + $0x8] sm:$0xff]
  %v11106 = vld [vmem:[%s18 + $0x10] sm:$0xff]
  %v11107 = vld [vmem:[%s18 + $0x18] sm:$0xff]
  %v11108 = vld [vmem:[%s18 + $0x20] sm:$0xff]
  %v11109 = vld [vmem:[%s18 + $0x28] sm:$0xff]
  %v11110 = vld [vmem:[%s18 + $0x30] sm:$0xff]
  %v11111 = vld [vmem:[%s18 + $0x38] sm:$0xff]
  %v11112 = vld [vmem:[%s19] sm:$0x1]
  %v11114 = vperm.slane %v11112, 0
  %vm11116 = vcmask 523264
  %v11118 = vsel %vm11116, %v11102, 0
  %v11121 = vsel %vm11116, %v11103, 0
  %11123 = vmatpush.msra.mxu0 0.0
  %11124 = vmatpush.msra.mxu0 0.0
  %11125 = vmatpush.msra.mxu0 0.0
  %11126 = vmatpush.msra.mxu0 0.0
  %11127 = vmatpush.msra.mxu0 0.0
  %11128 = vmatpush.msra.mxu0 0.0
  %11129 = vmatpush.msra.mxu0 0.0
  %11130 = vmatpush.msra.mxu0 0.0
  %11131 = vmatpush.msra.mxu0 %v11111
  %11132 = vmatpush.msra.mxu0 %v11110
  %11133 = vmatpush.msra.mxu0 %v11109
  %11134 = vmatpush.msra.mxu0 %v11108
  %11135 = vmatpush.msra.mxu0 %v11107
  %11136 = vmatpush.msra.mxu0 %v11106
  %11137 = vmatpush.msra.mxu0 %v11105
  %11138 = vmatpush.msra.mxu0 %v11104
  %11139 = vmatmul.f32.gmra.mxu0 %v11118
  %v11140 = vpop.f32.mrf.mxu0
  %v11141 = vadd.f32 %v11114, %v11140
  %11142 = vmatmul.f32.gmra.mxu0 %v11121
  %v11143 = vpop.f32.mrf.mxu0
  %v11144 = vadd.f32 %v11114, %v11143
  %11145 = vdwg.mxu0
  %v11146 = vadd.f32 %v11063, %v11141
  %v11147 = vadd.f32 %v11064, %v11144
  %v11148 = vsel %vm949, %v11146, 0.0
  %11149 = vadd.xlane.f32.xlu0 %v11148
  %v11150 = vpop.xlane.xlu0 %11149
  %v11151 = vsel %vm11004, %v11147, 0.0
  %11152 = vadd.xlane.f32.xlu0 %v11151
  %v11153 = vpop.xlane.xlu0 %11152
  %v11154 = vmul.f32 %v11150, %v11014
  %v11155 = vmul.f32 %v11153, %v11014
  %v11156 = vsub.f32 %v11146, %v11154
  %v11157 = vsub.f32 %v11147, %v11155
  %v11158 = vmul.f32 %v11156, %v11156
  %v11159 = vmul.f32 %v11157, %v11157
  %v11160 = vsel %vm949, %v11158, 0.0
  %11161 = vadd.xlane.f32.xlu0 %v11160
  %v11162 = vpop.xlane.xlu0 %11161
  %v11163 = vsel %vm11004, %v11159, 0.0
  %11164 = vadd.xlane.f32.xlu0 %v11163
  %v11165 = vpop.xlane.xlu0 %11164
  %v11166 = vmul.f32 %v11162, %v11014
  %v11167 = vmul.f32 %v11165, %v11014
  %v11168 = vadd.f32 %v11166, 1e-05
  %v11169 = vadd.f32 %v11167, 1e-05
  %v11170 = vrsqrt.pop %v11168
  %v11171 = vmul.f32 %v11170, %v11168
  %v11172 = vmul.f32 %v11171, %v11170
  %v11173 = vmul.f32 0.5, %v11172
  %v11174 = vsub.f32 1.5, %v11173
  %v11175 = vmul.f32 %v11170, %v11174
  %vm11176 = vweird.f32 %v11168
  %vm11177 = vweird.f32 %v11170
  %vm11178 = vmor %vm11176, %vm11177
  %v11179 = vsel %vm11178, %v11170, %v11175
  %v11180 = vrsqrt.pop %v11169
  %v11181 = vmul.f32 %v11180, %v11169
  %v11182 = vmul.f32 %v11181, %v11180
  %v11183 = vmul.f32 0.5, %v11182
  %v11184 = vsub.f32 1.5, %v11183
  %v11185 = vmul.f32 %v11180, %v11184
  %vm11186 = vweird.f32 %v11169
  %vm11187 = vweird.f32 %v11180
  %vm11188 = vmor %vm11186, %vm11187
  %v11189 = vsel %vm11188, %v11180, %v11185
  %v11190 = vmul.f32 %v11156, %v11179
  %v11191 = vmul.f32 %v11157, %v11189
  %v11192 = vld [vmem:[%s22] sm:$0x1]
  %v11194 = vperm.slane %v11192, 0
  %v11196 = vmul.f32 %v11190, %v11194
  %v11197 = vmul.f32 %v11191, %v11194
  %v11198 = vld [vmem:[%s23] sm:$0x1]
  %v11200 = vperm.slane %v11198, 0
  %v11202 = vadd.f32 %v11196, %v11200
  %v11203 = vadd.f32 %v11197, %v11200
  %s11204 = scalar_lea.vmem %s12, 32
  %v11205 = vld [vmem:[%s11204] sm:$0xff]
  %v11206 = vld [vmem:[%s11204 + $0x8] sm:$0xff]
  %v11207 = vld [vmem:[%s11204 + $0x10] sm:$0xff]
  %v11208 = vld [vmem:[%s11204 + $0x18] sm:$0xff]
  %s11209 = scalar_lea.vmem %s13, 1
  %v11210 = vld [vmem:[%s11209] sm:$0x1]
  %v11212 = vperm.slane %v11210, 0
  %v11215 = vsel %vm949, %v11202, 0
  %v11218 = vsel %vm949, %v11203, 0
  %11220 = vmatpush.msra.mxu0 0.0
  %11221 = vmatpush.msra.mxu0 0.0
  %11222 = vmatpush.msra.mxu0 0.0
  %11223 = vmatpush.msra.mxu0 0.0
  %11224 = vmatpush.msra.mxu0 0.0
  %11225 = vmatpush.msra.mxu0 0.0
  %11226 = vmatpush.msra.mxu0 0.0
  %11227 = vmatpush.msra.mxu0 0.0
  %11228 = vmatpush.msra.mxu0 0.0
  %11229 = vmatpush.msra.mxu0 0.0
  %11230 = vmatpush.msra.mxu0 0.0
  %11231 = vmatpush.msra.mxu0 0.0
  %11232 = vmatpush.msra.mxu0 %v11208
  %11233 = vmatpush.msra.mxu0 %v11207
  %11234 = vmatpush.msra.mxu0 %v11206
  %11235 = vmatpush.msra.mxu0 %v11205
  %11236 = vmatmul.f32.gmra.mxu0 %v11215
  %v11237 = vpop.f32.mrf.mxu0
  %v11238 = vadd.f32 %v11212, %v11237
  %11239 = vmatmul.f32.gmra.mxu0 %v11218
  %v11240 = vpop.f32.mrf.mxu0
  %v11241 = vadd.f32 %v11212, %v11240
  %11242 = vdwg.mxu0
  %11245 = vrot.lane.b32.xlu0 %v11238, 96
  %v11246 = vpop.permute.xlu0 %11245
  %11247 = vrot.lane.b32.xlu0 %v11241, 96
  %v11248 = vpop.permute.xlu0 %11247
  %v11249 = vsel %vm10427, %v11238, 0
  %v11251 = vsel %vm10427, %v11241, 0
  %v11253 = vsel %vm10427, %v11246, 0
  %v11255 = vsel %vm10427, %v11248, 0
  %11257 = vmatpush.xpose.msra.mxu0 0.0
  %11258 = vmatpush.xpose.msra.mxu0 0.0
  %11259 = vmatpush.xpose.msra.mxu0 0.0
  %11260 = vmatpush.xpose.msra.mxu0 0.0
  %11261 = vmatpush.xpose.msra.mxu0 0.0
  %11262 = vmatpush.xpose.msra.mxu0 0.0
  %11263 = vmatpush.xpose.msra.mxu0 0.0
  %11264 = vmatpush.xpose.msra.mxu0 0.0
  %11265 = vmatpush.xpose.msra.mxu0 0.0
  %11266 = vmatpush.xpose.msra.mxu0 0.0
  %11267 = vmatpush.xpose.msra.mxu0 0.0
  %11268 = vmatpush.xpose.msra.mxu0 0.0
  %11269 = vmatpush.xpose.msra.mxu0 0.0
  %11270 = vmatpush.xpose.msra.mxu0 0.0
  %11271 = vmatpush.xpose.msra.mxu0 %v11255
  %11272 = vmatpush.xpose.msra.mxu0 %v11253
  %11273 = vmatmul.f32.gmra.mxu0 %v11249
  %v11274 = vpop.f32.mrf.mxu0
  %v11275 = vadd.f32 0.0, %v11274
  %11276 = vmatmul.f32.gmra.mxu0 %v11251
  %v11277 = vpop.f32.mrf.mxu0
  %v11278 = vadd.f32 0.0, %v11277
  %11279 = vdwg.mxu0
  %v11280 = vmul.f32 %v11275, 0.35355338
  %v11281 = vmul.f32 %v11278, 0.35355338
  %v11282 = vadd.f32 %v11280, %v10382
  %v11283 = vadd.f32 %v11281, %v10383
  %v11284 = vsel %vm10463, %v11282, -inf
  %11285 = vmax.xlane.f32.xlu0 %v11284
  %v11286 = vpop.xlane.xlu0 %11285
  %v11287 = vsel %vm10467, %v11283, -inf
  %11288 = vmax.xlane.f32.xlu0 %v11287
  %v11289 = vpop.xlane.xlu0 %11288
  %v11290 = vsub.f32 %v11282, %v11286
  %v11291 = vsub.f32 %v11283, %v11289
  %v11292 = vmul.f32 %v11290, 1.442695
  %v11293 = vpow.pop %v11292
  %v11294 = vmul.f32 %v11291, 1.442695
  %v11295 = vpow.pop %v11294
  %v11296 = vsel %vm10463, %v11293, 0.0
  %11297 = vadd.xlane.f32.xlu0 %v11296
  %v11298 = vpop.xlane.xlu0 %11297
  %v11299 = vsel %vm10467, %v11295, 0.0
  %11300 = vadd.xlane.f32.xlu0 %v11299
  %v11301 = vpop.xlane.xlu0 %11300
  %v11302 = vrcp.pop %v11298
  %v11303 = vmul.f32 %v11298, %v11302
  %v11304 = vsub.f32 1.0, %v11303
  %v11305 = vmul.f32 %v11302, %v11304
  %v11306 = vadd.f32 %v11302, %v11305
  %vm11307 = vweird.f32 %v11298
  %vm11308 = vweird.f32 %v11302
  %vm11309 = vmor %vm11307, %vm11308
  %v11310 = vsel %vm11309, %v11302, %v11306
  %v11311 = vand.u32 2147483647, %v11298
  %vm11312 = vcmp.eq.f32.partialorder %v11311, 8.507059e+37
  %v11313 = vand.u32 %v11298, 2147483648
  %v11314 = vor.u32 1.1754944e-38, %v11313
  %v11315 = vsel %vm11312, %v11314, %v11310
  %v11316 = vmul.f32 %v11293, %v11315
  %v11317 = vrcp.pop %v11301
  %v11318 = vmul.f32 %v11301, %v11317
  %v11319 = vsub.f32 1.0, %v11318
  %v11320 = vmul.f32 %v11317, %v11319
  %v11321 = vadd.f32 %v11317, %v11320
  %vm11322 = vweird.f32 %v11301
  %vm11323 = vweird.f32 %v11317
  %vm11324 = vmor %vm11322, %vm11323
  %v11325 = vsel %vm11324, %v11317, %v11321
  %v11326 = vand.u32 2147483647, %v11301
  %vm11327 = vcmp.eq.f32.partialorder %v11326, 8.507059e+37
  %v11328 = vand.u32 %v11301, 2147483648
  %v11329 = vor.u32 1.1754944e-38, %v11328
  %v11330 = vsel %vm11327, %v11329, %v11325
  %v11331 = vmul.f32 %v11295, %v11330
  %11332 = vrot.lane.b32.xlu0 %v11238, 64
  %v11333 = vpop.permute.xlu0 %11332
  %11334 = vrot.lane.b32.xlu0 %v11241, 64
  %v11335 = vpop.permute.xlu0 %11334
  %v11338 = vsel %vm10463, %v11316, 0
  %v11341 = vsel %vm10463, %v11331, 0
  %v11343 = vsel %vm5845, %v11335, 0
  %11345 = vmatpush.msra.mxu0 0.0
  %11346 = vmatpush.msra.mxu0 0.0
  %11347 = vmatpush.msra.mxu0 0.0
  %11348 = vmatpush.msra.mxu0 0.0
  %11349 = vmatpush.msra.mxu0 0.0
  %11350 = vmatpush.msra.mxu0 0.0
  %11351 = vmatpush.msra.mxu0 0.0
  %11352 = vmatpush.msra.mxu0 0.0
  %11353 = vmatpush.msra.mxu0 0.0
  %11354 = vmatpush.msra.mxu0 0.0
  %11355 = vmatpush.msra.mxu0 0.0
  %11356 = vmatpush.msra.mxu0 0.0
  %11357 = vmatpush.msra.mxu0 0.0
  %11358 = vmatpush.msra.mxu0 0.0
  %11359 = vmatpush.msra.mxu0 %v11343
  %11360 = vmatpush.msra.mxu0 %v11333
  %11361 = vmatmul.f32.gmra.mxu0 %v11338
  %v11362 = vpop.f32.mrf.mxu0
  %v11363 = vadd.f32 0.0, %v11362
  %11364 = vmatmul.f32.gmra.mxu0 %v11341
  %v11365 = vpop.f32.mrf.mxu0
  %v11366 = vadd.f32 0.0, %v11365
  %11367 = vdwg.mxu0
  %11368 = vrot.lane.b32.xlu0 %v11238, 120
  %v11369 = vpop.permute.xlu0 %11368
  %11370 = vrot.lane.b32.xlu0 %v11241, 120
  %v11371 = vpop.permute.xlu0 %11370
  %11372 = vrot.lane.b32.xlu0 %v11238, 88
  %v11373 = vpop.permute.xlu0 %11372
  %11374 = vrot.lane.b32.xlu0 %v11241, 88
  %v11375 = vpop.permute.xlu0 %11374
  %v11376 = vsel %vm10427, %v11369, 0
  %v11378 = vsel %vm10427, %v11371, 0
  %v11380 = vsel %vm10427, %v11373, 0
  %v11382 = vsel %vm10427, %v11375, 0
  %11384 = vmatpush.xpose.msra.mxu0 0.0
  %11385 = vmatpush.xpose.msra.mxu0 0.0
  %11386 = vmatpush.xpose.msra.mxu0 0.0
  %11387 = vmatpush.xpose.msra.mxu0 0.0
  %11388 = vmatpush.xpose.msra.mxu0 0.0
  %11389 = vmatpush.xpose.msra.mxu0 0.0
  %11390 = vmatpush.xpose.msra.mxu0 0.0
  %11391 = vmatpush.xpose.msra.mxu0 0.0
  %11392 = vmatpush.xpose.msra.mxu0 0.0
  %11393 = vmatpush.xpose.msra.mxu0 0.0
  %11394 = vmatpush.xpose.msra.mxu0 0.0
  %11395 = vmatpush.xpose.msra.mxu0 0.0
  %11396 = vmatpush.xpose.msra.mxu0 0.0
  %11397 = vmatpush.xpose.msra.mxu0 0.0
  %11398 = vmatpush.xpose.msra.mxu0 %v11382
  %11399 = vmatpush.xpose.msra.mxu0 %v11380
  %11400 = vmatmul.f32.gmra.mxu0 %v11376
  %v11401 = vpop.f32.mrf.mxu0
  %v11402 = vadd.f32 0.0, %v11401
  %11403 = vmatmul.f32.gmra.mxu0 %v11378
  %v11404 = vpop.f32.mrf.mxu0
  %v11405 = vadd.f32 0.0, %v11404
  %11406 = vdwg.mxu0
  %v11407 = vmul.f32 %v11402, 0.35355338
  %v11408 = vmul.f32 %v11405, 0.35355338
  %v11409 = vadd.f32 %v11407, %v10382
  %v11410 = vadd.f32 %v11408, %v10383
  %v11411 = vsel %vm10463, %v11409, -inf
  %11412 = vmax.xlane.f32.xlu0 %v11411
  %v11413 = vpop.xlane.xlu0 %11412
  %v11414 = vsel %vm10467, %v11410, -inf
  %11415 = vmax.xlane.f32.xlu0 %v11414
  %v11416 = vpop.xlane.xlu0 %11415
  %v11417 = vsub.f32 %v11409, %v11413
  %v11418 = vsub.f32 %v11410, %v11416
  %v11419 = vmul.f32 %v11417, 1.442695
  %v11420 = vpow.pop %v11419
  %v11421 = vmul.f32 %v11418, 1.442695
  %v11422 = vpow.pop %v11421
  %v11423 = vsel %vm10463, %v11420, 0.0
  %11424 = vadd.xlane.f32.xlu0 %v11423
  %v11425 = vpop.xlane.xlu0 %11424
  %v11426 = vsel %vm10467, %v11422, 0.0
  %11427 = vadd.xlane.f32.xlu0 %v11426
  %v11428 = vpop.xlane.xlu0 %11427
  %v11429 = vrcp.pop %v11425
  %v11430 = vmul.f32 %v11425, %v11429
  %v11431 = vsub.f32 1.0, %v11430
  %v11432 = vmul.f32 %v11429, %v11431
  %v11433 = vadd.f32 %v11429, %v11432
  %vm11434 = vweird.f32 %v11425
  %vm11435 = vweird.f32 %v11429
  %vm11436 = vmor %vm11434, %vm11435
  %v11437 = vsel %vm11436, %v11429, %v11433
  %v11438 = vand.u32 2147483647, %v11425
  %vm11439 = vcmp.eq.f32.partialorder %v11438, 8.507059e+37
  %v11440 = vand.u32 %v11425, 2147483648
  %v11441 = vor.u32 1.1754944e-38, %v11440
  %v11442 = vsel %vm11439, %v11441, %v11437
  %v11443 = vmul.f32 %v11420, %v11442
  %v11444 = vrcp.pop %v11428
  %v11445 = vmul.f32 %v11428, %v11444
  %v11446 = vsub.f32 1.0, %v11445
  %v11447 = vmul.f32 %v11444, %v11446
  %v11448 = vadd.f32 %v11444, %v11447
  %vm11449 = vweird.f32 %v11428
  %vm11450 = vweird.f32 %v11444
  %vm11451 = vmor %vm11449, %vm11450
  %v11452 = vsel %vm11451, %v11444, %v11448
  %v11453 = vand.u32 2147483647, %v11428
  %vm11454 = vcmp.eq.f32.partialorder %v11453, 8.507059e+37
  %v11455 = vand.u32 %v11428, 2147483648
  %v11456 = vor.u32 1.1754944e-38, %v11455
  %v11457 = vsel %vm11454, %v11456, %v11452
  %v11458 = vmul.f32 %v11422, %v11457
  %11459 = vrot.lane.b32.xlu0 %v11238, 56
  %v11460 = vpop.permute.xlu0 %11459
  %11461 = vrot.lane.b32.xlu0 %v11241, 56
  %v11462 = vpop.permute.xlu0 %11461
  %v11465 = vsel %vm10463, %v11443, 0
  %v11468 = vsel %vm10463, %v11458, 0
  %v11470 = vsel %vm5845, %v11462, 0
  %11472 = vmatpush.msra.mxu0 0.0
  %11473 = vmatpush.msra.mxu0 0.0
  %11474 = vmatpush.msra.mxu0 0.0
  %11475 = vmatpush.msra.mxu0 0.0
  %11476 = vmatpush.msra.mxu0 0.0
  %11477 = vmatpush.msra.mxu0 0.0
  %11478 = vmatpush.msra.mxu0 0.0
  %11479 = vmatpush.msra.mxu0 0.0
  %11480 = vmatpush.msra.mxu0 0.0
  %11481 = vmatpush.msra.mxu0 0.0
  %11482 = vmatpush.msra.mxu0 0.0
  %11483 = vmatpush.msra.mxu0 0.0
  %11484 = vmatpush.msra.mxu0 0.0
  %11485 = vmatpush.msra.mxu0 0.0
  %11486 = vmatpush.msra.mxu0 %v11470
  %11487 = vmatpush.msra.mxu0 %v11460
  %11488 = vmatmul.f32.gmra.mxu0 %v11465
  %v11489 = vpop.f32.mrf.mxu0
  %v11490 = vadd.f32 0.0, %v11489
  %11491 = vmatmul.f32.gmra.mxu0 %v11468
  %v11492 = vpop.f32.mrf.mxu0
  %v11493 = vadd.f32 0.0, %v11492
  %11494 = vdwg.mxu0
  %11495 = vrot.lane.b32.xlu0 %v11238, 112
  %v11496 = vpop.permute.xlu0 %11495
  %11497 = vrot.lane.b32.xlu0 %v11241, 112
  %v11498 = vpop.permute.xlu0 %11497
  %11499 = vrot.lane.b32.xlu0 %v11238, 80
  %v11500 = vpop.permute.xlu0 %11499
  %11501 = vrot.lane.b32.xlu0 %v11241, 80
  %v11502 = vpop.permute.xlu0 %11501
  %v11503 = vsel %vm10427, %v11496, 0
  %v11505 = vsel %vm10427, %v11498, 0
  %v11507 = vsel %vm10427, %v11500, 0
  %v11509 = vsel %vm10427, %v11502, 0
  %11511 = vmatpush.xpose.msra.mxu0 0.0
  %11512 = vmatpush.xpose.msra.mxu0 0.0
  %11513 = vmatpush.xpose.msra.mxu0 0.0
  %11514 = vmatpush.xpose.msra.mxu0 0.0
  %11515 = vmatpush.xpose.msra.mxu0 0.0
  %11516 = vmatpush.xpose.msra.mxu0 0.0
  %11517 = vmatpush.xpose.msra.mxu0 0.0
  %11518 = vmatpush.xpose.msra.mxu0 0.0
  %11519 = vmatpush.xpose.msra.mxu0 0.0
  %11520 = vmatpush.xpose.msra.mxu0 0.0
  %11521 = vmatpush.xpose.msra.mxu0 0.0
  %11522 = vmatpush.xpose.msra.mxu0 0.0
  %11523 = vmatpush.xpose.msra.mxu0 0.0
  %11524 = vmatpush.xpose.msra.mxu0 0.0
  %11525 = vmatpush.xpose.msra.mxu0 %v11509
  %11526 = vmatpush.xpose.msra.mxu0 %v11507
  %11527 = vmatmul.f32.gmra.mxu0 %v11503
  %v11528 = vpop.f32.mrf.mxu0
  %v11529 = vadd.f32 0.0, %v11528
  %11530 = vmatmul.f32.gmra.mxu0 %v11505
  %v11531 = vpop.f32.mrf.mxu0
  %v11532 = vadd.f32 0.0, %v11531
  %11533 = vdwg.mxu0
  %v11534 = vmul.f32 %v11529, 0.35355338
  %v11535 = vmul.f32 %v11532, 0.35355338
  %v11536 = vadd.f32 %v11534, %v10382
  %v11537 = vadd.f32 %v11535, %v10383
  %v11538 = vsel %vm10463, %v11536, -inf
  %11539 = vmax.xlane.f32.xlu0 %v11538
  %v11540 = vpop.xlane.xlu0 %11539
  %v11541 = vsel %vm10467, %v11537, -inf
  %11542 = vmax.xlane.f32.xlu0 %v11541
  %v11543 = vpop.xlane.xlu0 %11542
  %v11544 = vsub.f32 %v11536, %v11540
  %v11545 = vsub.f32 %v11537, %v11543
  %v11546 = vmul.f32 %v11544, 1.442695
  %v11547 = vpow.pop %v11546
  %v11548 = vmul.f32 %v11545, 1.442695
  %v11549 = vpow.pop %v11548
  %v11550 = vsel %vm10463, %v11547, 0.0
  %11551 = vadd.xlane.f32.xlu0 %v11550
  %v11552 = vpop.xlane.xlu0 %11551
  %v11553 = vsel %vm10467, %v11549, 0.0
  %11554 = vadd.xlane.f32.xlu0 %v11553
  %v11555 = vpop.xlane.xlu0 %11554
  %v11556 = vrcp.pop %v11552
  %v11557 = vmul.f32 %v11552, %v11556
  %v11558 = vsub.f32 1.0, %v11557
  %v11559 = vmul.f32 %v11556, %v11558
  %v11560 = vadd.f32 %v11556, %v11559
  %vm11561 = vweird.f32 %v11552
  %vm11562 = vweird.f32 %v11556
  %vm11563 = vmor %vm11561, %vm11562
  %v11564 = vsel %vm11563, %v11556, %v11560
  %v11565 = vand.u32 2147483647, %v11552
  %vm11566 = vcmp.eq.f32.partialorder %v11565, 8.507059e+37
  %v11567 = vand.u32 %v11552, 2147483648
  %v11568 = vor.u32 1.1754944e-38, %v11567
  %v11569 = vsel %vm11566, %v11568, %v11564
  %v11570 = vmul.f32 %v11547, %v11569
  %v11571 = vrcp.pop %v11555
  %v11572 = vmul.f32 %v11555, %v11571
  %v11573 = vsub.f32 1.0, %v11572
  %v11574 = vmul.f32 %v11571, %v11573
  %v11575 = vadd.f32 %v11571, %v11574
  %vm11576 = vweird.f32 %v11555
  %vm11577 = vweird.f32 %v11571
  %vm11578 = vmor %vm11576, %vm11577
  %v11579 = vsel %vm11578, %v11571, %v11575
  %v11580 = vand.u32 2147483647, %v11555
  %vm11581 = vcmp.eq.f32.partialorder %v11580, 8.507059e+37
  %v11582 = vand.u32 %v11555, 2147483648
  %v11583 = vor.u32 1.1754944e-38, %v11582
  %v11584 = vsel %vm11581, %v11583, %v11579
  %v11585 = vmul.f32 %v11549, %v11584
  %11586 = vrot.lane.b32.xlu0 %v11238, 48
  %v11587 = vpop.permute.xlu0 %11586
  %11588 = vrot.lane.b32.xlu0 %v11241, 48
  %v11589 = vpop.permute.xlu0 %11588
  %v11592 = vsel %vm10463, %v11570, 0
  %v11595 = vsel %vm10463, %v11585, 0
  %v11597 = vsel %vm5845, %v11589, 0
  %11599 = vmatpush.msra.mxu0 0.0
  %11600 = vmatpush.msra.mxu0 0.0
  %11601 = vmatpush.msra.mxu0 0.0
  %11602 = vmatpush.msra.mxu0 0.0
  %11603 = vmatpush.msra.mxu0 0.0
  %11604 = vmatpush.msra.mxu0 0.0
  %11605 = vmatpush.msra.mxu0 0.0
  %11606 = vmatpush.msra.mxu0 0.0
  %11607 = vmatpush.msra.mxu0 0.0
  %11608 = vmatpush.msra.mxu0 0.0
  %11609 = vmatpush.msra.mxu0 0.0
  %11610 = vmatpush.msra.mxu0 0.0
  %11611 = vmatpush.msra.mxu0 0.0
  %11612 = vmatpush.msra.mxu0 0.0
  %11613 = vmatpush.msra.mxu0 %v11597
  %11614 = vmatpush.msra.mxu0 %v11587
  %11615 = vmatmul.f32.gmra.mxu0 %v11592
  %v11616 = vpop.f32.mrf.mxu0
  %v11617 = vadd.f32 0.0, %v11616
  %11618 = vmatmul.f32.gmra.mxu0 %v11595
  %v11619 = vpop.f32.mrf.mxu0
  %v11620 = vadd.f32 0.0, %v11619
  %11621 = vdwg.mxu0
  %11622 = vrot.lane.b32.xlu0 %v11238, 104
  %v11623 = vpop.permute.xlu0 %11622
  %11624 = vrot.lane.b32.xlu0 %v11241, 104
  %v11625 = vpop.permute.xlu0 %11624
  %11626 = vrot.lane.b32.xlu0 %v11238, 72
  %v11627 = vpop.permute.xlu0 %11626
  %11628 = vrot.lane.b32.xlu0 %v11241, 72
  %v11629 = vpop.permute.xlu0 %11628
  %v11630 = vsel %vm10427, %v11623, 0
  %v11632 = vsel %vm10427, %v11625, 0
  %v11634 = vsel %vm10427, %v11627, 0
  %v11636 = vsel %vm10427, %v11629, 0
  %11638 = vmatpush.xpose.msra.mxu0 0.0
  %11639 = vmatpush.xpose.msra.mxu0 0.0
  %11640 = vmatpush.xpose.msra.mxu0 0.0
  %11641 = vmatpush.xpose.msra.mxu0 0.0
  %11642 = vmatpush.xpose.msra.mxu0 0.0
  %11643 = vmatpush.xpose.msra.mxu0 0.0
  %11644 = vmatpush.xpose.msra.mxu0 0.0
  %11645 = vmatpush.xpose.msra.mxu0 0.0
  %11646 = vmatpush.xpose.msra.mxu0 0.0
  %11647 = vmatpush.xpose.msra.mxu0 0.0
  %11648 = vmatpush.xpose.msra.mxu0 0.0
  %11649 = vmatpush.xpose.msra.mxu0 0.0
  %11650 = vmatpush.xpose.msra.mxu0 0.0
  %11651 = vmatpush.xpose.msra.mxu0 0.0
  %11652 = vmatpush.xpose.msra.mxu0 %v11636
  %11653 = vmatpush.xpose.msra.mxu0 %v11634
  %11654 = vmatmul.f32.gmra.mxu0 %v11630
  %v11655 = vpop.f32.mrf.mxu0
  %v11656 = vadd.f32 0.0, %v11655
  %11657 = vmatmul.f32.gmra.mxu0 %v11632
  %v11658 = vpop.f32.mrf.mxu0
  %v11659 = vadd.f32 0.0, %v11658
  %11660 = vdwg.mxu0
  %v11661 = vmul.f32 %v11656, 0.35355338
  %v11662 = vmul.f32 %v11659, 0.35355338
  %v11663 = vadd.f32 %v11661, %v10382
  %v11664 = vadd.f32 %v11662, %v10383
  %v11665 = vsel %vm10463, %v11663, -inf
  %11666 = vmax.xlane.f32.xlu0 %v11665
  %v11667 = vpop.xlane.xlu0 %11666
  %v11668 = vsel %vm10467, %v11664, -inf
  %11669 = vmax.xlane.f32.xlu0 %v11668
  %v11670 = vpop.xlane.xlu0 %11669
  %v11671 = vsub.f32 %v11663, %v11667
  %v11672 = vsub.f32 %v11664, %v11670
  %v11673 = vmul.f32 %v11671, 1.442695
  %v11674 = vpow.pop %v11673
  %v11675 = vmul.f32 %v11672, 1.442695
  %v11676 = vpow.pop %v11675
  %v11677 = vsel %vm10463, %v11674, 0.0
  %11678 = vadd.xlane.f32.xlu0 %v11677
  %v11679 = vpop.xlane.xlu0 %11678
  %v11680 = vsel %vm10467, %v11676, 0.0
  %11681 = vadd.xlane.f32.xlu0 %v11680
  %v11682 = vpop.xlane.xlu0 %11681
  %v11683 = vrcp.pop %v11679
  %v11684 = vmul.f32 %v11679, %v11683
  %v11685 = vsub.f32 1.0, %v11684
  %v11686 = vmul.f32 %v11683, %v11685
  %v11687 = vadd.f32 %v11683, %v11686
  %vm11688 = vweird.f32 %v11679
  %vm11689 = vweird.f32 %v11683
  %vm11690 = vmor %vm11688, %vm11689
  %v11691 = vsel %vm11690, %v11683, %v11687
  %v11692 = vand.u32 2147483647, %v11679
  %vm11693 = vcmp.eq.f32.partialorder %v11692, 8.507059e+37
  %v11694 = vand.u32 %v11679, 2147483648
  %v11695 = vor.u32 1.1754944e-38, %v11694
  %v11696 = vsel %vm11693, %v11695, %v11691
  %v11697 = vmul.f32 %v11674, %v11696
  %v11698 = vrcp.pop %v11682
  %v11699 = vmul.f32 %v11682, %v11698
  %v11700 = vsub.f32 1.0, %v11699
  %v11701 = vmul.f32 %v11698, %v11700
  %v11702 = vadd.f32 %v11698, %v11701
  %vm11703 = vweird.f32 %v11682
  %vm11704 = vweird.f32 %v11698
  %vm11705 = vmor %vm11703, %vm11704
  %v11706 = vsel %vm11705, %v11698, %v11702
  %v11707 = vand.u32 2147483647, %v11682
  %vm11708 = vcmp.eq.f32.partialorder %v11707, 8.507059e+37
  %v11709 = vand.u32 %v11682, 2147483648
  %v11710 = vor.u32 1.1754944e-38, %v11709
  %v11711 = vsel %vm11708, %v11710, %v11706
  %v11712 = vmul.f32 %v11676, %v11711
  %11713 = vrot.lane.b32.xlu0 %v11238, 40
  %v11714 = vpop.permute.xlu0 %11713
  %11715 = vrot.lane.b32.xlu0 %v11241, 40
  %v11716 = vpop.permute.xlu0 %11715
  %v11719 = vsel %vm10463, %v11697, 0
  %v11722 = vsel %vm10463, %v11712, 0
  %v11724 = vsel %vm5845, %v11716, 0
  %11726 = vmatpush.msra.mxu0 0.0
  %11727 = vmatpush.msra.mxu0 0.0
  %11728 = vmatpush.msra.mxu0 0.0
  %11729 = vmatpush.msra.mxu0 0.0
  %11730 = vmatpush.msra.mxu0 0.0
  %11731 = vmatpush.msra.mxu0 0.0
  %11732 = vmatpush.msra.mxu0 0.0
  %11733 = vmatpush.msra.mxu0 0.0
  %11734 = vmatpush.msra.mxu0 0.0
  %11735 = vmatpush.msra.mxu0 0.0
  %11736 = vmatpush.msra.mxu0 0.0
  %11737 = vmatpush.msra.mxu0 0.0
  %11738 = vmatpush.msra.mxu0 0.0
  %11739 = vmatpush.msra.mxu0 0.0
  %11740 = vmatpush.msra.mxu0 %v11724
  %11741 = vmatpush.msra.mxu0 %v11714
  %11742 = vmatmul.f32.gmra.mxu0 %v11719
  %v11743 = vpop.f32.mrf.mxu0
  %v11744 = vadd.f32 0.0, %v11743
  %11745 = vmatmul.f32.gmra.mxu0 %v11722
  %v11746 = vpop.f32.mrf.mxu0
  %v11747 = vadd.f32 0.0, %v11746
  %11748 = vdwg.mxu0
  %11751 = vrot.lane.b32.xlu0 %v11490, 8
  %v11752 = vpop.permute.xlu0 %11751
  %11753 = vrot.lane.b32.xlu0 %v11493, 8
  %v11754 = vpop.permute.xlu0 %11753
  %11759 = vrot.lane.b32.xlu0 %v11617, 16
  %v11760 = vpop.permute.xlu0 %11759
  %11761 = vrot.lane.b32.xlu0 %v11620, 16
  %v11762 = vpop.permute.xlu0 %11761
  %11767 = vrot.lane.b32.xlu0 %v11744, 24
  %v11768 = vpop.permute.xlu0 %11767
  %11769 = vrot.lane.b32.xlu0 %v11747, 24
  %v11770 = vpop.permute.xlu0 %11769
  %v11773 = vsel %vm10427, %v11363, %v11752
  %v11774 = vsel %vm10427, %v11366, %v11754
  %v11775 = vsel %vm10956, %v11773, %v11760
  %v11776 = vsel %vm10956, %v11774, %v11762
  %v11777 = vsel %vm10959, %v11775, %v11768
  %v11778 = vsel %vm10959, %v11776, %v11770
  %s11779 = scalar_lea.vmem %s14, 32
  %v11780 = vld [vmem:[%s11779] sm:$0xff]
  %v11781 = vld [vmem:[%s11779 + $0x8] sm:$0xff]
  %v11782 = vld [vmem:[%s11779 + $0x10] sm:$0xff]
  %v11783 = vld [vmem:[%s11779 + $0x18] sm:$0xff]
  %s11784 = scalar_lea.vmem %s15, 1
  %v11785 = vld [vmem:[%s11784] sm:$0x1]
  %v11787 = vperm.slane %v11785, 0
  %v11790 = vsel %vm949, %v11777, 0
  %v11793 = vsel %vm949, %v11778, 0
  %11795 = vmatpush.msra.mxu0 0.0
  %11796 = vmatpush.msra.mxu0 0.0
  %11797 = vmatpush.msra.mxu0 0.0
  %11798 = vmatpush.msra.mxu0 0.0
  %11799 = vmatpush.msra.mxu0 0.0
  %11800 = vmatpush.msra.mxu0 0.0
  %11801 = vmatpush.msra.mxu0 0.0
  %11802 = vmatpush.msra.mxu0 0.0
  %11803 = vmatpush.msra.mxu0 0.0
  %11804 = vmatpush.msra.mxu0 0.0
  %11805 = vmatpush.msra.mxu0 0.0
  %11806 = vmatpush.msra.mxu0 0.0
  %11807 = vmatpush.msra.mxu0 %v11783
  %11808 = vmatpush.msra.mxu0 %v11782
  %11809 = vmatpush.msra.mxu0 %v11781
  %11810 = vmatpush.msra.mxu0 %v11780
  %11811 = vmatmul.f32.gmra.mxu0 %v11790
  %v11812 = vpop.f32.mrf.mxu0
  %v11813 = vadd.f32 %v11787, %v11812
  %11814 = vmatmul.f32.gmra.mxu0 %v11793
  %v11815 = vpop.f32.mrf.mxu0
  %v11816 = vadd.f32 %v11787, %v11815
  %11817 = vdwg.mxu0
  %v11818 = vadd.f32 %v11202, %v11813
  %v11819 = vadd.f32 %v11203, %v11816
  %v11820 = vsel %vm949, %v11818, 0.0
  %11821 = vadd.xlane.f32.xlu0 %v11820
  %v11822 = vpop.xlane.xlu0 %11821
  %v11823 = vsel %vm11004, %v11819, 0.0
  %11824 = vadd.xlane.f32.xlu0 %v11823
  %v11825 = vpop.xlane.xlu0 %11824
  %v11826 = vmul.f32 %v11822, %v11014
  %v11827 = vmul.f32 %v11825, %v11014
  %v11828 = vsub.f32 %v11818, %v11826
  %v11829 = vsub.f32 %v11819, %v11827
  %v11830 = vmul.f32 %v11828, %v11828
  %v11831 = vmul.f32 %v11829, %v11829
  %v11832 = vsel %vm949, %v11830, 0.0
  %11833 = vadd.xlane.f32.xlu0 %v11832
  %v11834 = vpop.xlane.xlu0 %11833
  %v11835 = vsel %vm11004, %v11831, 0.0
  %11836 = vadd.xlane.f32.xlu0 %v11835
  %v11837 = vpop.xlane.xlu0 %11836
  %v11838 = vmul.f32 %v11834, %v11014
  %v11839 = vmul.f32 %v11837, %v11014
  %v11840 = vadd.f32 %v11838, 1e-05
  %v11841 = vadd.f32 %v11839, 1e-05
  %v11842 = vrsqrt.pop %v11840
  %v11843 = vmul.f32 %v11842, %v11840
  %v11844 = vmul.f32 %v11843, %v11842
  %v11845 = vmul.f32 0.5, %v11844
  %v11846 = vsub.f32 1.5, %v11845
  %v11847 = vmul.f32 %v11842, %v11846
  %vm11848 = vweird.f32 %v11840
  %vm11849 = vweird.f32 %v11842
  %vm11850 = vmor %vm11848, %vm11849
  %v11851 = vsel %vm11850, %v11842, %v11847
  %v11852 = vrsqrt.pop %v11841
  %v11853 = vmul.f32 %v11852, %v11841
  %v11854 = vmul.f32 %v11853, %v11852
  %v11855 = vmul.f32 0.5, %v11854
  %v11856 = vsub.f32 1.5, %v11855
  %v11857 = vmul.f32 %v11852, %v11856
  %vm11858 = vweird.f32 %v11841
  %vm11859 = vweird.f32 %v11852
  %vm11860 = vmor %vm11858, %vm11859
  %v11861 = vsel %vm11860, %v11852, %v11857
  %v11862 = vmul.f32 %v11828, %v11851
  %v11863 = vmul.f32 %v11829, %v11861
  %s11864 = scalar_lea.vmem %s20, 1
  %v11865 = vld [vmem:[%s11864] sm:$0x1]
  %v11867 = vperm.slane %v11865, 0
  %v11869 = vmul.f32 %v11862, %v11867
  %v11870 = vmul.f32 %v11863, %v11867
  %s11871 = scalar_lea.vmem %s21, 1
  %v11872 = vld [vmem:[%s11871] sm:$0x1]
  %v11874 = vperm.slane %v11872, 0
  %v11876 = vadd.f32 %v11869, %v11874
  %v11877 = vadd.f32 %v11870, %v11874
  %s11878 = scalar_lea.vmem %s16, 32
  %v11879 = vld [vmem:[%s11878] sm:$0xff]
  %v11880 = vld [vmem:[%s11878 + $0x8] sm:$0xff]
  %v11881 = vld [vmem:[%s11878 + $0x10] sm:$0xff]
  %v11882 = vld [vmem:[%s11878 + $0x18] sm:$0xff]
  %s11883 = scalar_lea.vmem %s17, 1
  %v11884 = vld [vmem:[%s11883] sm:$0x1]
  %v11886 = vperm.slane %v11884, 0
  %v11889 = vsel %vm949, %v11876, 0
  %v11892 = vsel %vm949, %v11877, 0
  %11894 = vmatpush.msra.mxu0 0.0
  %11895 = vmatpush.msra.mxu0 0.0
  %11896 = vmatpush.msra.mxu0 0.0
  %11897 = vmatpush.msra.mxu0 0.0
  %11898 = vmatpush.msra.mxu0 0.0
  %11899 = vmatpush.msra.mxu0 0.0
  %11900 = vmatpush.msra.mxu0 0.0
  %11901 = vmatpush.msra.mxu0 0.0
  %11902 = vmatpush.msra.mxu0 0.0
  %11903 = vmatpush.msra.mxu0 0.0
  %11904 = vmatpush.msra.mxu0 0.0
  %11905 = vmatpush.msra.mxu0 0.0
  %11906 = vmatpush.msra.mxu0 %v11882
  %11907 = vmatpush.msra.mxu0 %v11881
  %11908 = vmatpush.msra.mxu0 %v11880
  %11909 = vmatpush.msra.mxu0 %v11879
  %11910 = vmatmul.f32.gmra.mxu0 %v11889
  %v11911 = vpop.f32.mrf.mxu0
  %v11912 = vadd.f32 %v11886, %v11911
  %11913 = vmatmul.f32.gmra.mxu0 %v11892
  %v11914 = vpop.f32.mrf.mxu0
  %v11915 = vadd.f32 %v11886, %v11914
  %11916 = vdwg.mxu0
  %v11917 = vmax.f32 %v11912, 0.0
  %v11918 = vmax.f32 %v11915, 0.0
  %s11919 = scalar_lea.vmem %s18, 64
  %v11920 = vld [vmem:[%s11919] sm:$0xff]
  %v11921 = vld [vmem:[%s11919 + $0x8] sm:$0xff]
  %v11922 = vld [vmem:[%s11919 + $0x10] sm:$0xff]
  %v11923 = vld [vmem:[%s11919 + $0x18] sm:$0xff]
  %v11924 = vld [vmem:[%s11919 + $0x20] sm:$0xff]
  %v11925 = vld [vmem:[%s11919 + $0x28] sm:$0xff]
  %v11926 = vld [vmem:[%s11919 + $0x30] sm:$0xff]
  %v11927 = vld [vmem:[%s11919 + $0x38] sm:$0xff]
  %s11928 = scalar_lea.vmem %s19, 1
  %v11929 = vld [vmem:[%s11928] sm:$0x1]
  %v11931 = vperm.slane %v11929, 0
  %v11934 = vsel %vm11116, %v11917, 0
  %v11937 = vsel %vm11116, %v11918, 0
  %11939 = vmatpush.msra.mxu0 0.0
  %11940 = vmatpush.msra.mxu0 0.0
  %11941 = vmatpush.msra.mxu0 0.0
  %11942 = vmatpush.msra.mxu0 0.0
  %11943 = vmatpush.msra.mxu0 0.0
  %11944 = vmatpush.msra.mxu0 0.0
  %11945 = vmatpush.msra.mxu0 0.0
  %11946 = vmatpush.msra.mxu0 0.0
  %11947 = vmatpush.msra.mxu0 %v11927
  %11948 = vmatpush.msra.mxu0 %v11926
  %11949 = vmatpush.msra.mxu0 %v11925
  %11950 = vmatpush.msra.mxu0 %v11924
  %11951 = vmatpush.msra.mxu0 %v11923
  %11952 = vmatpush.msra.mxu0 %v11922
  %11953 = vmatpush.msra.mxu0 %v11921
  %11954 = vmatpush.msra.mxu0 %v11920
  %11955 = vmatmul.f32.gmra.mxu0 %v11934
  %v11956 = vpop.f32.mrf.mxu0
  %v11957 = vadd.f32 %v11931, %v11956
  %11958 = vmatmul.f32.gmra.mxu0 %v11937
  %v11959 = vpop.f32.mrf.mxu0
  %v11960 = vadd.f32 %v11931, %v11959
  %11961 = vdwg.mxu0
  %v11962 = vadd.f32 %v11876, %v11957
  %v11963 = vadd.f32 %v11877, %v11960
  %v11964 = vsel %vm949, %v11962, 0.0
  %11965 = vadd.xlane.f32.xlu0 %v11964
  %v11966 = vpop.xlane.xlu0 %11965
  %v11967 = vsel %vm11004, %v11963, 0.0
  %11968 = vadd.xlane.f32.xlu0 %v11967
  %v11969 = vpop.xlane.xlu0 %11968
  %v11970 = vmul.f32 %v11966, %v11014
  %v11971 = vmul.f32 %v11969, %v11014
  %v11972 = vsub.f32 %v11962, %v11970
  %v11973 = vsub.f32 %v11963, %v11971
  %v11974 = vmul.f32 %v11972, %v11972
  %v11975 = vmul.f32 %v11973, %v11973
  %v11976 = vsel %vm949, %v11974, 0.0
  %11977 = vadd.xlane.f32.xlu0 %v11976
  %v11978 = vpop.xlane.xlu0 %11977
  %v11979 = vsel %vm11004, %v11975, 0.0
  %11980 = vadd.xlane.f32.xlu0 %v11979
  %v11981 = vpop.xlane.xlu0 %11980
  %v11982 = vmul.f32 %v11978, %v11014
  %v11983 = vmul.f32 %v11981, %v11014
  %v11984 = vadd.f32 %v11982, 1e-05
  %v11985 = vadd.f32 %v11983, 1e-05
  %v11986 = vrsqrt.pop %v11984
  %v11987 = vmul.f32 %v11986, %v11984
  %v11988 = vmul.f32 %v11987, %v11986
  %v11989 = vmul.f32 0.5, %v11988
  %v11990 = vsub.f32 1.5, %v11989
  %v11991 = vmul.f32 %v11986, %v11990
  %vm11992 = vweird.f32 %v11984
  %vm11993 = vweird.f32 %v11986
  %vm11994 = vmor %vm11992, %vm11993
  %v11995 = vsel %vm11994, %v11986, %v11991
  %v11996 = vrsqrt.pop %v11985
  %v11997 = vmul.f32 %v11996, %v11985
  %v11998 = vmul.f32 %v11997, %v11996
  %v11999 = vmul.f32 0.5, %v11998
  %v12000 = vsub.f32 1.5, %v11999
  %v12001 = vmul.f32 %v11996, %v12000
  %vm12002 = vweird.f32 %v11985
  %vm12003 = vweird.f32 %v11996
  %vm12004 = vmor %vm12002, %vm12003
  %v12005 = vsel %vm12004, %v11996, %v12001
  %v12006 = vmul.f32 %v11972, %v11995
  %v12007 = vmul.f32 %v11973, %v12005
  %s12008 = scalar_lea.vmem %s22, 1
  %v12009 = vld [vmem:[%s12008] sm:$0x1]
  %v12011 = vperm.slane %v12009, 0
  %v12013 = vmul.f32 %v12006, %v12011
  %v12014 = vmul.f32 %v12007, %v12011
  %s12015 = scalar_lea.vmem %s23, 1
  %v12016 = vld [vmem:[%s12015] sm:$0x1]
  %v12018 = vperm.slane %v12016, 0
  %v12020 = vadd.f32 %v12013, %v12018
  %v12021 = vadd.f32 %v12014, %v12018
  %12022 = vst.msk [vmem:[%s24] sm:$0xff] %vm949, %v12020
  %12023 = vst.msk [vmem:[%s24 + $0x8] sm:$0xf] %vm11004, %v12021
  // Predicated region
  $region98: #{transformer_encoder_forward.1} parent=0 // pred_check
    _
  $region99: #{transformer_encoder_forward.1} parent=0 // pred_check_branch
    %12025 = sbr.rel (0) target = $region101
  $region100: #{transformer_encoder_forward.1} parent=0 // pred_region
    _
  $region101: #{transformer_encoder_forward.1} parent=0 // pred_fallthru
    _
  // Predicated region
  $region102: #{transformer_encoder_forward.1} parent=0 // pred_check
    _
  $region103: #{transformer_encoder_forward.1} parent=0 // pred_check_branch
    %12027 = sbr.rel (0) target = $region105
  $region104: #{transformer_encoder_forward.1} parent=0 // pred_region
    _
  $region105: #{transformer_encoder_forward.1} parent=0 // pred_fallthru
    _

</llo_original>
